<compile_context>
chip_gen: v6e
topology: v6e:2x2x1
jax: 0.10.0
libtpu: 0.0.40
codegen_flags: <defaults>
</compile_context>

<pallas_src>
import numpy as np
import jax
import jax.numpy as jnp
from jax.experimental import pallas as pl
from jax.experimental.pallas import tpu as pltpu

NVT = 3          # vertex types (module default nvt=3)
VHS = 100        # logical node hidden size (module default vhs=100)
VHS_PAD = 128    # padded to full lane width
N_NODES = 16     # nodes in the synthetic layered DAG (multiple of 8 sublanes)
N_LAYERS = 4     # topological layers
NROUNDS = 3      # GRU rounds (module default 10, small for the demo)


# -----------------------------------------------------------------------------
# Pallas kernel
# -----------------------------------------------------------------------------
def dgdagrnn_kernel(gi0_ref, af_ref, ab_ref, mf_ref, mb_ref,
                    wcomb_ref, bcomb_ref, whh_f_ref, bhh_f_ref,
                    wih_b_ref, bih_b_ref, whh_b_ref, bhh_b_ref,
                    wgm_f_ref, bg_f_ref, wgm_b_ref, bg_b_ref,
                    h_ref):
    n, vp = h_ref.shape
    L = af_ref.shape[0]

    def mm(a, w_ref):
        # bf16 MXU operands (weights stored bf16 in VMEM, loaded at point of use),
        # f32 accumulation.
        return jnp.dot(a.astype(jnp.bfloat16), w_ref[...],
                       preferred_element_type=jnp.float32)

    def gru(gi, hid, whh_ref, bhh_ref):
        # nn.GRUCell with fused (r|z|n) lane-stacked weights.  r/z hidden biases are
        # folded into the input-side bias; bhh only carries the n-gate hidden bias
        # (needed inside the r*(...) term).
        gh = mm(hid, whh_ref) + bhh_ref[...]
        r = jax.nn.sigmoid(gi[:, 0 * vp:1 * vp] + gh[:, 0 * vp:1 * vp])
        z = jax.nn.sigmoid(gi[:, 1 * vp:2 * vp] + gh[:, 1 * vp:2 * vp])
        c = jnp.tanh(gi[:, 2 * vp:3 * vp] + r * gh[:, 2 * vp:3 * vp])
        return (1.0 - z) * c + z * hid

    def gru_zero_hidden(gi, bhh_ref):
        # l == 0: hidden state (aggregated message) is identically zero, so the
        # whh matmul and the z*hid blend term are skipped statically.
        r = jax.nn.sigmoid(gi[:, 0 * vp:1 * vp])
        z = jax.nn.sigmoid(gi[:, 1 * vp:2 * vp])
        c = jnp.tanh(gi[:, 2 * vp:3 * vp] + r * bhh_ref[:, 2 * vp:3 * vp])
        return (1.0 - z) * c

    def gated_msg(h, wgm_ref, bg_ref):
        # GatedSumConv message: sigmoid(gate(h)) * mapper(h), one fused matmul.
        gm = mm(h, wgm_ref)
        return jax.nn.sigmoid(gm[:, :vp] + bg_ref[...]) * gm[:, vp:]

    def blend(m, h_new, h):
        # m in {0,1}, pre-broadcast to [N, VP]: exact row select, no compare needed.
        return m * h_new + (1.0 - m) * h

    def sweep(h, gi_f):
        # ---- forward topological sweep (gi_f is round-invariant, hoisted) ----
        h = blend(mf_ref[0], gru_zero_hidden(gi_f, bhh_f_ref), h)
        for l in range(1, L):
            ps = jnp.dot(af_ref[l],
                         gated_msg(h, wgm_f_ref, bg_f_ref).astype(jnp.bfloat16),
                         preferred_element_type=jnp.float32)
            h = blend(mf_ref[l], gru(gi_f, ps, whh_f_ref, bhh_f_ref), h)
        # ---- backward topological sweep (GRU input is the *current* h) ----
        gi_b = mm(h, wih_b_ref) + bih_b_ref[...]
        h = blend(mb_ref[0], gru_zero_hidden(gi_b, bhh_b_ref), h)
        for l in range(1, L):
            ps = jnp.dot(ab_ref[l],
                         gated_msg(h, wgm_b_ref, bg_b_ref).astype(jnp.bfloat16),
                         preferred_element_type=jnp.float32)
            gi_b = mm(h, wih_b_ref) + bih_b_ref[...]
            h = blend(mb_ref[l], gru(gi_b, ps, whh_b_ref, bhh_b_ref), h)
        return h

    # Round 0 peeled: input is G.x; its GRU pre-activation gi0 = x @ W_ih + b was
    # precomputed host-side (no lane-3 intermediates anywhere in the kernel).
    h = sweep(jnp.zeros((n, vp), jnp.float32), gi0_ref[...])

    # Rounds 1..NROUNDS-1: projector fused into wcomb/bcomb; gi_f is computed exactly
    # once per round from h captured at round start (matches reference semantics).
    def round_body(_, h):
        gi_f = mm(h, wcomb_ref) + bcomb_ref[...]
        return sweep(h, gi_f)

    h_ref[...] = jax.lax.fori_loop(1, NROUNDS, round_body, h)


def dgdagrnn_forward(kp, A_fwd, A_bwd, mask_fwd, mask_bwd):
    gi0 = kp["gi0"]
    n = gi0.shape[0]
    vp = kp["whh_f"].shape[0]
    L = A_fwd.shape[0]
    args = (gi0, A_fwd, A_bwd, mask_fwd, mask_bwd,
            kp["wcomb"], kp["bcomb"], kp["whh_f"], kp["bhh_f"],
            kp["wih_b"], kp["bih_b"], kp["whh_b"], kp["bhh_b"],
            kp["wgm_f"], kp["bg_f"], kp["wgm_b"], kp["bg_b"])

    # Advisory cost estimate for XLA's scheduler.
    mm3 = 2 * n * vp * (3 * vp)          # [n,vp] x [vp,3vp]
    mm2 = 2 * n * vp * (2 * vp)          # fused gate|mapper
    mma = 2 * n * n * vp                 # per-layer aggregation
    per_round = (L - 1) * (mm2 + mma + mm3)           # fwd l>0 (msg + A + gh)
    per_round += mm3                                  # bwd l==0 (gi)
    per_round += (L - 1) * (mm2 + mma + 2 * mm3)      # bwd l>0 (msg + A + gi + gh)
    flops = NROUNDS * per_round + (NROUNDS - 1) * mm3  # fused-projector gi_f, rounds>0
    trans = NROUNDS * (8 * L - 2) * n * vp
    bytes_acc = int(sum(int(np.prod(a.shape)) * jnp.dtype(a.dtype).itemsize
                        for a in args) + n * vp * 4)

    vmem = pl.BlockSpec(memory_space=pltpu.MemorySpace.VMEM)
    return pl.pallas_call(
        dgdagrnn_kernel,
        out_shape=jax.ShapeDtypeStruct((n, vp), jnp.float32),
        in_specs=[vmem] * len(args),
        out_specs=vmem,
        compiler_params=pltpu.CompilerParams(vmem_limit_bytes=32 * 1024 * 1024),
        cost_estimate=pl.CostEstimate(flops=int(flops), transcendentals=int(trans),
                                      bytes_accessed=bytes_acc),
    )(*args)


# -----------------------------------------------------------------------------
# Host-side glue: graph construction, parameter init, fuse+pad packing
# -----------------------------------------------------------------------------
def build_graph(n_nodes, n_layers, nvt):
    per = n_nodes // n_layers
    fwd_layer_of = np.arange(n_nodes) // per
    bwd_layer_of = (n_layers - 1) - fwd_layer_of
    src, dst = [], []
    for v in range(n_nodes):
        l = fwd_layer_of[v]
        if l == 0:
            continue
        base = (l - 1) * per
        src += [base + (v % per), base + ((v + 1) % per)]
        dst += [v, v]
    edge_index = np.array([src, dst], dtype=np.int64)

    A_fwd = np.zeros((n_layers, n_nodes, n_nodes), np.float32)
    A_bwd = np.zeros((n_layers, n_nodes, n_nodes), np.float32)
    mask_fwd = np.zeros((n_layers, n_nodes, 1), np.float32)
    mask_bwd = np.zeros((n_layers, n_nodes, 1), np.float32)
    for l in range(n_layers):
        mask_fwd[l, fwd_layer_of == l, 0] = 1.0
        mask_bwd[l, bwd_layer_of == l, 0] = 1.0
    for e in range(edge_index.shape[1]):
        s, t = edge_index[0, e], edge_index[1, e]
        lf = fwd_layer_of[t]
        if lf > 0:                       # forward: aggregate source messages at target
            A_fwd[lf, t, s] += 1.0
        lb = bwd_layer_of[t]
        if lb > 0:                       # backward (faithful to reference code): edges
            A_bwd[lb, s, t] += 1.0       # selected by target-in-layer, reverse-flow aggregation

    x = np.zeros((n_nodes, nvt), np.float32)
    x[np.arange(n_nodes), np.arange(n_nodes) % nvt] = 1.0
    return x, A_fwd, A_bwd, mask_fwd, mask_bwd


def init_params(key, nvt, vhs):
    ks = iter(jax.random.split(key, 20))

    def lin(fan_in, shape):
        b = 1.0 / np.sqrt(fan_in)
        return jax.random.uniform(next(ks), shape, jnp.float32, -b, b)

    p = {}
    # GRUCell(nvt, vhs): stacked (r, z, n), pre-transposed to [3, in, vhs]
    p["wih_f"] = lin(vhs, (3, nvt, vhs)); p["whh_f"] = lin(vhs, (3, vhs, vhs))
    p["bih_f"] = lin(vhs, (3, vhs));      p["bhh_f"] = lin(vhs, (3, vhs))
    # GRUCell(vhs, vhs)
    p["wih_b"] = lin(vhs, (3, vhs, vhs)); p["whh_b"] = lin(vhs, (3, vhs, vhs))
    p["bih_b"] = lin(vhs, (3, vhs));      p["bhh_b"] = lin(vhs, (3, vhs))
    # projector Linear(vhs, nvt)
    p["wp"] = lin(vhs, (vhs, nvt)); p["bp"] = lin(vhs, (nvt,))
    # gate_forward / mapper_forward, gate_backward / mapper_backward
    p["wg_f"] = lin(vhs, (vhs, vhs)); p["bg_f"] = lin(vhs, (vhs,)); p["wm_f"] = lin(vhs, (vhs, vhs))
    p["wg_b"] = lin(vhs, (vhs, vhs)); p["bg_b"] = lin(vhs, (vhs,)); p["wm_b"] = lin(vhs, (vhs, vhs))
    return p


def pack_params(p, vhs, vp, x):
    """Fuse GRU gates, projector and gate+mapper; zero-pad vhs -> vp; cast all MXU
    weights to bf16 (biases and the precomputed gi0 stay f32)."""
    def stack3(blocks, rows):
        out = jnp.zeros((rows, 3 * vp), jnp.float32)
        for g, blk in enumerate(blocks):
            out = out.at[:blk.shape[0], g * vp:g * vp + vhs].set(blk)
        return out

    def bias3(vals):
        out = jnp.zeros((1, 3 * vp), jnp.float32)
        for g, v in enumerate(vals):
            out = out.at[0, g * vp:g * vp + vhs].set(v)
        return out

    # fold r/z hidden biases into the input-side bias; keep the n-gate biases split
    bif = [p["bih_f"][0] + p["bhh_f"][0], p["bih_f"][1] + p["bhh_f"][1], p["bih_f"][2]]
    bib = [p["bih_b"][0] + p["bhh_b"][0], p["bih_b"][1] + p["bhh_b"][1], p["bih_b"][2]]
    zeros = jnp.zeros((vhs,), jnp.float32)

    k = {}
    # forward GRU: projector fused into the (rounds>0) input-side weight/bias, and the
    # round-0 pre-activation gi0 = x @ W_ih + b precomputed host-side.
    k["wcomb"] = stack3([p["wp"] @ p["wih_f"][g] for g in range(3)], vp).astype(jnp.bfloat16)
    k["bcomb"] = bias3([p["bp"] @ p["wih_f"][g] + bif[g] for g in range(3)])
    k["gi0"]   = stack3([x @ p["wih_f"][g] + bif[g] for g in range(3)], x.shape[0])
    k["whh_f"] = stack3([p["whh_f"][g] for g in range(3)], vp).astype(jnp.bfloat16)
    k["bhh_f"] = bias3([zeros, zeros, p["bhh_f"][2]])
    # backward GRU
    k["wih_b"] = stack3([p["wih_b"][g] for g in range(3)], vp).astype(jnp.bfloat16)
    k["bih_b"] = bias3(bib)
    k["whh_b"] = stack3([p["whh_b"][g] for g in range(3)], vp).astype(jnp.bfloat16)
    k["bhh_b"] = bias3([zeros, zeros, p["bhh_b"][2]])

    # fused gate|mapper projections
    def gm_w(wg, wm):
        out = jnp.zeros((vp, 2 * vp), jnp.float32)
        out = out.at[:vhs, :vhs].set(wg)
        out = out.at[:vhs, vp:vp + vhs].set(wm)
        return out.astype(jnp.bfloat16)

    k["wgm_f"] = gm_w(p["wg_f"], p["wm_f"])
    k["bg_f"] = jnp.zeros((1, vp), jnp.float32).at[0, :vhs].set(p["bg_f"])
    k["wgm_b"] = gm_w(p["wg_b"], p["wm_b"])
    k["bg_b"] = jnp.zeros((1, vp), jnp.float32).at[0, :vhs].set(p["bg_b"])
    return k


# -----------------------------------------------------------------------------
# Pure-JAX reference (unfused, unpadded, all-f32) for verification
# -----------------------------------------------------------------------------
def reference_forward(x, A_fwd, A_bwd, mask_fwd, mask_bwd, p, nrounds):
    def gru(inp, hid, wih, bih, whh, bhh):
        r = jax.nn.sigmoid(inp @ wih[0] + bih[0] + hid @ whh[0] + bhh[0])
        z = jax.nn.sigmoid(inp @ wih[1] + bih[1] + hid @ whh[1] + bhh[1])
        c = jnp.tanh(inp @ wih[2] + bih[2] + r * (hid @ whh[2] + bhh[2]))
        return (1.0 - z) * c + z * hid

    n_nodes = x.shape[0]
    vhs = p["whh_f"].shape[-1]
    h = jnp.zeros((n_nodes, vhs), jnp.float32)
    L = A_fwd.shape[0]
    for r_idx in range(nrounds):
        inp = x if r_idx == 0 else (h @ p["wp"] + p["bp"])
        for l in range(L):
            msg = jax.nn.sigmoid(h @ p["wg_f"] + p["bg_f"]) * (h @ p["wm_f"])
            ps = A_fwd[l] @ msg
            h_new = gru(inp, ps, p["wih_f"], p["bih_f"], p["whh_f"], p["bhh_f"])
            m = mask_fwd[l]
            h = m * h_new + (1.0 - m) * h
        for l in range(L):
            msg = jax.nn.sigmoid(h @ p["wg_b"] + p["bg_b"]) * (h @ p["wm_b"])
            ps = A_bwd[l] @ msg
            h_new = gru(h, ps, p["wih_b"], p["bih_b"], p["whh_b"], p["bhh_b"])
            m = mask_bwd[l]
            h = m * h_new + (1.0 - m) * h
    return h


if __name__ == "__main__":
    key = jax.random.PRNGKey(0)
    x_np, A_fwd_np, A_bwd_np, mf_np, mb_np = build_graph(N_NODES, N_LAYERS, NVT)
    x = jnp.asarray(x_np)

    params = init_params(key, NVT, VHS)
    kparams = pack_params(params, VHS, VHS_PAD, x)

    # Kernel-side graph tensors: bf16 aggregation matrices (values 0/1/2 are exact),
    # pre-broadcast f32 layer masks (no in-kernel compare / lane broadcast).
    A_fwd_k = jnp.asarray(A_fwd_np, dtype=jnp.bfloat16)
    A_bwd_k = jnp.asarray(A_bwd_np, dtype=jnp.bfloat16)
    mf_k = jnp.asarray(np.broadcast_to(mf_np, (N_LAYERS, N_NODES, VHS_PAD)).copy())
    mb_k = jnp.asarray(np.broadcast_to(mb_np, (N_LAYERS, N_NODES, VHS_PAD)).copy())

    h_pad = dgdagrnn_forward(kparams, A_fwd_k, A_bwd_k, mf_k, mb_k)
    h_pad = jax.block_until_ready(h_pad)
    h = np.asarray(h_pad)[:, :VHS]          # strip lane padding

    h_ref = reference_forward(x, jnp.asarray(A_fwd_np), jnp.asarray(A_bwd_np),
                              jnp.asarray(mf_np), jnp.asarray(mb_np), params, NROUNDS)
    h_ref = jax.block_until_ready(h_ref)
    # Tolerance reflects bf16 MXU operands (f32 accumulation) vs the all-f32 reference.
    np.testing.assert_allclose(h, np.asarray(h_ref), rtol=3e-2, atol=3e-2)

    print("KERNEL_OK")
</pallas_src>

<mosaic_0001>
module attributes {stable_mosaic.version = 11 : i64} {
  func.func @dgdagrnn_kernel(%arg0: memref<16x384xf32, #tpu.memory_space<vmem>>, %arg1: memref<4x16x16xbf16, #tpu.memory_space<vmem>>, %arg2: memref<4x16x16xbf16, #tpu.memory_space<vmem>>, %arg3: memref<4x16x128xf32, #tpu.memory_space<vmem>>, %arg4: memref<4x16x128xf32, #tpu.memory_space<vmem>>, %arg5: memref<128x384xbf16, #tpu.memory_space<vmem>>, %arg6: memref<1x384xf32, #tpu.memory_space<vmem>>, %arg7: memref<128x384xbf16, #tpu.memory_space<vmem>>, %arg8: memref<1x384xf32, #tpu.memory_space<vmem>>, %arg9: memref<128x384xbf16, #tpu.memory_space<vmem>>, %arg10: memref<1x384xf32, #tpu.memory_space<vmem>>, %arg11: memref<128x384xbf16, #tpu.memory_space<vmem>>, %arg12: memref<1x384xf32, #tpu.memory_space<vmem>>, %arg13: memref<128x256xbf16, #tpu.memory_space<vmem>>, %arg14: memref<1x128xf32, #tpu.memory_space<vmem>>, %arg15: memref<128x256xbf16, #tpu.memory_space<vmem>>, %arg16: memref<1x128xf32, #tpu.memory_space<vmem>>, %arg17: memref<16x128xf32, #tpu.memory_space<vmem>>) attributes {dimension_semantics = [], scalar_prefetch = 0 : i64, scratch_operands = 0 : i64, tpu.core_type = #tpu.core_type<tc>} {
    %cst = arith.constant 0.000000e+00 : f32
    %0 = vector.broadcast %cst : f32 to vector<16x128xf32>
    %c0 = arith.constant 0 : index
    %c0_0 = arith.constant 0 : index
    %1 = vector.load %arg0[%c0, %c0_0] : memref<16x384xf32, #tpu.memory_space<vmem>>, vector<16x384xf32>
    %c0_1 = arith.constant 0 : index
    %c0_2 = arith.constant 0 : index
    %c0_3 = arith.constant 0 : index
    %2 = vector.load %arg3[%c0_1, %c0_2, %c0_3] : memref<4x16x128xf32, #tpu.memory_space<vmem>>, vector<1x16x128xf32>
    %3 = vector.shape_cast %2 : vector<1x16x128xf32> to vector<16x128xf32>
    %4 = vector.extract_strided_slice %1 {offsets = [0, 0], sizes = [16, 128], strides = [1, 1]} : vector<16x384xf32> to vector<16x128xf32>
    %5 = arith.negf %4 : vector<16x128xf32>
    %6 = math.exp %5 : vector<16x128xf32>
    %cst_4 = arith.constant 1.000000e+00 : f32
    %7 = vector.broadcast %cst_4 : f32 to vector<16x128xf32>
    %8 = arith.addf %7, %6 : vector<16x128xf32>
    %9 = arith.divf %7, %8 : vector<16x128xf32>
    %10 = vector.extract_strided_slice %1 {offsets = [0, 128], sizes = [16, 128], strides = [1, 1]} : vector<16x384xf32> to vector<16x128xf32>
    %11 = arith.negf %10 : vector<16x128xf32>
    %12 = math.exp %11 : vector<16x128xf32>
    %cst_5 = arith.constant 1.000000e+00 : f32
    %13 = vector.broadcast %cst_5 : f32 to vector<16x128xf32>
    %14 = arith.addf %13, %12 : vector<16x128xf32>
    %15 = arith.divf %13, %14 : vector<16x128xf32>
    %16 = vector.extract_strided_slice %1 {offsets = [0, 256], sizes = [16, 128], strides = [1, 1]} : vector<16x384xf32> to vector<16x128xf32>
    %c0_6 = arith.constant 0 : index
    %c256 = arith.constant 256 : index
    %17 = vector.load %arg8[%c0_6, %c256] : memref<1x384xf32, #tpu.memory_space<vmem>>, vector<1x128xf32>
    %18 = vector.broadcast %17 : vector<1x128xf32> to vector<16x128xf32>
    %19 = arith.mulf %9, %18 : vector<16x128xf32>
    %20 = arith.addf %16, %19 : vector<16x128xf32>
    %21 = math.tanh %20 : vector<16x128xf32>
    %cst_7 = arith.constant 1.000000e+00 : f32
    %22 = vector.broadcast %cst_7 : f32 to vector<16x128xf32>
    %23 = arith.subf %22, %15 : vector<16x128xf32>
    %24 = arith.mulf %23, %21 : vector<16x128xf32>
    %25 = arith.mulf %3, %24 : vector<16x128xf32>
    %cst_8 = arith.constant 1.000000e+00 : f32
    %26 = vector.broadcast %cst_8 : f32 to vector<16x128xf32>
    %27 = arith.subf %26, %3 : vector<16x128xf32>
    %28 = arith.mulf %27, %0 : vector<16x128xf32>
    %29 = arith.addf %25, %28 : vector<16x128xf32>
    %c1 = arith.constant 1 : index
    %c0_9 = arith.constant 0 : index
    %c0_10 = arith.constant 0 : index
    %30 = vector.load %arg1[%c1, %c0_9, %c0_10] : memref<4x16x16xbf16, #tpu.memory_space<vmem>>, vector<1x16x16xbf16>
    %31 = vector.shape_cast %30 : vector<1x16x16xbf16> to vector<16x16xbf16>
    %32 = arith.truncf %29 : vector<16x128xf32> to vector<16x128xbf16>
    %c0_11 = arith.constant 0 : index
    %c0_12 = arith.constant 0 : index
    %33 = vector.load %arg13[%c0_11, %c0_12] : memref<128x256xbf16, #tpu.memory_space<vmem>>, vector<128x256xbf16>
    %cst_13 = arith.constant dense<0.000000e+00> : vector<16x256xf32>
    %34 = tpu.matmul %32, %33, %cst_13 {dimension_numbers = #tpu.dot_dimension_numbers<[1], [0], [0], [1], [0, 0, 1, 1], [], []>} : vector<16x128xbf16>, vector<128x256xbf16>, vector<16x256xf32> -> vector<16x256xf32>
    %35 = vector.extract_strided_slice %34 {offsets = [0, 0], sizes = [16, 128], strides = [1, 1]} : vector<16x256xf32> to vector<16x128xf32>
    %c0_14 = arith.constant 0 : index
    %c0_15 = arith.constant 0 : index
    %36 = vector.load %arg14[%c0_14, %c0_15] : memref<1x128xf32, #tpu.memory_space<vmem>>, vector<1x128xf32>
    %37 = vector.broadcast %36 : vector<1x128xf32> to vector<16x128xf32>
    %38 = arith.addf %35, %37 : vector<16x128xf32>
    %39 = arith.negf %38 : vector<16x128xf32>
    %40 = math.exp %39 : vector<16x128xf32>
    %cst_16 = arith.constant 1.000000e+00 : f32
    %41 = vector.broadcast %cst_16 : f32 to vector<16x128xf32>
    %42 = arith.addf %41, %40 : vector<16x128xf32>
    %43 = arith.divf %41, %42 : vector<16x128xf32>
    %44 = vector.extract_strided_slice %34 {offsets = [0, 128], sizes = [16, 128], strides = [1, 1]} : vector<16x256xf32> to vector<16x128xf32>
    %45 = arith.mulf %43, %44 : vector<16x128xf32>
    %46 = arith.truncf %45 : vector<16x128xf32> to vector<16x128xbf16>
    %cst_17 = arith.constant dense<0.000000e+00> : vector<16x128xf32>
    %47 = tpu.matmul %31, %46, %cst_17 {dimension_numbers = #tpu.dot_dimension_numbers<[1], [0], [0], [1], [0, 0, 1, 1], [], []>} : vector<16x16xbf16>, vector<16x128xbf16>, vector<16x128xf32> -> vector<16x128xf32>
    %c1_18 = arith.constant 1 : index
    %c0_19 = arith.constant 0 : index
    %c0_20 = arith.constant 0 : index
    %48 = vector.load %arg3[%c1_18, %c0_19, %c0_20] : memref<4x16x128xf32, #tpu.memory_space<vmem>>, vector<1x16x128xf32>
    %49 = vector.shape_cast %48 : vector<1x16x128xf32> to vector<16x128xf32>
    %50 = arith.truncf %47 : vector<16x128xf32> to vector<16x128xbf16>
    %c0_21 = arith.constant 0 : index
    %c0_22 = arith.constant 0 : index
    %51 = vector.load %arg7[%c0_21, %c0_22] : memref<128x384xbf16, #tpu.memory_space<vmem>>, vector<128x384xbf16>
    %cst_23 = arith.constant dense<0.000000e+00> : vector<16x384xf32>
    %52 = tpu.matmul %50, %51, %cst_23 {dimension_numbers = #tpu.dot_dimension_numbers<[1], [0], [0], [1], [0, 0, 1, 1], [], []>} : vector<16x128xbf16>, vector<128x384xbf16>, vector<16x384xf32> -> vector<16x384xf32>
    %c0_24 = arith.constant 0 : index
    %c0_25 = arith.constant 0 : index
    %53 = vector.load %arg8[%c0_24, %c0_25] : memref<1x384xf32, #tpu.memory_space<vmem>>, vector<1x384xf32>
    %54 = vector.broadcast %53 : vector<1x384xf32> to vector<16x384xf32>
    %55 = arith.addf %52, %54 : vector<16x384xf32>
    %56 = vector.extract_strided_slice %1 {offsets = [0, 0], sizes = [16, 128], strides = [1, 1]} : vector<16x384xf32> to vector<16x128xf32>
    %57 = vector.extract_strided_slice %55 {offsets = [0, 0], sizes = [16, 128], strides = [1, 1]} : vector<16x384xf32> to vector<16x128xf32>
    %58 = arith.addf %56, %57 : vector<16x128xf32>
    %59 = arith.negf %58 : vector<16x128xf32>
    %60 = math.exp %59 : vector<16x128xf32>
    %cst_26 = arith.constant 1.000000e+00 : f32
    %61 = vector.broadcast %cst_26 : f32 to vector<16x128xf32>
    %62 = arith.addf %61, %60 : vector<16x128xf32>
    %63 = arith.divf %61, %62 : vector<16x128xf32>
    %64 = vector.extract_strided_slice %1 {offsets = [0, 128], sizes = [16, 128], strides = [1, 1]} : vector<16x384xf32> to vector<16x128xf32>
    %65 = vector.extract_strided_slice %55 {offsets = [0, 128], sizes = [16, 128], strides = [1, 1]} : vector<16x384xf32> to vector<16x128xf32>
    %66 = arith.addf %64, %65 : vector<16x128xf32>
    %67 = arith.negf %66 : vector<16x128xf32>
    %68 = math.exp %67 : vector<16x128xf32>
    %cst_27 = arith.constant 1.000000e+00 : f32
    %69 = vector.broadcast %cst_27 : f32 to vector<16x128xf32>
    %70 = arith.addf %69, %68 : vector<16x128xf32>
    %71 = arith.divf %69, %70 : vector<16x128xf32>
    %72 = vector.extract_strided_slice %1 {offsets = [0, 256], sizes = [16, 128], strides = [1, 1]} : vector<16x384xf32> to vector<16x128xf32>
    %73 = vector.extract_strided_slice %55 {offsets = [0, 256], sizes = [16, 128], strides = [1, 1]} : vector<16x384xf32> to vector<16x128xf32>
    %74 = arith.mulf %63, %73 : vector<16x128xf32>
    %75 = arith.addf %72, %74 : vector<16x128xf32>
    %76 = math.tanh %75 : vector<16x128xf32>
    %cst_28 = arith.constant 1.000000e+00 : f32
    %77 = vector.broadcast %cst_28 : f32 to vector<16x128xf32>
    %78 = arith.subf %77, %71 : vector<16x128xf32>
    %79 = arith.mulf %78, %76 : vector<16x128xf32>
    %80 = arith.mulf %71, %47 : vector<16x128xf32>
    %81 = arith.addf %79, %80 : vector<16x128xf32>
    %82 = arith.mulf %49, %81 : vector<16x128xf32>
    %cst_29 = arith.constant 1.000000e+00 : f32
    %83 = vector.broadcast %cst_29 : f32 to vector<16x128xf32>
    %84 = arith.subf %83, %49 : vector<16x128xf32>
    %85 = arith.mulf %84, %29 : vector<16x128xf32>
    %86 = arith.addf %82, %85 : vector<16x128xf32>
    %c2 = arith.constant 2 : index
    %c0_30 = arith.constant 0 : index
    %c0_31 = arith.constant 0 : index
    %87 = vector.load %arg1[%c2, %c0_30, %c0_31] : memref<4x16x16xbf16, #tpu.memory_space<vmem>>, vector<1x16x16xbf16>
    %88 = vector.shape_cast %87 : vector<1x16x16xbf16> to vector<16x16xbf16>
    %89 = arith.truncf %86 : vector<16x128xf32> to vector<16x128xbf16>
    %c0_32 = arith.constant 0 : index
    %c0_33 = arith.constant 0 : index
    %90 = vector.load %arg13[%c0_32, %c0_33] : memref<128x256xbf16, #tpu.memory_space<vmem>>, vector<128x256xbf16>
    %cst_34 = arith.constant dense<0.000000e+00> : vector<16x256xf32>
    %91 = tpu.matmul %89, %90, %cst_34 {dimension_numbers = #tpu.dot_dimension_numbers<[1], [0], [0], [1], [0, 0, 1, 1], [], []>} : vector<16x128xbf16>, vector<128x256xbf16>, vector<16x256xf32> -> vector<16x256xf32>
    %92 = vector.extract_strided_slice %91 {offsets = [0, 0], sizes = [16, 128], strides = [1, 1]} : vector<16x256xf32> to vector<16x128xf32>
    %c0_35 = arith.constant 0 : index
    %c0_36 = arith.constant 0 : index
    %93 = vector.load %arg14[%c0_35, %c0_36] : memref<1x128xf32, #tpu.memory_space<vmem>>, vector<1x128xf32>
    %94 = vector.broadcast %93 : vector<1x128xf32> to vector<16x128xf32>
    %95 = arith.addf %92, %94 : vector<16x128xf32>
    %96 = arith.negf %95 : vector<16x128xf32>
    %97 = math.exp %96 : vector<16x128xf32>
    %cst_37 = arith.constant 1.000000e+00 : f32
    %98 = vector.broadcast %cst_37 : f32 to vector<16x128xf32>
    %99 = arith.addf %98, %97 : vector<16x128xf32>
    %100 = arith.divf %98, %99 : vector<16x128xf32>
    %101 = vector.extract_strided_slice %91 {offsets = [0, 128], sizes = [16, 128], strides = [1, 1]} : vector<16x256xf32> to vector<16x128xf32>
    %102 = arith.mulf %100, %101 : vector<16x128xf32>
    %103 = arith.truncf %102 : vector<16x128xf32> to vector<16x128xbf16>
    %cst_38 = arith.constant dense<0.000000e+00> : vector<16x128xf32>
    %104 = tpu.matmul %88, %103, %cst_38 {dimension_numbers = #tpu.dot_dimension_numbers<[1], [0], [0], [1], [0, 0, 1, 1], [], []>} : vector<16x16xbf16>, vector<16x128xbf16>, vector<16x128xf32> -> vector<16x128xf32>
    %c2_39 = arith.constant 2 : index
    %c0_40 = arith.constant 0 : index
    %c0_41 = arith.constant 0 : index
    %105 = vector.load %arg3[%c2_39, %c0_40, %c0_41] : memref<4x16x128xf32, #tpu.memory_space<vmem>>, vector<1x16x128xf32>
    %106 = vector.shape_cast %105 : vector<1x16x128xf32> to vector<16x128xf32>
    %107 = arith.truncf %104 : vector<16x128xf32> to vector<16x128xbf16>
    %c0_42 = arith.constant 0 : index
    %c0_43 = arith.constant 0 : index
    %108 = vector.load %arg7[%c0_42, %c0_43] : memref<128x384xbf16, #tpu.memory_space<vmem>>, vector<128x384xbf16>
    %cst_44 = arith.constant dense<0.000000e+00> : vector<16x384xf32>
    %109 = tpu.matmul %107, %108, %cst_44 {dimension_numbers = #tpu.dot_dimension_numbers<[1], [0], [0], [1], [0, 0, 1, 1], [], []>} : vector<16x128xbf16>, vector<128x384xbf16>, vector<16x384xf32> -> vector<16x384xf32>
    %c0_45 = arith.constant 0 : index
    %c0_46 = arith.constant 0 : index
    %110 = vector.load %arg8[%c0_45, %c0_46] : memref<1x384xf32, #tpu.memory_space<vmem>>, vector<1x384xf32>
    %111 = vector.broadcast %110 : vector<1x384xf32> to vector<16x384xf32>
    %112 = arith.addf %109, %111 : vector<16x384xf32>
    %113 = vector.extract_strided_slice %1 {offsets = [0, 0], sizes = [16, 128], strides = [1, 1]} : vector<16x384xf32> to vector<16x128xf32>
    %114 = vector.extract_strided_slice %112 {offsets = [0, 0], sizes = [16, 128], strides = [1, 1]} : vector<16x384xf32> to vector<16x128xf32>
    %115 = arith.addf %113, %114 : vector<16x128xf32>
    %116 = arith.negf %115 : vector<16x128xf32>
    %117 = math.exp %116 : vector<16x128xf32>
    %cst_47 = arith.constant 1.000000e+00 : f32
    %118 = vector.broadcast %cst_47 : f32 to vector<16x128xf32>
    %119 = arith.addf %118, %117 : vector<16x128xf32>
    %120 = arith.divf %118, %119 : vector<16x128xf32>
    %121 = vector.extract_strided_slice %1 {offsets = [0, 128], sizes = [16, 128], strides = [1, 1]} : vector<16x384xf32> to vector<16x128xf32>
    %122 = vector.extract_strided_slice %112 {offsets = [0, 128], sizes = [16, 128], strides = [1, 1]} : vector<16x384xf32> to vector<16x128xf32>
    %123 = arith.addf %121, %122 : vector<16x128xf32>
    %124 = arith.negf %123 : vector<16x128xf32>
    %125 = math.exp %124 : vector<16x128xf32>
    %cst_48 = arith.constant 1.000000e+00 : f32
    %126 = vector.broadcast %cst_48 : f32 to vector<16x128xf32>
    %127 = arith.addf %126, %125 : vector<16x128xf32>
    %128 = arith.divf %126, %127 : vector<16x128xf32>
    %129 = vector.extract_strided_slice %1 {offsets = [0, 256], sizes = [16, 128], strides = [1, 1]} : vector<16x384xf32> to vector<16x128xf32>
    %130 = vector.extract_strided_slice %112 {offsets = [0, 256], sizes = [16, 128], strides = [1, 1]} : vector<16x384xf32> to vector<16x128xf32>
    %131 = arith.mulf %120, %130 : vector<16x128xf32>
    %132 = arith.addf %129, %131 : vector<16x128xf32>
    %133 = math.tanh %132 : vector<16x128xf32>
    %cst_49 = arith.constant 1.000000e+00 : f32
    %134 = vector.broadcast %cst_49 : f32 to vector<16x128xf32>
    %135 = arith.subf %134, %128 : vector<16x128xf32>
    %136 = arith.mulf %135, %133 : vector<16x128xf32>
    %137 = arith.mulf %128, %104 : vector<16x128xf32>
    %138 = arith.addf %136, %137 : vector<16x128xf32>
    %139 = arith.mulf %106, %138 : vector<16x128xf32>
    %cst_50 = arith.constant 1.000000e+00 : f32
    %140 = vector.broadcast %cst_50 : f32 to vector<16x128xf32>
    %141 = arith.subf %140, %106 : vector<16x128xf32>
    %142 = arith.mulf %141, %86 : vector<16x128xf32>
    %143 = arith.addf %139, %142 : vector<16x128xf32>
    %c3 = arith.constant 3 : index
    %c0_51 = arith.constant 0 : index
    %c0_52 = arith.constant 0 : index
    %144 = vector.load %arg1[%c3, %c0_51, %c0_52] : memref<4x16x16xbf16, #tpu.memory_space<vmem>>, vector<1x16x16xbf16>
    %145 = vector.shape_cast %144 : vector<1x16x16xbf16> to vector<16x16xbf16>
    %146 = arith.truncf %143 : vector<16x128xf32> to vector<16x128xbf16>
    %c0_53 = arith.constant 0 : index
    %c0_54 = arith.constant 0 : index
    %147 = vector.load %arg13[%c0_53, %c0_54] : memref<128x256xbf16, #tpu.memory_space<vmem>>, vector<128x256xbf16>
    %cst_55 = arith.constant dense<0.000000e+00> : vector<16x256xf32>
    %148 = tpu.matmul %146, %147, %cst_55 {dimension_numbers = #tpu.dot_dimension_numbers<[1], [0], [0], [1], [0, 0, 1, 1], [], []>} : vector<16x128xbf16>, vector<128x256xbf16>, vector<16x256xf32> -> vector<16x256xf32>
    %149 = vector.extract_strided_slice %148 {offsets = [0, 0], sizes = [16, 128], strides = [1, 1]} : vector<16x256xf32> to vector<16x128xf32>
    %c0_56 = arith.constant 0 : index
    %c0_57 = arith.constant 0 : index
    %150 = vector.load %arg14[%c0_56, %c0_57] : memref<1x128xf32, #tpu.memory_space<vmem>>, vector<1x128xf32>
    %151 = vector.broadcast %150 : vector<1x128xf32> to vector<16x128xf32>
    %152 = arith.addf %149, %151 : vector<16x128xf32>
    %153 = arith.negf %152 : vector<16x128xf32>
    %154 = math.exp %153 : vector<16x128xf32>
    %cst_58 = arith.constant 1.000000e+00 : f32
    %155 = vector.broadcast %cst_58 : f32 to vector<16x128xf32>
    %156 = arith.addf %155, %154 : vector<16x128xf32>
    %157 = arith.divf %155, %156 : vector<16x128xf32>
    %158 = vector.extract_strided_slice %148 {offsets = [0, 128], sizes = [16, 128], strides = [1, 1]} : vector<16x256xf32> to vector<16x128xf32>
    %159 = arith.mulf %157, %158 : vector<16x128xf32>
    %160 = arith.truncf %159 : vector<16x128xf32> to vector<16x128xbf16>
    %cst_59 = arith.constant dense<0.000000e+00> : vector<16x128xf32>
    %161 = tpu.matmul %145, %160, %cst_59 {dimension_numbers = #tpu.dot_dimension_numbers<[1], [0], [0], [1], [0, 0, 1, 1], [], []>} : vector<16x16xbf16>, vector<16x128xbf16>, vector<16x128xf32> -> vector<16x128xf32>
    %c3_60 = arith.constant 3 : index
    %c0_61 = arith.constant 0 : index
    %c0_62 = arith.constant 0 : index
    %162 = vector.load %arg3[%c3_60, %c0_61, %c0_62] : memref<4x16x128xf32, #tpu.memory_space<vmem>>, vector<1x16x128xf32>
    %163 = vector.shape_cast %162 : vector<1x16x128xf32> to vector<16x128xf32>
    %164 = arith.truncf %161 : vector<16x128xf32> to vector<16x128xbf16>
    %c0_63 = arith.constant 0 : index
    %c0_64 = arith.constant 0 : index
    %165 = vector.load %arg7[%c0_63, %c0_64] : memref<128x384xbf16, #tpu.memory_space<vmem>>, vector<128x384xbf16>
    %cst_65 = arith.constant dense<0.000000e+00> : vector<16x384xf32>
    %166 = tpu.matmul %164, %165, %cst_65 {dimension_numbers = #tpu.dot_dimension_numbers<[1], [0], [0], [1], [0, 0, 1, 1], [], []>} : vector<16x128xbf16>, vector<128x384xbf16>, vector<16x384xf32> -> vector<16x384xf32>
    %c0_66 = arith.constant 0 : index
    %c0_67 = arith.constant 0 : index
    %167 = vector.load %arg8[%c0_66, %c0_67] : memref<1x384xf32, #tpu.memory_space<vmem>>, vector<1x384xf32>
    %168 = vector.broadcast %167 : vector<1x384xf32> to vector<16x384xf32>
    %169 = arith.addf %166, %168 : vector<16x384xf32>
    %170 = vector.extract_strided_slice %1 {offsets = [0, 0], sizes = [16, 128], strides = [1, 1]} : vector<16x384xf32> to vector<16x128xf32>
    %171 = vector.extract_strided_slice %169 {offsets = [0, 0], sizes = [16, 128], strides = [1, 1]} : vector<16x384xf32> to vector<16x128xf32>
    %172 = arith.addf %170, %171 : vector<16x128xf32>
    %173 = arith.negf %172 : vector<16x128xf32>
    %174 = math.exp %173 : vector<16x128xf32>
    %cst_68 = arith.constant 1.000000e+00 : f32
    %175 = vector.broadcast %cst_68 : f32 to vector<16x128xf32>
    %176 = arith.addf %175, %174 : vector<16x128xf32>
    %177 = arith.divf %175, %176 : vector<16x128xf32>
    %178 = vector.extract_strided_slice %1 {offsets = [0, 128], sizes = [16, 128], strides = [1, 1]} : vector<16x384xf32> to vector<16x128xf32>
    %179 = vector.extract_strided_slice %169 {offsets = [0, 128], sizes = [16, 128], strides = [1, 1]} : vector<16x384xf32> to vector<16x128xf32>
    %180 = arith.addf %178, %179 : vector<16x128xf32>
    %181 = arith.negf %180 : vector<16x128xf32>
    %182 = math.exp %181 : vector<16x128xf32>
    %cst_69 = arith.constant 1.000000e+00 : f32
    %183 = vector.broadcast %cst_69 : f32 to vector<16x128xf32>
    %184 = arith.addf %183, %182 : vector<16x128xf32>
    %185 = arith.divf %183, %184 : vector<16x128xf32>
    %186 = vector.extract_strided_slice %1 {offsets = [0, 256], sizes = [16, 128], strides = [1, 1]} : vector<16x384xf32> to vector<16x128xf32>
    %187 = vector.extract_strided_slice %169 {offsets = [0, 256], sizes = [16, 128], strides = [1, 1]} : vector<16x384xf32> to vector<16x128xf32>
    %188 = arith.mulf %177, %187 : vector<16x128xf32>
    %189 = arith.addf %186, %188 : vector<16x128xf32>
    %190 = math.tanh %189 : vector<16x128xf32>
    %cst_70 = arith.constant 1.000000e+00 : f32
    %191 = vector.broadcast %cst_70 : f32 to vector<16x128xf32>
    %192 = arith.subf %191, %185 : vector<16x128xf32>
    %193 = arith.mulf %192, %190 : vector<16x128xf32>
    %194 = arith.mulf %185, %161 : vector<16x128xf32>
    %195 = arith.addf %193, %194 : vector<16x128xf32>
    %196 = arith.mulf %163, %195 : vector<16x128xf32>
    %cst_71 = arith.constant 1.000000e+00 : f32
    %197 = vector.broadcast %cst_71 : f32 to vector<16x128xf32>
    %198 = arith.subf %197, %163 : vector<16x128xf32>
    %199 = arith.mulf %198, %143 : vector<16x128xf32>
    %200 = arith.addf %196, %199 : vector<16x128xf32>
    %201 = arith.truncf %200 : vector<16x128xf32> to vector<16x128xbf16>
    %c0_72 = arith.constant 0 : index
    %c0_73 = arith.constant 0 : index
    %202 = vector.load %arg9[%c0_72, %c0_73] : memref<128x384xbf16, #tpu.memory_space<vmem>>, vector<128x384xbf16>
    %cst_74 = arith.constant dense<0.000000e+00> : vector<16x384xf32>
    %203 = tpu.matmul %201, %202, %cst_74 {dimension_numbers = #tpu.dot_dimension_numbers<[1], [0], [0], [1], [0, 0, 1, 1], [], []>} : vector<16x128xbf16>, vector<128x384xbf16>, vector<16x384xf32> -> vector<16x384xf32>
    %c0_75 = arith.constant 0 : index
    %c0_76 = arith.constant 0 : index
    %204 = vector.load %arg10[%c0_75, %c0_76] : memref<1x384xf32, #tpu.memory_space<vmem>>, vector<1x384xf32>
    %205 = vector.broadcast %204 : vector<1x384xf32> to vector<16x384xf32>
    %206 = arith.addf %203, %205 : vector<16x384xf32>
    %c0_77 = arith.constant 0 : index
    %c0_78 = arith.constant 0 : index
    %c0_79 = arith.constant 0 : index
    %207 = vector.load %arg4[%c0_77, %c0_78, %c0_79] : memref<4x16x128xf32, #tpu.memory_space<vmem>>, vector<1x16x128xf32>
    %208 = vector.shape_cast %207 : vector<1x16x128xf32> to vector<16x128xf32>
    %209 = vector.extract_strided_slice %206 {offsets = [0, 0], sizes = [16, 128], strides = [1, 1]} : vector<16x384xf32> to vector<16x128xf32>
    %210 = arith.negf %209 : vector<16x128xf32>
    %211 = math.exp %210 : vector<16x128xf32>
    %cst_80 = arith.constant 1.000000e+00 : f32
    %212 = vector.broadcast %cst_80 : f32 to vector<16x128xf32>
    %213 = arith.addf %212, %211 : vector<16x128xf32>
    %214 = arith.divf %212, %213 : vector<16x128xf32>
    %215 = vector.extract_strided_slice %206 {offsets = [0, 128], sizes = [16, 128], strides = [1, 1]} : vector<16x384xf32> to vector<16x128xf32>
    %216 = arith.negf %215 : vector<16x128xf32>
    %217 = math.exp %216 : vector<16x128xf32>
    %cst_81 = arith.constant 1.000000e+00 : f32
    %218 = vector.broadcast %cst_81 : f32 to vector<16x128xf32>
    %219 = arith.addf %218, %217 : vector<16x128xf32>
    %220 = arith.divf %218, %219 : vector<16x128xf32>
    %221 = vector.extract_strided_slice %206 {offsets = [0, 256], sizes = [16, 128], strides = [1, 1]} : vector<16x384xf32> to vector<16x128xf32>
    %c0_82 = arith.constant 0 : index
    %c256_83 = arith.constant 256 : index
    %222 = vector.load %arg12[%c0_82, %c256_83] : memref<1x384xf32, #tpu.memory_space<vmem>>, vector<1x128xf32>
    %223 = vector.broadcast %222 : vector<1x128xf32> to vector<16x128xf32>
    %224 = arith.mulf %214, %223 : vector<16x128xf32>
    %225 = arith.addf %221, %224 : vector<16x128xf32>
    %226 = math.tanh %225 : vector<16x128xf32>
    %cst_84 = arith.constant 1.000000e+00 : f32
    %227 = vector.broadcast %cst_84 : f32 to vector<16x128xf32>
    %228 = arith.subf %227, %220 : vector<16x128xf32>
    %229 = arith.mulf %228, %226 : vector<16x128xf32>
    %230 = arith.mulf %208, %229 : vector<16x128xf32>
    %cst_85 = arith.constant 1.000000e+00 : f32
    %231 = vector.broadcast %cst_85 : f32 to vector<16x128xf32>
    %232 = arith.subf %231, %208 : vector<16x128xf32>
    %233 = arith.mulf %232, %200 : vector<16x128xf32>
    %234 = arith.addf %230, %233 : vector<16x128xf32>
    %c1_86 = arith.constant 1 : index
    %c0_87 = arith.constant 0 : index
    %c0_88 = arith.constant 0 : index
    %235 = vector.load %arg2[%c1_86, %c0_87, %c0_88] : memref<4x16x16xbf16, #tpu.memory_space<vmem>>, vector<1x16x16xbf16>
    %236 = vector.shape_cast %235 : vector<1x16x16xbf16> to vector<16x16xbf16>
    %237 = arith.truncf %234 : vector<16x128xf32> to vector<16x128xbf16>
    %c0_89 = arith.constant 0 : index
    %c0_90 = arith.constant 0 : index
    %238 = vector.load %arg15[%c0_89, %c0_90] : memref<128x256xbf16, #tpu.memory_space<vmem>>, vector<128x256xbf16>
    %cst_91 = arith.constant dense<0.000000e+00> : vector<16x256xf32>
    %239 = tpu.matmul %237, %238, %cst_91 {dimension_numbers = #tpu.dot_dimension_numbers<[1], [0], [0], [1], [0, 0, 1, 1], [], []>} : vector<16x128xbf16>, vector<128x256xbf16>, vector<16x256xf32> -> vector<16x256xf32>
    %240 = vector.extract_strided_slice %239 {offsets = [0, 0], sizes = [16, 128], strides = [1, 1]} : vector<16x256xf32> to vector<16x128xf32>
    %c0_92 = arith.constant 0 : index
    %c0_93 = arith.constant 0 : index
    %241 = vector.load %arg16[%c0_92, %c0_93] : memref<1x128xf32, #tpu.memory_space<vmem>>, vector<1x128xf32>
    %242 = vector.broadcast %241 : vector<1x128xf32> to vector<16x128xf32>
    %243 = arith.addf %240, %242 : vector<16x128xf32>
    %244 = arith.negf %243 : vector<16x128xf32>
    %245 = math.exp %244 : vector<16x128xf32>
    %cst_94 = arith.constant 1.000000e+00 : f32
    %246 = vector.broadcast %cst_94 : f32 to vector<16x128xf32>
    %247 = arith.addf %246, %245 : vector<16x128xf32>
    %248 = arith.divf %246, %247 : vector<16x128xf32>
    %249 = vector.extract_strided_slice %239 {offsets = [0, 128], sizes = [16, 128], strides = [1, 1]} : vector<16x256xf32> to vector<16x128xf32>
    %250 = arith.mulf %248, %249 : vector<16x128xf32>
    %251 = arith.truncf %250 : vector<16x128xf32> to vector<16x128xbf16>
    %cst_95 = arith.constant dense<0.000000e+00> : vector<16x128xf32>
    %252 = tpu.matmul %236, %251, %cst_95 {dimension_numbers = #tpu.dot_dimension_numbers<[1], [0], [0], [1], [0, 0, 1, 1], [], []>} : vector<16x16xbf16>, vector<16x128xbf16>, vector<16x128xf32> -> vector<16x128xf32>
    %253 = arith.truncf %234 : vector<16x128xf32> to vector<16x128xbf16>
    %c0_96 = arith.constant 0 : index
    %c0_97 = arith.constant 0 : index
    %254 = vector.load %arg9[%c0_96, %c0_97] : memref<128x384xbf16, #tpu.memory_space<vmem>>, vector<128x384xbf16>
    %cst_98 = arith.constant dense<0.000000e+00> : vector<16x384xf32>
    %255 = tpu.matmul %253, %254, %cst_98 {dimension_numbers = #tpu.dot_dimension_numbers<[1], [0], [0], [1], [0, 0, 1, 1], [], []>} : vector<16x128xbf16>, vector<128x384xbf16>, vector<16x384xf32> -> vector<16x384xf32>
    %c0_99 = arith.constant 0 : index
    %c0_100 = arith.constant 0 : index
    %256 = vector.load %arg10[%c0_99, %c0_100] : memref<1x384xf32, #tpu.memory_space<vmem>>, vector<1x384xf32>
    %257 = vector.broadcast %256 : vector<1x384xf32> to vector<16x384xf32>
    %258 = arith.addf %255, %257 : vector<16x384xf32>
    %c1_101 = arith.constant 1 : index
    %c0_102 = arith.constant 0 : index
    %c0_103 = arith.constant 0 : index
    %259 = vector.load %arg4[%c1_101, %c0_102, %c0_103] : memref<4x16x128xf32, #tpu.memory_space<vmem>>, vector<1x16x128xf32>
    %260 = vector.shape_cast %259 : vector<1x16x128xf32> to vector<16x128xf32>
    %261 = arith.truncf %252 : vector<16x128xf32> to vector<16x128xbf16>
    %c0_104 = arith.constant 0 : index
    %c0_105 = arith.constant 0 : index
    %262 = vector.load %arg11[%c0_104, %c0_105] : memref<128x384xbf16, #tpu.memory_space<vmem>>, vector<128x384xbf16>
    %cst_106 = arith.constant dense<0.000000e+00> : vector<16x384xf32>
    %263 = tpu.matmul %261, %262, %cst_106 {dimension_numbers = #tpu.dot_dimension_numbers<[1], [0], [0], [1], [0, 0, 1, 1], [], []>} : vector<16x128xbf16>, vector<128x384xbf16>, vector<16x384xf32> -> vector<16x384xf32>
    %c0_107 = arith.constant 0 : index
    %c0_108 = arith.constant 0 : index
    %264 = vector.load %arg12[%c0_107, %c0_108] : memref<1x384xf32, #tpu.memory_space<vmem>>, vector<1x384xf32>
    %265 = vector.broadcast %264 : vector<1x384xf32> to vector<16x384xf32>
    %266 = arith.addf %263, %265 : vector<16x384xf32>
    %267 = vector.extract_strided_slice %258 {offsets = [0, 0], sizes = [16, 128], strides = [1, 1]} : vector<16x384xf32> to vector<16x128xf32>
    %268 = vector.extract_strided_slice %266 {offsets = [0, 0], sizes = [16, 128], strides = [1, 1]} : vector<16x384xf32> to vector<16x128xf32>
    %269 = arith.addf %267, %268 : vector<16x128xf32>
    %270 = arith.negf %269 : vector<16x128xf32>
    %271 = math.exp %270 : vector<16x128xf32>
    %cst_109 = arith.constant 1.000000e+00 : f32
    %272 = vector.broadcast %cst_109 : f32 to vector<16x128xf32>
    %273 = arith.addf %272, %271 : vector<16x128xf32>
    %274 = arith.divf %272, %273 : vector<16x128xf32>
    %275 = vector.extract_strided_slice %258 {offsets = [0, 128], sizes = [16, 128], strides = [1, 1]} : vector<16x384xf32> to vector<16x128xf32>
    %276 = vector.extract_strided_slice %266 {offsets = [0, 128], sizes = [16, 128], strides = [1, 1]} : vector<16x384xf32> to vector<16x128xf32>
    %277 = arith.addf %275, %276 : vector<16x128xf32>
    %278 = arith.negf %277 : vector<16x128xf32>
    %279 = math.exp %278 : vector<16x128xf32>
    %cst_110 = arith.constant 1.000000e+00 : f32
    %280 = vector.broadcast %cst_110 : f32 to vector<16x128xf32>
    %281 = arith.addf %280, %279 : vector<16x128xf32>
    %282 = arith.divf %280, %281 : vector<16x128xf32>
    %283 = vector.extract_strided_slice %258 {offsets = [0, 256], sizes = [16, 128], strides = [1, 1]} : vector<16x384xf32> to vector<16x128xf32>
    %284 = vector.extract_strided_slice %266 {offsets = [0, 256], sizes = [16, 128], strides = [1, 1]} : vector<16x384xf32> to vector<16x128xf32>
    %285 = arith.mulf %274, %284 : vector<16x128xf32>
    %286 = arith.addf %283, %285 : vector<16x128xf32>
    %287 = math.tanh %286 : vector<16x128xf32>
    %cst_111 = arith.constant 1.000000e+00 : f32
    %288 = vector.broadcast %cst_111 : f32 to vector<16x128xf32>
    %289 = arith.subf %288, %282 : vector<16x128xf32>
    %290 = arith.mulf %289, %287 : vector<16x128xf32>
    %291 = arith.mulf %282, %252 : vector<16x128xf32>
    %292 = arith.addf %290, %291 : vector<16x128xf32>
    %293 = arith.mulf %260, %292 : vector<16x128xf32>
    %cst_112 = arith.constant 1.000000e+00 : f32
    %294 = vector.broadcast %cst_112 : f32 to vector<16x128xf32>
    %295 = arith.subf %294, %260 : vector<16x128xf32>
    %296 = arith.mulf %295, %234 : vector<16x128xf32>
    %297 = arith.addf %293, %296 : vector<16x128xf32>
    %c2_113 = arith.constant 2 : index
    %c0_114 = arith.constant 0 : index
    %c0_115 = arith.constant 0 : index
    %298 = vector.load %arg2[%c2_113, %c0_114, %c0_115] : memref<4x16x16xbf16, #tpu.memory_space<vmem>>, vector<1x16x16xbf16>
    %299 = vector.shape_cast %298 : vector<1x16x16xbf16> to vector<16x16xbf16>
    %300 = arith.truncf %297 : vector<16x128xf32> to vector<16x128xbf16>
    %c0_116 = arith.constant 0 : index
    %c0_117 = arith.constant 0 : index
    %301 = vector.load %arg15[%c0_116, %c0_117] : memref<128x256xbf16, #tpu.memory_space<vmem>>, vector<128x256xbf16>
    %cst_118 = arith.constant dense<0.000000e+00> : vector<16x256xf32>
    %302 = tpu.matmul %300, %301, %cst_118 {dimension_numbers = #tpu.dot_dimension_numbers<[1], [0], [0], [1], [0, 0, 1, 1], [], []>} : vector<16x128xbf16>, vector<128x256xbf16>, vector<16x256xf32> -> vector<16x256xf32>
    %303 = vector.extract_strided_slice %302 {offsets = [0, 0], sizes = [16, 128], strides = [1, 1]} : vector<16x256xf32> to vector<16x128xf32>
    %c0_119 = arith.constant 0 : index
    %c0_120 = arith.constant 0 : index
    %304 = vector.load %arg16[%c0_119, %c0_120] : memref<1x128xf32, #tpu.memory_space<vmem>>, vector<1x128xf32>
    %305 = vector.broadcast %304 : vector<1x128xf32> to vector<16x128xf32>
    %306 = arith.addf %303, %305 : vector<16x128xf32>
    %307 = arith.negf %306 : vector<16x128xf32>
    %308 = math.exp %307 : vector<16x128xf32>
    %cst_121 = arith.constant 1.000000e+00 : f32
    %309 = vector.broadcast %cst_121 : f32 to vector<16x128xf32>
    %310 = arith.addf %309, %308 : vector<16x128xf32>
    %311 = arith.divf %309, %310 : vector<16x128xf32>
    %312 = vector.extract_strided_slice %302 {offsets = [0, 128], sizes = [16, 128], strides = [1, 1]} : vector<16x256xf32> to vector<16x128xf32>
    %313 = arith.mulf %311, %312 : vector<16x128xf32>
    %314 = arith.truncf %313 : vector<16x128xf32> to vector<16x128xbf16>
    %cst_122 = arith.constant dense<0.000000e+00> : vector<16x128xf32>
    %315 = tpu.matmul %299, %314, %cst_122 {dimension_numbers = #tpu.dot_dimension_numbers<[1], [0], [0], [1], [0, 0, 1, 1], [], []>} : vector<16x16xbf16>, vector<16x128xbf16>, vector<16x128xf32> -> vector<16x128xf32>
    %316 = arith.truncf %297 : vector<16x128xf32> to vector<16x128xbf16>
    %c0_123 = arith.constant 0 : index
    %c0_124 = arith.constant 0 : index
    %317 = vector.load %arg9[%c0_123, %c0_124] : memref<128x384xbf16, #tpu.memory_space<vmem>>, vector<128x384xbf16>
    %cst_125 = arith.constant dense<0.000000e+00> : vector<16x384xf32>
    %318 = tpu.matmul %316, %317, %cst_125 {dimension_numbers = #tpu.dot_dimension_numbers<[1], [0], [0], [1], [0, 0, 1, 1], [], []>} : vector<16x128xbf16>, vector<128x384xbf16>, vector<16x384xf32> -> vector<16x384xf32>
    %c0_126 = arith.constant 0 : index
    %c0_127 = arith.constant 0 : index
    %319 = vector.load %arg10[%c0_126, %c0_127] : memref<1x384xf32, #tpu.memory_space<vmem>>, vector<1x384xf32>
    %320 = vector.broadcast %319 : vector<1x384xf32> to vector<16x384xf32>
    %321 = arith.addf %318, %320 : vector<16x384xf32>
    %c2_128 = arith.constant 2 : index
    %c0_129 = arith.constant 0 : index
    %c0_130 = arith.constant 0 : index
    %322 = vector.load %arg4[%c2_128, %c0_129, %c0_130] : memref<4x16x128xf32, #tpu.memory_space<vmem>>, vector<1x16x128xf32>
    %323 = vector.shape_cast %322 : vector<1x16x128xf32> to vector<16x128xf32>
    %324 = arith.truncf %315 : vector<16x128xf32> to vector<16x128xbf16>
    %c0_131 = arith.constant 0 : index
    %c0_132 = arith.constant 0 : index
    %325 = vector.load %arg11[%c0_131, %c0_132] : memref<128x384xbf16, #tpu.memory_space<vmem>>, vector<128x384xbf16>
    %cst_133 = arith.constant dense<0.000000e+00> : vector<16x384xf32>
    %326 = tpu.matmul %324, %325, %cst_133 {dimension_numbers = #tpu.dot_dimension_numbers<[1], [0], [0], [1], [0, 0, 1, 1], [], []>} : vector<16x128xbf16>, vector<128x384xbf16>, vector<16x384xf32> -> vector<16x384xf32>
    %c0_134 = arith.constant 0 : index
    %c0_135 = arith.constant 0 : index
    %327 = vector.load %arg12[%c0_134, %c0_135] : memref<1x384xf32, #tpu.memory_space<vmem>>, vector<1x384xf32>
    %328 = vector.broadcast %327 : vector<1x384xf32> to vector<16x384xf32>
    %329 = arith.addf %326, %328 : vector<16x384xf32>
    %330 = vector.extract_strided_slice %321 {offsets = [0, 0], sizes = [16, 128], strides = [1, 1]} : vector<16x384xf32> to vector<16x128xf32>
    %331 = vector.extract_strided_slice %329 {offsets = [0, 0], sizes = [16, 128], strides = [1, 1]} : vector<16x384xf32> to vector<16x128xf32>
    %332 = arith.addf %330, %331 : vector<16x128xf32>
    %333 = arith.negf %332 : vector<16x128xf32>
    %334 = math.exp %333 : vector<16x128xf32>
    %cst_136 = arith.constant 1.000000e+00 : f32
    %335 = vector.broadcast %cst_136 : f32 to vector<16x128xf32>
    %336 = arith.addf %335, %334 : vector<16x128xf32>
    %337 = arith.divf %335, %336 : vector<16x128xf32>
    %338 = vector.extract_strided_slice %321 {offsets = [0, 128], sizes = [16, 128], strides = [1, 1]} : vector<16x384xf32> to vector<16x128xf32>
    %339 = vector.extract_strided_slice %329 {offsets = [0, 128], sizes = [16, 128], strides = [1, 1]} : vector<16x384xf32> to vector<16x128xf32>
    %340 = arith.addf %338, %339 : vector<16x128xf32>
    %341 = arith.negf %340 : vector<16x128xf32>
    %342 = math.exp %341 : vector<16x128xf32>
    %cst_137 = arith.constant 1.000000e+00 : f32
    %343 = vector.broadcast %cst_137 : f32 to vector<16x128xf32>
    %344 = arith.addf %343, %342 : vector<16x128xf32>
    %345 = arith.divf %343, %344 : vector<16x128xf32>
    %346 = vector.extract_strided_slice %321 {offsets = [0, 256], sizes = [16, 128], strides = [1, 1]} : vector<16x384xf32> to vector<16x128xf32>
    %347 = vector.extract_strided_slice %329 {offsets = [0, 256], sizes = [16, 128], strides = [1, 1]} : vector<16x384xf32> to vector<16x128xf32>
    %348 = arith.mulf %337, %347 : vector<16x128xf32>
    %349 = arith.addf %346, %348 : vector<16x128xf32>
    %350 = math.tanh %349 : vector<16x128xf32>
    %cst_138 = arith.constant 1.000000e+00 : f32
    %351 = vector.broadcast %cst_138 : f32 to vector<16x128xf32>
    %352 = arith.subf %351, %345 : vector<16x128xf32>
    %353 = arith.mulf %352, %350 : vector<16x128xf32>
    %354 = arith.mulf %345, %315 : vector<16x128xf32>
    %355 = arith.addf %353, %354 : vector<16x128xf32>
    %356 = arith.mulf %323, %355 : vector<16x128xf32>
    %cst_139 = arith.constant 1.000000e+00 : f32
    %357 = vector.broadcast %cst_139 : f32 to vector<16x128xf32>
    %358 = arith.subf %357, %323 : vector<16x128xf32>
    %359 = arith.mulf %358, %297 : vector<16x128xf32>
    %360 = arith.addf %356, %359 : vector<16x128xf32>
    %c3_140 = arith.constant 3 : index
    %c0_141 = arith.constant 0 : index
    %c0_142 = arith.constant 0 : index
    %361 = vector.load %arg2[%c3_140, %c0_141, %c0_142] : memref<4x16x16xbf16, #tpu.memory_space<vmem>>, vector<1x16x16xbf16>
    %362 = vector.shape_cast %361 : vector<1x16x16xbf16> to vector<16x16xbf16>
    %363 = arith.truncf %360 : vector<16x128xf32> to vector<16x128xbf16>
    %c0_143 = arith.constant 0 : index
    %c0_144 = arith.constant 0 : index
    %364 = vector.load %arg15[%c0_143, %c0_144] : memref<128x256xbf16, #tpu.memory_space<vmem>>, vector<128x256xbf16>
    %cst_145 = arith.constant dense<0.000000e+00> : vector<16x256xf32>
    %365 = tpu.matmul %363, %364, %cst_145 {dimension_numbers = #tpu.dot_dimension_numbers<[1], [0], [0], [1], [0, 0, 1, 1], [], []>} : vector<16x128xbf16>, vector<128x256xbf16>, vector<16x256xf32> -> vector<16x256xf32>
    %366 = vector.extract_strided_slice %365 {offsets = [0, 0], sizes = [16, 128], strides = [1, 1]} : vector<16x256xf32> to vector<16x128xf32>
    %c0_146 = arith.constant 0 : index
    %c0_147 = arith.constant 0 : index
    %367 = vector.load %arg16[%c0_146, %c0_147] : memref<1x128xf32, #tpu.memory_space<vmem>>, vector<1x128xf32>
    %368 = vector.broadcast %367 : vector<1x128xf32> to vector<16x128xf32>
    %369 = arith.addf %366, %368 : vector<16x128xf32>
    %370 = arith.negf %369 : vector<16x128xf32>
    %371 = math.exp %370 : vector<16x128xf32>
    %cst_148 = arith.constant 1.000000e+00 : f32
    %372 = vector.broadcast %cst_148 : f32 to vector<16x128xf32>
    %373 = arith.addf %372, %371 : vector<16x128xf32>
    %374 = arith.divf %372, %373 : vector<16x128xf32>
    %375 = vector.extract_strided_slice %365 {offsets = [0, 128], sizes = [16, 128], strides = [1, 1]} : vector<16x256xf32> to vector<16x128xf32>
    %376 = arith.mulf %374, %375 : vector<16x128xf32>
    %377 = arith.truncf %376 : vector<16x128xf32> to vector<16x128xbf16>
    %cst_149 = arith.constant dense<0.000000e+00> : vector<16x128xf32>
    %378 = tpu.matmul %362, %377, %cst_149 {dimension_numbers = #tpu.dot_dimension_numbers<[1], [0], [0], [1], [0, 0, 1, 1], [], []>} : vector<16x16xbf16>, vector<16x128xbf16>, vector<16x128xf32> -> vector<16x128xf32>
    %379 = arith.truncf %360 : vector<16x128xf32> to vector<16x128xbf16>
    %c0_150 = arith.constant 0 : index
    %c0_151 = arith.constant 0 : index
    %380 = vector.load %arg9[%c0_150, %c0_151] : memref<128x384xbf16, #tpu.memory_space<vmem>>, vector<128x384xbf16>
    %cst_152 = arith.constant dense<0.000000e+00> : vector<16x384xf32>
    %381 = tpu.matmul %379, %380, %cst_152 {dimension_numbers = #tpu.dot_dimension_numbers<[1], [0], [0], [1], [0, 0, 1, 1], [], []>} : vector<16x128xbf16>, vector<128x384xbf16>, vector<16x384xf32> -> vector<16x384xf32>
    %c0_153 = arith.constant 0 : index
    %c0_154 = arith.constant 0 : index
    %382 = vector.load %arg10[%c0_153, %c0_154] : memref<1x384xf32, #tpu.memory_space<vmem>>, vector<1x384xf32>
    %383 = vector.broadcast %382 : vector<1x384xf32> to vector<16x384xf32>
    %384 = arith.addf %381, %383 : vector<16x384xf32>
    %c3_155 = arith.constant 3 : index
    %c0_156 = arith.constant 0 : index
    %c0_157 = arith.constant 0 : index
    %385 = vector.load %arg4[%c3_155, %c0_156, %c0_157] : memref<4x16x128xf32, #tpu.memory_space<vmem>>, vector<1x16x128xf32>
    %386 = vector.shape_cast %385 : vector<1x16x128xf32> to vector<16x128xf32>
    %387 = arith.truncf %378 : vector<16x128xf32> to vector<16x128xbf16>
    %c0_158 = arith.constant 0 : index
    %c0_159 = arith.constant 0 : index
    %388 = vector.load %arg11[%c0_158, %c0_159] : memref<128x384xbf16, #tpu.memory_space<vmem>>, vector<128x384xbf16>
    %cst_160 = arith.constant dense<0.000000e+00> : vector<16x384xf32>
    %389 = tpu.matmul %387, %388, %cst_160 {dimension_numbers = #tpu.dot_dimension_numbers<[1], [0], [0], [1], [0, 0, 1, 1], [], []>} : vector<16x128xbf16>, vector<128x384xbf16>, vector<16x384xf32> -> vector<16x384xf32>
    %c0_161 = arith.constant 0 : index
    %c0_162 = arith.constant 0 : index
    %390 = vector.load %arg12[%c0_161, %c0_162] : memref<1x384xf32, #tpu.memory_space<vmem>>, vector<1x384xf32>
    %391 = vector.broadcast %390 : vector<1x384xf32> to vector<16x384xf32>
    %392 = arith.addf %389, %391 : vector<16x384xf32>
    %393 = vector.extract_strided_slice %384 {offsets = [0, 0], sizes = [16, 128], strides = [1, 1]} : vector<16x384xf32> to vector<16x128xf32>
    %394 = vector.extract_strided_slice %392 {offsets = [0, 0], sizes = [16, 128], strides = [1, 1]} : vector<16x384xf32> to vector<16x128xf32>
    %395 = arith.addf %393, %394 : vector<16x128xf32>
    %396 = arith.negf %395 : vector<16x128xf32>
    %397 = math.exp %396 : vector<16x128xf32>
    %cst_163 = arith.constant 1.000000e+00 : f32
    %398 = vector.broadcast %cst_163 : f32 to vector<16x128xf32>
    %399 = arith.addf %398, %397 : vector<16x128xf32>
    %400 = arith.divf %398, %399 : vector<16x128xf32>
    %401 = vector.extract_strided_slice %384 {offsets = [0, 128], sizes = [16, 128], strides = [1, 1]} : vector<16x384xf32> to vector<16x128xf32>
    %402 = vector.extract_strided_slice %392 {offsets = [0, 128], sizes = [16, 128], strides = [1, 1]} : vector<16x384xf32> to vector<16x128xf32>
    %403 = arith.addf %401, %402 : vector<16x128xf32>
    %404 = arith.negf %403 : vector<16x128xf32>
    %405 = math.exp %404 : vector<16x128xf32>
    %cst_164 = arith.constant 1.000000e+00 : f32
    %406 = vector.broadcast %cst_164 : f32 to vector<16x128xf32>
    %407 = arith.addf %406, %405 : vector<16x128xf32>
    %408 = arith.divf %406, %407 : vector<16x128xf32>
    %409 = vector.extract_strided_slice %384 {offsets = [0, 256], sizes = [16, 128], strides = [1, 1]} : vector<16x384xf32> to vector<16x128xf32>
    %410 = vector.extract_strided_slice %392 {offsets = [0, 256], sizes = [16, 128], strides = [1, 1]} : vector<16x384xf32> to vector<16x128xf32>
    %411 = arith.mulf %400, %410 : vector<16x128xf32>
    %412 = arith.addf %409, %411 : vector<16x128xf32>
    %413 = math.tanh %412 : vector<16x128xf32>
    %cst_165 = arith.constant 1.000000e+00 : f32
    %414 = vector.broadcast %cst_165 : f32 to vector<16x128xf32>
    %415 = arith.subf %414, %408 : vector<16x128xf32>
    %416 = arith.mulf %415, %413 : vector<16x128xf32>
    %417 = arith.mulf %408, %378 : vector<16x128xf32>
    %418 = arith.addf %416, %417 : vector<16x128xf32>
    %419 = arith.mulf %386, %418 : vector<16x128xf32>
    %cst_166 = arith.constant 1.000000e+00 : f32
    %420 = vector.broadcast %cst_166 : f32 to vector<16x128xf32>
    %421 = arith.subf %420, %386 : vector<16x128xf32>
    %422 = arith.mulf %421, %360 : vector<16x128xf32>
    %423 = arith.addf %419, %422 : vector<16x128xf32>
    %c0_i32 = arith.constant 0 : i32
    %c2_i32 = arith.constant 2 : i32
    %424 = arith.addi %c0_i32, %c2_i32 : i32
    %c1_i32 = arith.constant 1 : i32
    %425 = scf.for %arg18 = %c0_i32 to %424 step %c1_i32 iter_args(%arg19 = %423) -> (vector<16x128xf32>)  : i32 {
      %427 = arith.truncf %arg19 : vector<16x128xf32> to vector<16x128xbf16>
      %c0_169 = arith.constant 0 : index
      %c0_170 = arith.constant 0 : index
      %428 = vector.load %arg5[%c0_169, %c0_170] : memref<128x384xbf16, #tpu.memory_space<vmem>>, vector<128x384xbf16>
      %cst_171 = arith.constant dense<0.000000e+00> : vector<16x384xf32>
      %429 = tpu.matmul %427, %428, %cst_171 {dimension_numbers = #tpu.dot_dimension_numbers<[1], [0], [0], [1], [0, 0, 1, 1], [], []>} : vector<16x128xbf16>, vector<128x384xbf16>, vector<16x384xf32> -> vector<16x384xf32>
      %c0_172 = arith.constant 0 : index
      %c0_173 = arith.constant 0 : index
      %430 = vector.load %arg6[%c0_172, %c0_173] : memref<1x384xf32, #tpu.memory_space<vmem>>, vector<1x384xf32>
      %431 = vector.broadcast %430 : vector<1x384xf32> to vector<16x384xf32>
      %432 = arith.addf %429, %431 : vector<16x384xf32>
      %c0_174 = arith.constant 0 : index
      %c0_175 = arith.constant 0 : index
      %c0_176 = arith.constant 0 : index
      %433 = vector.load %arg3[%c0_174, %c0_175, %c0_176] : memref<4x16x128xf32, #tpu.memory_space<vmem>>, vector<1x16x128xf32>
      %434 = vector.shape_cast %433 : vector<1x16x128xf32> to vector<16x128xf32>
      %435 = vector.extract_strided_slice %432 {offsets = [0, 0], sizes = [16, 128], strides = [1, 1]} : vector<16x384xf32> to vector<16x128xf32>
      %436 = arith.negf %435 : vector<16x128xf32>
      %437 = math.exp %436 : vector<16x128xf32>
      %cst_177 = arith.constant 1.000000e+00 : f32
      %438 = vector.broadcast %cst_177 : f32 to vector<16x128xf32>
      %439 = arith.addf %438, %437 : vector<16x128xf32>
      %440 = arith.divf %438, %439 : vector<16x128xf32>
      %441 = vector.extract_strided_slice %432 {offsets = [0, 128], sizes = [16, 128], strides = [1, 1]} : vector<16x384xf32> to vector<16x128xf32>
      %442 = arith.negf %441 : vector<16x128xf32>
      %443 = math.exp %442 : vector<16x128xf32>
      %cst_178 = arith.constant 1.000000e+00 : f32
      %444 = vector.broadcast %cst_178 : f32 to vector<16x128xf32>
      %445 = arith.addf %444, %443 : vector<16x128xf32>
      %446 = arith.divf %444, %445 : vector<16x128xf32>
      %447 = vector.extract_strided_slice %432 {offsets = [0, 256], sizes = [16, 128], strides = [1, 1]} : vector<16x384xf32> to vector<16x128xf32>
      %c0_179 = arith.constant 0 : index
      %c256_180 = arith.constant 256 : index
      %448 = vector.load %arg8[%c0_179, %c256_180] : memref<1x384xf32, #tpu.memory_space<vmem>>, vector<1x128xf32>
      %449 = vector.broadcast %448 : vector<1x128xf32> to vector<16x128xf32>
      %450 = arith.mulf %440, %449 : vector<16x128xf32>
      %451 = arith.addf %447, %450 : vector<16x128xf32>
      %452 = math.tanh %451 : vector<16x128xf32>
      %cst_181 = arith.constant 1.000000e+00 : f32
      %453 = vector.broadcast %cst_181 : f32 to vector<16x128xf32>
      %454 = arith.subf %453, %446 : vector<16x128xf32>
      %455 = arith.mulf %454, %452 : vector<16x128xf32>
      %456 = arith.mulf %434, %455 : vector<16x128xf32>
      %cst_182 = arith.constant 1.000000e+00 : f32
      %457 = vector.broadcast %cst_182 : f32 to vector<16x128xf32>
      %458 = arith.subf %457, %434 : vector<16x128xf32>
      %459 = arith.mulf %458, %arg19 : vector<16x128xf32>
      %460 = arith.addf %456, %459 : vector<16x128xf32>
      %c1_183 = arith.constant 1 : index
      %c0_184 = arith.constant 0 : index
      %c0_185 = arith.constant 0 : index
      %461 = vector.load %arg1[%c1_183, %c0_184, %c0_185] : memref<4x16x16xbf16, #tpu.memory_space<vmem>>, vector<1x16x16xbf16>
      %462 = vector.shape_cast %461 : vector<1x16x16xbf16> to vector<16x16xbf16>
      %463 = arith.truncf %460 : vector<16x128xf32> to vector<16x128xbf16>
      %c0_186 = arith.constant 0 : index
      %c0_187 = arith.constant 0 : index
      %464 = vector.load %arg13[%c0_186, %c0_187] : memref<128x256xbf16, #tpu.memory_space<vmem>>, vector<128x256xbf16>
      %cst_188 = arith.constant dense<0.000000e+00> : vector<16x256xf32>
      %465 = tpu.matmul %463, %464, %cst_188 {dimension_numbers = #tpu.dot_dimension_numbers<[1], [0], [0], [1], [0, 0, 1, 1], [], []>} : vector<16x128xbf16>, vector<128x256xbf16>, vector<16x256xf32> -> vector<16x256xf32>
      %466 = vector.extract_strided_slice %465 {offsets = [0, 0], sizes = [16, 128], strides = [1, 1]} : vector<16x256xf32> to vector<16x128xf32>
      %c0_189 = arith.constant 0 : index
      %c0_190 = arith.constant 0 : index
      %467 = vector.load %arg14[%c0_189, %c0_190] : memref<1x128xf32, #tpu.memory_space<vmem>>, vector<1x128xf32>
      %468 = vector.broadcast %467 : vector<1x128xf32> to vector<16x128xf32>
      %469 = arith.addf %466, %468 : vector<16x128xf32>
      %470 = arith.negf %469 : vector<16x128xf32>
      %471 = math.exp %470 : vector<16x128xf32>
      %cst_191 = arith.constant 1.000000e+00 : f32
      %472 = vector.broadcast %cst_191 : f32 to vector<16x128xf32>
      %473 = arith.addf %472, %471 : vector<16x128xf32>
      %474 = arith.divf %472, %473 : vector<16x128xf32>
      %475 = vector.extract_strided_slice %465 {offsets = [0, 128], sizes = [16, 128], strides = [1, 1]} : vector<16x256xf32> to vector<16x128xf32>
      %476 = arith.mulf %474, %475 : vector<16x128xf32>
      %477 = arith.truncf %476 : vector<16x128xf32> to vector<16x128xbf16>
      %cst_192 = arith.constant dense<0.000000e+00> : vector<16x128xf32>
      %478 = tpu.matmul %462, %477, %cst_192 {dimension_numbers = #tpu.dot_dimension_numbers<[1], [0], [0], [1], [0, 0, 1, 1], [], []>} : vector<16x16xbf16>, vector<16x128xbf16>, vector<16x128xf32> -> vector<16x128xf32>
      %c1_193 = arith.constant 1 : index
      %c0_194 = arith.constant 0 : index
      %c0_195 = arith.constant 0 : index
      %479 = vector.load %arg3[%c1_193, %c0_194, %c0_195] : memref<4x16x128xf32, #tpu.memory_space<vmem>>, vector<1x16x128xf32>
      %480 = vector.shape_cast %479 : vector<1x16x128xf32> to vector<16x128xf32>
      %481 = arith.truncf %478 : vector<16x128xf32> to vector<16x128xbf16>
      %c0_196 = arith.constant 0 : index
      %c0_197 = arith.constant 0 : index
      %482 = vector.load %arg7[%c0_196, %c0_197] : memref<128x384xbf16, #tpu.memory_space<vmem>>, vector<128x384xbf16>
      %cst_198 = arith.constant dense<0.000000e+00> : vector<16x384xf32>
      %483 = tpu.matmul %481, %482, %cst_198 {dimension_numbers = #tpu.dot_dimension_numbers<[1], [0], [0], [1], [0, 0, 1, 1], [], []>} : vector<16x128xbf16>, vector<128x384xbf16>, vector<16x384xf32> -> vector<16x384xf32>
      %c0_199 = arith.constant 0 : index
      %c0_200 = arith.constant 0 : index
      %484 = vector.load %arg8[%c0_199, %c0_200] : memref<1x384xf32, #tpu.memory_space<vmem>>, vector<1x384xf32>
      %485 = vector.broadcast %484 : vector<1x384xf32> to vector<16x384xf32>
      %486 = arith.addf %483, %485 : vector<16x384xf32>
      %487 = vector.extract_strided_slice %432 {offsets = [0, 0], sizes = [16, 128], strides = [1, 1]} : vector<16x384xf32> to vector<16x128xf32>
      %488 = vector.extract_strided_slice %486 {offsets = [0, 0], sizes = [16, 128], strides = [1, 1]} : vector<16x384xf32> to vector<16x128xf32>
      %489 = arith.addf %487, %488 : vector<16x128xf32>
      %490 = arith.negf %489 : vector<16x128xf32>
      %491 = math.exp %490 : vector<16x128xf32>
      %cst_201 = arith.constant 1.000000e+00 : f32
      %492 = vector.broadcast %cst_201 : f32 to vector<16x128xf32>
      %493 = arith.addf %492, %491 : vector<16x128xf32>
      %494 = arith.divf %492, %493 : vector<16x128xf32>
      %495 = vector.extract_strided_slice %432 {offsets = [0, 128], sizes = [16, 128], strides = [1, 1]} : vector<16x384xf32> to vector<16x128xf32>
      %496 = vector.extract_strided_slice %486 {offsets = [0, 128], sizes = [16, 128], strides = [1, 1]} : vector<16x384xf32> to vector<16x128xf32>
      %497 = arith.addf %495, %496 : vector<16x128xf32>
      %498 = arith.negf %497 : vector<16x128xf32>
      %499 = math.exp %498 : vector<16x128xf32>
      %cst_202 = arith.constant 1.000000e+00 : f32
      %500 = vector.broadcast %cst_202 : f32 to vector<16x128xf32>
      %501 = arith.addf %500, %499 : vector<16x128xf32>
      %502 = arith.divf %500, %501 : vector<16x128xf32>
      %503 = vector.extract_strided_slice %432 {offsets = [0, 256], sizes = [16, 128], strides = [1, 1]} : vector<16x384xf32> to vector<16x128xf32>
      %504 = vector.extract_strided_slice %486 {offsets = [0, 256], sizes = [16, 128], strides = [1, 1]} : vector<16x384xf32> to vector<16x128xf32>
      %505 = arith.mulf %494, %504 : vector<16x128xf32>
      %506 = arith.addf %503, %505 : vector<16x128xf32>
      %507 = math.tanh %506 : vector<16x128xf32>
      %cst_203 = arith.constant 1.000000e+00 : f32
      %508 = vector.broadcast %cst_203 : f32 to vector<16x128xf32>
      %509 = arith.subf %508, %502 : vector<16x128xf32>
      %510 = arith.mulf %509, %507 : vector<16x128xf32>
      %511 = arith.mulf %502, %478 : vector<16x128xf32>
      %512 = arith.addf %510, %511 : vector<16x128xf32>
      %513 = arith.mulf %480, %512 : vector<16x128xf32>
      %cst_204 = arith.constant 1.000000e+00 : f32
      %514 = vector.broadcast %cst_204 : f32 to vector<16x128xf32>
      %515 = arith.subf %514, %480 : vector<16x128xf32>
      %516 = arith.mulf %515, %460 : vector<16x128xf32>
      %517 = arith.addf %513, %516 : vector<16x128xf32>
      %c2_205 = arith.constant 2 : index
      %c0_206 = arith.constant 0 : index
      %c0_207 = arith.constant 0 : index
      %518 = vector.load %arg1[%c2_205, %c0_206, %c0_207] : memref<4x16x16xbf16, #tpu.memory_space<vmem>>, vector<1x16x16xbf16>
      %519 = vector.shape_cast %518 : vector<1x16x16xbf16> to vector<16x16xbf16>
      %520 = arith.truncf %517 : vector<16x128xf32> to vector<16x128xbf16>
      %c0_208 = arith.constant 0 : index
      %c0_209 = arith.constant 0 : index
      %521 = vector.load %arg13[%c0_208, %c0_209] : memref<128x256xbf16, #tpu.memory_space<vmem>>, vector<128x256xbf16>
      %cst_210 = arith.constant dense<0.000000e+00> : vector<16x256xf32>
      %522 = tpu.matmul %520, %521, %cst_210 {dimension_numbers = #tpu.dot_dimension_numbers<[1], [0], [0], [1], [0, 0, 1, 1], [], []>} : vector<16x128xbf16>, vector<128x256xbf16>, vector<16x256xf32> -> vector<16x256xf32>
      %523 = vector.extract_strided_slice %522 {offsets = [0, 0], sizes = [16, 128], strides = [1, 1]} : vector<16x256xf32> to vector<16x128xf32>
      %c0_211 = arith.constant 0 : index
      %c0_212 = arith.constant 0 : index
      %524 = vector.load %arg14[%c0_211, %c0_212] : memref<1x128xf32, #tpu.memory_space<vmem>>, vector<1x128xf32>
      %525 = vector.broadcast %524 : vector<1x128xf32> to vector<16x128xf32>
      %526 = arith.addf %523, %525 : vector<16x128xf32>
      %527 = arith.negf %526 : vector<16x128xf32>
      %528 = math.exp %527 : vector<16x128xf32>
      %cst_213 = arith.constant 1.000000e+00 : f32
      %529 = vector.broadcast %cst_213 : f32 to vector<16x128xf32>
      %530 = arith.addf %529, %528 : vector<16x128xf32>
      %531 = arith.divf %529, %530 : vector<16x128xf32>
      %532 = vector.extract_strided_slice %522 {offsets = [0, 128], sizes = [16, 128], strides = [1, 1]} : vector<16x256xf32> to vector<16x128xf32>
      %533 = arith.mulf %531, %532 : vector<16x128xf32>
      %534 = arith.truncf %533 : vector<16x128xf32> to vector<16x128xbf16>
      %cst_214 = arith.constant dense<0.000000e+00> : vector<16x128xf32>
      %535 = tpu.matmul %519, %534, %cst_214 {dimension_numbers = #tpu.dot_dimension_numbers<[1], [0], [0], [1], [0, 0, 1, 1], [], []>} : vector<16x16xbf16>, vector<16x128xbf16>, vector<16x128xf32> -> vector<16x128xf32>
      %c2_215 = arith.constant 2 : index
      %c0_216 = arith.constant 0 : index
      %c0_217 = arith.constant 0 : index
      %536 = vector.load %arg3[%c2_215, %c0_216, %c0_217] : memref<4x16x128xf32, #tpu.memory_space<vmem>>, vector<1x16x128xf32>
      %537 = vector.shape_cast %536 : vector<1x16x128xf32> to vector<16x128xf32>
      %538 = arith.truncf %535 : vector<16x128xf32> to vector<16x128xbf16>
      %c0_218 = arith.constant 0 : index
      %c0_219 = arith.constant 0 : index
      %539 = vector.load %arg7[%c0_218, %c0_219] : memref<128x384xbf16, #tpu.memory_space<vmem>>, vector<128x384xbf16>
      %cst_220 = arith.constant dense<0.000000e+00> : vector<16x384xf32>
      %540 = tpu.matmul %538, %539, %cst_220 {dimension_numbers = #tpu.dot_dimension_numbers<[1], [0], [0], [1], [0, 0, 1, 1], [], []>} : vector<16x128xbf16>, vector<128x384xbf16>, vector<16x384xf32> -> vector<16x384xf32>
      %c0_221 = arith.constant 0 : index
      %c0_222 = arith.constant 0 : index
      %541 = vector.load %arg8[%c0_221, %c0_222] : memref<1x384xf32, #tpu.memory_space<vmem>>, vector<1x384xf32>
      %542 = vector.broadcast %541 : vector<1x384xf32> to vector<16x384xf32>
      %543 = arith.addf %540, %542 : vector<16x384xf32>
      %544 = vector.extract_strided_slice %432 {offsets = [0, 0], sizes = [16, 128], strides = [1, 1]} : vector<16x384xf32> to vector<16x128xf32>
      %545 = vector.extract_strided_slice %543 {offsets = [0, 0], sizes = [16, 128], strides = [1, 1]} : vector<16x384xf32> to vector<16x128xf32>
      %546 = arith.addf %544, %545 : vector<16x128xf32>
      %547 = arith.negf %546 : vector<16x128xf32>
      %548 = math.exp %547 : vector<16x128xf32>
      %cst_223 = arith.constant 1.000000e+00 : f32
      %549 = vector.broadcast %cst_223 : f32 to vector<16x128xf32>
      %550 = arith.addf %549, %548 : vector<16x128xf32>
      %551 = arith.divf %549, %550 : vector<16x128xf32>
      %552 = vector.extract_strided_slice %432 {offsets = [0, 128], sizes = [16, 128], strides = [1, 1]} : vector<16x384xf32> to vector<16x128xf32>
      %553 = vector.extract_strided_slice %543 {offsets = [0, 128], sizes = [16, 128], strides = [1, 1]} : vector<16x384xf32> to vector<16x128xf32>
      %554 = arith.addf %552, %553 : vector<16x128xf32>
      %555 = arith.negf %554 : vector<16x128xf32>
      %556 = math.exp %555 : vector<16x128xf32>
      %cst_224 = arith.constant 1.000000e+00 : f32
      %557 = vector.broadcast %cst_224 : f32 to vector<16x128xf32>
      %558 = arith.addf %557, %556 : vector<16x128xf32>
      %559 = arith.divf %557, %558 : vector<16x128xf32>
      %560 = vector.extract_strided_slice %432 {offsets = [0, 256], sizes = [16, 128], strides = [1, 1]} : vector<16x384xf32> to vector<16x128xf32>
      %561 = vector.extract_strided_slice %543 {offsets = [0, 256], sizes = [16, 128], strides = [1, 1]} : vector<16x384xf32> to vector<16x128xf32>
      %562 = arith.mulf %551, %561 : vector<16x128xf32>
      %563 = arith.addf %560, %562 : vector<16x128xf32>
      %564 = math.tanh %563 : vector<16x128xf32>
      %cst_225 = arith.constant 1.000000e+00 : f32
      %565 = vector.broadcast %cst_225 : f32 to vector<16x128xf32>
      %566 = arith.subf %565, %559 : vector<16x128xf32>
      %567 = arith.mulf %566, %564 : vector<16x128xf32>
      %568 = arith.mulf %559, %535 : vector<16x128xf32>
      %569 = arith.addf %567, %568 : vector<16x128xf32>
      %570 = arith.mulf %537, %569 : vector<16x128xf32>
      %cst_226 = arith.constant 1.000000e+00 : f32
      %571 = vector.broadcast %cst_226 : f32 to vector<16x128xf32>
      %572 = arith.subf %571, %537 : vector<16x128xf32>
      %573 = arith.mulf %572, %517 : vector<16x128xf32>
      %574 = arith.addf %570, %573 : vector<16x128xf32>
      %c3_227 = arith.constant 3 : index
      %c0_228 = arith.constant 0 : index
      %c0_229 = arith.constant 0 : index
      %575 = vector.load %arg1[%c3_227, %c0_228, %c0_229] : memref<4x16x16xbf16, #tpu.memory_space<vmem>>, vector<1x16x16xbf16>
      %576 = vector.shape_cast %575 : vector<1x16x16xbf16> to vector<16x16xbf16>
      %577 = arith.truncf %574 : vector<16x128xf32> to vector<16x128xbf16>
      %c0_230 = arith.constant 0 : index
      %c0_231 = arith.constant 0 : index
      %578 = vector.load %arg13[%c0_230, %c0_231] : memref<128x256xbf16, #tpu.memory_space<vmem>>, vector<128x256xbf16>
      %cst_232 = arith.constant dense<0.000000e+00> : vector<16x256xf32>
      %579 = tpu.matmul %577, %578, %cst_232 {dimension_numbers = #tpu.dot_dimension_numbers<[1], [0], [0], [1], [0, 0, 1, 1], [], []>} : vector<16x128xbf16>, vector<128x256xbf16>, vector<16x256xf32> -> vector<16x256xf32>
      %580 = vector.extract_strided_slice %579 {offsets = [0, 0], sizes = [16, 128], strides = [1, 1]} : vector<16x256xf32> to vector<16x128xf32>
      %c0_233 = arith.constant 0 : index
      %c0_234 = arith.constant 0 : index
      %581 = vector.load %arg14[%c0_233, %c0_234] : memref<1x128xf32, #tpu.memory_space<vmem>>, vector<1x128xf32>
      %582 = vector.broadcast %581 : vector<1x128xf32> to vector<16x128xf32>
      %583 = arith.addf %580, %582 : vector<16x128xf32>
      %584 = arith.negf %583 : vector<16x128xf32>
      %585 = math.exp %584 : vector<16x128xf32>
      %cst_235 = arith.constant 1.000000e+00 : f32
      %586 = vector.broadcast %cst_235 : f32 to vector<16x128xf32>
      %587 = arith.addf %586, %585 : vector<16x128xf32>
      %588 = arith.divf %586, %587 : vector<16x128xf32>
      %589 = vector.extract_strided_slice %579 {offsets = [0, 128], sizes = [16, 128], strides = [1, 1]} : vector<16x256xf32> to vector<16x128xf32>
      %590 = arith.mulf %588, %589 : vector<16x128xf32>
      %591 = arith.truncf %590 : vector<16x128xf32> to vector<16x128xbf16>
      %cst_236 = arith.constant dense<0.000000e+00> : vector<16x128xf32>
      %592 = tpu.matmul %576, %591, %cst_236 {dimension_numbers = #tpu.dot_dimension_numbers<[1], [0], [0], [1], [0, 0, 1, 1], [], []>} : vector<16x16xbf16>, vector<16x128xbf16>, vector<16x128xf32> -> vector<16x128xf32>
      %c3_237 = arith.constant 3 : index
      %c0_238 = arith.constant 0 : index
      %c0_239 = arith.constant 0 : index
      %593 = vector.load %arg3[%c3_237, %c0_238, %c0_239] : memref<4x16x128xf32, #tpu.memory_space<vmem>>, vector<1x16x128xf32>
      %594 = vector.shape_cast %593 : vector<1x16x128xf32> to vector<16x128xf32>
      %595 = arith.truncf %592 : vector<16x128xf32> to vector<16x128xbf16>
      %c0_240 = arith.constant 0 : index
      %c0_241 = arith.constant 0 : index
      %596 = vector.load %arg7[%c0_240, %c0_241] : memref<128x384xbf16, #tpu.memory_space<vmem>>, vector<128x384xbf16>
      %cst_242 = arith.constant dense<0.000000e+00> : vector<16x384xf32>
      %597 = tpu.matmul %595, %596, %cst_242 {dimension_numbers = #tpu.dot_dimension_numbers<[1], [0], [0], [1], [0, 0, 1, 1], [], []>} : vector<16x128xbf16>, vector<128x384xbf16>, vector<16x384xf32> -> vector<16x384xf32>
      %c0_243 = arith.constant 0 : index
      %c0_244 = arith.constant 0 : index
      %598 = vector.load %arg8[%c0_243, %c0_244] : memref<1x384xf32, #tpu.memory_space<vmem>>, vector<1x384xf32>
      %599 = vector.broadcast %598 : vector<1x384xf32> to vector<16x384xf32>
      %600 = arith.addf %597, %599 : vector<16x384xf32>
      %601 = vector.extract_strided_slice %432 {offsets = [0, 0], sizes = [16, 128], strides = [1, 1]} : vector<16x384xf32> to vector<16x128xf32>
      %602 = vector.extract_strided_slice %600 {offsets = [0, 0], sizes = [16, 128], strides = [1, 1]} : vector<16x384xf32> to vector<16x128xf32>
      %603 = arith.addf %601, %602 : vector<16x128xf32>
      %604 = arith.negf %603 : vector<16x128xf32>
      %605 = math.exp %604 : vector<16x128xf32>
      %cst_245 = arith.constant 1.000000e+00 : f32
      %606 = vector.broadcast %cst_245 : f32 to vector<16x128xf32>
      %607 = arith.addf %606, %605 : vector<16x128xf32>
      %608 = arith.divf %606, %607 : vector<16x128xf32>
      %609 = vector.extract_strided_slice %432 {offsets = [0, 128], sizes = [16, 128], strides = [1, 1]} : vector<16x384xf32> to vector<16x128xf32>
      %610 = vector.extract_strided_slice %600 {offsets = [0, 128], sizes = [16, 128], strides = [1, 1]} : vector<16x384xf32> to vector<16x128xf32>
      %611 = arith.addf %609, %610 : vector<16x128xf32>
      %612 = arith.negf %611 : vector<16x128xf32>
      %613 = math.exp %612 : vector<16x128xf32>
      %cst_246 = arith.constant 1.000000e+00 : f32
      %614 = vector.broadcast %cst_246 : f32 to vector<16x128xf32>
      %615 = arith.addf %614, %613 : vector<16x128xf32>
      %616 = arith.divf %614, %615 : vector<16x128xf32>
      %617 = vector.extract_strided_slice %432 {offsets = [0, 256], sizes = [16, 128], strides = [1, 1]} : vector<16x384xf32> to vector<16x128xf32>
      %618 = vector.extract_strided_slice %600 {offsets = [0, 256], sizes = [16, 128], strides = [1, 1]} : vector<16x384xf32> to vector<16x128xf32>
      %619 = arith.mulf %608, %618 : vector<16x128xf32>
      %620 = arith.addf %617, %619 : vector<16x128xf32>
      %621 = math.tanh %620 : vector<16x128xf32>
      %cst_247 = arith.constant 1.000000e+00 : f32
      %622 = vector.broadcast %cst_247 : f32 to vector<16x128xf32>
      %623 = arith.subf %622, %616 : vector<16x128xf32>
      %624 = arith.mulf %623, %621 : vector<16x128xf32>
      %625 = arith.mulf %616, %592 : vector<16x128xf32>
      %626 = arith.addf %624, %625 : vector<16x128xf32>
      %627 = arith.mulf %594, %626 : vector<16x128xf32>
      %cst_248 = arith.constant 1.000000e+00 : f32
      %628 = vector.broadcast %cst_248 : f32 to vector<16x128xf32>
      %629 = arith.subf %628, %594 : vector<16x128xf32>
      %630 = arith.mulf %629, %574 : vector<16x128xf32>
      %631 = arith.addf %627, %630 : vector<16x128xf32>
      %632 = arith.truncf %631 : vector<16x128xf32> to vector<16x128xbf16>
      %c0_249 = arith.constant 0 : index
      %c0_250 = arith.constant 0 : index
      %633 = vector.load %arg9[%c0_249, %c0_250] : memref<128x384xbf16, #tpu.memory_space<vmem>>, vector<128x384xbf16>
      %cst_251 = arith.constant dense<0.000000e+00> : vector<16x384xf32>
      %634 = tpu.matmul %632, %633, %cst_251 {dimension_numbers = #tpu.dot_dimension_numbers<[1], [0], [0], [1], [0, 0, 1, 1], [], []>} : vector<16x128xbf16>, vector<128x384xbf16>, vector<16x384xf32> -> vector<16x384xf32>
      %c0_252 = arith.constant 0 : index
      %c0_253 = arith.constant 0 : index
      %635 = vector.load %arg10[%c0_252, %c0_253] : memref<1x384xf32, #tpu.memory_space<vmem>>, vector<1x384xf32>
      %636 = vector.broadcast %635 : vector<1x384xf32> to vector<16x384xf32>
      %637 = arith.addf %634, %636 : vector<16x384xf32>
      %c0_254 = arith.constant 0 : index
      %c0_255 = arith.constant 0 : index
      %c0_256 = arith.constant 0 : index
      %638 = vector.load %arg4[%c0_254, %c0_255, %c0_256] : memref<4x16x128xf32, #tpu.memory_space<vmem>>, vector<1x16x128xf32>
      %639 = vector.shape_cast %638 : vector<1x16x128xf32> to vector<16x128xf32>
      %640 = vector.extract_strided_slice %637 {offsets = [0, 0], sizes = [16, 128], strides = [1, 1]} : vector<16x384xf32> to vector<16x128xf32>
      %641 = arith.negf %640 : vector<16x128xf32>
      %642 = math.exp %641 : vector<16x128xf32>
      %cst_257 = arith.constant 1.000000e+00 : f32
      %643 = vector.broadcast %cst_257 : f32 to vector<16x128xf32>
      %644 = arith.addf %643, %642 : vector<16x128xf32>
      %645 = arith.divf %643, %644 : vector<16x128xf32>
      %646 = vector.extract_strided_slice %637 {offsets = [0, 128], sizes = [16, 128], strides = [1, 1]} : vector<16x384xf32> to vector<16x128xf32>
      %647 = arith.negf %646 : vector<16x128xf32>
      %648 = math.exp %647 : vector<16x128xf32>
      %cst_258 = arith.constant 1.000000e+00 : f32
      %649 = vector.broadcast %cst_258 : f32 to vector<16x128xf32>
      %650 = arith.addf %649, %648 : vector<16x128xf32>
      %651 = arith.divf %649, %650 : vector<16x128xf32>
      %652 = vector.extract_strided_slice %637 {offsets = [0, 256], sizes = [16, 128], strides = [1, 1]} : vector<16x384xf32> to vector<16x128xf32>
      %c0_259 = arith.constant 0 : index
      %c256_260 = arith.constant 256 : index
      %653 = vector.load %arg12[%c0_259, %c256_260] : memref<1x384xf32, #tpu.memory_space<vmem>>, vector<1x128xf32>
      %654 = vector.broadcast %653 : vector<1x128xf32> to vector<16x128xf32>
      %655 = arith.mulf %645, %654 : vector<16x128xf32>
      %656 = arith.addf %652, %655 : vector<16x128xf32>
      %657 = math.tanh %656 : vector<16x128xf32>
      %cst_261 = arith.constant 1.000000e+00 : f32
      %658 = vector.broadcast %cst_261 : f32 to vector<16x128xf32>
      %659 = arith.subf %658, %651 : vector<16x128xf32>
      %660 = arith.mulf %659, %657 : vector<16x128xf32>
      %661 = arith.mulf %639, %660 : vector<16x128xf32>
      %cst_262 = arith.constant 1.000000e+00 : f32
      %662 = vector.broadcast %cst_262 : f32 to vector<16x128xf32>
      %663 = arith.subf %662, %639 : vector<16x128xf32>
      %664 = arith.mulf %663, %631 : vector<16x128xf32>
      %665 = arith.addf %661, %664 : vector<16x128xf32>
      %c1_263 = arith.constant 1 : index
      %c0_264 = arith.constant 0 : index
      %c0_265 = arith.constant 0 : index
      %666 = vector.load %arg2[%c1_263, %c0_264, %c0_265] : memref<4x16x16xbf16, #tpu.memory_space<vmem>>, vector<1x16x16xbf16>
      %667 = vector.shape_cast %666 : vector<1x16x16xbf16> to vector<16x16xbf16>
      %668 = arith.truncf %665 : vector<16x128xf32> to vector<16x128xbf16>
      %c0_266 = arith.constant 0 : index
      %c0_267 = arith.constant 0 : index
      %669 = vector.load %arg15[%c0_266, %c0_267] : memref<128x256xbf16, #tpu.memory_space<vmem>>, vector<128x256xbf16>
      %cst_268 = arith.constant dense<0.000000e+00> : vector<16x256xf32>
      %670 = tpu.matmul %668, %669, %cst_268 {dimension_numbers = #tpu.dot_dimension_numbers<[1], [0], [0], [1], [0, 0, 1, 1], [], []>} : vector<16x128xbf16>, vector<128x256xbf16>, vector<16x256xf32> -> vector<16x256xf32>
      %671 = vector.extract_strided_slice %670 {offsets = [0, 0], sizes = [16, 128], strides = [1, 1]} : vector<16x256xf32> to vector<16x128xf32>
      %c0_269 = arith.constant 0 : index
      %c0_270 = arith.constant 0 : index
      %672 = vector.load %arg16[%c0_269, %c0_270] : memref<1x128xf32, #tpu.memory_space<vmem>>, vector<1x128xf32>
      %673 = vector.broadcast %672 : vector<1x128xf32> to vector<16x128xf32>
      %674 = arith.addf %671, %673 : vector<16x128xf32>
      %675 = arith.negf %674 : vector<16x128xf32>
      %676 = math.exp %675 : vector<16x128xf32>
      %cst_271 = arith.constant 1.000000e+00 : f32
      %677 = vector.broadcast %cst_271 : f32 to vector<16x128xf32>
      %678 = arith.addf %677, %676 : vector<16x128xf32>
      %679 = arith.divf %677, %678 : vector<16x128xf32>
      %680 = vector.extract_strided_slice %670 {offsets = [0, 128], sizes = [16, 128], strides = [1, 1]} : vector<16x256xf32> to vector<16x128xf32>
      %681 = arith.mulf %679, %680 : vector<16x128xf32>
      %682 = arith.truncf %681 : vector<16x128xf32> to vector<16x128xbf16>
      %cst_272 = arith.constant dense<0.000000e+00> : vector<16x128xf32>
      %683 = tpu.matmul %667, %682, %cst_272 {dimension_numbers = #tpu.dot_dimension_numbers<[1], [0], [0], [1], [0, 0, 1, 1], [], []>} : vector<16x16xbf16>, vector<16x128xbf16>, vector<16x128xf32> -> vector<16x128xf32>
      %684 = arith.truncf %665 : vector<16x128xf32> to vector<16x128xbf16>
      %c0_273 = arith.constant 0 : index
      %c0_274 = arith.constant 0 : index
      %685 = vector.load %arg9[%c0_273, %c0_274] : memref<128x384xbf16, #tpu.memory_space<vmem>>, vector<128x384xbf16>
      %cst_275 = arith.constant dense<0.000000e+00> : vector<16x384xf32>
      %686 = tpu.matmul %684, %685, %cst_275 {dimension_numbers = #tpu.dot_dimension_numbers<[1], [0], [0], [1], [0, 0, 1, 1], [], []>} : vector<16x128xbf16>, vector<128x384xbf16>, vector<16x384xf32> -> vector<16x384xf32>
      %c0_276 = arith.constant 0 : index
      %c0_277 = arith.constant 0 : index
      %687 = vector.load %arg10[%c0_276, %c0_277] : memref<1x384xf32, #tpu.memory_space<vmem>>, vector<1x384xf32>
      %688 = vector.broadcast %687 : vector<1x384xf32> to vector<16x384xf32>
      %689 = arith.addf %686, %688 : vector<16x384xf32>
      %c1_278 = arith.constant 1 : index
      %c0_279 = arith.constant 0 : index
      %c0_280 = arith.constant 0 : index
      %690 = vector.load %arg4[%c1_278, %c0_279, %c0_280] : memref<4x16x128xf32, #tpu.memory_space<vmem>>, vector<1x16x128xf32>
      %691 = vector.shape_cast %690 : vector<1x16x128xf32> to vector<16x128xf32>
      %692 = arith.truncf %683 : vector<16x128xf32> to vector<16x128xbf16>
      %c0_281 = arith.constant 0 : index
      %c0_282 = arith.constant 0 : index
      %693 = vector.load %arg11[%c0_281, %c0_282] : memref<128x384xbf16, #tpu.memory_space<vmem>>, vector<128x384xbf16>
      %cst_283 = arith.constant dense<0.000000e+00> : vector<16x384xf32>
      %694 = tpu.matmul %692, %693, %cst_283 {dimension_numbers = #tpu.dot_dimension_numbers<[1], [0], [0], [1], [0, 0, 1, 1], [], []>} : vector<16x128xbf16>, vector<128x384xbf16>, vector<16x384xf32> -> vector<16x384xf32>
      %c0_284 = arith.constant 0 : index
      %c0_285 = arith.constant 0 : index
      %695 = vector.load %arg12[%c0_284, %c0_285] : memref<1x384xf32, #tpu.memory_space<vmem>>, vector<1x384xf32>
      %696 = vector.broadcast %695 : vector<1x384xf32> to vector<16x384xf32>
      %697 = arith.addf %694, %696 : vector<16x384xf32>
      %698 = vector.extract_strided_slice %689 {offsets = [0, 0], sizes = [16, 128], strides = [1, 1]} : vector<16x384xf32> to vector<16x128xf32>
      %699 = vector.extract_strided_slice %697 {offsets = [0, 0], sizes = [16, 128], strides = [1, 1]} : vector<16x384xf32> to vector<16x128xf32>
      %700 = arith.addf %698, %699 : vector<16x128xf32>
      %701 = arith.negf %700 : vector<16x128xf32>
      %702 = math.exp %701 : vector<16x128xf32>
      %cst_286 = arith.constant 1.000000e+00 : f32
      %703 = vector.broadcast %cst_286 : f32 to vector<16x128xf32>
      %704 = arith.addf %703, %702 : vector<16x128xf32>
      %705 = arith.divf %703, %704 : vector<16x128xf32>
      %706 = vector.extract_strided_slice %689 {offsets = [0, 128], sizes = [16, 128], strides = [1, 1]} : vector<16x384xf32> to vector<16x128xf32>
      %707 = vector.extract_strided_slice %697 {offsets = [0, 128], sizes = [16, 128], strides = [1, 1]} : vector<16x384xf32> to vector<16x128xf32>
      %708 = arith.addf %706, %707 : vector<16x128xf32>
      %709 = arith.negf %708 : vector<16x128xf32>
      %710 = math.exp %709 : vector<16x128xf32>
      %cst_287 = arith.constant 1.000000e+00 : f32
      %711 = vector.broadcast %cst_287 : f32 to vector<16x128xf32>
      %712 = arith.addf %711, %710 : vector<16x128xf32>
      %713 = arith.divf %711, %712 : vector<16x128xf32>
      %714 = vector.extract_strided_slice %689 {offsets = [0, 256], sizes = [16, 128], strides = [1, 1]} : vector<16x384xf32> to vector<16x128xf32>
      %715 = vector.extract_strided_slice %697 {offsets = [0, 256], sizes = [16, 128], strides = [1, 1]} : vector<16x384xf32> to vector<16x128xf32>
      %716 = arith.mulf %705, %715 : vector<16x128xf32>
      %717 = arith.addf %714, %716 : vector<16x128xf32>
      %718 = math.tanh %717 : vector<16x128xf32>
      %cst_288 = arith.constant 1.000000e+00 : f32
      %719 = vector.broadcast %cst_288 : f32 to vector<16x128xf32>
      %720 = arith.subf %719, %713 : vector<16x128xf32>
      %721 = arith.mulf %720, %718 : vector<16x128xf32>
      %722 = arith.mulf %713, %683 : vector<16x128xf32>
      %723 = arith.addf %721, %722 : vector<16x128xf32>
      %724 = arith.mulf %691, %723 : vector<16x128xf32>
      %cst_289 = arith.constant 1.000000e+00 : f32
      %725 = vector.broadcast %cst_289 : f32 to vector<16x128xf32>
      %726 = arith.subf %725, %691 : vector<16x128xf32>
      %727 = arith.mulf %726, %665 : vector<16x128xf32>
      %728 = arith.addf %724, %727 : vector<16x128xf32>
      %c2_290 = arith.constant 2 : index
      %c0_291 = arith.constant 0 : index
      %c0_292 = arith.constant 0 : index
      %729 = vector.load %arg2[%c2_290, %c0_291, %c0_292] : memref<4x16x16xbf16, #tpu.memory_space<vmem>>, vector<1x16x16xbf16>
      %730 = vector.shape_cast %729 : vector<1x16x16xbf16> to vector<16x16xbf16>
      %731 = arith.truncf %728 : vector<16x128xf32> to vector<16x128xbf16>
      %c0_293 = arith.constant 0 : index
      %c0_294 = arith.constant 0 : index
      %732 = vector.load %arg15[%c0_293, %c0_294] : memref<128x256xbf16, #tpu.memory_space<vmem>>, vector<128x256xbf16>
      %cst_295 = arith.constant dense<0.000000e+00> : vector<16x256xf32>
      %733 = tpu.matmul %731, %732, %cst_295 {dimension_numbers = #tpu.dot_dimension_numbers<[1], [0], [0], [1], [0, 0, 1, 1], [], []>} : vector<16x128xbf16>, vector<128x256xbf16>, vector<16x256xf32> -> vector<16x256xf32>
      %734 = vector.extract_strided_slice %733 {offsets = [0, 0], sizes = [16, 128], strides = [1, 1]} : vector<16x256xf32> to vector<16x128xf32>
      %c0_296 = arith.constant 0 : index
      %c0_297 = arith.constant 0 : index
      %735 = vector.load %arg16[%c0_296, %c0_297] : memref<1x128xf32, #tpu.memory_space<vmem>>, vector<1x128xf32>
      %736 = vector.broadcast %735 : vector<1x128xf32> to vector<16x128xf32>
      %737 = arith.addf %734, %736 : vector<16x128xf32>
      %738 = arith.negf %737 : vector<16x128xf32>
      %739 = math.exp %738 : vector<16x128xf32>
      %cst_298 = arith.constant 1.000000e+00 : f32
      %740 = vector.broadcast %cst_298 : f32 to vector<16x128xf32>
      %741 = arith.addf %740, %739 : vector<16x128xf32>
      %742 = arith.divf %740, %741 : vector<16x128xf32>
      %743 = vector.extract_strided_slice %733 {offsets = [0, 128], sizes = [16, 128], strides = [1, 1]} : vector<16x256xf32> to vector<16x128xf32>
      %744 = arith.mulf %742, %743 : vector<16x128xf32>
      %745 = arith.truncf %744 : vector<16x128xf32> to vector<16x128xbf16>
      %cst_299 = arith.constant dense<0.000000e+00> : vector<16x128xf32>
      %746 = tpu.matmul %730, %745, %cst_299 {dimension_numbers = #tpu.dot_dimension_numbers<[1], [0], [0], [1], [0, 0, 1, 1], [], []>} : vector<16x16xbf16>, vector<16x128xbf16>, vector<16x128xf32> -> vector<16x128xf32>
      %747 = arith.truncf %728 : vector<16x128xf32> to vector<16x128xbf16>
      %c0_300 = arith.constant 0 : index
      %c0_301 = arith.constant 0 : index
      %748 = vector.load %arg9[%c0_300, %c0_301] : memref<128x384xbf16, #tpu.memory_space<vmem>>, vector<128x384xbf16>
      %cst_302 = arith.constant dense<0.000000e+00> : vector<16x384xf32>
      %749 = tpu.matmul %747, %748, %cst_302 {dimension_numbers = #tpu.dot_dimension_numbers<[1], [0], [0], [1], [0, 0, 1, 1], [], []>} : vector<16x128xbf16>, vector<128x384xbf16>, vector<16x384xf32> -> vector<16x384xf32>
      %c0_303 = arith.constant 0 : index
      %c0_304 = arith.constant 0 : index
      %750 = vector.load %arg10[%c0_303, %c0_304] : memref<1x384xf32, #tpu.memory_space<vmem>>, vector<1x384xf32>
      %751 = vector.broadcast %750 : vector<1x384xf32> to vector<16x384xf32>
      %752 = arith.addf %749, %751 : vector<16x384xf32>
      %c2_305 = arith.constant 2 : index
      %c0_306 = arith.constant 0 : index
      %c0_307 = arith.constant 0 : index
      %753 = vector.load %arg4[%c2_305, %c0_306, %c0_307] : memref<4x16x128xf32, #tpu.memory_space<vmem>>, vector<1x16x128xf32>
      %754 = vector.shape_cast %753 : vector<1x16x128xf32> to vector<16x128xf32>
      %755 = arith.truncf %746 : vector<16x128xf32> to vector<16x128xbf16>
      %c0_308 = arith.constant 0 : index
      %c0_309 = arith.constant 0 : index
      %756 = vector.load %arg11[%c0_308, %c0_309] : memref<128x384xbf16, #tpu.memory_space<vmem>>, vector<128x384xbf16>
      %cst_310 = arith.constant dense<0.000000e+00> : vector<16x384xf32>
      %757 = tpu.matmul %755, %756, %cst_310 {dimension_numbers = #tpu.dot_dimension_numbers<[1], [0], [0], [1], [0, 0, 1, 1], [], []>} : vector<16x128xbf16>, vector<128x384xbf16>, vector<16x384xf32> -> vector<16x384xf32>
      %c0_311 = arith.constant 0 : index
      %c0_312 = arith.constant 0 : index
      %758 = vector.load %arg12[%c0_311, %c0_312] : memref<1x384xf32, #tpu.memory_space<vmem>>, vector<1x384xf32>
      %759 = vector.broadcast %758 : vector<1x384xf32> to vector<16x384xf32>
      %760 = arith.addf %757, %759 : vector<16x384xf32>
      %761 = vector.extract_strided_slice %752 {offsets = [0, 0], sizes = [16, 128], strides = [1, 1]} : vector<16x384xf32> to vector<16x128xf32>
      %762 = vector.extract_strided_slice %760 {offsets = [0, 0], sizes = [16, 128], strides = [1, 1]} : vector<16x384xf32> to vector<16x128xf32>
      %763 = arith.addf %761, %762 : vector<16x128xf32>
      %764 = arith.negf %763 : vector<16x128xf32>
      %765 = math.exp %764 : vector<16x128xf32>
      %cst_313 = arith.constant 1.000000e+00 : f32
      %766 = vector.broadcast %cst_313 : f32 to vector<16x128xf32>
      %767 = arith.addf %766, %765 : vector<16x128xf32>
      %768 = arith.divf %766, %767 : vector<16x128xf32>
      %769 = vector.extract_strided_slice %752 {offsets = [0, 128], sizes = [16, 128], strides = [1, 1]} : vector<16x384xf32> to vector<16x128xf32>
      %770 = vector.extract_strided_slice %760 {offsets = [0, 128], sizes = [16, 128], strides = [1, 1]} : vector<16x384xf32> to vector<16x128xf32>
      %771 = arith.addf %769, %770 : vector<16x128xf32>
      %772 = arith.negf %771 : vector<16x128xf32>
      %773 = math.exp %772 : vector<16x128xf32>
      %cst_314 = arith.constant 1.000000e+00 : f32
      %774 = vector.broadcast %cst_314 : f32 to vector<16x128xf32>
      %775 = arith.addf %774, %773 : vector<16x128xf32>
      %776 = arith.divf %774, %775 : vector<16x128xf32>
      %777 = vector.extract_strided_slice %752 {offsets = [0, 256], sizes = [16, 128], strides = [1, 1]} : vector<16x384xf32> to vector<16x128xf32>
      %778 = vector.extract_strided_slice %760 {offsets = [0, 256], sizes = [16, 128], strides = [1, 1]} : vector<16x384xf32> to vector<16x128xf32>
      %779 = arith.mulf %768, %778 : vector<16x128xf32>
      %780 = arith.addf %777, %779 : vector<16x128xf32>
      %781 = math.tanh %780 : vector<16x128xf32>
      %cst_315 = arith.constant 1.000000e+00 : f32
      %782 = vector.broadcast %cst_315 : f32 to vector<16x128xf32>
      %783 = arith.subf %782, %776 : vector<16x128xf32>
      %784 = arith.mulf %783, %781 : vector<16x128xf32>
      %785 = arith.mulf %776, %746 : vector<16x128xf32>
      %786 = arith.addf %784, %785 : vector<16x128xf32>
      %787 = arith.mulf %754, %786 : vector<16x128xf32>
      %cst_316 = arith.constant 1.000000e+00 : f32
      %788 = vector.broadcast %cst_316 : f32 to vector<16x128xf32>
      %789 = arith.subf %788, %754 : vector<16x128xf32>
      %790 = arith.mulf %789, %728 : vector<16x128xf32>
      %791 = arith.addf %787, %790 : vector<16x128xf32>
      %c3_317 = arith.constant 3 : index
      %c0_318 = arith.constant 0 : index
      %c0_319 = arith.constant 0 : index
      %792 = vector.load %arg2[%c3_317, %c0_318, %c0_319] : memref<4x16x16xbf16, #tpu.memory_space<vmem>>, vector<1x16x16xbf16>
      %793 = vector.shape_cast %792 : vector<1x16x16xbf16> to vector<16x16xbf16>
      %794 = arith.truncf %791 : vector<16x128xf32> to vector<16x128xbf16>
      %c0_320 = arith.constant 0 : index
      %c0_321 = arith.constant 0 : index
      %795 = vector.load %arg15[%c0_320, %c0_321] : memref<128x256xbf16, #tpu.memory_space<vmem>>, vector<128x256xbf16>
      %cst_322 = arith.constant dense<0.000000e+00> : vector<16x256xf32>
      %796 = tpu.matmul %794, %795, %cst_322 {dimension_numbers = #tpu.dot_dimension_numbers<[1], [0], [0], [1], [0, 0, 1, 1], [], []>} : vector<16x128xbf16>, vector<128x256xbf16>, vector<16x256xf32> -> vector<16x256xf32>
      %797 = vector.extract_strided_slice %796 {offsets = [0, 0], sizes = [16, 128], strides = [1, 1]} : vector<16x256xf32> to vector<16x128xf32>
      %c0_323 = arith.constant 0 : index
      %c0_324 = arith.constant 0 : index
      %798 = vector.load %arg16[%c0_323, %c0_324] : memref<1x128xf32, #tpu.memory_space<vmem>>, vector<1x128xf32>
      %799 = vector.broadcast %798 : vector<1x128xf32> to vector<16x128xf32>
      %800 = arith.addf %797, %799 : vector<16x128xf32>
      %801 = arith.negf %800 : vector<16x128xf32>
      %802 = math.exp %801 : vector<16x128xf32>
      %cst_325 = arith.constant 1.000000e+00 : f32
      %803 = vector.broadcast %cst_325 : f32 to vector<16x128xf32>
      %804 = arith.addf %803, %802 : vector<16x128xf32>
      %805 = arith.divf %803, %804 : vector<16x128xf32>
      %806 = vector.extract_strided_slice %796 {offsets = [0, 128], sizes = [16, 128], strides = [1, 1]} : vector<16x256xf32> to vector<16x128xf32>
      %807 = arith.mulf %805, %806 : vector<16x128xf32>
      %808 = arith.truncf %807 : vector<16x128xf32> to vector<16x128xbf16>
      %cst_326 = arith.constant dense<0.000000e+00> : vector<16x128xf32>
      %809 = tpu.matmul %793, %808, %cst_326 {dimension_numbers = #tpu.dot_dimension_numbers<[1], [0], [0], [1], [0, 0, 1, 1], [], []>} : vector<16x16xbf16>, vector<16x128xbf16>, vector<16x128xf32> -> vector<16x128xf32>
      %810 = arith.truncf %791 : vector<16x128xf32> to vector<16x128xbf16>
      %c0_327 = arith.constant 0 : index
      %c0_328 = arith.constant 0 : index
      %811 = vector.load %arg9[%c0_327, %c0_328] : memref<128x384xbf16, #tpu.memory_space<vmem>>, vector<128x384xbf16>
      %cst_329 = arith.constant dense<0.000000e+00> : vector<16x384xf32>
      %812 = tpu.matmul %810, %811, %cst_329 {dimension_numbers = #tpu.dot_dimension_numbers<[1], [0], [0], [1], [0, 0, 1, 1], [], []>} : vector<16x128xbf16>, vector<128x384xbf16>, vector<16x384xf32> -> vector<16x384xf32>
      %c0_330 = arith.constant 0 : index
      %c0_331 = arith.constant 0 : index
      %813 = vector.load %arg10[%c0_330, %c0_331] : memref<1x384xf32, #tpu.memory_space<vmem>>, vector<1x384xf32>
      %814 = vector.broadcast %813 : vector<1x384xf32> to vector<16x384xf32>
      %815 = arith.addf %812, %814 : vector<16x384xf32>
      %c3_332 = arith.constant 3 : index
      %c0_333 = arith.constant 0 : index
      %c0_334 = arith.constant 0 : index
      %816 = vector.load %arg4[%c3_332, %c0_333, %c0_334] : memref<4x16x128xf32, #tpu.memory_space<vmem>>, vector<1x16x128xf32>
      %817 = vector.shape_cast %816 : vector<1x16x128xf32> to vector<16x128xf32>
      %818 = arith.truncf %809 : vector<16x128xf32> to vector<16x128xbf16>
      %c0_335 = arith.constant 0 : index
      %c0_336 = arith.constant 0 : index
      %819 = vector.load %arg11[%c0_335, %c0_336] : memref<128x384xbf16, #tpu.memory_space<vmem>>, vector<128x384xbf16>
      %cst_337 = arith.constant dense<0.000000e+00> : vector<16x384xf32>
      %820 = tpu.matmul %818, %819, %cst_337 {dimension_numbers = #tpu.dot_dimension_numbers<[1], [0], [0], [1], [0, 0, 1, 1], [], []>} : vector<16x128xbf16>, vector<128x384xbf16>, vector<16x384xf32> -> vector<16x384xf32>
      %c0_338 = arith.constant 0 : index
      %c0_339 = arith.constant 0 : index
      %821 = vector.load %arg12[%c0_338, %c0_339] : memref<1x384xf32, #tpu.memory_space<vmem>>, vector<1x384xf32>
      %822 = vector.broadcast %821 : vector<1x384xf32> to vector<16x384xf32>
      %823 = arith.addf %820, %822 : vector<16x384xf32>
      %824 = vector.extract_strided_slice %815 {offsets = [0, 0], sizes = [16, 128], strides = [1, 1]} : vector<16x384xf32> to vector<16x128xf32>
      %825 = vector.extract_strided_slice %823 {offsets = [0, 0], sizes = [16, 128], strides = [1, 1]} : vector<16x384xf32> to vector<16x128xf32>
      %826 = arith.addf %824, %825 : vector<16x128xf32>
      %827 = arith.negf %826 : vector<16x128xf32>
      %828 = math.exp %827 : vector<16x128xf32>
      %cst_340 = arith.constant 1.000000e+00 : f32
      %829 = vector.broadcast %cst_340 : f32 to vector<16x128xf32>
      %830 = arith.addf %829, %828 : vector<16x128xf32>
      %831 = arith.divf %829, %830 : vector<16x128xf32>
      %832 = vector.extract_strided_slice %815 {offsets = [0, 128], sizes = [16, 128], strides = [1, 1]} : vector<16x384xf32> to vector<16x128xf32>
      %833 = vector.extract_strided_slice %823 {offsets = [0, 128], sizes = [16, 128], strides = [1, 1]} : vector<16x384xf32> to vector<16x128xf32>
      %834 = arith.addf %832, %833 : vector<16x128xf32>
      %835 = arith.negf %834 : vector<16x128xf32>
      %836 = math.exp %835 : vector<16x128xf32>
      %cst_341 = arith.constant 1.000000e+00 : f32
      %837 = vector.broadcast %cst_341 : f32 to vector<16x128xf32>
      %838 = arith.addf %837, %836 : vector<16x128xf32>
      %839 = arith.divf %837, %838 : vector<16x128xf32>
      %840 = vector.extract_strided_slice %815 {offsets = [0, 256], sizes = [16, 128], strides = [1, 1]} : vector<16x384xf32> to vector<16x128xf32>
      %841 = vector.extract_strided_slice %823 {offsets = [0, 256], sizes = [16, 128], strides = [1, 1]} : vector<16x384xf32> to vector<16x128xf32>
      %842 = arith.mulf %831, %841 : vector<16x128xf32>
      %843 = arith.addf %840, %842 : vector<16x128xf32>
      %844 = math.tanh %843 : vector<16x128xf32>
      %cst_342 = arith.constant 1.000000e+00 : f32
      %845 = vector.broadcast %cst_342 : f32 to vector<16x128xf32>
      %846 = arith.subf %845, %839 : vector<16x128xf32>
      %847 = arith.mulf %846, %844 : vector<16x128xf32>
      %848 = arith.mulf %839, %809 : vector<16x128xf32>
      %849 = arith.addf %847, %848 : vector<16x128xf32>
      %850 = arith.mulf %817, %849 : vector<16x128xf32>
      %cst_343 = arith.constant 1.000000e+00 : f32
      %851 = vector.broadcast %cst_343 : f32 to vector<16x128xf32>
      %852 = arith.subf %851, %817 : vector<16x128xf32>
      %853 = arith.mulf %852, %791 : vector<16x128xf32>
      %854 = arith.addf %850, %853 : vector<16x128xf32>
      scf.yield %854 : vector<16x128xf32>
    }
    %c0_167 = arith.constant 0 : index
    %c0_168 = arith.constant 0 : index
    %426 = vector.load %arg17[%c0_167, %c0_168] : memref<16x128xf32, #tpu.memory_space<vmem>>, vector<16x128xf32>
    tpu.vector_store %arg17[%c0_167, %c0_168], %425 {strides = array<i32>} : memref<16x128xf32, #tpu.memory_space<vmem>>, vector<16x128xf32>,
    return
  }
}

</mosaic_0001>

<llo_original>
// kernel: tpu_custom_call.1
$region0: #{tpu_custom_call.1}
  #allocation0 [shape = 'u32[]', space=smem, size = 0x4, offset = 0x4, fixed_abs, tag = 'smem constant byte address 0x4 - core index']
  #allocation1 [shape = 'u32[144,128]{1,0:T(1,128)}', space=vmem, size = 0x12000, scoped, tag = 'internal scratch']
  %s0 = inlined_call_operand.hbm [shape: f32[16,384], index: 0, kind: input, shape index: {}]
  %s1 = inlined_call_operand.hbm [shape: bf16[4,16,16], index: 1, kind: input, shape index: {}]
  %s2 = inlined_call_operand.hbm [shape: bf16[4,16,16], index: 2, kind: input, shape index: {}]
  %s3 = inlined_call_operand.hbm [shape: f32[4,16,128], index: 3, kind: input, shape index: {}]
  %s4 = inlined_call_operand.hbm [shape: f32[4,16,128], index: 4, kind: input, shape index: {}]
  %s5 = inlined_call_operand.hbm [shape: bf16[128,384], index: 5, kind: input, shape index: {}]
  %s6 = inlined_call_operand.vmem [shape: f32[1,384], index: 6, kind: input, shape index: {}]
  %s7 = inlined_call_operand.hbm [shape: bf16[128,384], index: 7, kind: input, shape index: {}]
  %s8 = inlined_call_operand.vmem [shape: f32[1,384], index: 8, kind: input, shape index: {}]
  %s9 = inlined_call_operand.hbm [shape: bf16[128,384], index: 9, kind: input, shape index: {}]
  %s10 = inlined_call_operand.vmem [shape: f32[1,384], index: 10, kind: input, shape index: {}]
  %s11 = inlined_call_operand.hbm [shape: bf16[128,384], index: 11, kind: input, shape index: {}]
  %s12 = inlined_call_operand.vmem [shape: f32[1,384], index: 12, kind: input, shape index: {}]
  %s13 = inlined_call_operand.hbm [shape: bf16[128,256], index: 13, kind: input, shape index: {}]
  %s14 = inlined_call_operand.vmem [shape: f32[1,128], index: 14, kind: input, shape index: {}]
  %s15 = inlined_call_operand.hbm [shape: bf16[128,256], index: 15, kind: input, shape index: {}]
  %s16 = inlined_call_operand.vmem [shape: f32[1,128], index: 16, kind: input, shape index: {}]
  %s17 = inlined_call_operand.hbm [shape: f32[16,128], index: 17, kind: output, shape index: {}]
  %s18 = sld [smem:[#allocation0]]
  $region129: #{tpu_custom_call.1} parent=0
    _
  %s20 = ssub.s32 1, %s18
  %s21 = scalar_select 0, %s20, %s18
  $region1: #{tpu_custom_call.1} parent=0
    #allocation2 [shape = 'u8[24576]{0}', space=vmem, size = 0x6000, scoped, tag = 'input window, operand 0, single buffered']
    #allocation3 [shape = 's32[1]{0}', space=sflag, size = 0x4, scoped, tag = 'scoped memory for tpu_custom_call.1']
    #allocation4 [shape = 's32[1]{0}', space=sflag, size = 0x4, scoped, tag = 'scoped memory for tpu_custom_call.1']
    #allocation5 [shape = 'u8[16384]{0}', space=vmem, size = 0x4000, scoped, tag = 'input window, operand 1, single buffered']
    #allocation6 [shape = 's32[1]{0}', space=sflag, size = 0x4, scoped, tag = 'scoped memory for tpu_custom_call.1']
    #allocation7 [shape = 'u8[16384]{0}', space=vmem, size = 0x4000, scoped, tag = 'input window, operand 2, single buffered']
    #allocation8 [shape = 'u8[32768]{0}', space=vmem, size = 0x8000, scoped, tag = 'input window, operand 3, single buffered']
    #allocation9 [shape = 's32[1]{0}', space=sflag, size = 0x4, scoped, tag = 'scoped memory for tpu_custom_call.1']
    #allocation10 [shape = 'u8[32768]{0}', space=vmem, size = 0x8000, scoped, tag = 'input window, operand 4, single buffered']
    #allocation11 [shape = 'u8[98304]{0}', space=vmem, size = 0x18000, scoped, tag = 'input window, operand 5, single buffered']
    #allocation12 [shape = 's32[1]{0}', space=sflag, size = 0x4, scoped, tag = 'scoped memory for tpu_custom_call.1']
    #allocation13 [shape = 'u8[98304]{0}', space=vmem, size = 0x18000, scoped, tag = 'input window, operand 7, single buffered']
    #allocation14 [shape = 'u8[98304]{0}', space=vmem, size = 0x18000, scoped, tag = 'input window, operand 9, single buffered']
    #allocation15 [shape = 's32[1]{0}', space=sflag, size = 0x4, scoped, tag = 'scoped memory for tpu_custom_call.1']
    #allocation16 [shape = 'u8[98304]{0}', space=vmem, size = 0x18000, scoped, tag = 'input window, operand 11, single buffered']
    #allocation17 [shape = 'u8[65536]{0}', space=vmem, size = 0x10000, scoped, tag = 'input window, operand 13, single buffered']
    #allocation18 [shape = 's32[1]{0}', space=sflag, size = 0x4, scoped, tag = 'scoped memory for tpu_custom_call.1']
    #allocation19 [shape = 'u8[65536]{0}', space=vmem, size = 0x10000, scoped, tag = 'input window, operand 15, single buffered']
    #allocation20 [shape = 'u8[8192]{0}', space=vmem, size = 0x2000, scoped, tag = 'output window, operand 0, single buffered']
    %22 = vsyncpa [#allocation3], 0
    %23 = vsyncpa [#allocation6], 0
    %24 = vsyncpa [#allocation9], 0
    %25 = vsyncpa [#allocation12], 0
    %26 = vsyncpa [#allocation15], 0
    %27 = vsyncpa [#allocation18], 0
    %28 = vsyncpa [#allocation4], 0
    // Predicated region
    $region2: #{tpu_custom_call.1} parent=1 // pred_check
      _
    $region3: #{tpu_custom_call.1} parent=1 // pred_check_branch
      %30 = sbr.rel (0) target = $region5
    $region4: #{tpu_custom_call.1} parent=1 // pred_region
      %s32 = ssub.s32 768, 768
      %33 = vsyncadd [#allocation3], %s32
      %s34 = sshll.u32 [#allocation2], 4
      %s35 = int_to_ptr.vmem [resolvable:$true] %s34
      %40 = dma.hbm_to_vmem [thread:$0]  %s0, 768, %s35, [#allocation3], 384, 384, 24
    $region5: #{tpu_custom_call.1} parent=1 // pred_fallthru
      _
    // Predicated region
    $region6: #{tpu_custom_call.1} parent=1 // pred_check
      _
    $region7: #{tpu_custom_call.1} parent=1 // pred_check_branch
      %42 = sbr.rel (0) target = $region9
    $region8: #{tpu_custom_call.1} parent=1 // pred_region
      %s44 = ssub.s32 512, 512
      %45 = vsyncadd [#allocation6], %s44
      %s46 = sshll.u32 [#allocation5], 4
      %s47 = int_to_ptr.vmem [resolvable:$true] %s46
      %52 = dma.hbm_to_vmem [thread:$0]  %s1, 512, %s47, [#allocation6], 64, 64, 4
    $region9: #{tpu_custom_call.1} parent=1 // pred_fallthru
      _
    // Predicated region
    $region10: #{tpu_custom_call.1} parent=1 // pred_check
      _
    $region11: #{tpu_custom_call.1} parent=1 // pred_check_branch
      %54 = sbr.rel (0) target = $region13
    $region12: #{tpu_custom_call.1} parent=1 // pred_region
      %s56 = ssub.s32 512, 512
      %57 = vsyncadd [#allocation6], %s56
      %s58 = sshll.u32 [#allocation7], 4
      %s59 = int_to_ptr.vmem [resolvable:$true] %s58
      %64 = dma.hbm_to_vmem [thread:$0]  %s2, 512, %s59, [#allocation6], 64, 64, 4
    $region13: #{tpu_custom_call.1} parent=1 // pred_fallthru
      _
    // Predicated region
    $region14: #{tpu_custom_call.1} parent=1 // pred_check
      _
    $region15: #{tpu_custom_call.1} parent=1 // pred_check_branch
      %66 = sbr.rel (0) target = $region17
    $region16: #{tpu_custom_call.1} parent=1 // pred_region
      %s68 = ssub.s32 1024, 1024
      %69 = vsyncadd [#allocation9], %s68
      %s70 = sshll.u32 [#allocation8], 4
      %s71 = int_to_ptr.vmem [resolvable:$true] %s70
      %76 = dma.hbm_to_vmem [thread:$0]  %s3, 1024, %s71, [#allocation9], 128, 128, 8
    $region17: #{tpu_custom_call.1} parent=1 // pred_fallthru
      _
    // Predicated region
    $region18: #{tpu_custom_call.1} parent=1 // pred_check
      _
    $region19: #{tpu_custom_call.1} parent=1 // pred_check_branch
      %78 = sbr.rel (0) target = $region21
    $region20: #{tpu_custom_call.1} parent=1 // pred_region
      %s80 = ssub.s32 1024, 1024
      %81 = vsyncadd [#allocation9], %s80
      %s82 = sshll.u32 [#allocation10], 4
      %s83 = int_to_ptr.vmem [resolvable:$true] %s82
      %88 = dma.hbm_to_vmem [thread:$0]  %s4, 1024, %s83, [#allocation9], 128, 128, 8
    $region21: #{tpu_custom_call.1} parent=1 // pred_fallthru
      _
    // Predicated region
    $region22: #{tpu_custom_call.1} parent=1 // pred_check
      _
    $region23: #{tpu_custom_call.1} parent=1 // pred_check_branch
      %90 = sbr.rel (0) target = $region25
    $region24: #{tpu_custom_call.1} parent=1 // pred_region
      %s92 = ssub.s32 3072, 3072
      %93 = vsyncadd [#allocation12], %s92
      %s94 = sshll.u32 [#allocation11], 4
      %s95 = int_to_ptr.vmem [resolvable:$true] %s94
      %100 = dma.hbm_to_vmem [thread:$0]  %s5, 3072, %s95, [#allocation12], 192, 192, 12
    $region25: #{tpu_custom_call.1} parent=1 // pred_fallthru
      _
    // Predicated region
    $region26: #{tpu_custom_call.1} parent=1 // pred_check
      _
    $region27: #{tpu_custom_call.1} parent=1 // pred_check_branch
      %102 = sbr.rel (0) target = $region29
    $region28: #{tpu_custom_call.1} parent=1 // pred_region
      _
    $region29: #{tpu_custom_call.1} parent=1 // pred_fallthru
      _
    // Predicated region
    $region30: #{tpu_custom_call.1} parent=1 // pred_check
      _
    $region31: #{tpu_custom_call.1} parent=1 // pred_check_branch
      %104 = sbr.rel (0) target = $region33
    $region32: #{tpu_custom_call.1} parent=1 // pred_region
      %s106 = ssub.s32 3072, 3072
      %107 = vsyncadd [#allocation12], %s106
      %s108 = sshll.u32 [#allocation13], 4
      %s109 = int_to_ptr.vmem [resolvable:$true] %s108
      %114 = dma.hbm_to_vmem [thread:$0]  %s7, 3072, %s109, [#allocation12], 192, 192, 12
    $region33: #{tpu_custom_call.1} parent=1 // pred_fallthru
      _
    // Predicated region
    $region34: #{tpu_custom_call.1} parent=1 // pred_check
      _
    $region35: #{tpu_custom_call.1} parent=1 // pred_check_branch
      %116 = sbr.rel (0) target = $region37
    $region36: #{tpu_custom_call.1} parent=1 // pred_region
      _
    $region37: #{tpu_custom_call.1} parent=1 // pred_fallthru
      _
    // Predicated region
    $region38: #{tpu_custom_call.1} parent=1 // pred_check
      _
    $region39: #{tpu_custom_call.1} parent=1 // pred_check_branch
      %118 = sbr.rel (0) target = $region41
    $region40: #{tpu_custom_call.1} parent=1 // pred_region
      %s120 = ssub.s32 3072, 3072
      %121 = vsyncadd [#allocation15], %s120
      %s122 = sshll.u32 [#allocation14], 4
      %s123 = int_to_ptr.vmem [resolvable:$true] %s122
      %128 = dma.hbm_to_vmem [thread:$0]  %s9, 3072, %s123, [#allocation15], 192, 192, 12
    $region41: #{tpu_custom_call.1} parent=1 // pred_fallthru
      _
    // Predicated region
    $region42: #{tpu_custom_call.1} parent=1 // pred_check
      _
    $region43: #{tpu_custom_call.1} parent=1 // pred_check_branch
      %130 = sbr.rel (0) target = $region45
    $region44: #{tpu_custom_call.1} parent=1 // pred_region
      _
    $region45: #{tpu_custom_call.1} parent=1 // pred_fallthru
      _
    // Predicated region
    $region46: #{tpu_custom_call.1} parent=1 // pred_check
      _
    $region47: #{tpu_custom_call.1} parent=1 // pred_check_branch
      %132 = sbr.rel (0) target = $region49
    $region48: #{tpu_custom_call.1} parent=1 // pred_region
      %s134 = ssub.s32 3072, 3072
      %135 = vsyncadd [#allocation15], %s134
      %s136 = sshll.u32 [#allocation16], 4
      %s137 = int_to_ptr.vmem [resolvable:$true] %s136
      %142 = dma.hbm_to_vmem [thread:$0]  %s11, 3072, %s137, [#allocation15], 192, 192, 12
    $region49: #{tpu_custom_call.1} parent=1 // pred_fallthru
      _
    // Predicated region
    $region50: #{tpu_custom_call.1} parent=1 // pred_check
      _
    $region51: #{tpu_custom_call.1} parent=1 // pred_check_branch
      %144 = sbr.rel (0) target = $region53
    $region52: #{tpu_custom_call.1} parent=1 // pred_region
      _
    $region53: #{tpu_custom_call.1} parent=1 // pred_fallthru
      _
    // Predicated region
    $region54: #{tpu_custom_call.1} parent=1 // pred_check
      _
    $region55: #{tpu_custom_call.1} parent=1 // pred_check_branch
      %146 = sbr.rel (0) target = $region57
    $region56: #{tpu_custom_call.1} parent=1 // pred_region
      %s148 = ssub.s32 2048, 2048
      %149 = vsyncadd [#allocation18], %s148
      %s150 = sshll.u32 [#allocation17], 4
      %s151 = int_to_ptr.vmem [resolvable:$true] %s150
      %156 = dma.hbm_to_vmem [thread:$0]  %s13, 2048, %s151, [#allocation18], 128, 128, 8
    $region57: #{tpu_custom_call.1} parent=1 // pred_fallthru
      _
    // Predicated region
    $region58: #{tpu_custom_call.1} parent=1 // pred_check
      _
    $region59: #{tpu_custom_call.1} parent=1 // pred_check_branch
      %158 = sbr.rel (0) target = $region61
    $region60: #{tpu_custom_call.1} parent=1 // pred_region
      _
    $region61: #{tpu_custom_call.1} parent=1 // pred_fallthru
      _
    // Predicated region
    $region62: #{tpu_custom_call.1} parent=1 // pred_check
      _
    $region63: #{tpu_custom_call.1} parent=1 // pred_check_branch
      %160 = sbr.rel (0) target = $region65
    $region64: #{tpu_custom_call.1} parent=1 // pred_region
      %s162 = ssub.s32 2048, 2048
      %163 = vsyncadd [#allocation18], %s162
      %s164 = sshll.u32 [#allocation19], 4
      %s165 = int_to_ptr.vmem [resolvable:$true] %s164
      %170 = dma.hbm_to_vmem [thread:$0]  %s15, 2048, %s165, [#allocation18], 128, 128, 8
    $region65: #{tpu_custom_call.1} parent=1 // pred_fallthru
      _
    // Predicated region
    $region66: #{tpu_custom_call.1} parent=1 // pred_check
      _
    $region67: #{tpu_custom_call.1} parent=1 // pred_check_branch
      %172 = sbr.rel (0) target = $region69
    $region68: #{tpu_custom_call.1} parent=1 // pred_region
      _
    $region69: #{tpu_custom_call.1} parent=1 // pred_fallthru
      _
    // Predicated region
    $region70: #{tpu_custom_call.1} parent=1 // pred_check
      _
    $region71: #{tpu_custom_call.1} parent=1 // pred_check_branch
      %174 = sbr.rel (0) target = $region73
    $region72: #{tpu_custom_call.1} parent=1 // pred_region
      %175 = dma.done [#allocation3], 768
    $region73: #{tpu_custom_call.1} parent=1 // pred_fallthru
      _
    // Predicated region
    $region74: #{tpu_custom_call.1} parent=1 // pred_check
      _
    $region75: #{tpu_custom_call.1} parent=1 // pred_check_branch
      %177 = sbr.rel (0) target = $region77
    $region76: #{tpu_custom_call.1} parent=1 // pred_region
      %178 = dma.done [#allocation6], 512
    $region77: #{tpu_custom_call.1} parent=1 // pred_fallthru
      _
    // Predicated region
    $region78: #{tpu_custom_call.1} parent=1 // pred_check
      _
    $region79: #{tpu_custom_call.1} parent=1 // pred_check_branch
      %180 = sbr.rel (0) target = $region81
    $region80: #{tpu_custom_call.1} parent=1 // pred_region
      %181 = dma.done [#allocation6], 512
    $region81: #{tpu_custom_call.1} parent=1 // pred_fallthru
      _
    // Predicated region
    $region82: #{tpu_custom_call.1} parent=1 // pred_check
      _
    $region83: #{tpu_custom_call.1} parent=1 // pred_check_branch
      %183 = sbr.rel (0) target = $region85
    $region84: #{tpu_custom_call.1} parent=1 // pred_region
      %184 = dma.done [#allocation9], 1024
    $region85: #{tpu_custom_call.1} parent=1 // pred_fallthru
      _
    // Predicated region
    $region86: #{tpu_custom_call.1} parent=1 // pred_check
      _
    $region87: #{tpu_custom_call.1} parent=1 // pred_check_branch
      %186 = sbr.rel (0) target = $region89
    $region88: #{tpu_custom_call.1} parent=1 // pred_region
      %187 = dma.done [#allocation9], 1024
    $region89: #{tpu_custom_call.1} parent=1 // pred_fallthru
      _
    // Predicated region
    $region90: #{tpu_custom_call.1} parent=1 // pred_check
      _
    $region91: #{tpu_custom_call.1} parent=1 // pred_check_branch
      %189 = sbr.rel (0) target = $region93
    $region92: #{tpu_custom_call.1} parent=1 // pred_region
      %190 = dma.done [#allocation12], 3072
    $region93: #{tpu_custom_call.1} parent=1 // pred_fallthru
      _
    // Predicated region
    $region94: #{tpu_custom_call.1} parent=1 // pred_check
      _
    $region95: #{tpu_custom_call.1} parent=1 // pred_check_branch
      %192 = sbr.rel (0) target = $region97
    $region96: #{tpu_custom_call.1} parent=1 // pred_region
      %193 = dma.done [#allocation12], 3072
    $region97: #{tpu_custom_call.1} parent=1 // pred_fallthru
      _
    // Predicated region
    $region98: #{tpu_custom_call.1} parent=1 // pred_check
      _
    $region99: #{tpu_custom_call.1} parent=1 // pred_check_branch
      %195 = sbr.rel (0) target = $region101
    $region100: #{tpu_custom_call.1} parent=1 // pred_region
      %196 = dma.done [#allocation15], 3072
    $region101: #{tpu_custom_call.1} parent=1 // pred_fallthru
      _
    // Predicated region
    $region102: #{tpu_custom_call.1} parent=1 // pred_check
      _
    $region103: #{tpu_custom_call.1} parent=1 // pred_check_branch
      %198 = sbr.rel (0) target = $region105
    $region104: #{tpu_custom_call.1} parent=1 // pred_region
      %199 = dma.done [#allocation15], 3072
    $region105: #{tpu_custom_call.1} parent=1 // pred_fallthru
      _
    // Predicated region
    $region106: #{tpu_custom_call.1} parent=1 // pred_check
      _
    $region107: #{tpu_custom_call.1} parent=1 // pred_check_branch
      %201 = sbr.rel (0) target = $region109
    $region108: #{tpu_custom_call.1} parent=1 // pred_region
      %202 = dma.done [#allocation18], 2048
    $region109: #{tpu_custom_call.1} parent=1 // pred_fallthru
      _
    // Predicated region
    $region110: #{tpu_custom_call.1} parent=1 // pred_check
      _
    $region111: #{tpu_custom_call.1} parent=1 // pred_check_branch
      %204 = sbr.rel (0) target = $region113
    $region112: #{tpu_custom_call.1} parent=1 // pred_region
      %205 = dma.done [#allocation18], 2048
    $region113: #{tpu_custom_call.1} parent=1 // pred_fallthru
      _
    %v207 = vld [vmem:[#allocation2] sm:$0xff]
    %v208 = vld [vmem:[#allocation2 + $0x8] sm:$0xff]
    %v209 = vld [vmem:[#allocation2 + $0x10] sm:$0xff]
    %v210 = vld [vmem:[#allocation2 + $0x18] sm:$0xff]
    %v211 = vld [vmem:[#allocation2 + $0x20] sm:$0xff]
    %v212 = vld [vmem:[#allocation2 + $0x28] sm:$0xff]
    %v213 = vld [vmem:[#allocation8] sm:$0xff]
    %v214 = vld [vmem:[#allocation8 + $0x8] sm:$0xff]
    %v215 = vxor.u32 %v207, 2147483648
    %v216 = vxor.u32 %v210, 2147483648
    %v217 = vmul.f32 %v215, 1.442695
    %v218 = vpow.pop %v217
    %v219 = vmul.f32 %v216, 1.442695
    %v220 = vpow.pop %v219
    %v221 = vadd.f32 %v218, 1.0
    %v222 = vadd.f32 %v220, 1.0
    %v223 = vrcp.pop %v221
    %v224 = vmul.f32 1.0, %v223
    %v225 = vrcp.pop %v222
    %v226 = vmul.f32 1.0, %v225
    %v227 = vxor.u32 %v208, 2147483648
    %v228 = vxor.u32 %v211, 2147483648
    %v229 = vmul.f32 %v227, 1.442695
    %v230 = vpow.pop %v229
    %v231 = vmul.f32 %v228, 1.442695
    %v232 = vpow.pop %v231
    %v233 = vadd.f32 %v230, 1.0
    %v234 = vadd.f32 %v232, 1.0
    %v235 = vrcp.pop %v233
    %v236 = vmul.f32 1.0, %v235
    %v237 = vrcp.pop %v234
    %v238 = vmul.f32 1.0, %v237
    %v239 = vld [vmem:[%s8 + $0x2] sm:$0x1]
    %v241 = vlaneseq
    %v242 = vshrl.u32 %v241, 7
    %v243 = vsub.s32 0, %v242
    %v244 = vrot.slane %v239, %v243
    %v246 = vmul.f32 %v224, %v244
    %v247 = vmul.f32 %v226, %v244
    %v248 = vadd.f32 %v209, %v246
    %v249 = vadd.f32 %v212, %v247
    %v250 = vtanh.pop %v248
    %v251 = vtanh.pop %v249
    %v252 = vsub.f32 1.0, %v236
    %v253 = vsub.f32 1.0, %v238
    %v254 = vmul.f32 %v252, %v250
    %v255 = vmul.f32 %v253, %v251
    %v256 = vmul.f32 %v213, %v254
    %v257 = vmul.f32 %v214, %v255
    %v258 = vsub.f32 1.0, %v213
    %v259 = vsub.f32 1.0, %v214
    %v260 = vmul.f32 %v258, 0.0
    %v261 = vmul.f32 %v259, 0.0
    %v262 = vadd.f32 %v256, %v260
    %v263 = vadd.f32 %v257, %v261
    %s264 = scalar_lea.vmem [#allocation5], 8
    %v265 = vld [vmem:[%s264] sm:$0xf]
    %v266 = vld [vmem:[%s264 + $0x4] sm:$0xf]
    %v267 = vpack.c.bf16 %v263, %v262
    %v268 = vld [vmem:[#allocation17] sm:$0xff]
    %v269 = vld [vmem:[#allocation17 + $0x8] sm:$0xff]
    %v270 = vld [vmem:[#allocation17 + $0x10] sm:$0xff]
    %v271 = vld [vmem:[#allocation17 + $0x18] sm:$0xff]
    %v272 = vld [vmem:[#allocation17 + $0x20] sm:$0xff]
    %v273 = vld [vmem:[#allocation17 + $0x28] sm:$0xff]
    %v274 = vld [vmem:[#allocation17 + $0x30] sm:$0xff]
    %v275 = vld [vmem:[#allocation17 + $0x38] sm:$0xff]
    %v276 = vld [vmem:[#allocation17 + $0x40] sm:$0xff]
    %v277 = vld [vmem:[#allocation17 + $0x48] sm:$0xff]
    %v278 = vld [vmem:[#allocation17 + $0x50] sm:$0xff]
    %v279 = vld [vmem:[#allocation17 + $0x58] sm:$0xff]
    %v280 = vld [vmem:[#allocation17 + $0x60] sm:$0xff]
    %v281 = vld [vmem:[#allocation17 + $0x68] sm:$0xff]
    %v282 = vld [vmem:[#allocation17 + $0x70] sm:$0xff]
    %v283 = vld [vmem:[#allocation17 + $0x78] sm:$0xff]
    %v300 = vunpack.c.l.b16 %v268
    %v301 = vunpack.c.h.b16 %v268
    %v302 = vunpack.c.l.b16 %v269
    %v303 = vunpack.c.h.b16 %v269
    %v304 = vunpack.c.l.b16 %v270
    %v305 = vunpack.c.h.b16 %v270
    %v306 = vunpack.c.l.b16 %v271
    %v307 = vunpack.c.h.b16 %v271
    %v308 = vunpack.c.l.b16 %v272
    %v309 = vunpack.c.h.b16 %v272
    %v310 = vunpack.c.l.b16 %v273
    %v311 = vunpack.c.h.b16 %v273
    %v312 = vunpack.c.l.b16 %v274
    %v313 = vunpack.c.h.b16 %v274
    %v314 = vunpack.c.l.b16 %v275
    %v315 = vunpack.c.h.b16 %v275
    %v316 = vunpack.c.l.b16 %v276
    %v317 = vunpack.c.h.b16 %v276
    %v318 = vunpack.c.l.b16 %v277
    %v319 = vunpack.c.h.b16 %v277
    %v320 = vunpack.c.l.b16 %v278
    %v321 = vunpack.c.h.b16 %v278
    %v322 = vunpack.c.l.b16 %v279
    %v323 = vunpack.c.h.b16 %v279
    %v324 = vunpack.c.l.b16 %v280
    %v325 = vunpack.c.h.b16 %v280
    %v326 = vunpack.c.l.b16 %v281
    %v327 = vunpack.c.h.b16 %v281
    %v328 = vunpack.c.l.b16 %v282
    %v329 = vunpack.c.h.b16 %v282
    %v330 = vunpack.c.l.b16 %v283
    %v331 = vunpack.c.h.b16 %v283
    %v332 = vpack.c.b16 %v302, %v300
    %v333 = vpack.c.b16 %v303, %v301
    %v334 = vpack.c.b16 %v306, %v304
    %v335 = vpack.c.b16 %v307, %v305
    %v336 = vpack.c.b16 %v310, %v308
    %v337 = vpack.c.b16 %v311, %v309
    %v338 = vpack.c.b16 %v314, %v312
    %v339 = vpack.c.b16 %v315, %v313
    %v340 = vpack.c.b16 %v318, %v316
    %v341 = vpack.c.b16 %v319, %v317
    %v342 = vpack.c.b16 %v322, %v320
    %v343 = vpack.c.b16 %v323, %v321
    %v344 = vpack.c.b16 %v326, %v324
    %v345 = vpack.c.b16 %v327, %v325
    %v346 = vpack.c.b16 %v330, %v328
    %v347 = vpack.c.b16 %v331, %v329
    %364 = vmatprep.subr.bf16.mxu0 %v347
    %365 = vmatpush1.bf16.msra.mxu0 %v346
    %366 = vmatprep.subr.bf16.mxu0 %v345
    %367 = vmatpush1.bf16.msra.mxu0 %v344
    %368 = vmatprep.subr.bf16.mxu0 %v343
    %369 = vmatpush1.bf16.msra.mxu0 %v342
    %370 = vmatprep.subr.bf16.mxu0 %v341
    %371 = vmatpush1.bf16.msra.mxu0 %v340
    %372 = vmatprep.subr.bf16.mxu0 %v339
    %373 = vmatpush1.bf16.msra.mxu0 %v338
    %374 = vmatprep.subr.bf16.mxu0 %v337
    %375 = vmatpush1.bf16.msra.mxu0 %v336
    %376 = vmatprep.subr.bf16.mxu0 %v335
    %377 = vmatpush1.bf16.msra.mxu0 %v334
    %378 = vmatprep.subr.bf16.mxu0 %v333
    %379 = vmatpush1.bf16.msra.mxu0 %v332
    %380 = vmatprep.subr.bf16.mxu0 0
    %381 = vmatpush2.bf16.msra.mxu0 0
    %382 = vmatprep.subr.bf16.mxu0 0
    %383 = vmatpush2.bf16.msra.mxu0 0
    %384 = vmatprep.subr.bf16.mxu0 0
    %385 = vmatpush2.bf16.msra.mxu0 0
    %386 = vmatprep.subr.bf16.mxu0 0
    %387 = vmatpush2.bf16.msra.mxu0 0
    %388 = vmatprep.subr.bf16.mxu0 0
    %389 = vmatpush2.bf16.msra.mxu0 0
    %390 = vmatprep.subr.bf16.mxu0 0
    %391 = vmatpush2.bf16.msra.mxu0 0
    %392 = vmatprep.subr.bf16.mxu0 0
    %393 = vmatpush2.bf16.msra.mxu0 0
    %394 = vmatprep.subr.bf16.mxu0 0
    %395 = vmatpush2.bf16.msra.mxu0 0
    %396 = vmatprep.mubr.bf16.mxu0 0
    %397 = vmatmul.mubr.bf16.gmra.mxu0 %v267
    %v398 = vpop.f32.mrf.mxu0
    %v399 = vadd.f32 0.0, %v398
    %v400 = vpop.f32.mrf.mxu0
    %v401 = vadd.f32 0.0, %v400
    %v402 = vpop.f32.mrf.mxu0
    %v403 = vadd.f32 0.0, %v402
    %v404 = vpop.f32.mrf.mxu0
    %v405 = vadd.f32 0.0, %v404
    %406 = vdwg.mxu0
    %v407 = vld [vmem:[%s14] sm:$0x1]
    %v409 = vlaneseq
    %v410 = vshrl.u32 %v409, 7
    %v411 = vsub.s32 0, %v410
    %v412 = vrot.slane %v407, %v411
    %v414 = vadd.f32 %v399, %v412
    %v415 = vadd.f32 %v403, %v412
    %v416 = vxor.u32 %v414, 2147483648
    %v417 = vxor.u32 %v415, 2147483648
    %v418 = vmul.f32 %v416, 1.442695
    %v419 = vpow.pop %v418
    %v420 = vmul.f32 %v417, 1.442695
    %v421 = vpow.pop %v420
    %v422 = vadd.f32 %v419, 1.0
    %v423 = vadd.f32 %v421, 1.0
    %v424 = vrcp.pop %v422
    %v425 = vmul.f32 1.0, %v424
    %v426 = vrcp.pop %v423
    %v427 = vmul.f32 1.0, %v426
    %v428 = vmul.f32 %v425, %v401
    %v429 = vmul.f32 %v427, %v405
    %v430 = vpack.c.bf16 %v429, %v428
    %v433 = vunpack.c.l.b16 %v265
    %v434 = vunpack.c.l.b16 %v266
    %v435 = vpack.c.b16 %v434, %v433
    %vm436 = vcmask 130048
    %v438 = vsel %vm436, %v435, 0
    %440 = vmatprep.subr.bf16.mxu0 0
    %441 = vmatpush1.bf16.msra.mxu0 0
    %442 = vmatprep.subr.bf16.mxu0 0
    %443 = vmatpush1.bf16.msra.mxu0 0
    %444 = vmatprep.subr.bf16.mxu0 0
    %445 = vmatpush1.bf16.msra.mxu0 0
    %446 = vmatprep.subr.bf16.mxu0 0
    %447 = vmatpush1.bf16.msra.mxu0 0
    %448 = vmatprep.subr.bf16.mxu0 0
    %449 = vmatpush1.bf16.msra.mxu0 0
    %450 = vmatprep.subr.bf16.mxu0 0
    %451 = vmatpush1.bf16.msra.mxu0 0
    %452 = vmatprep.subr.bf16.mxu0 0
    %453 = vmatpush1.bf16.msra.mxu0 0
    %454 = vmatprep.subr.bf16.mxu0 0
    %455 = vmatpush1.bf16.msra.mxu0 %v430
    %456 = vmatprep.subr.bf16.mxu0 0
    %457 = vmatpush2.bf16.msra.mxu0 0
    %458 = vmatprep.subr.bf16.mxu0 0
    %459 = vmatpush2.bf16.msra.mxu0 0
    %460 = vmatprep.subr.bf16.mxu0 0
    %461 = vmatpush2.bf16.msra.mxu0 0
    %462 = vmatprep.subr.bf16.mxu0 0
    %463 = vmatpush2.bf16.msra.mxu0 0
    %464 = vmatprep.subr.bf16.mxu0 0
    %465 = vmatpush2.bf16.msra.mxu0 0
    %466 = vmatprep.subr.bf16.mxu0 0
    %467 = vmatpush2.bf16.msra.mxu0 0
    %468 = vmatprep.subr.bf16.mxu0 0
    %469 = vmatpush2.bf16.msra.mxu0 0
    %470 = vmatprep.subr.bf16.mxu0 0
    %471 = vmatpush2.bf16.msra.mxu0 0
    %472 = vmatprep.mubr.bf16.mxu0 0
    %473 = vmatmul.mubr.bf16.gmra.mxu0 %v438
    %v474 = vpop.f32.mrf.mxu0
    %v475 = vadd.f32 0.0, %v474
    %v476 = vpop.f32.mrf.mxu0
    %v477 = vpop.f32.mrf.mxu0
    %v478 = vadd.f32 0.0, %v477
    %v479 = vpop.f32.mrf.mxu0
    %480 = vdwg.mxu0
    %s481 = scalar_lea.vmem [#allocation8], 16
    %v482 = vld [vmem:[%s481] sm:$0xff]
    %v483 = vld [vmem:[%s481 + $0x8] sm:$0xff]
    %v484 = vpack.c.bf16 %v478, %v475
    %v485 = vld [vmem:[#allocation13] sm:$0xff]
    %v486 = vld [vmem:[#allocation13 + $0x8] sm:$0xf]
    %v487 = vld [vmem:[#allocation13 + $0xc] sm:$0xff]
    %v488 = vld [vmem:[#allocation13 + $0x14] sm:$0xf]
    %v489 = vld [vmem:[#allocation13 + $0x18] sm:$0xff]
    %v490 = vld [vmem:[#allocation13 + $0x20] sm:$0xf]
    %v491 = vld [vmem:[#allocation13 + $0x24] sm:$0xff]
    %v492 = vld [vmem:[#allocation13 + $0x2c] sm:$0xf]
    %v493 = vld [vmem:[#allocation13 + $0x30] sm:$0xff]
    %v494 = vld [vmem:[#allocation13 + $0x38] sm:$0xf]
    %v495 = vld [vmem:[#allocation13 + $0x3c] sm:$0xff]
    %v496 = vld [vmem:[#allocation13 + $0x44] sm:$0xf]
    %v497 = vld [vmem:[#allocation13 + $0x48] sm:$0xff]
    %v498 = vld [vmem:[#allocation13 + $0x50] sm:$0xf]
    %v499 = vld [vmem:[#allocation13 + $0x54] sm:$0xff]
    %v500 = vld [vmem:[#allocation13 + $0x5c] sm:$0xf]
    %v501 = vld [vmem:[#allocation13 + $0x60] sm:$0xff]
    %v502 = vld [vmem:[#allocation13 + $0x68] sm:$0xf]
    %v503 = vld [vmem:[#allocation13 + $0x6c] sm:$0xff]
    %v504 = vld [vmem:[#allocation13 + $0x74] sm:$0xf]
    %v505 = vld [vmem:[#allocation13 + $0x78] sm:$0xff]
    %v506 = vld [vmem:[#allocation13 + $0x80] sm:$0xf]
    %v507 = vld [vmem:[#allocation13 + $0x84] sm:$0xff]
    %v508 = vld [vmem:[#allocation13 + $0x8c] sm:$0xf]
    %v509 = vld [vmem:[#allocation13 + $0x90] sm:$0xff]
    %v510 = vld [vmem:[#allocation13 + $0x98] sm:$0xf]
    %v511 = vld [vmem:[#allocation13 + $0x9c] sm:$0xff]
    %v512 = vld [vmem:[#allocation13 + $0xa4] sm:$0xf]
    %v513 = vld [vmem:[#allocation13 + $0xa8] sm:$0xff]
    %v514 = vld [vmem:[#allocation13 + $0xb0] sm:$0xf]
    %v515 = vld [vmem:[#allocation13 + $0xb4] sm:$0xff]
    %v516 = vld [vmem:[#allocation13 + $0xbc] sm:$0xf]
    %v517 = vld [vmem:[%s8] sm:$0x7]
    %v519 = vlaneseq
    %v520 = vshrl.u32 %v519, 7
    %v521 = vsub.s32 0, %v520
    %v522 = vrot.slane %v517, %v521
    %v523 = vlaneseq
    %v524 = vshrl.u32 %v523, 7
    %v525 = vsub.s32 1, %v524
    %v526 = vrot.slane %v517, %v525
    %v527 = vlaneseq
    %v528 = vshrl.u32 %v527, 7
    %v529 = vsub.s32 2, %v528
    %v530 = vrot.slane %v517, %v529
    %v566 = vunpack.c.l.b16 %v485
    %v567 = vunpack.c.h.b16 %v485
    %v568 = vunpack.c.l.b16 %v486
    %v569 = vunpack.c.l.b16 %v487
    %v570 = vunpack.c.h.b16 %v487
    %v571 = vunpack.c.l.b16 %v488
    %v572 = vunpack.c.l.b16 %v489
    %v573 = vunpack.c.h.b16 %v489
    %v574 = vunpack.c.l.b16 %v490
    %v575 = vunpack.c.l.b16 %v491
    %v576 = vunpack.c.h.b16 %v491
    %v577 = vunpack.c.l.b16 %v492
    %v578 = vunpack.c.l.b16 %v493
    %v579 = vunpack.c.h.b16 %v493
    %v580 = vunpack.c.l.b16 %v494
    %v581 = vunpack.c.l.b16 %v495
    %v582 = vunpack.c.h.b16 %v495
    %v583 = vunpack.c.l.b16 %v496
    %v584 = vunpack.c.l.b16 %v497
    %v585 = vunpack.c.h.b16 %v497
    %v586 = vunpack.c.l.b16 %v498
    %v587 = vunpack.c.l.b16 %v499
    %v588 = vunpack.c.h.b16 %v499
    %v589 = vunpack.c.l.b16 %v500
    %v590 = vunpack.c.l.b16 %v501
    %v591 = vunpack.c.h.b16 %v501
    %v592 = vunpack.c.l.b16 %v502
    %v593 = vunpack.c.l.b16 %v503
    %v594 = vunpack.c.h.b16 %v503
    %v595 = vunpack.c.l.b16 %v504
    %v596 = vunpack.c.l.b16 %v505
    %v597 = vunpack.c.h.b16 %v505
    %v598 = vunpack.c.l.b16 %v506
    %v599 = vunpack.c.l.b16 %v507
    %v600 = vunpack.c.h.b16 %v507
    %v601 = vunpack.c.l.b16 %v508
    %v602 = vunpack.c.l.b16 %v509
    %v603 = vunpack.c.h.b16 %v509
    %v604 = vunpack.c.l.b16 %v510
    %v605 = vunpack.c.l.b16 %v511
    %v606 = vunpack.c.h.b16 %v511
    %v607 = vunpack.c.l.b16 %v512
    %v608 = vunpack.c.l.b16 %v513
    %v609 = vunpack.c.h.b16 %v513
    %v610 = vunpack.c.l.b16 %v514
    %v611 = vunpack.c.l.b16 %v515
    %v612 = vunpack.c.h.b16 %v515
    %v613 = vunpack.c.l.b16 %v516
    %v614 = vpack.c.b16 %v569, %v566
    %v615 = vpack.c.b16 %v570, %v567
    %v616 = vpack.c.b16 %v571, %v568
    %v617 = vpack.c.b16 %v575, %v572
    %v618 = vpack.c.b16 %v576, %v573
    %v619 = vpack.c.b16 %v577, %v574
    %v620 = vpack.c.b16 %v581, %v578
    %v621 = vpack.c.b16 %v582, %v579
    %v622 = vpack.c.b16 %v583, %v580
    %v623 = vpack.c.b16 %v587, %v584
    %v624 = vpack.c.b16 %v588, %v585
    %v625 = vpack.c.b16 %v589, %v586
    %v626 = vpack.c.b16 %v593, %v590
    %v627 = vpack.c.b16 %v594, %v591
    %v628 = vpack.c.b16 %v595, %v592
    %v629 = vpack.c.b16 %v599, %v596
    %v630 = vpack.c.b16 %v600, %v597
    %v631 = vpack.c.b16 %v601, %v598
    %v632 = vpack.c.b16 %v605, %v602
    %v633 = vpack.c.b16 %v606, %v603
    %v634 = vpack.c.b16 %v607, %v604
    %v635 = vpack.c.b16 %v611, %v608
    %v636 = vpack.c.b16 %v612, %v609
    %v637 = vpack.c.b16 %v613, %v610
    %662 = vmatprep.subr.bf16.mxu0 %v636
    %663 = vmatpush1.bf16.msra.mxu0 %v635
    %664 = vmatprep.subr.bf16.mxu0 %v633
    %665 = vmatpush1.bf16.msra.mxu0 %v632
    %666 = vmatprep.subr.bf16.mxu0 %v630
    %667 = vmatpush1.bf16.msra.mxu0 %v629
    %668 = vmatprep.subr.bf16.mxu0 %v627
    %669 = vmatpush1.bf16.msra.mxu0 %v626
    %670 = vmatprep.subr.bf16.mxu0 %v624
    %671 = vmatpush1.bf16.msra.mxu0 %v623
    %672 = vmatprep.subr.bf16.mxu0 %v621
    %673 = vmatpush1.bf16.msra.mxu0 %v620
    %674 = vmatprep.subr.bf16.mxu0 %v618
    %675 = vmatpush1.bf16.msra.mxu0 %v617
    %676 = vmatprep.subr.bf16.mxu0 %v615
    %677 = vmatpush1.bf16.msra.mxu0 %v614
    %678 = vmatprep.subr.bf16.mxu0 0
    %679 = vmatpush2.bf16.msra.mxu0 0
    %680 = vmatprep.subr.bf16.mxu0 0
    %681 = vmatpush2.bf16.msra.mxu0 0
    %682 = vmatprep.subr.bf16.mxu0 0
    %683 = vmatpush2.bf16.msra.mxu0 0
    %684 = vmatprep.subr.bf16.mxu0 0
    %685 = vmatpush2.bf16.msra.mxu0 0
    %686 = vmatprep.subr.bf16.mxu0 0
    %687 = vmatpush2.bf16.msra.mxu0 0
    %688 = vmatprep.subr.bf16.mxu0 0
    %689 = vmatpush2.bf16.msra.mxu0 0
    %690 = vmatprep.subr.bf16.mxu0 0
    %691 = vmatpush2.bf16.msra.mxu0 0
    %692 = vmatprep.subr.bf16.mxu0 0
    %693 = vmatpush2.bf16.msra.mxu0 0
    %694 = vmatprep.mubr.bf16.mxu0 0
    %695 = vmatmul.mubr.bf16.gmra.mxu0 %v484
    %v696 = vpop.f32.mrf.mxu0
    %v697 = vadd.f32 %v522, %v696
    %v698 = vpop.f32.mrf.mxu0
    %v699 = vadd.f32 %v526, %v698
    %v700 = vpop.f32.mrf.mxu0
    %v701 = vadd.f32 %v522, %v700
    %v702 = vpop.f32.mrf.mxu0
    %v703 = vadd.f32 %v526, %v702
    %704 = vdwg.mxu0
    %705 = vmatprep.subr.bf16.mxu0 0
    %706 = vmatpush1.bf16.msra.mxu0 %v637
    %707 = vmatprep.subr.bf16.mxu0 0
    %708 = vmatpush1.bf16.msra.mxu0 %v634
    %709 = vmatprep.subr.bf16.mxu0 0
    %710 = vmatpush1.bf16.msra.mxu0 %v631
    %711 = vmatprep.subr.bf16.mxu0 0
    %712 = vmatpush1.bf16.msra.mxu0 %v628
    %713 = vmatprep.subr.bf16.mxu0 0
    %714 = vmatpush1.bf16.msra.mxu0 %v625
    %715 = vmatprep.subr.bf16.mxu0 0
    %716 = vmatpush1.bf16.msra.mxu0 %v622
    %717 = vmatprep.subr.bf16.mxu0 0
    %718 = vmatpush1.bf16.msra.mxu0 %v619
    %719 = vmatprep.subr.bf16.mxu0 0
    %720 = vmatpush1.bf16.msra.mxu0 %v616
    %721 = vmatprep.subr.bf16.mxu0 0
    %722 = vmatpush2.bf16.msra.mxu0 0
    %723 = vmatprep.subr.bf16.mxu0 0
    %724 = vmatpush2.bf16.msra.mxu0 0
    %725 = vmatprep.subr.bf16.mxu0 0
    %726 = vmatpush2.bf16.msra.mxu0 0
    %727 = vmatprep.subr.bf16.mxu0 0
    %728 = vmatpush2.bf16.msra.mxu0 0
    %729 = vmatprep.subr.bf16.mxu0 0
    %730 = vmatpush2.bf16.msra.mxu0 0
    %731 = vmatprep.subr.bf16.mxu0 0
    %732 = vmatpush2.bf16.msra.mxu0 0
    %733 = vmatprep.subr.bf16.mxu0 0
    %734 = vmatpush2.bf16.msra.mxu0 0
    %735 = vmatprep.subr.bf16.mxu0 0
    %736 = vmatpush2.bf16.msra.mxu0 0
    %737 = vmatprep.mubr.bf16.mxu0 0
    %738 = vmatmul.mubr.bf16.gmra.mxu0 %v484
    %v739 = vpop.f32.mrf.mxu0
    %v740 = vadd.f32 %v530, %v739
    %v741 = vpop.f32.mrf.mxu0
    %v742 = vpop.f32.mrf.mxu0
    %v743 = vadd.f32 %v530, %v742
    %v744 = vpop.f32.mrf.mxu0
    %745 = vdwg.mxu0
    %v746 = vadd.f32 %v207, %v697
    %v747 = vadd.f32 %v210, %v701
    %v748 = vxor.u32 %v746, 2147483648
    %v749 = vxor.u32 %v747, 2147483648
    %v750 = vmul.f32 %v748, 1.442695
    %v751 = vpow.pop %v750
    %v752 = vmul.f32 %v749, 1.442695
    %v753 = vpow.pop %v752
    %v754 = vadd.f32 %v751, 1.0
    %v755 = vadd.f32 %v753, 1.0
    %v756 = vrcp.pop %v754
    %v757 = vmul.f32 1.0, %v756
    %v758 = vrcp.pop %v755
    %v759 = vmul.f32 1.0, %v758
    %v760 = vadd.f32 %v208, %v699
    %v761 = vadd.f32 %v211, %v703
    %v762 = vxor.u32 %v760, 2147483648
    %v763 = vxor.u32 %v761, 2147483648
    %v764 = vmul.f32 %v762, 1.442695
    %v765 = vpow.pop %v764
    %v766 = vmul.f32 %v763, 1.442695
    %v767 = vpow.pop %v766
    %v768 = vadd.f32 %v765, 1.0
    %v769 = vadd.f32 %v767, 1.0
    %v770 = vrcp.pop %v768
    %v771 = vmul.f32 1.0, %v770
    %v772 = vrcp.pop %v769
    %v773 = vmul.f32 1.0, %v772
    %v774 = vmul.f32 %v757, %v740
    %v775 = vmul.f32 %v759, %v743
    %v776 = vadd.f32 %v209, %v774
    %v777 = vadd.f32 %v212, %v775
    %v778 = vtanh.pop %v776
    %v779 = vtanh.pop %v777
    %v780 = vsub.f32 1.0, %v771
    %v781 = vsub.f32 1.0, %v773
    %v782 = vmul.f32 %v780, %v778
    %v783 = vmul.f32 %v781, %v779
    %v784 = vmul.f32 %v771, %v475
    %v785 = vmul.f32 %v773, %v478
    %v786 = vadd.f32 %v782, %v784
    %v787 = vadd.f32 %v783, %v785
    %v788 = vmul.f32 %v482, %v786
    %v789 = vmul.f32 %v483, %v787
    %v790 = vsub.f32 1.0, %v482
    %v791 = vsub.f32 1.0, %v483
    %v792 = vmul.f32 %v790, %v262
    %v793 = vmul.f32 %v791, %v263
    %v794 = vadd.f32 %v788, %v792
    %v795 = vadd.f32 %v789, %v793
    %s796 = scalar_lea.vmem [#allocation5], 16
    %v797 = vld [vmem:[%s796] sm:$0xf]
    %v798 = vld [vmem:[%s796 + $0x4] sm:$0xf]
    %v799 = vpack.c.bf16 %v795, %v794
    %800 = vmatprep.subr.bf16.mxu0 %v347
    %801 = vmatpush1.bf16.msra.mxu0 %v346
    %802 = vmatprep.subr.bf16.mxu0 %v345
    %803 = vmatpush1.bf16.msra.mxu0 %v344
    %804 = vmatprep.subr.bf16.mxu0 %v343
    %805 = vmatpush1.bf16.msra.mxu0 %v342
    %806 = vmatprep.subr.bf16.mxu0 %v341
    %807 = vmatpush1.bf16.msra.mxu0 %v340
    %808 = vmatprep.subr.bf16.mxu0 %v339
    %809 = vmatpush1.bf16.msra.mxu0 %v338
    %810 = vmatprep.subr.bf16.mxu0 %v337
    %811 = vmatpush1.bf16.msra.mxu0 %v336
    %812 = vmatprep.subr.bf16.mxu0 %v335
    %813 = vmatpush1.bf16.msra.mxu0 %v334
    %814 = vmatprep.subr.bf16.mxu0 %v333
    %815 = vmatpush1.bf16.msra.mxu0 %v332
    %816 = vmatprep.subr.bf16.mxu0 0
    %817 = vmatpush2.bf16.msra.mxu0 0
    %818 = vmatprep.subr.bf16.mxu0 0
    %819 = vmatpush2.bf16.msra.mxu0 0
    %820 = vmatprep.subr.bf16.mxu0 0
    %821 = vmatpush2.bf16.msra.mxu0 0
    %822 = vmatprep.subr.bf16.mxu0 0
    %823 = vmatpush2.bf16.msra.mxu0 0
    %824 = vmatprep.subr.bf16.mxu0 0
    %825 = vmatpush2.bf16.msra.mxu0 0
    %826 = vmatprep.subr.bf16.mxu0 0
    %827 = vmatpush2.bf16.msra.mxu0 0
    %828 = vmatprep.subr.bf16.mxu0 0
    %829 = vmatpush2.bf16.msra.mxu0 0
    %830 = vmatprep.subr.bf16.mxu0 0
    %831 = vmatpush2.bf16.msra.mxu0 0
    %832 = vmatprep.mubr.bf16.mxu0 0
    %833 = vmatmul.mubr.bf16.gmra.mxu0 %v799
    %v834 = vpop.f32.mrf.mxu0
    %v835 = vadd.f32 0.0, %v834
    %v836 = vpop.f32.mrf.mxu0
    %v837 = vadd.f32 0.0, %v836
    %v838 = vpop.f32.mrf.mxu0
    %v839 = vadd.f32 0.0, %v838
    %v840 = vpop.f32.mrf.mxu0
    %v841 = vadd.f32 0.0, %v840
    %842 = vdwg.mxu0
    %v843 = vadd.f32 %v835, %v412
    %v844 = vadd.f32 %v839, %v412
    %v845 = vxor.u32 %v843, 2147483648
    %v846 = vxor.u32 %v844, 2147483648
    %v847 = vmul.f32 %v845, 1.442695
    %v848 = vpow.pop %v847
    %v849 = vmul.f32 %v846, 1.442695
    %v850 = vpow.pop %v849
    %v851 = vadd.f32 %v848, 1.0
    %v852 = vadd.f32 %v850, 1.0
    %v853 = vrcp.pop %v851
    %v854 = vmul.f32 1.0, %v853
    %v855 = vrcp.pop %v852
    %v856 = vmul.f32 1.0, %v855
    %v857 = vmul.f32 %v854, %v837
    %v858 = vmul.f32 %v856, %v841
    %v859 = vpack.c.bf16 %v858, %v857
    %v862 = vunpack.c.l.b16 %v797
    %v863 = vunpack.c.l.b16 %v798
    %v864 = vpack.c.b16 %v863, %v862
    %v866 = vsel %vm436, %v864, 0
    %868 = vmatprep.subr.bf16.mxu0 0
    %869 = vmatpush1.bf16.msra.mxu0 0
    %870 = vmatprep.subr.bf16.mxu0 0
    %871 = vmatpush1.bf16.msra.mxu0 0
    %872 = vmatprep.subr.bf16.mxu0 0
    %873 = vmatpush1.bf16.msra.mxu0 0
    %874 = vmatprep.subr.bf16.mxu0 0
    %875 = vmatpush1.bf16.msra.mxu0 0
    %876 = vmatprep.subr.bf16.mxu0 0
    %877 = vmatpush1.bf16.msra.mxu0 0
    %878 = vmatprep.subr.bf16.mxu0 0
    %879 = vmatpush1.bf16.msra.mxu0 0
    %880 = vmatprep.subr.bf16.mxu0 0
    %881 = vmatpush1.bf16.msra.mxu0 0
    %882 = vmatprep.subr.bf16.mxu0 0
    %883 = vmatpush1.bf16.msra.mxu0 %v859
    %884 = vmatprep.subr.bf16.mxu0 0
    %885 = vmatpush2.bf16.msra.mxu0 0
    %886 = vmatprep.subr.bf16.mxu0 0
    %887 = vmatpush2.bf16.msra.mxu0 0
    %888 = vmatprep.subr.bf16.mxu0 0
    %889 = vmatpush2.bf16.msra.mxu0 0
    %890 = vmatprep.subr.bf16.mxu0 0
    %891 = vmatpush2.bf16.msra.mxu0 0
    %892 = vmatprep.subr.bf16.mxu0 0
    %893 = vmatpush2.bf16.msra.mxu0 0
    %894 = vmatprep.subr.bf16.mxu0 0
    %895 = vmatpush2.bf16.msra.mxu0 0
    %896 = vmatprep.subr.bf16.mxu0 0
    %897 = vmatpush2.bf16.msra.mxu0 0
    %898 = vmatprep.subr.bf16.mxu0 0
    %899 = vmatpush2.bf16.msra.mxu0 0
    %900 = vmatprep.mubr.bf16.mxu0 0
    %901 = vmatmul.mubr.bf16.gmra.mxu0 %v866
    %v902 = vpop.f32.mrf.mxu0
    %v903 = vadd.f32 0.0, %v902
    %v904 = vpop.f32.mrf.mxu0
    %v905 = vpop.f32.mrf.mxu0
    %v906 = vadd.f32 0.0, %v905
    %v907 = vpop.f32.mrf.mxu0
    %908 = vdwg.mxu0
    %s909 = scalar_lea.vmem [#allocation8], 32
    %v910 = vld [vmem:[%s909] sm:$0xff]
    %v911 = vld [vmem:[%s909 + $0x8] sm:$0xff]
    %v912 = vpack.c.bf16 %v906, %v903
    %913 = vmatprep.subr.bf16.mxu0 %v636
    %914 = vmatpush1.bf16.msra.mxu0 %v635
    %915 = vmatprep.subr.bf16.mxu0 %v633
    %916 = vmatpush1.bf16.msra.mxu0 %v632
    %917 = vmatprep.subr.bf16.mxu0 %v630
    %918 = vmatpush1.bf16.msra.mxu0 %v629
    %919 = vmatprep.subr.bf16.mxu0 %v627
    %920 = vmatpush1.bf16.msra.mxu0 %v626
    %921 = vmatprep.subr.bf16.mxu0 %v624
    %922 = vmatpush1.bf16.msra.mxu0 %v623
    %923 = vmatprep.subr.bf16.mxu0 %v621
    %924 = vmatpush1.bf16.msra.mxu0 %v620
    %925 = vmatprep.subr.bf16.mxu0 %v618
    %926 = vmatpush1.bf16.msra.mxu0 %v617
    %927 = vmatprep.subr.bf16.mxu0 %v615
    %928 = vmatpush1.bf16.msra.mxu0 %v614
    %929 = vmatprep.subr.bf16.mxu0 0
    %930 = vmatpush2.bf16.msra.mxu0 0
    %931 = vmatprep.subr.bf16.mxu0 0
    %932 = vmatpush2.bf16.msra.mxu0 0
    %933 = vmatprep.subr.bf16.mxu0 0
    %934 = vmatpush2.bf16.msra.mxu0 0
    %935 = vmatprep.subr.bf16.mxu0 0
    %936 = vmatpush2.bf16.msra.mxu0 0
    %937 = vmatprep.subr.bf16.mxu0 0
    %938 = vmatpush2.bf16.msra.mxu0 0
    %939 = vmatprep.subr.bf16.mxu0 0
    %940 = vmatpush2.bf16.msra.mxu0 0
    %941 = vmatprep.subr.bf16.mxu0 0
    %942 = vmatpush2.bf16.msra.mxu0 0
    %943 = vmatprep.subr.bf16.mxu0 0
    %944 = vmatpush2.bf16.msra.mxu0 0
    %945 = vmatprep.mubr.bf16.mxu0 0
    %946 = vmatmul.mubr.bf16.gmra.mxu0 %v912
    %v947 = vpop.f32.mrf.mxu0
    %v948 = vadd.f32 %v522, %v947
    %v949 = vpop.f32.mrf.mxu0
    %v950 = vadd.f32 %v526, %v949
    %v951 = vpop.f32.mrf.mxu0
    %v952 = vadd.f32 %v522, %v951
    %v953 = vpop.f32.mrf.mxu0
    %v954 = vadd.f32 %v526, %v953
    %955 = vdwg.mxu0
    %956 = vmatprep.subr.bf16.mxu0 0
    %957 = vmatpush1.bf16.msra.mxu0 %v637
    %958 = vmatprep.subr.bf16.mxu0 0
    %959 = vmatpush1.bf16.msra.mxu0 %v634
    %960 = vmatprep.subr.bf16.mxu0 0
    %961 = vmatpush1.bf16.msra.mxu0 %v631
    %962 = vmatprep.subr.bf16.mxu0 0
    %963 = vmatpush1.bf16.msra.mxu0 %v628
    %964 = vmatprep.subr.bf16.mxu0 0
    %965 = vmatpush1.bf16.msra.mxu0 %v625
    %966 = vmatprep.subr.bf16.mxu0 0
    %967 = vmatpush1.bf16.msra.mxu0 %v622
    %968 = vmatprep.subr.bf16.mxu0 0
    %969 = vmatpush1.bf16.msra.mxu0 %v619
    %970 = vmatprep.subr.bf16.mxu0 0
    %971 = vmatpush1.bf16.msra.mxu0 %v616
    %972 = vmatprep.subr.bf16.mxu0 0
    %973 = vmatpush2.bf16.msra.mxu0 0
    %974 = vmatprep.subr.bf16.mxu0 0
    %975 = vmatpush2.bf16.msra.mxu0 0
    %976 = vmatprep.subr.bf16.mxu0 0
    %977 = vmatpush2.bf16.msra.mxu0 0
    %978 = vmatprep.subr.bf16.mxu0 0
    %979 = vmatpush2.bf16.msra.mxu0 0
    %980 = vmatprep.subr.bf16.mxu0 0
    %981 = vmatpush2.bf16.msra.mxu0 0
    %982 = vmatprep.subr.bf16.mxu0 0
    %983 = vmatpush2.bf16.msra.mxu0 0
    %984 = vmatprep.subr.bf16.mxu0 0
    %985 = vmatpush2.bf16.msra.mxu0 0
    %986 = vmatprep.subr.bf16.mxu0 0
    %987 = vmatpush2.bf16.msra.mxu0 0
    %988 = vmatprep.mubr.bf16.mxu0 0
    %989 = vmatmul.mubr.bf16.gmra.mxu0 %v912
    %v990 = vpop.f32.mrf.mxu0
    %v991 = vadd.f32 %v530, %v990
    %v992 = vpop.f32.mrf.mxu0
    %v993 = vpop.f32.mrf.mxu0
    %v994 = vadd.f32 %v530, %v993
    %v995 = vpop.f32.mrf.mxu0
    %996 = vdwg.mxu0
    %v997 = vadd.f32 %v207, %v948
    %v998 = vadd.f32 %v210, %v952
    %v999 = vxor.u32 %v997, 2147483648
    %v1000 = vxor.u32 %v998, 2147483648
    %v1001 = vmul.f32 %v999, 1.442695
    %v1002 = vpow.pop %v1001
    %v1003 = vmul.f32 %v1000, 1.442695
    %v1004 = vpow.pop %v1003
    %v1005 = vadd.f32 %v1002, 1.0
    %v1006 = vadd.f32 %v1004, 1.0
    %v1007 = vrcp.pop %v1005
    %v1008 = vmul.f32 1.0, %v1007
    %v1009 = vrcp.pop %v1006
    %v1010 = vmul.f32 1.0, %v1009
    %v1011 = vadd.f32 %v208, %v950
    %v1012 = vadd.f32 %v211, %v954
    %v1013 = vxor.u32 %v1011, 2147483648
    %v1014 = vxor.u32 %v1012, 2147483648
    %v1015 = vmul.f32 %v1013, 1.442695
    %v1016 = vpow.pop %v1015
    %v1017 = vmul.f32 %v1014, 1.442695
    %v1018 = vpow.pop %v1017
    %v1019 = vadd.f32 %v1016, 1.0
    %v1020 = vadd.f32 %v1018, 1.0
    %v1021 = vrcp.pop %v1019
    %v1022 = vmul.f32 1.0, %v1021
    %v1023 = vrcp.pop %v1020
    %v1024 = vmul.f32 1.0, %v1023
    %v1025 = vmul.f32 %v1008, %v991
    %v1026 = vmul.f32 %v1010, %v994
    %v1027 = vadd.f32 %v209, %v1025
    %v1028 = vadd.f32 %v212, %v1026
    %v1029 = vtanh.pop %v1027
    %v1030 = vtanh.pop %v1028
    %v1031 = vsub.f32 1.0, %v1022
    %v1032 = vsub.f32 1.0, %v1024
    %v1033 = vmul.f32 %v1031, %v1029
    %v1034 = vmul.f32 %v1032, %v1030
    %v1035 = vmul.f32 %v1022, %v903
    %v1036 = vmul.f32 %v1024, %v906
    %v1037 = vadd.f32 %v1033, %v1035
    %v1038 = vadd.f32 %v1034, %v1036
    %v1039 = vmul.f32 %v910, %v1037
    %v1040 = vmul.f32 %v911, %v1038
    %v1041 = vsub.f32 1.0, %v910
    %v1042 = vsub.f32 1.0, %v911
    %v1043 = vmul.f32 %v1041, %v794
    %v1044 = vmul.f32 %v1042, %v795
    %v1045 = vadd.f32 %v1039, %v1043
    %v1046 = vadd.f32 %v1040, %v1044
    %s1047 = scalar_lea.vmem [#allocation5], 24
    %v1048 = vld [vmem:[%s1047] sm:$0xf]
    %v1049 = vld [vmem:[%s1047 + $0x4] sm:$0xf]
    %v1050 = vpack.c.bf16 %v1046, %v1045
    %1051 = vmatprep.subr.bf16.mxu0 %v347
    %1052 = vmatpush1.bf16.msra.mxu0 %v346
    %1053 = vmatprep.subr.bf16.mxu0 %v345
    %1054 = vmatpush1.bf16.msra.mxu0 %v344
    %1055 = vmatprep.subr.bf16.mxu0 %v343
    %1056 = vmatpush1.bf16.msra.mxu0 %v342
    %1057 = vmatprep.subr.bf16.mxu0 %v341
    %1058 = vmatpush1.bf16.msra.mxu0 %v340
    %1059 = vmatprep.subr.bf16.mxu0 %v339
    %1060 = vmatpush1.bf16.msra.mxu0 %v338
    %1061 = vmatprep.subr.bf16.mxu0 %v337
    %1062 = vmatpush1.bf16.msra.mxu0 %v336
    %1063 = vmatprep.subr.bf16.mxu0 %v335
    %1064 = vmatpush1.bf16.msra.mxu0 %v334
    %1065 = vmatprep.subr.bf16.mxu0 %v333
    %1066 = vmatpush1.bf16.msra.mxu0 %v332
    %1067 = vmatprep.subr.bf16.mxu0 0
    %1068 = vmatpush2.bf16.msra.mxu0 0
    %1069 = vmatprep.subr.bf16.mxu0 0
    %1070 = vmatpush2.bf16.msra.mxu0 0
    %1071 = vmatprep.subr.bf16.mxu0 0
    %1072 = vmatpush2.bf16.msra.mxu0 0
    %1073 = vmatprep.subr.bf16.mxu0 0
    %1074 = vmatpush2.bf16.msra.mxu0 0
    %1075 = vmatprep.subr.bf16.mxu0 0
    %1076 = vmatpush2.bf16.msra.mxu0 0
    %1077 = vmatprep.subr.bf16.mxu0 0
    %1078 = vmatpush2.bf16.msra.mxu0 0
    %1079 = vmatprep.subr.bf16.mxu0 0
    %1080 = vmatpush2.bf16.msra.mxu0 0
    %1081 = vmatprep.subr.bf16.mxu0 0
    %1082 = vmatpush2.bf16.msra.mxu0 0
    %1083 = vmatprep.mubr.bf16.mxu0 0
    %1084 = vmatmul.mubr.bf16.gmra.mxu0 %v1050
    %v1085 = vpop.f32.mrf.mxu0
    %v1086 = vadd.f32 0.0, %v1085
    %v1087 = vpop.f32.mrf.mxu0
    %v1088 = vadd.f32 0.0, %v1087
    %v1089 = vpop.f32.mrf.mxu0
    %v1090 = vadd.f32 0.0, %v1089
    %v1091 = vpop.f32.mrf.mxu0
    %v1092 = vadd.f32 0.0, %v1091
    %1093 = vdwg.mxu0
    %v1094 = vadd.f32 %v1086, %v412
    %v1095 = vadd.f32 %v1090, %v412
    %v1096 = vxor.u32 %v1094, 2147483648
    %v1097 = vxor.u32 %v1095, 2147483648
    %v1098 = vmul.f32 %v1096, 1.442695
    %v1099 = vpow.pop %v1098
    %v1100 = vmul.f32 %v1097, 1.442695
    %v1101 = vpow.pop %v1100
    %v1102 = vadd.f32 %v1099, 1.0
    %v1103 = vadd.f32 %v1101, 1.0
    %v1104 = vrcp.pop %v1102
    %v1105 = vmul.f32 1.0, %v1104
    %v1106 = vrcp.pop %v1103
    %v1107 = vmul.f32 1.0, %v1106
    %v1108 = vmul.f32 %v1105, %v1088
    %v1109 = vmul.f32 %v1107, %v1092
    %v1110 = vpack.c.bf16 %v1109, %v1108
    %v1113 = vunpack.c.l.b16 %v1048
    %v1114 = vunpack.c.l.b16 %v1049
    %v1115 = vpack.c.b16 %v1114, %v1113
    %v1117 = vsel %vm436, %v1115, 0
    %1119 = vmatprep.subr.bf16.mxu0 0
    %1120 = vmatpush1.bf16.msra.mxu0 0
    %1121 = vmatprep.subr.bf16.mxu0 0
    %1122 = vmatpush1.bf16.msra.mxu0 0
    %1123 = vmatprep.subr.bf16.mxu0 0
    %1124 = vmatpush1.bf16.msra.mxu0 0
    %1125 = vmatprep.subr.bf16.mxu0 0
    %1126 = vmatpush1.bf16.msra.mxu0 0
    %1127 = vmatprep.subr.bf16.mxu0 0
    %1128 = vmatpush1.bf16.msra.mxu0 0
    %1129 = vmatprep.subr.bf16.mxu0 0
    %1130 = vmatpush1.bf16.msra.mxu0 0
    %1131 = vmatprep.subr.bf16.mxu0 0
    %1132 = vmatpush1.bf16.msra.mxu0 0
    %1133 = vmatprep.subr.bf16.mxu0 0
    %1134 = vmatpush1.bf16.msra.mxu0 %v1110
    %1135 = vmatprep.subr.bf16.mxu0 0
    %1136 = vmatpush2.bf16.msra.mxu0 0
    %1137 = vmatprep.subr.bf16.mxu0 0
    %1138 = vmatpush2.bf16.msra.mxu0 0
    %1139 = vmatprep.subr.bf16.mxu0 0
    %1140 = vmatpush2.bf16.msra.mxu0 0
    %1141 = vmatprep.subr.bf16.mxu0 0
    %1142 = vmatpush2.bf16.msra.mxu0 0
    %1143 = vmatprep.subr.bf16.mxu0 0
    %1144 = vmatpush2.bf16.msra.mxu0 0
    %1145 = vmatprep.subr.bf16.mxu0 0
    %1146 = vmatpush2.bf16.msra.mxu0 0
    %1147 = vmatprep.subr.bf16.mxu0 0
    %1148 = vmatpush2.bf16.msra.mxu0 0
    %1149 = vmatprep.subr.bf16.mxu0 0
    %1150 = vmatpush2.bf16.msra.mxu0 0
    %1151 = vmatprep.mubr.bf16.mxu0 0
    %1152 = vmatmul.mubr.bf16.gmra.mxu0 %v1117
    %v1153 = vpop.f32.mrf.mxu0
    %v1154 = vadd.f32 0.0, %v1153
    %v1155 = vpop.f32.mrf.mxu0
    %v1156 = vpop.f32.mrf.mxu0
    %v1157 = vadd.f32 0.0, %v1156
    %v1158 = vpop.f32.mrf.mxu0
    %1159 = vdwg.mxu0
    %s1160 = scalar_lea.vmem [#allocation8], 48
    %v1161 = vld [vmem:[%s1160] sm:$0xff]
    %v1162 = vld [vmem:[%s1160 + $0x8] sm:$0xff]
    %v1163 = vpack.c.bf16 %v1157, %v1154
    %1164 = vmatprep.subr.bf16.mxu0 %v636
    %1165 = vmatpush1.bf16.msra.mxu0 %v635
    %1166 = vmatprep.subr.bf16.mxu0 %v633
    %1167 = vmatpush1.bf16.msra.mxu0 %v632
    %1168 = vmatprep.subr.bf16.mxu0 %v630
    %1169 = vmatpush1.bf16.msra.mxu0 %v629
    %1170 = vmatprep.subr.bf16.mxu0 %v627
    %1171 = vmatpush1.bf16.msra.mxu0 %v626
    %1172 = vmatprep.subr.bf16.mxu0 %v624
    %1173 = vmatpush1.bf16.msra.mxu0 %v623
    %1174 = vmatprep.subr.bf16.mxu0 %v621
    %1175 = vmatpush1.bf16.msra.mxu0 %v620
    %1176 = vmatprep.subr.bf16.mxu0 %v618
    %1177 = vmatpush1.bf16.msra.mxu0 %v617
    %1178 = vmatprep.subr.bf16.mxu0 %v615
    %1179 = vmatpush1.bf16.msra.mxu0 %v614
    %1180 = vmatprep.subr.bf16.mxu0 0
    %1181 = vmatpush2.bf16.msra.mxu0 0
    %1182 = vmatprep.subr.bf16.mxu0 0
    %1183 = vmatpush2.bf16.msra.mxu0 0
    %1184 = vmatprep.subr.bf16.mxu0 0
    %1185 = vmatpush2.bf16.msra.mxu0 0
    %1186 = vmatprep.subr.bf16.mxu0 0
    %1187 = vmatpush2.bf16.msra.mxu0 0
    %1188 = vmatprep.subr.bf16.mxu0 0
    %1189 = vmatpush2.bf16.msra.mxu0 0
    %1190 = vmatprep.subr.bf16.mxu0 0
    %1191 = vmatpush2.bf16.msra.mxu0 0
    %1192 = vmatprep.subr.bf16.mxu0 0
    %1193 = vmatpush2.bf16.msra.mxu0 0
    %1194 = vmatprep.subr.bf16.mxu0 0
    %1195 = vmatpush2.bf16.msra.mxu0 0
    %1196 = vmatprep.mubr.bf16.mxu0 0
    %1197 = vmatmul.mubr.bf16.gmra.mxu0 %v1163
    %v1198 = vpop.f32.mrf.mxu0
    %v1199 = vadd.f32 %v522, %v1198
    %v1200 = vpop.f32.mrf.mxu0
    %v1201 = vadd.f32 %v526, %v1200
    %v1202 = vpop.f32.mrf.mxu0
    %v1203 = vadd.f32 %v522, %v1202
    %v1204 = vpop.f32.mrf.mxu0
    %v1205 = vadd.f32 %v526, %v1204
    %1206 = vdwg.mxu0
    %1207 = vmatprep.subr.bf16.mxu0 0
    %1208 = vmatpush1.bf16.msra.mxu0 %v637
    %1209 = vmatprep.subr.bf16.mxu0 0
    %1210 = vmatpush1.bf16.msra.mxu0 %v634
    %1211 = vmatprep.subr.bf16.mxu0 0
    %1212 = vmatpush1.bf16.msra.mxu0 %v631
    %1213 = vmatprep.subr.bf16.mxu0 0
    %1214 = vmatpush1.bf16.msra.mxu0 %v628
    %1215 = vmatprep.subr.bf16.mxu0 0
    %1216 = vmatpush1.bf16.msra.mxu0 %v625
    %1217 = vmatprep.subr.bf16.mxu0 0
    %1218 = vmatpush1.bf16.msra.mxu0 %v622
    %1219 = vmatprep.subr.bf16.mxu0 0
    %1220 = vmatpush1.bf16.msra.mxu0 %v619
    %1221 = vmatprep.subr.bf16.mxu0 0
    %1222 = vmatpush1.bf16.msra.mxu0 %v616
    %1223 = vmatprep.subr.bf16.mxu0 0
    %1224 = vmatpush2.bf16.msra.mxu0 0
    %1225 = vmatprep.subr.bf16.mxu0 0
    %1226 = vmatpush2.bf16.msra.mxu0 0
    %1227 = vmatprep.subr.bf16.mxu0 0
    %1228 = vmatpush2.bf16.msra.mxu0 0
    %1229 = vmatprep.subr.bf16.mxu0 0
    %1230 = vmatpush2.bf16.msra.mxu0 0
    %1231 = vmatprep.subr.bf16.mxu0 0
    %1232 = vmatpush2.bf16.msra.mxu0 0
    %1233 = vmatprep.subr.bf16.mxu0 0
    %1234 = vmatpush2.bf16.msra.mxu0 0
    %1235 = vmatprep.subr.bf16.mxu0 0
    %1236 = vmatpush2.bf16.msra.mxu0 0
    %1237 = vmatprep.subr.bf16.mxu0 0
    %1238 = vmatpush2.bf16.msra.mxu0 0
    %1239 = vmatprep.mubr.bf16.mxu0 0
    %1240 = vmatmul.mubr.bf16.gmra.mxu0 %v1163
    %v1241 = vpop.f32.mrf.mxu0
    %v1242 = vadd.f32 %v530, %v1241
    %v1243 = vpop.f32.mrf.mxu0
    %v1244 = vpop.f32.mrf.mxu0
    %v1245 = vadd.f32 %v530, %v1244
    %v1246 = vpop.f32.mrf.mxu0
    %1247 = vdwg.mxu0
    %v1248 = vadd.f32 %v207, %v1199
    %v1249 = vadd.f32 %v210, %v1203
    %v1250 = vxor.u32 %v1248, 2147483648
    %v1251 = vxor.u32 %v1249, 2147483648
    %v1252 = vmul.f32 %v1250, 1.442695
    %v1253 = vpow.pop %v1252
    %v1254 = vmul.f32 %v1251, 1.442695
    %v1255 = vpow.pop %v1254
    %v1256 = vadd.f32 %v1253, 1.0
    %v1257 = vadd.f32 %v1255, 1.0
    %v1258 = vrcp.pop %v1256
    %v1259 = vmul.f32 1.0, %v1258
    %v1260 = vrcp.pop %v1257
    %v1261 = vmul.f32 1.0, %v1260
    %v1262 = vadd.f32 %v208, %v1201
    %v1263 = vadd.f32 %v211, %v1205
    %v1264 = vxor.u32 %v1262, 2147483648
    %v1265 = vxor.u32 %v1263, 2147483648
    %v1266 = vmul.f32 %v1264, 1.442695
    %v1267 = vpow.pop %v1266
    %v1268 = vmul.f32 %v1265, 1.442695
    %v1269 = vpow.pop %v1268
    %v1270 = vadd.f32 %v1267, 1.0
    %v1271 = vadd.f32 %v1269, 1.0
    %v1272 = vrcp.pop %v1270
    %v1273 = vmul.f32 1.0, %v1272
    %v1274 = vrcp.pop %v1271
    %v1275 = vmul.f32 1.0, %v1274
    %v1276 = vmul.f32 %v1259, %v1242
    %v1277 = vmul.f32 %v1261, %v1245
    %v1278 = vadd.f32 %v209, %v1276
    %v1279 = vadd.f32 %v212, %v1277
    %v1280 = vtanh.pop %v1278
    %v1281 = vtanh.pop %v1279
    %v1282 = vsub.f32 1.0, %v1273
    %v1283 = vsub.f32 1.0, %v1275
    %v1284 = vmul.f32 %v1282, %v1280
    %v1285 = vmul.f32 %v1283, %v1281
    %v1286 = vmul.f32 %v1273, %v1154
    %v1287 = vmul.f32 %v1275, %v1157
    %v1288 = vadd.f32 %v1284, %v1286
    %v1289 = vadd.f32 %v1285, %v1287
    %v1290 = vmul.f32 %v1161, %v1288
    %v1291 = vmul.f32 %v1162, %v1289
    %v1292 = vsub.f32 1.0, %v1161
    %v1293 = vsub.f32 1.0, %v1162
    %v1294 = vmul.f32 %v1292, %v1045
    %v1295 = vmul.f32 %v1293, %v1046
    %v1296 = vadd.f32 %v1290, %v1294
    %v1297 = vadd.f32 %v1291, %v1295
    %v1298 = vpack.c.bf16 %v1297, %v1296
    %v1299 = vld [vmem:[#allocation14] sm:$0xff]
    %v1300 = vld [vmem:[#allocation14 + $0x8] sm:$0xf]
    %v1301 = vld [vmem:[#allocation14 + $0xc] sm:$0xff]
    %v1302 = vld [vmem:[#allocation14 + $0x14] sm:$0xf]
    %v1303 = vld [vmem:[#allocation14 + $0x18] sm:$0xff]
    %v1304 = vld [vmem:[#allocation14 + $0x20] sm:$0xf]
    %v1305 = vld [vmem:[#allocation14 + $0x24] sm:$0xff]
    %v1306 = vld [vmem:[#allocation14 + $0x2c] sm:$0xf]
    %v1307 = vld [vmem:[#allocation14 + $0x30] sm:$0xff]
    %v1308 = vld [vmem:[#allocation14 + $0x38] sm:$0xf]
    %v1309 = vld [vmem:[#allocation14 + $0x3c] sm:$0xff]
    %v1310 = vld [vmem:[#allocation14 + $0x44] sm:$0xf]
    %v1311 = vld [vmem:[#allocation14 + $0x48] sm:$0xff]
    %v1312 = vld [vmem:[#allocation14 + $0x50] sm:$0xf]
    %v1313 = vld [vmem:[#allocation14 + $0x54] sm:$0xff]
    %v1314 = vld [vmem:[#allocation14 + $0x5c] sm:$0xf]
    %v1315 = vld [vmem:[#allocation14 + $0x60] sm:$0xff]
    %v1316 = vld [vmem:[#allocation14 + $0x68] sm:$0xf]
    %v1317 = vld [vmem:[#allocation14 + $0x6c] sm:$0xff]
    %v1318 = vld [vmem:[#allocation14 + $0x74] sm:$0xf]
    %v1319 = vld [vmem:[#allocation14 + $0x78] sm:$0xff]
    %v1320 = vld [vmem:[#allocation14 + $0x80] sm:$0xf]
    %v1321 = vld [vmem:[#allocation14 + $0x84] sm:$0xff]
    %v1322 = vld [vmem:[#allocation14 + $0x8c] sm:$0xf]
    %v1323 = vld [vmem:[#allocation14 + $0x90] sm:$0xff]
    %v1324 = vld [vmem:[#allocation14 + $0x98] sm:$0xf]
    %v1325 = vld [vmem:[#allocation14 + $0x9c] sm:$0xff]
    %v1326 = vld [vmem:[#allocation14 + $0xa4] sm:$0xf]
    %v1327 = vld [vmem:[#allocation14 + $0xa8] sm:$0xff]
    %v1328 = vld [vmem:[#allocation14 + $0xb0] sm:$0xf]
    %v1329 = vld [vmem:[#allocation14 + $0xb4] sm:$0xff]
    %v1330 = vld [vmem:[#allocation14 + $0xbc] sm:$0xf]
    %v1331 = vld [vmem:[%s10] sm:$0x7]
    %v1333 = vlaneseq
    %v1334 = vshrl.u32 %v1333, 7
    %v1335 = vsub.s32 0, %v1334
    %v1336 = vrot.slane %v1331, %v1335
    %v1337 = vlaneseq
    %v1338 = vshrl.u32 %v1337, 7
    %v1339 = vsub.s32 1, %v1338
    %v1340 = vrot.slane %v1331, %v1339
    %v1341 = vlaneseq
    %v1342 = vshrl.u32 %v1341, 7
    %v1343 = vsub.s32 2, %v1342
    %v1344 = vrot.slane %v1331, %v1343
    %v1380 = vunpack.c.l.b16 %v1299
    %v1381 = vunpack.c.h.b16 %v1299
    %v1382 = vunpack.c.l.b16 %v1300
    %v1383 = vunpack.c.l.b16 %v1301
    %v1384 = vunpack.c.h.b16 %v1301
    %v1385 = vunpack.c.l.b16 %v1302
    %v1386 = vunpack.c.l.b16 %v1303
    %v1387 = vunpack.c.h.b16 %v1303
    %v1388 = vunpack.c.l.b16 %v1304
    %v1389 = vunpack.c.l.b16 %v1305
    %v1390 = vunpack.c.h.b16 %v1305
    %v1391 = vunpack.c.l.b16 %v1306
    %v1392 = vunpack.c.l.b16 %v1307
    %v1393 = vunpack.c.h.b16 %v1307
    %v1394 = vunpack.c.l.b16 %v1308
    %v1395 = vunpack.c.l.b16 %v1309
    %v1396 = vunpack.c.h.b16 %v1309
    %v1397 = vunpack.c.l.b16 %v1310
    %v1398 = vunpack.c.l.b16 %v1311
    %v1399 = vunpack.c.h.b16 %v1311
    %v1400 = vunpack.c.l.b16 %v1312
    %v1401 = vunpack.c.l.b16 %v1313
    %v1402 = vunpack.c.h.b16 %v1313
    %v1403 = vunpack.c.l.b16 %v1314
    %v1404 = vunpack.c.l.b16 %v1315
    %v1405 = vunpack.c.h.b16 %v1315
    %v1406 = vunpack.c.l.b16 %v1316
    %v1407 = vunpack.c.l.b16 %v1317
    %v1408 = vunpack.c.h.b16 %v1317
    %v1409 = vunpack.c.l.b16 %v1318
    %v1410 = vunpack.c.l.b16 %v1319
    %v1411 = vunpack.c.h.b16 %v1319
    %v1412 = vunpack.c.l.b16 %v1320
    %v1413 = vunpack.c.l.b16 %v1321
    %v1414 = vunpack.c.h.b16 %v1321
    %v1415 = vunpack.c.l.b16 %v1322
    %v1416 = vunpack.c.l.b16 %v1323
    %v1417 = vunpack.c.h.b16 %v1323
    %v1418 = vunpack.c.l.b16 %v1324
    %v1419 = vunpack.c.l.b16 %v1325
    %v1420 = vunpack.c.h.b16 %v1325
    %v1421 = vunpack.c.l.b16 %v1326
    %v1422 = vunpack.c.l.b16 %v1327
    %v1423 = vunpack.c.h.b16 %v1327
    %v1424 = vunpack.c.l.b16 %v1328
    %v1425 = vunpack.c.l.b16 %v1329
    %v1426 = vunpack.c.h.b16 %v1329
    %v1427 = vunpack.c.l.b16 %v1330
    %v1428 = vpack.c.b16 %v1383, %v1380
    %v1429 = vpack.c.b16 %v1384, %v1381
    %v1430 = vpack.c.b16 %v1385, %v1382
    %v1431 = vpack.c.b16 %v1389, %v1386
    %v1432 = vpack.c.b16 %v1390, %v1387
    %v1433 = vpack.c.b16 %v1391, %v1388
    %v1434 = vpack.c.b16 %v1395, %v1392
    %v1435 = vpack.c.b16 %v1396, %v1393
    %v1436 = vpack.c.b16 %v1397, %v1394
    %v1437 = vpack.c.b16 %v1401, %v1398
    %v1438 = vpack.c.b16 %v1402, %v1399
    %v1439 = vpack.c.b16 %v1403, %v1400
    %v1440 = vpack.c.b16 %v1407, %v1404
    %v1441 = vpack.c.b16 %v1408, %v1405
    %v1442 = vpack.c.b16 %v1409, %v1406
    %v1443 = vpack.c.b16 %v1413, %v1410
    %v1444 = vpack.c.b16 %v1414, %v1411
    %v1445 = vpack.c.b16 %v1415, %v1412
    %v1446 = vpack.c.b16 %v1419, %v1416
    %v1447 = vpack.c.b16 %v1420, %v1417
    %v1448 = vpack.c.b16 %v1421, %v1418
    %v1449 = vpack.c.b16 %v1425, %v1422
    %v1450 = vpack.c.b16 %v1426, %v1423
    %v1451 = vpack.c.b16 %v1427, %v1424
    %1476 = vmatprep.subr.bf16.mxu0 %v1450
    %1477 = vmatpush1.bf16.msra.mxu0 %v1449
    %1478 = vmatprep.subr.bf16.mxu0 %v1447
    %1479 = vmatpush1.bf16.msra.mxu0 %v1446
    %1480 = vmatprep.subr.bf16.mxu0 %v1444
    %1481 = vmatpush1.bf16.msra.mxu0 %v1443
    %1482 = vmatprep.subr.bf16.mxu0 %v1441
    %1483 = vmatpush1.bf16.msra.mxu0 %v1440
    %1484 = vmatprep.subr.bf16.mxu0 %v1438
    %1485 = vmatpush1.bf16.msra.mxu0 %v1437
    %1486 = vmatprep.subr.bf16.mxu0 %v1435
    %1487 = vmatpush1.bf16.msra.mxu0 %v1434
    %1488 = vmatprep.subr.bf16.mxu0 %v1432
    %1489 = vmatpush1.bf16.msra.mxu0 %v1431
    %1490 = vmatprep.subr.bf16.mxu0 %v1429
    %1491 = vmatpush1.bf16.msra.mxu0 %v1428
    %1492 = vmatprep.subr.bf16.mxu0 0
    %1493 = vmatpush2.bf16.msra.mxu0 0
    %1494 = vmatprep.subr.bf16.mxu0 0
    %1495 = vmatpush2.bf16.msra.mxu0 0
    %1496 = vmatprep.subr.bf16.mxu0 0
    %1497 = vmatpush2.bf16.msra.mxu0 0
    %1498 = vmatprep.subr.bf16.mxu0 0
    %1499 = vmatpush2.bf16.msra.mxu0 0
    %1500 = vmatprep.subr.bf16.mxu0 0
    %1501 = vmatpush2.bf16.msra.mxu0 0
    %1502 = vmatprep.subr.bf16.mxu0 0
    %1503 = vmatpush2.bf16.msra.mxu0 0
    %1504 = vmatprep.subr.bf16.mxu0 0
    %1505 = vmatpush2.bf16.msra.mxu0 0
    %1506 = vmatprep.subr.bf16.mxu0 0
    %1507 = vmatpush2.bf16.msra.mxu0 0
    %1508 = vmatprep.mubr.bf16.mxu0 0
    %1509 = vmatmul.mubr.bf16.gmra.mxu0 %v1298
    %v1510 = vpop.f32.mrf.mxu0
    %v1511 = vadd.f32 %v1336, %v1510
    %v1512 = vpop.f32.mrf.mxu0
    %v1513 = vadd.f32 %v1340, %v1512
    %v1514 = vpop.f32.mrf.mxu0
    %v1515 = vadd.f32 %v1336, %v1514
    %v1516 = vpop.f32.mrf.mxu0
    %v1517 = vadd.f32 %v1340, %v1516
    %1518 = vdwg.mxu0
    %1519 = vmatprep.subr.bf16.mxu0 0
    %1520 = vmatpush1.bf16.msra.mxu0 %v1451
    %1521 = vmatprep.subr.bf16.mxu0 0
    %1522 = vmatpush1.bf16.msra.mxu0 %v1448
    %1523 = vmatprep.subr.bf16.mxu0 0
    %1524 = vmatpush1.bf16.msra.mxu0 %v1445
    %1525 = vmatprep.subr.bf16.mxu0 0
    %1526 = vmatpush1.bf16.msra.mxu0 %v1442
    %1527 = vmatprep.subr.bf16.mxu0 0
    %1528 = vmatpush1.bf16.msra.mxu0 %v1439
    %1529 = vmatprep.subr.bf16.mxu0 0
    %1530 = vmatpush1.bf16.msra.mxu0 %v1436
    %1531 = vmatprep.subr.bf16.mxu0 0
    %1532 = vmatpush1.bf16.msra.mxu0 %v1433
    %1533 = vmatprep.subr.bf16.mxu0 0
    %1534 = vmatpush1.bf16.msra.mxu0 %v1430
    %1535 = vmatprep.subr.bf16.mxu0 0
    %1536 = vmatpush2.bf16.msra.mxu0 0
    %1537 = vmatprep.subr.bf16.mxu0 0
    %1538 = vmatpush2.bf16.msra.mxu0 0
    %1539 = vmatprep.subr.bf16.mxu0 0
    %1540 = vmatpush2.bf16.msra.mxu0 0
    %1541 = vmatprep.subr.bf16.mxu0 0
    %1542 = vmatpush2.bf16.msra.mxu0 0
    %1543 = vmatprep.subr.bf16.mxu0 0
    %1544 = vmatpush2.bf16.msra.mxu0 0
    %1545 = vmatprep.subr.bf16.mxu0 0
    %1546 = vmatpush2.bf16.msra.mxu0 0
    %1547 = vmatprep.subr.bf16.mxu0 0
    %1548 = vmatpush2.bf16.msra.mxu0 0
    %1549 = vmatprep.subr.bf16.mxu0 0
    %1550 = vmatpush2.bf16.msra.mxu0 0
    %1551 = vmatprep.mubr.bf16.mxu0 0
    %1552 = vmatmul.mubr.bf16.gmra.mxu0 %v1298
    %v1553 = vpop.f32.mrf.mxu0
    %v1554 = vadd.f32 %v1344, %v1553
    %v1555 = vpop.f32.mrf.mxu0
    %v1556 = vpop.f32.mrf.mxu0
    %v1557 = vadd.f32 %v1344, %v1556
    %v1558 = vpop.f32.mrf.mxu0
    %1559 = vdwg.mxu0
    %v1560 = vld [vmem:[#allocation10] sm:$0xff]
    %v1561 = vld [vmem:[#allocation10 + $0x8] sm:$0xff]
    %v1562 = vxor.u32 %v1511, 2147483648
    %v1563 = vxor.u32 %v1515, 2147483648
    %v1564 = vmul.f32 %v1562, 1.442695
    %v1565 = vpow.pop %v1564
    %v1566 = vmul.f32 %v1563, 1.442695
    %v1567 = vpow.pop %v1566
    %v1568 = vadd.f32 %v1565, 1.0
    %v1569 = vadd.f32 %v1567, 1.0
    %v1570 = vrcp.pop %v1568
    %v1571 = vmul.f32 1.0, %v1570
    %v1572 = vrcp.pop %v1569
    %v1573 = vmul.f32 1.0, %v1572
    %v1574 = vxor.u32 %v1513, 2147483648
    %v1575 = vxor.u32 %v1517, 2147483648
    %v1576 = vmul.f32 %v1574, 1.442695
    %v1577 = vpow.pop %v1576
    %v1578 = vmul.f32 %v1575, 1.442695
    %v1579 = vpow.pop %v1578
    %v1580 = vadd.f32 %v1577, 1.0
    %v1581 = vadd.f32 %v1579, 1.0
    %v1582 = vrcp.pop %v1580
    %v1583 = vmul.f32 1.0, %v1582
    %v1584 = vrcp.pop %v1581
    %v1585 = vmul.f32 1.0, %v1584
    %v1586 = vld [vmem:[%s12 + $0x2] sm:$0x1]
    %v1588 = vlaneseq
    %v1589 = vshrl.u32 %v1588, 7
    %v1590 = vsub.s32 0, %v1589
    %v1591 = vrot.slane %v1586, %v1590
    %v1593 = vmul.f32 %v1571, %v1591
    %v1594 = vmul.f32 %v1573, %v1591
    %v1595 = vadd.f32 %v1554, %v1593
    %v1596 = vadd.f32 %v1557, %v1594
    %v1597 = vtanh.pop %v1595
    %v1598 = vtanh.pop %v1596
    %v1599 = vsub.f32 1.0, %v1583
    %v1600 = vsub.f32 1.0, %v1585
    %v1601 = vmul.f32 %v1599, %v1597
    %v1602 = vmul.f32 %v1600, %v1598
    %v1603 = vmul.f32 %v1560, %v1601
    %v1604 = vmul.f32 %v1561, %v1602
    %v1605 = vsub.f32 1.0, %v1560
    %v1606 = vsub.f32 1.0, %v1561
    %v1607 = vmul.f32 %v1605, %v1296
    %v1608 = vmul.f32 %v1606, %v1297
    %v1609 = vadd.f32 %v1603, %v1607
    %v1610 = vadd.f32 %v1604, %v1608
    %s1611 = scalar_lea.vmem [#allocation7], 8
    %v1612 = vld [vmem:[%s1611] sm:$0xf]
    %v1613 = vld [vmem:[%s1611 + $0x4] sm:$0xf]
    %v1614 = vpack.c.bf16 %v1610, %v1609
    %v1615 = vld [vmem:[#allocation19] sm:$0xff]
    %v1616 = vld [vmem:[#allocation19 + $0x8] sm:$0xff]
    %v1617 = vld [vmem:[#allocation19 + $0x10] sm:$0xff]
    %v1618 = vld [vmem:[#allocation19 + $0x18] sm:$0xff]
    %v1619 = vld [vmem:[#allocation19 + $0x20] sm:$0xff]
    %v1620 = vld [vmem:[#allocation19 + $0x28] sm:$0xff]
    %v1621 = vld [vmem:[#allocation19 + $0x30] sm:$0xff]
    %v1622 = vld [vmem:[#allocation19 + $0x38] sm:$0xff]
    %v1623 = vld [vmem:[#allocation19 + $0x40] sm:$0xff]
    %v1624 = vld [vmem:[#allocation19 + $0x48] sm:$0xff]
    %v1625 = vld [vmem:[#allocation19 + $0x50] sm:$0xff]
    %v1626 = vld [vmem:[#allocation19 + $0x58] sm:$0xff]
    %v1627 = vld [vmem:[#allocation19 + $0x60] sm:$0xff]
    %v1628 = vld [vmem:[#allocation19 + $0x68] sm:$0xff]
    %v1629 = vld [vmem:[#allocation19 + $0x70] sm:$0xff]
    %v1630 = vld [vmem:[#allocation19 + $0x78] sm:$0xff]
    %v1647 = vunpack.c.l.b16 %v1615
    %v1648 = vunpack.c.h.b16 %v1615
    %v1649 = vunpack.c.l.b16 %v1616
    %v1650 = vunpack.c.h.b16 %v1616
    %v1651 = vunpack.c.l.b16 %v1617
    %v1652 = vunpack.c.h.b16 %v1617
    %v1653 = vunpack.c.l.b16 %v1618
    %v1654 = vunpack.c.h.b16 %v1618
    %v1655 = vunpack.c.l.b16 %v1619
    %v1656 = vunpack.c.h.b16 %v1619
    %v1657 = vunpack.c.l.b16 %v1620
    %v1658 = vunpack.c.h.b16 %v1620
    %v1659 = vunpack.c.l.b16 %v1621
    %v1660 = vunpack.c.h.b16 %v1621
    %v1661 = vunpack.c.l.b16 %v1622
    %v1662 = vunpack.c.h.b16 %v1622
    %v1663 = vunpack.c.l.b16 %v1623
    %v1664 = vunpack.c.h.b16 %v1623
    %v1665 = vunpack.c.l.b16 %v1624
    %v1666 = vunpack.c.h.b16 %v1624
    %v1667 = vunpack.c.l.b16 %v1625
    %v1668 = vunpack.c.h.b16 %v1625
    %v1669 = vunpack.c.l.b16 %v1626
    %v1670 = vunpack.c.h.b16 %v1626
    %v1671 = vunpack.c.l.b16 %v1627
    %v1672 = vunpack.c.h.b16 %v1627
    %v1673 = vunpack.c.l.b16 %v1628
    %v1674 = vunpack.c.h.b16 %v1628
    %v1675 = vunpack.c.l.b16 %v1629
    %v1676 = vunpack.c.h.b16 %v1629
    %v1677 = vunpack.c.l.b16 %v1630
    %v1678 = vunpack.c.h.b16 %v1630
    %v1679 = vpack.c.b16 %v1649, %v1647
    %v1680 = vpack.c.b16 %v1650, %v1648
    %v1681 = vpack.c.b16 %v1653, %v1651
    %v1682 = vpack.c.b16 %v1654, %v1652
    %v1683 = vpack.c.b16 %v1657, %v1655
    %v1684 = vpack.c.b16 %v1658, %v1656
    %v1685 = vpack.c.b16 %v1661, %v1659
    %v1686 = vpack.c.b16 %v1662, %v1660
    %v1687 = vpack.c.b16 %v1665, %v1663
    %v1688 = vpack.c.b16 %v1666, %v1664
    %v1689 = vpack.c.b16 %v1669, %v1667
    %v1690 = vpack.c.b16 %v1670, %v1668
    %v1691 = vpack.c.b16 %v1673, %v1671
    %v1692 = vpack.c.b16 %v1674, %v1672
    %v1693 = vpack.c.b16 %v1677, %v1675
    %v1694 = vpack.c.b16 %v1678, %v1676
    %1711 = vmatprep.subr.bf16.mxu0 %v1694
    %1712 = vmatpush1.bf16.msra.mxu0 %v1693
    %1713 = vmatprep.subr.bf16.mxu0 %v1692
    %1714 = vmatpush1.bf16.msra.mxu0 %v1691
    %1715 = vmatprep.subr.bf16.mxu0 %v1690
    %1716 = vmatpush1.bf16.msra.mxu0 %v1689
    %1717 = vmatprep.subr.bf16.mxu0 %v1688
    %1718 = vmatpush1.bf16.msra.mxu0 %v1687
    %1719 = vmatprep.subr.bf16.mxu0 %v1686
    %1720 = vmatpush1.bf16.msra.mxu0 %v1685
    %1721 = vmatprep.subr.bf16.mxu0 %v1684
    %1722 = vmatpush1.bf16.msra.mxu0 %v1683
    %1723 = vmatprep.subr.bf16.mxu0 %v1682
    %1724 = vmatpush1.bf16.msra.mxu0 %v1681
    %1725 = vmatprep.subr.bf16.mxu0 %v1680
    %1726 = vmatpush1.bf16.msra.mxu0 %v1679
    %1727 = vmatprep.subr.bf16.mxu0 0
    %1728 = vmatpush2.bf16.msra.mxu0 0
    %1729 = vmatprep.subr.bf16.mxu0 0
    %1730 = vmatpush2.bf16.msra.mxu0 0
    %1731 = vmatprep.subr.bf16.mxu0 0
    %1732 = vmatpush2.bf16.msra.mxu0 0
    %1733 = vmatprep.subr.bf16.mxu0 0
    %1734 = vmatpush2.bf16.msra.mxu0 0
    %1735 = vmatprep.subr.bf16.mxu0 0
    %1736 = vmatpush2.bf16.msra.mxu0 0
    %1737 = vmatprep.subr.bf16.mxu0 0
    %1738 = vmatpush2.bf16.msra.mxu0 0
    %1739 = vmatprep.subr.bf16.mxu0 0
    %1740 = vmatpush2.bf16.msra.mxu0 0
    %1741 = vmatprep.subr.bf16.mxu0 0
    %1742 = vmatpush2.bf16.msra.mxu0 0
    %1743 = vmatprep.mubr.bf16.mxu0 0
    %1744 = vmatmul.mubr.bf16.gmra.mxu0 %v1614
    %v1745 = vpop.f32.mrf.mxu0
    %v1746 = vadd.f32 0.0, %v1745
    %v1747 = vpop.f32.mrf.mxu0
    %v1748 = vadd.f32 0.0, %v1747
    %v1749 = vpop.f32.mrf.mxu0
    %v1750 = vadd.f32 0.0, %v1749
    %v1751 = vpop.f32.mrf.mxu0
    %v1752 = vadd.f32 0.0, %v1751
    %1753 = vdwg.mxu0
    %v1754 = vld [vmem:[%s16] sm:$0x1]
    %v1756 = vlaneseq
    %v1757 = vshrl.u32 %v1756, 7
    %v1758 = vsub.s32 0, %v1757
    %v1759 = vrot.slane %v1754, %v1758
    %v1761 = vadd.f32 %v1746, %v1759
    %v1762 = vadd.f32 %v1750, %v1759
    %v1763 = vxor.u32 %v1761, 2147483648
    %v1764 = vxor.u32 %v1762, 2147483648
    %v1765 = vmul.f32 %v1763, 1.442695
    %v1766 = vpow.pop %v1765
    %v1767 = vmul.f32 %v1764, 1.442695
    %v1768 = vpow.pop %v1767
    %v1769 = vadd.f32 %v1766, 1.0
    %v1770 = vadd.f32 %v1768, 1.0
    %v1771 = vrcp.pop %v1769
    %v1772 = vmul.f32 1.0, %v1771
    %v1773 = vrcp.pop %v1770
    %v1774 = vmul.f32 1.0, %v1773
    %v1775 = vmul.f32 %v1772, %v1748
    %v1776 = vmul.f32 %v1774, %v1752
    %v1777 = vpack.c.bf16 %v1776, %v1775
    %v1780 = vunpack.c.l.b16 %v1612
    %v1781 = vunpack.c.l.b16 %v1613
    %v1782 = vpack.c.b16 %v1781, %v1780
    %v1784 = vsel %vm436, %v1782, 0
    %1786 = vmatprep.subr.bf16.mxu0 0
    %1787 = vmatpush1.bf16.msra.mxu0 0
    %1788 = vmatprep.subr.bf16.mxu0 0
    %1789 = vmatpush1.bf16.msra.mxu0 0
    %1790 = vmatprep.subr.bf16.mxu0 0
    %1791 = vmatpush1.bf16.msra.mxu0 0
    %1792 = vmatprep.subr.bf16.mxu0 0
    %1793 = vmatpush1.bf16.msra.mxu0 0
    %1794 = vmatprep.subr.bf16.mxu0 0
    %1795 = vmatpush1.bf16.msra.mxu0 0
    %1796 = vmatprep.subr.bf16.mxu0 0
    %1797 = vmatpush1.bf16.msra.mxu0 0
    %1798 = vmatprep.subr.bf16.mxu0 0
    %1799 = vmatpush1.bf16.msra.mxu0 0
    %1800 = vmatprep.subr.bf16.mxu0 0
    %1801 = vmatpush1.bf16.msra.mxu0 %v1777
    %1802 = vmatprep.subr.bf16.mxu0 0
    %1803 = vmatpush2.bf16.msra.mxu0 0
    %1804 = vmatprep.subr.bf16.mxu0 0
    %1805 = vmatpush2.bf16.msra.mxu0 0
    %1806 = vmatprep.subr.bf16.mxu0 0
    %1807 = vmatpush2.bf16.msra.mxu0 0
    %1808 = vmatprep.subr.bf16.mxu0 0
    %1809 = vmatpush2.bf16.msra.mxu0 0
    %1810 = vmatprep.subr.bf16.mxu0 0
    %1811 = vmatpush2.bf16.msra.mxu0 0
    %1812 = vmatprep.subr.bf16.mxu0 0
    %1813 = vmatpush2.bf16.msra.mxu0 0
    %1814 = vmatprep.subr.bf16.mxu0 0
    %1815 = vmatpush2.bf16.msra.mxu0 0
    %1816 = vmatprep.subr.bf16.mxu0 0
    %1817 = vmatpush2.bf16.msra.mxu0 0
    %1818 = vmatprep.mubr.bf16.mxu0 0
    %1819 = vmatmul.mubr.bf16.gmra.mxu0 %v1784
    %v1820 = vpop.f32.mrf.mxu0
    %v1821 = vadd.f32 0.0, %v1820
    %v1822 = vpop.f32.mrf.mxu0
    %v1823 = vpop.f32.mrf.mxu0
    %v1824 = vadd.f32 0.0, %v1823
    %v1825 = vpop.f32.mrf.mxu0
    %1826 = vdwg.mxu0
    %1827 = vmatprep.subr.bf16.mxu0 %v1450
    %1828 = vmatpush1.bf16.msra.mxu0 %v1449
    %1829 = vmatprep.subr.bf16.mxu0 %v1447
    %1830 = vmatpush1.bf16.msra.mxu0 %v1446
    %1831 = vmatprep.subr.bf16.mxu0 %v1444
    %1832 = vmatpush1.bf16.msra.mxu0 %v1443
    %1833 = vmatprep.subr.bf16.mxu0 %v1441
    %1834 = vmatpush1.bf16.msra.mxu0 %v1440
    %1835 = vmatprep.subr.bf16.mxu0 %v1438
    %1836 = vmatpush1.bf16.msra.mxu0 %v1437
    %1837 = vmatprep.subr.bf16.mxu0 %v1435
    %1838 = vmatpush1.bf16.msra.mxu0 %v1434
    %1839 = vmatprep.subr.bf16.mxu0 %v1432
    %1840 = vmatpush1.bf16.msra.mxu0 %v1431
    %1841 = vmatprep.subr.bf16.mxu0 %v1429
    %1842 = vmatpush1.bf16.msra.mxu0 %v1428
    %1843 = vmatprep.subr.bf16.mxu0 0
    %1844 = vmatpush2.bf16.msra.mxu0 0
    %1845 = vmatprep.subr.bf16.mxu0 0
    %1846 = vmatpush2.bf16.msra.mxu0 0
    %1847 = vmatprep.subr.bf16.mxu0 0
    %1848 = vmatpush2.bf16.msra.mxu0 0
    %1849 = vmatprep.subr.bf16.mxu0 0
    %1850 = vmatpush2.bf16.msra.mxu0 0
    %1851 = vmatprep.subr.bf16.mxu0 0
    %1852 = vmatpush2.bf16.msra.mxu0 0
    %1853 = vmatprep.subr.bf16.mxu0 0
    %1854 = vmatpush2.bf16.msra.mxu0 0
    %1855 = vmatprep.subr.bf16.mxu0 0
    %1856 = vmatpush2.bf16.msra.mxu0 0
    %1857 = vmatprep.subr.bf16.mxu0 0
    %1858 = vmatpush2.bf16.msra.mxu0 0
    %1859 = vmatprep.mubr.bf16.mxu0 0
    %1860 = vmatmul.mubr.bf16.gmra.mxu0 %v1614
    %v1861 = vpop.f32.mrf.mxu0
    %v1862 = vadd.f32 %v1336, %v1861
    %v1863 = vpop.f32.mrf.mxu0
    %v1864 = vadd.f32 %v1340, %v1863
    %v1865 = vpop.f32.mrf.mxu0
    %v1866 = vadd.f32 %v1336, %v1865
    %v1867 = vpop.f32.mrf.mxu0
    %v1868 = vadd.f32 %v1340, %v1867
    %1869 = vdwg.mxu0
    %1870 = vmatprep.subr.bf16.mxu0 0
    %1871 = vmatpush1.bf16.msra.mxu0 %v1451
    %1872 = vmatprep.subr.bf16.mxu0 0
    %1873 = vmatpush1.bf16.msra.mxu0 %v1448
    %1874 = vmatprep.subr.bf16.mxu0 0
    %1875 = vmatpush1.bf16.msra.mxu0 %v1445
    %1876 = vmatprep.subr.bf16.mxu0 0
    %1877 = vmatpush1.bf16.msra.mxu0 %v1442
    %1878 = vmatprep.subr.bf16.mxu0 0
    %1879 = vmatpush1.bf16.msra.mxu0 %v1439
    %1880 = vmatprep.subr.bf16.mxu0 0
    %1881 = vmatpush1.bf16.msra.mxu0 %v1436
    %1882 = vmatprep.subr.bf16.mxu0 0
    %1883 = vmatpush1.bf16.msra.mxu0 %v1433
    %1884 = vmatprep.subr.bf16.mxu0 0
    %1885 = vmatpush1.bf16.msra.mxu0 %v1430
    %1886 = vmatprep.subr.bf16.mxu0 0
    %1887 = vmatpush2.bf16.msra.mxu0 0
    %1888 = vmatprep.subr.bf16.mxu0 0
    %1889 = vmatpush2.bf16.msra.mxu0 0
    %1890 = vmatprep.subr.bf16.mxu0 0
    %1891 = vmatpush2.bf16.msra.mxu0 0
    %1892 = vmatprep.subr.bf16.mxu0 0
    %1893 = vmatpush2.bf16.msra.mxu0 0
    %1894 = vmatprep.subr.bf16.mxu0 0
    %1895 = vmatpush2.bf16.msra.mxu0 0
    %1896 = vmatprep.subr.bf16.mxu0 0
    %1897 = vmatpush2.bf16.msra.mxu0 0
    %1898 = vmatprep.subr.bf16.mxu0 0
    %1899 = vmatpush2.bf16.msra.mxu0 0
    %1900 = vmatprep.subr.bf16.mxu0 0
    %1901 = vmatpush2.bf16.msra.mxu0 0
    %1902 = vmatprep.mubr.bf16.mxu0 0
    %1903 = vmatmul.mubr.bf16.gmra.mxu0 %v1614
    %v1904 = vpop.f32.mrf.mxu0
    %v1905 = vadd.f32 %v1344, %v1904
    %v1906 = vpop.f32.mrf.mxu0
    %v1907 = vpop.f32.mrf.mxu0
    %v1908 = vadd.f32 %v1344, %v1907
    %v1909 = vpop.f32.mrf.mxu0
    %1910 = vdwg.mxu0
    %s1911 = scalar_lea.vmem [#allocation10], 16
    %v1912 = vld [vmem:[%s1911] sm:$0xff]
    %v1913 = vld [vmem:[%s1911 + $0x8] sm:$0xff]
    %v1914 = vpack.c.bf16 %v1824, %v1821
    %v1915 = vld [vmem:[#allocation16] sm:$0xff]
    %v1916 = vld [vmem:[#allocation16 + $0x8] sm:$0xf]
    %v1917 = vld [vmem:[#allocation16 + $0xc] sm:$0xff]
    %v1918 = vld [vmem:[#allocation16 + $0x14] sm:$0xf]
    %v1919 = vld [vmem:[#allocation16 + $0x18] sm:$0xff]
    %v1920 = vld [vmem:[#allocation16 + $0x20] sm:$0xf]
    %v1921 = vld [vmem:[#allocation16 + $0x24] sm:$0xff]
    %v1922 = vld [vmem:[#allocation16 + $0x2c] sm:$0xf]
    %v1923 = vld [vmem:[#allocation16 + $0x30] sm:$0xff]
    %v1924 = vld [vmem:[#allocation16 + $0x38] sm:$0xf]
    %v1925 = vld [vmem:[#allocation16 + $0x3c] sm:$0xff]
    %v1926 = vld [vmem:[#allocation16 + $0x44] sm:$0xf]
    %v1927 = vld [vmem:[#allocation16 + $0x48] sm:$0xff]
    %v1928 = vld [vmem:[#allocation16 + $0x50] sm:$0xf]
    %v1929 = vld [vmem:[#allocation16 + $0x54] sm:$0xff]
    %v1930 = vld [vmem:[#allocation16 + $0x5c] sm:$0xf]
    %v1931 = vld [vmem:[#allocation16 + $0x60] sm:$0xff]
    %v1932 = vld [vmem:[#allocation16 + $0x68] sm:$0xf]
    %v1933 = vld [vmem:[#allocation16 + $0x6c] sm:$0xff]
    %v1934 = vld [vmem:[#allocation16 + $0x74] sm:$0xf]
    %v1935 = vld [vmem:[#allocation16 + $0x78] sm:$0xff]
    %v1936 = vld [vmem:[#allocation16 + $0x80] sm:$0xf]
    %v1937 = vld [vmem:[#allocation16 + $0x84] sm:$0xff]
    %v1938 = vld [vmem:[#allocation16 + $0x8c] sm:$0xf]
    %v1939 = vld [vmem:[#allocation16 + $0x90] sm:$0xff]
    %v1940 = vld [vmem:[#allocation16 + $0x98] sm:$0xf]
    %v1941 = vld [vmem:[#allocation16 + $0x9c] sm:$0xff]
    %v1942 = vld [vmem:[#allocation16 + $0xa4] sm:$0xf]
    %v1943 = vld [vmem:[#allocation16 + $0xa8] sm:$0xff]
    %v1944 = vld [vmem:[#allocation16 + $0xb0] sm:$0xf]
    %v1945 = vld [vmem:[#allocation16 + $0xb4] sm:$0xff]
    %v1946 = vld [vmem:[#allocation16 + $0xbc] sm:$0xf]
    %v1947 = vld [vmem:[%s12] sm:$0x7]
    %v1949 = vlaneseq
    %v1950 = vshrl.u32 %v1949, 7
    %v1951 = vsub.s32 0, %v1950
    %v1952 = vrot.slane %v1947, %v1951
    %v1953 = vlaneseq
    %v1954 = vshrl.u32 %v1953, 7
    %v1955 = vsub.s32 1, %v1954
    %v1956 = vrot.slane %v1947, %v1955
    %v1957 = vlaneseq
    %v1958 = vshrl.u32 %v1957, 7
    %v1959 = vsub.s32 2, %v1958
    %v1960 = vrot.slane %v1947, %v1959
    %v1996 = vunpack.c.l.b16 %v1915
    %v1997 = vunpack.c.h.b16 %v1915
    %v1998 = vunpack.c.l.b16 %v1916
    %v1999 = vunpack.c.l.b16 %v1917
    %v2000 = vunpack.c.h.b16 %v1917
    %v2001 = vunpack.c.l.b16 %v1918
    %v2002 = vunpack.c.l.b16 %v1919
    %v2003 = vunpack.c.h.b16 %v1919
    %v2004 = vunpack.c.l.b16 %v1920
    %v2005 = vunpack.c.l.b16 %v1921
    %v2006 = vunpack.c.h.b16 %v1921
    %v2007 = vunpack.c.l.b16 %v1922
    %v2008 = vunpack.c.l.b16 %v1923
    %v2009 = vunpack.c.h.b16 %v1923
    %v2010 = vunpack.c.l.b16 %v1924
    %v2011 = vunpack.c.l.b16 %v1925
    %v2012 = vunpack.c.h.b16 %v1925
    %v2013 = vunpack.c.l.b16 %v1926
    %v2014 = vunpack.c.l.b16 %v1927
    %v2015 = vunpack.c.h.b16 %v1927
    %v2016 = vunpack.c.l.b16 %v1928
    %v2017 = vunpack.c.l.b16 %v1929
    %v2018 = vunpack.c.h.b16 %v1929
    %v2019 = vunpack.c.l.b16 %v1930
    %v2020 = vunpack.c.l.b16 %v1931
    %v2021 = vunpack.c.h.b16 %v1931
    %v2022 = vunpack.c.l.b16 %v1932
    %v2023 = vunpack.c.l.b16 %v1933
    %v2024 = vunpack.c.h.b16 %v1933
    %v2025 = vunpack.c.l.b16 %v1934
    %v2026 = vunpack.c.l.b16 %v1935
    %v2027 = vunpack.c.h.b16 %v1935
    %v2028 = vunpack.c.l.b16 %v1936
    %v2029 = vunpack.c.l.b16 %v1937
    %v2030 = vunpack.c.h.b16 %v1937
    %v2031 = vunpack.c.l.b16 %v1938
    %v2032 = vunpack.c.l.b16 %v1939
    %v2033 = vunpack.c.h.b16 %v1939
    %v2034 = vunpack.c.l.b16 %v1940
    %v2035 = vunpack.c.l.b16 %v1941
    %v2036 = vunpack.c.h.b16 %v1941
    %v2037 = vunpack.c.l.b16 %v1942
    %v2038 = vunpack.c.l.b16 %v1943
    %v2039 = vunpack.c.h.b16 %v1943
    %v2040 = vunpack.c.l.b16 %v1944
    %v2041 = vunpack.c.l.b16 %v1945
    %v2042 = vunpack.c.h.b16 %v1945
    %v2043 = vunpack.c.l.b16 %v1946
    %v2044 = vpack.c.b16 %v1999, %v1996
    %v2045 = vpack.c.b16 %v2000, %v1997
    %v2046 = vpack.c.b16 %v2001, %v1998
    %v2047 = vpack.c.b16 %v2005, %v2002
    %v2048 = vpack.c.b16 %v2006, %v2003
    %v2049 = vpack.c.b16 %v2007, %v2004
    %v2050 = vpack.c.b16 %v2011, %v2008
    %v2051 = vpack.c.b16 %v2012, %v2009
    %v2052 = vpack.c.b16 %v2013, %v2010
    %v2053 = vpack.c.b16 %v2017, %v2014
    %v2054 = vpack.c.b16 %v2018, %v2015
    %v2055 = vpack.c.b16 %v2019, %v2016
    %v2056 = vpack.c.b16 %v2023, %v2020
    %v2057 = vpack.c.b16 %v2024, %v2021
    %v2058 = vpack.c.b16 %v2025, %v2022
    %v2059 = vpack.c.b16 %v2029, %v2026
    %v2060 = vpack.c.b16 %v2030, %v2027
    %v2061 = vpack.c.b16 %v2031, %v2028
    %v2062 = vpack.c.b16 %v2035, %v2032
    %v2063 = vpack.c.b16 %v2036, %v2033
    %v2064 = vpack.c.b16 %v2037, %v2034
    %v2065 = vpack.c.b16 %v2041, %v2038
    %v2066 = vpack.c.b16 %v2042, %v2039
    %v2067 = vpack.c.b16 %v2043, %v2040
    %2092 = vmatprep.subr.bf16.mxu0 %v2066
    %2093 = vmatpush1.bf16.msra.mxu0 %v2065
    %2094 = vmatprep.subr.bf16.mxu0 %v2063
    %2095 = vmatpush1.bf16.msra.mxu0 %v2062
    %2096 = vmatprep.subr.bf16.mxu0 %v2060
    %2097 = vmatpush1.bf16.msra.mxu0 %v2059
    %2098 = vmatprep.subr.bf16.mxu0 %v2057
    %2099 = vmatpush1.bf16.msra.mxu0 %v2056
    %2100 = vmatprep.subr.bf16.mxu0 %v2054
    %2101 = vmatpush1.bf16.msra.mxu0 %v2053
    %2102 = vmatprep.subr.bf16.mxu0 %v2051
    %2103 = vmatpush1.bf16.msra.mxu0 %v2050
    %2104 = vmatprep.subr.bf16.mxu0 %v2048
    %2105 = vmatpush1.bf16.msra.mxu0 %v2047
    %2106 = vmatprep.subr.bf16.mxu0 %v2045
    %2107 = vmatpush1.bf16.msra.mxu0 %v2044
    %2108 = vmatprep.subr.bf16.mxu0 0
    %2109 = vmatpush2.bf16.msra.mxu0 0
    %2110 = vmatprep.subr.bf16.mxu0 0
    %2111 = vmatpush2.bf16.msra.mxu0 0
    %2112 = vmatprep.subr.bf16.mxu0 0
    %2113 = vmatpush2.bf16.msra.mxu0 0
    %2114 = vmatprep.subr.bf16.mxu0 0
    %2115 = vmatpush2.bf16.msra.mxu0 0
    %2116 = vmatprep.subr.bf16.mxu0 0
    %2117 = vmatpush2.bf16.msra.mxu0 0
    %2118 = vmatprep.subr.bf16.mxu0 0
    %2119 = vmatpush2.bf16.msra.mxu0 0
    %2120 = vmatprep.subr.bf16.mxu0 0
    %2121 = vmatpush2.bf16.msra.mxu0 0
    %2122 = vmatprep.subr.bf16.mxu0 0
    %2123 = vmatpush2.bf16.msra.mxu0 0
    %2124 = vmatprep.mubr.bf16.mxu0 0
    %2125 = vmatmul.mubr.bf16.gmra.mxu0 %v1914
    %v2126 = vpop.f32.mrf.mxu0
    %v2127 = vadd.f32 %v1952, %v2126
    %v2128 = vpop.f32.mrf.mxu0
    %v2129 = vadd.f32 %v1956, %v2128
    %v2130 = vpop.f32.mrf.mxu0
    %v2131 = vadd.f32 %v1952, %v2130
    %v2132 = vpop.f32.mrf.mxu0
    %v2133 = vadd.f32 %v1956, %v2132
    %2134 = vdwg.mxu0
    %2135 = vmatprep.subr.bf16.mxu0 0
    %2136 = vmatpush1.bf16.msra.mxu0 %v2067
    %2137 = vmatprep.subr.bf16.mxu0 0
    %2138 = vmatpush1.bf16.msra.mxu0 %v2064
    %2139 = vmatprep.subr.bf16.mxu0 0
    %2140 = vmatpush1.bf16.msra.mxu0 %v2061
    %2141 = vmatprep.subr.bf16.mxu0 0
    %2142 = vmatpush1.bf16.msra.mxu0 %v2058
    %2143 = vmatprep.subr.bf16.mxu0 0
    %2144 = vmatpush1.bf16.msra.mxu0 %v2055
    %2145 = vmatprep.subr.bf16.mxu0 0
    %2146 = vmatpush1.bf16.msra.mxu0 %v2052
    %2147 = vmatprep.subr.bf16.mxu0 0
    %2148 = vmatpush1.bf16.msra.mxu0 %v2049
    %2149 = vmatprep.subr.bf16.mxu0 0
    %2150 = vmatpush1.bf16.msra.mxu0 %v2046
    %2151 = vmatprep.subr.bf16.mxu0 0
    %2152 = vmatpush2.bf16.msra.mxu0 0
    %2153 = vmatprep.subr.bf16.mxu0 0
    %2154 = vmatpush2.bf16.msra.mxu0 0
    %2155 = vmatprep.subr.bf16.mxu0 0
    %2156 = vmatpush2.bf16.msra.mxu0 0
    %2157 = vmatprep.subr.bf16.mxu0 0
    %2158 = vmatpush2.bf16.msra.mxu0 0
    %2159 = vmatprep.subr.bf16.mxu0 0
    %2160 = vmatpush2.bf16.msra.mxu0 0
    %2161 = vmatprep.subr.bf16.mxu0 0
    %2162 = vmatpush2.bf16.msra.mxu0 0
    %2163 = vmatprep.subr.bf16.mxu0 0
    %2164 = vmatpush2.bf16.msra.mxu0 0
    %2165 = vmatprep.subr.bf16.mxu0 0
    %2166 = vmatpush2.bf16.msra.mxu0 0
    %2167 = vmatprep.mubr.bf16.mxu0 0
    %2168 = vmatmul.mubr.bf16.gmra.mxu0 %v1914
    %v2169 = vpop.f32.mrf.mxu0
    %v2170 = vadd.f32 %v1960, %v2169
    %v2171 = vpop.f32.mrf.mxu0
    %v2172 = vpop.f32.mrf.mxu0
    %v2173 = vadd.f32 %v1960, %v2172
    %v2174 = vpop.f32.mrf.mxu0
    %2175 = vdwg.mxu0
    %v2176 = vadd.f32 %v1862, %v2127
    %v2177 = vadd.f32 %v1866, %v2131
    %v2178 = vxor.u32 %v2176, 2147483648
    %v2179 = vxor.u32 %v2177, 2147483648
    %v2180 = vmul.f32 %v2178, 1.442695
    %v2181 = vpow.pop %v2180
    %v2182 = vmul.f32 %v2179, 1.442695
    %v2183 = vpow.pop %v2182
    %v2184 = vadd.f32 %v2181, 1.0
    %v2185 = vadd.f32 %v2183, 1.0
    %v2186 = vrcp.pop %v2184
    %v2187 = vmul.f32 1.0, %v2186
    %v2188 = vrcp.pop %v2185
    %v2189 = vmul.f32 1.0, %v2188
    %v2190 = vadd.f32 %v1864, %v2129
    %v2191 = vadd.f32 %v1868, %v2133
    %v2192 = vxor.u32 %v2190, 2147483648
    %v2193 = vxor.u32 %v2191, 2147483648
    %v2194 = vmul.f32 %v2192, 1.442695
    %v2195 = vpow.pop %v2194
    %v2196 = vmul.f32 %v2193, 1.442695
    %v2197 = vpow.pop %v2196
    %v2198 = vadd.f32 %v2195, 1.0
    %v2199 = vadd.f32 %v2197, 1.0
    %v2200 = vrcp.pop %v2198
    %v2201 = vmul.f32 1.0, %v2200
    %v2202 = vrcp.pop %v2199
    %v2203 = vmul.f32 1.0, %v2202
    %v2204 = vmul.f32 %v2187, %v2170
    %v2205 = vmul.f32 %v2189, %v2173
    %v2206 = vadd.f32 %v1905, %v2204
    %v2207 = vadd.f32 %v1908, %v2205
    %v2208 = vtanh.pop %v2206
    %v2209 = vtanh.pop %v2207
    %v2210 = vsub.f32 1.0, %v2201
    %v2211 = vsub.f32 1.0, %v2203
    %v2212 = vmul.f32 %v2210, %v2208
    %v2213 = vmul.f32 %v2211, %v2209
    %v2214 = vmul.f32 %v2201, %v1821
    %v2215 = vmul.f32 %v2203, %v1824
    %v2216 = vadd.f32 %v2212, %v2214
    %v2217 = vadd.f32 %v2213, %v2215
    %v2218 = vmul.f32 %v1912, %v2216
    %v2219 = vmul.f32 %v1913, %v2217
    %v2220 = vsub.f32 1.0, %v1912
    %v2221 = vsub.f32 1.0, %v1913
    %v2222 = vmul.f32 %v2220, %v1609
    %v2223 = vmul.f32 %v2221, %v1610
    %v2224 = vadd.f32 %v2218, %v2222
    %v2225 = vadd.f32 %v2219, %v2223
    %s2226 = scalar_lea.vmem [#allocation7], 16
    %v2227 = vld [vmem:[%s2226] sm:$0xf]
    %v2228 = vld [vmem:[%s2226 + $0x4] sm:$0xf]
    %v2229 = vpack.c.bf16 %v2225, %v2224
    %2230 = vmatprep.subr.bf16.mxu0 %v1694
    %2231 = vmatpush1.bf16.msra.mxu0 %v1693
    %2232 = vmatprep.subr.bf16.mxu0 %v1692
    %2233 = vmatpush1.bf16.msra.mxu0 %v1691
    %2234 = vmatprep.subr.bf16.mxu0 %v1690
    %2235 = vmatpush1.bf16.msra.mxu0 %v1689
    %2236 = vmatprep.subr.bf16.mxu0 %v1688
    %2237 = vmatpush1.bf16.msra.mxu0 %v1687
    %2238 = vmatprep.subr.bf16.mxu0 %v1686
    %2239 = vmatpush1.bf16.msra.mxu0 %v1685
    %2240 = vmatprep.subr.bf16.mxu0 %v1684
    %2241 = vmatpush1.bf16.msra.mxu0 %v1683
    %2242 = vmatprep.subr.bf16.mxu0 %v1682
    %2243 = vmatpush1.bf16.msra.mxu0 %v1681
    %2244 = vmatprep.subr.bf16.mxu0 %v1680
    %2245 = vmatpush1.bf16.msra.mxu0 %v1679
    %2246 = vmatprep.subr.bf16.mxu0 0
    %2247 = vmatpush2.bf16.msra.mxu0 0
    %2248 = vmatprep.subr.bf16.mxu0 0
    %2249 = vmatpush2.bf16.msra.mxu0 0
    %2250 = vmatprep.subr.bf16.mxu0 0
    %2251 = vmatpush2.bf16.msra.mxu0 0
    %2252 = vmatprep.subr.bf16.mxu0 0
    %2253 = vmatpush2.bf16.msra.mxu0 0
    %2254 = vmatprep.subr.bf16.mxu0 0
    %2255 = vmatpush2.bf16.msra.mxu0 0
    %2256 = vmatprep.subr.bf16.mxu0 0
    %2257 = vmatpush2.bf16.msra.mxu0 0
    %2258 = vmatprep.subr.bf16.mxu0 0
    %2259 = vmatpush2.bf16.msra.mxu0 0
    %2260 = vmatprep.subr.bf16.mxu0 0
    %2261 = vmatpush2.bf16.msra.mxu0 0
    %2262 = vmatprep.mubr.bf16.mxu0 0
    %2263 = vmatmul.mubr.bf16.gmra.mxu0 %v2229
    %v2264 = vpop.f32.mrf.mxu0
    %v2265 = vadd.f32 0.0, %v2264
    %v2266 = vpop.f32.mrf.mxu0
    %v2267 = vadd.f32 0.0, %v2266
    %v2268 = vpop.f32.mrf.mxu0
    %v2269 = vadd.f32 0.0, %v2268
    %v2270 = vpop.f32.mrf.mxu0
    %v2271 = vadd.f32 0.0, %v2270
    %2272 = vdwg.mxu0
    %v2273 = vadd.f32 %v2265, %v1759
    %v2274 = vadd.f32 %v2269, %v1759
    %v2275 = vxor.u32 %v2273, 2147483648
    %v2276 = vxor.u32 %v2274, 2147483648
    %v2277 = vmul.f32 %v2275, 1.442695
    %v2278 = vpow.pop %v2277
    %v2279 = vmul.f32 %v2276, 1.442695
    %v2280 = vpow.pop %v2279
    %v2281 = vadd.f32 %v2278, 1.0
    %v2282 = vadd.f32 %v2280, 1.0
    %v2283 = vrcp.pop %v2281
    %v2284 = vmul.f32 1.0, %v2283
    %v2285 = vrcp.pop %v2282
    %v2286 = vmul.f32 1.0, %v2285
    %v2287 = vmul.f32 %v2284, %v2267
    %v2288 = vmul.f32 %v2286, %v2271
    %v2289 = vpack.c.bf16 %v2288, %v2287
    %v2292 = vunpack.c.l.b16 %v2227
    %v2293 = vunpack.c.l.b16 %v2228
    %v2294 = vpack.c.b16 %v2293, %v2292
    %v2296 = vsel %vm436, %v2294, 0
    %2298 = vmatprep.subr.bf16.mxu0 0
    %2299 = vmatpush1.bf16.msra.mxu0 0
    %2300 = vmatprep.subr.bf16.mxu0 0
    %2301 = vmatpush1.bf16.msra.mxu0 0
    %2302 = vmatprep.subr.bf16.mxu0 0
    %2303 = vmatpush1.bf16.msra.mxu0 0
    %2304 = vmatprep.subr.bf16.mxu0 0
    %2305 = vmatpush1.bf16.msra.mxu0 0
    %2306 = vmatprep.subr.bf16.mxu0 0
    %2307 = vmatpush1.bf16.msra.mxu0 0
    %2308 = vmatprep.subr.bf16.mxu0 0
    %2309 = vmatpush1.bf16.msra.mxu0 0
    %2310 = vmatprep.subr.bf16.mxu0 0
    %2311 = vmatpush1.bf16.msra.mxu0 0
    %2312 = vmatprep.subr.bf16.mxu0 0
    %2313 = vmatpush1.bf16.msra.mxu0 %v2289
    %2314 = vmatprep.subr.bf16.mxu0 0
    %2315 = vmatpush2.bf16.msra.mxu0 0
    %2316 = vmatprep.subr.bf16.mxu0 0
    %2317 = vmatpush2.bf16.msra.mxu0 0
    %2318 = vmatprep.subr.bf16.mxu0 0
    %2319 = vmatpush2.bf16.msra.mxu0 0
    %2320 = vmatprep.subr.bf16.mxu0 0
    %2321 = vmatpush2.bf16.msra.mxu0 0
    %2322 = vmatprep.subr.bf16.mxu0 0
    %2323 = vmatpush2.bf16.msra.mxu0 0
    %2324 = vmatprep.subr.bf16.mxu0 0
    %2325 = vmatpush2.bf16.msra.mxu0 0
    %2326 = vmatprep.subr.bf16.mxu0 0
    %2327 = vmatpush2.bf16.msra.mxu0 0
    %2328 = vmatprep.subr.bf16.mxu0 0
    %2329 = vmatpush2.bf16.msra.mxu0 0
    %2330 = vmatprep.mubr.bf16.mxu0 0
    %2331 = vmatmul.mubr.bf16.gmra.mxu0 %v2296
    %v2332 = vpop.f32.mrf.mxu0
    %v2333 = vadd.f32 0.0, %v2332
    %v2334 = vpop.f32.mrf.mxu0
    %v2335 = vpop.f32.mrf.mxu0
    %v2336 = vadd.f32 0.0, %v2335
    %v2337 = vpop.f32.mrf.mxu0
    %2338 = vdwg.mxu0
    %2339 = vmatprep.subr.bf16.mxu0 %v1450
    %2340 = vmatpush1.bf16.msra.mxu0 %v1449
    %2341 = vmatprep.subr.bf16.mxu0 %v1447
    %2342 = vmatpush1.bf16.msra.mxu0 %v1446
    %2343 = vmatprep.subr.bf16.mxu0 %v1444
    %2344 = vmatpush1.bf16.msra.mxu0 %v1443
    %2345 = vmatprep.subr.bf16.mxu0 %v1441
    %2346 = vmatpush1.bf16.msra.mxu0 %v1440
    %2347 = vmatprep.subr.bf16.mxu0 %v1438
    %2348 = vmatpush1.bf16.msra.mxu0 %v1437
    %2349 = vmatprep.subr.bf16.mxu0 %v1435
    %2350 = vmatpush1.bf16.msra.mxu0 %v1434
    %2351 = vmatprep.subr.bf16.mxu0 %v1432
    %2352 = vmatpush1.bf16.msra.mxu0 %v1431
    %2353 = vmatprep.subr.bf16.mxu0 %v1429
    %2354 = vmatpush1.bf16.msra.mxu0 %v1428
    %2355 = vmatprep.subr.bf16.mxu0 0
    %2356 = vmatpush2.bf16.msra.mxu0 0
    %2357 = vmatprep.subr.bf16.mxu0 0
    %2358 = vmatpush2.bf16.msra.mxu0 0
    %2359 = vmatprep.subr.bf16.mxu0 0
    %2360 = vmatpush2.bf16.msra.mxu0 0
    %2361 = vmatprep.subr.bf16.mxu0 0
    %2362 = vmatpush2.bf16.msra.mxu0 0
    %2363 = vmatprep.subr.bf16.mxu0 0
    %2364 = vmatpush2.bf16.msra.mxu0 0
    %2365 = vmatprep.subr.bf16.mxu0 0
    %2366 = vmatpush2.bf16.msra.mxu0 0
    %2367 = vmatprep.subr.bf16.mxu0 0
    %2368 = vmatpush2.bf16.msra.mxu0 0
    %2369 = vmatprep.subr.bf16.mxu0 0
    %2370 = vmatpush2.bf16.msra.mxu0 0
    %2371 = vmatprep.mubr.bf16.mxu0 0
    %2372 = vmatmul.mubr.bf16.gmra.mxu0 %v2229
    %v2373 = vpop.f32.mrf.mxu0
    %v2374 = vadd.f32 %v1336, %v2373
    %v2375 = vpop.f32.mrf.mxu0
    %v2376 = vadd.f32 %v1340, %v2375
    %v2377 = vpop.f32.mrf.mxu0
    %v2378 = vadd.f32 %v1336, %v2377
    %v2379 = vpop.f32.mrf.mxu0
    %v2380 = vadd.f32 %v1340, %v2379
    %2381 = vdwg.mxu0
    %2382 = vmatprep.subr.bf16.mxu0 0
    %2383 = vmatpush1.bf16.msra.mxu0 %v1451
    %2384 = vmatprep.subr.bf16.mxu0 0
    %2385 = vmatpush1.bf16.msra.mxu0 %v1448
    %2386 = vmatprep.subr.bf16.mxu0 0
    %2387 = vmatpush1.bf16.msra.mxu0 %v1445
    %2388 = vmatprep.subr.bf16.mxu0 0
    %2389 = vmatpush1.bf16.msra.mxu0 %v1442
    %2390 = vmatprep.subr.bf16.mxu0 0
    %2391 = vmatpush1.bf16.msra.mxu0 %v1439
    %2392 = vmatprep.subr.bf16.mxu0 0
    %2393 = vmatpush1.bf16.msra.mxu0 %v1436
    %2394 = vmatprep.subr.bf16.mxu0 0
    %2395 = vmatpush1.bf16.msra.mxu0 %v1433
    %2396 = vmatprep.subr.bf16.mxu0 0
    %2397 = vmatpush1.bf16.msra.mxu0 %v1430
    %2398 = vmatprep.subr.bf16.mxu0 0
    %2399 = vmatpush2.bf16.msra.mxu0 0
    %2400 = vmatprep.subr.bf16.mxu0 0
    %2401 = vmatpush2.bf16.msra.mxu0 0
    %2402 = vmatprep.subr.bf16.mxu0 0
    %2403 = vmatpush2.bf16.msra.mxu0 0
    %2404 = vmatprep.subr.bf16.mxu0 0
    %2405 = vmatpush2.bf16.msra.mxu0 0
    %2406 = vmatprep.subr.bf16.mxu0 0
    %2407 = vmatpush2.bf16.msra.mxu0 0
    %2408 = vmatprep.subr.bf16.mxu0 0
    %2409 = vmatpush2.bf16.msra.mxu0 0
    %2410 = vmatprep.subr.bf16.mxu0 0
    %2411 = vmatpush2.bf16.msra.mxu0 0
    %2412 = vmatprep.subr.bf16.mxu0 0
    %2413 = vmatpush2.bf16.msra.mxu0 0
    %2414 = vmatprep.mubr.bf16.mxu0 0
    %2415 = vmatmul.mubr.bf16.gmra.mxu0 %v2229
    %v2416 = vpop.f32.mrf.mxu0
    %v2417 = vadd.f32 %v1344, %v2416
    %v2418 = vpop.f32.mrf.mxu0
    %v2419 = vpop.f32.mrf.mxu0
    %v2420 = vadd.f32 %v1344, %v2419
    %v2421 = vpop.f32.mrf.mxu0
    %2422 = vdwg.mxu0
    %s2423 = scalar_lea.vmem [#allocation10], 32
    %v2424 = vld [vmem:[%s2423] sm:$0xff]
    %v2425 = vld [vmem:[%s2423 + $0x8] sm:$0xff]
    %v2426 = vpack.c.bf16 %v2336, %v2333
    %2427 = vmatprep.subr.bf16.mxu0 %v2066
    %2428 = vmatpush1.bf16.msra.mxu0 %v2065
    %2429 = vmatprep.subr.bf16.mxu0 %v2063
    %2430 = vmatpush1.bf16.msra.mxu0 %v2062
    %2431 = vmatprep.subr.bf16.mxu0 %v2060
    %2432 = vmatpush1.bf16.msra.mxu0 %v2059
    %2433 = vmatprep.subr.bf16.mxu0 %v2057
    %2434 = vmatpush1.bf16.msra.mxu0 %v2056
    %2435 = vmatprep.subr.bf16.mxu0 %v2054
    %2436 = vmatpush1.bf16.msra.mxu0 %v2053
    %2437 = vmatprep.subr.bf16.mxu0 %v2051
    %2438 = vmatpush1.bf16.msra.mxu0 %v2050
    %2439 = vmatprep.subr.bf16.mxu0 %v2048
    %2440 = vmatpush1.bf16.msra.mxu0 %v2047
    %2441 = vmatprep.subr.bf16.mxu0 %v2045
    %2442 = vmatpush1.bf16.msra.mxu0 %v2044
    %2443 = vmatprep.subr.bf16.mxu0 0
    %2444 = vmatpush2.bf16.msra.mxu0 0
    %2445 = vmatprep.subr.bf16.mxu0 0
    %2446 = vmatpush2.bf16.msra.mxu0 0
    %2447 = vmatprep.subr.bf16.mxu0 0
    %2448 = vmatpush2.bf16.msra.mxu0 0
    %2449 = vmatprep.subr.bf16.mxu0 0
    %2450 = vmatpush2.bf16.msra.mxu0 0
    %2451 = vmatprep.subr.bf16.mxu0 0
    %2452 = vmatpush2.bf16.msra.mxu0 0
    %2453 = vmatprep.subr.bf16.mxu0 0
    %2454 = vmatpush2.bf16.msra.mxu0 0
    %2455 = vmatprep.subr.bf16.mxu0 0
    %2456 = vmatpush2.bf16.msra.mxu0 0
    %2457 = vmatprep.subr.bf16.mxu0 0
    %2458 = vmatpush2.bf16.msra.mxu0 0
    %2459 = vmatprep.mubr.bf16.mxu0 0
    %2460 = vmatmul.mubr.bf16.gmra.mxu0 %v2426
    %v2461 = vpop.f32.mrf.mxu0
    %v2462 = vadd.f32 %v1952, %v2461
    %v2463 = vpop.f32.mrf.mxu0
    %v2464 = vadd.f32 %v1956, %v2463
    %v2465 = vpop.f32.mrf.mxu0
    %v2466 = vadd.f32 %v1952, %v2465
    %v2467 = vpop.f32.mrf.mxu0
    %v2468 = vadd.f32 %v1956, %v2467
    %2469 = vdwg.mxu0
    %2470 = vmatprep.subr.bf16.mxu0 0
    %2471 = vmatpush1.bf16.msra.mxu0 %v2067
    %2472 = vmatprep.subr.bf16.mxu0 0
    %2473 = vmatpush1.bf16.msra.mxu0 %v2064
    %2474 = vmatprep.subr.bf16.mxu0 0
    %2475 = vmatpush1.bf16.msra.mxu0 %v2061
    %2476 = vmatprep.subr.bf16.mxu0 0
    %2477 = vmatpush1.bf16.msra.mxu0 %v2058
    %2478 = vmatprep.subr.bf16.mxu0 0
    %2479 = vmatpush1.bf16.msra.mxu0 %v2055
    %2480 = vmatprep.subr.bf16.mxu0 0
    %2481 = vmatpush1.bf16.msra.mxu0 %v2052
    %2482 = vmatprep.subr.bf16.mxu0 0
    %2483 = vmatpush1.bf16.msra.mxu0 %v2049
    %2484 = vmatprep.subr.bf16.mxu0 0
    %2485 = vmatpush1.bf16.msra.mxu0 %v2046
    %2486 = vmatprep.subr.bf16.mxu0 0
    %2487 = vmatpush2.bf16.msra.mxu0 0
    %2488 = vmatprep.subr.bf16.mxu0 0
    %2489 = vmatpush2.bf16.msra.mxu0 0
    %2490 = vmatprep.subr.bf16.mxu0 0
    %2491 = vmatpush2.bf16.msra.mxu0 0
    %2492 = vmatprep.subr.bf16.mxu0 0
    %2493 = vmatpush2.bf16.msra.mxu0 0
    %2494 = vmatprep.subr.bf16.mxu0 0
    %2495 = vmatpush2.bf16.msra.mxu0 0
    %2496 = vmatprep.subr.bf16.mxu0 0
    %2497 = vmatpush2.bf16.msra.mxu0 0
    %2498 = vmatprep.subr.bf16.mxu0 0
    %2499 = vmatpush2.bf16.msra.mxu0 0
    %2500 = vmatprep.subr.bf16.mxu0 0
    %2501 = vmatpush2.bf16.msra.mxu0 0
    %2502 = vmatprep.mubr.bf16.mxu0 0
    %2503 = vmatmul.mubr.bf16.gmra.mxu0 %v2426
    %v2504 = vpop.f32.mrf.mxu0
    %v2505 = vadd.f32 %v1960, %v2504
    %v2506 = vpop.f32.mrf.mxu0
    %v2507 = vpop.f32.mrf.mxu0
    %v2508 = vadd.f32 %v1960, %v2507
    %v2509 = vpop.f32.mrf.mxu0
    %2510 = vdwg.mxu0
    %v2511 = vadd.f32 %v2374, %v2462
    %v2512 = vadd.f32 %v2378, %v2466
    %v2513 = vxor.u32 %v2511, 2147483648
    %v2514 = vxor.u32 %v2512, 2147483648
    %v2515 = vmul.f32 %v2513, 1.442695
    %v2516 = vpow.pop %v2515
    %v2517 = vmul.f32 %v2514, 1.442695
    %v2518 = vpow.pop %v2517
    %v2519 = vadd.f32 %v2516, 1.0
    %v2520 = vadd.f32 %v2518, 1.0
    %v2521 = vrcp.pop %v2519
    %v2522 = vmul.f32 1.0, %v2521
    %v2523 = vrcp.pop %v2520
    %v2524 = vmul.f32 1.0, %v2523
    %v2525 = vadd.f32 %v2376, %v2464
    %v2526 = vadd.f32 %v2380, %v2468
    %v2527 = vxor.u32 %v2525, 2147483648
    %v2528 = vxor.u32 %v2526, 2147483648
    %v2529 = vmul.f32 %v2527, 1.442695
    %v2530 = vpow.pop %v2529
    %v2531 = vmul.f32 %v2528, 1.442695
    %v2532 = vpow.pop %v2531
    %v2533 = vadd.f32 %v2530, 1.0
    %v2534 = vadd.f32 %v2532, 1.0
    %v2535 = vrcp.pop %v2533
    %v2536 = vmul.f32 1.0, %v2535
    %v2537 = vrcp.pop %v2534
    %v2538 = vmul.f32 1.0, %v2537
    %v2539 = vmul.f32 %v2522, %v2505
    %v2540 = vmul.f32 %v2524, %v2508
    %v2541 = vadd.f32 %v2417, %v2539
    %v2542 = vadd.f32 %v2420, %v2540
    %v2543 = vtanh.pop %v2541
    %v2544 = vtanh.pop %v2542
    %v2545 = vsub.f32 1.0, %v2536
    %v2546 = vsub.f32 1.0, %v2538
    %v2547 = vmul.f32 %v2545, %v2543
    %v2548 = vmul.f32 %v2546, %v2544
    %v2549 = vmul.f32 %v2536, %v2333
    %v2550 = vmul.f32 %v2538, %v2336
    %v2551 = vadd.f32 %v2547, %v2549
    %v2552 = vadd.f32 %v2548, %v2550
    %v2553 = vmul.f32 %v2424, %v2551
    %v2554 = vmul.f32 %v2425, %v2552
    %v2555 = vsub.f32 1.0, %v2424
    %v2556 = vsub.f32 1.0, %v2425
    %v2557 = vmul.f32 %v2555, %v2224
    %v2558 = vmul.f32 %v2556, %v2225
    %v2559 = vadd.f32 %v2553, %v2557
    %v2560 = vadd.f32 %v2554, %v2558
    %s2561 = scalar_lea.vmem [#allocation7], 24
    %v2562 = vld [vmem:[%s2561] sm:$0xf]
    %v2563 = vld [vmem:[%s2561 + $0x4] sm:$0xf]
    %v2564 = vpack.c.bf16 %v2560, %v2559
    %2565 = vmatprep.subr.bf16.mxu0 %v1694
    %2566 = vmatpush1.bf16.msra.mxu0 %v1693
    %2567 = vmatprep.subr.bf16.mxu0 %v1692
    %2568 = vmatpush1.bf16.msra.mxu0 %v1691
    %2569 = vmatprep.subr.bf16.mxu0 %v1690
    %2570 = vmatpush1.bf16.msra.mxu0 %v1689
    %2571 = vmatprep.subr.bf16.mxu0 %v1688
    %2572 = vmatpush1.bf16.msra.mxu0 %v1687
    %2573 = vmatprep.subr.bf16.mxu0 %v1686
    %2574 = vmatpush1.bf16.msra.mxu0 %v1685
    %2575 = vmatprep.subr.bf16.mxu0 %v1684
    %2576 = vmatpush1.bf16.msra.mxu0 %v1683
    %2577 = vmatprep.subr.bf16.mxu0 %v1682
    %2578 = vmatpush1.bf16.msra.mxu0 %v1681
    %2579 = vmatprep.subr.bf16.mxu0 %v1680
    %2580 = vmatpush1.bf16.msra.mxu0 %v1679
    %2581 = vmatprep.subr.bf16.mxu0 0
    %2582 = vmatpush2.bf16.msra.mxu0 0
    %2583 = vmatprep.subr.bf16.mxu0 0
    %2584 = vmatpush2.bf16.msra.mxu0 0
    %2585 = vmatprep.subr.bf16.mxu0 0
    %2586 = vmatpush2.bf16.msra.mxu0 0
    %2587 = vmatprep.subr.bf16.mxu0 0
    %2588 = vmatpush2.bf16.msra.mxu0 0
    %2589 = vmatprep.subr.bf16.mxu0 0
    %2590 = vmatpush2.bf16.msra.mxu0 0
    %2591 = vmatprep.subr.bf16.mxu0 0
    %2592 = vmatpush2.bf16.msra.mxu0 0
    %2593 = vmatprep.subr.bf16.mxu0 0
    %2594 = vmatpush2.bf16.msra.mxu0 0
    %2595 = vmatprep.subr.bf16.mxu0 0
    %2596 = vmatpush2.bf16.msra.mxu0 0
    %2597 = vmatprep.mubr.bf16.mxu0 0
    %2598 = vmatmul.mubr.bf16.gmra.mxu0 %v2564
    %v2599 = vpop.f32.mrf.mxu0
    %v2600 = vadd.f32 0.0, %v2599
    %v2601 = vpop.f32.mrf.mxu0
    %v2602 = vadd.f32 0.0, %v2601
    %v2603 = vpop.f32.mrf.mxu0
    %v2604 = vadd.f32 0.0, %v2603
    %v2605 = vpop.f32.mrf.mxu0
    %v2606 = vadd.f32 0.0, %v2605
    %2607 = vdwg.mxu0
    %v2608 = vadd.f32 %v2600, %v1759
    %v2609 = vadd.f32 %v2604, %v1759
    %v2610 = vxor.u32 %v2608, 2147483648
    %v2611 = vxor.u32 %v2609, 2147483648
    %v2612 = vmul.f32 %v2610, 1.442695
    %v2613 = vpow.pop %v2612
    %v2614 = vmul.f32 %v2611, 1.442695
    %v2615 = vpow.pop %v2614
    %v2616 = vadd.f32 %v2613, 1.0
    %v2617 = vadd.f32 %v2615, 1.0
    %v2618 = vrcp.pop %v2616
    %v2619 = vmul.f32 1.0, %v2618
    %v2620 = vrcp.pop %v2617
    %v2621 = vmul.f32 1.0, %v2620
    %v2622 = vmul.f32 %v2619, %v2602
    %v2623 = vmul.f32 %v2621, %v2606
    %v2624 = vpack.c.bf16 %v2623, %v2622
    %v2627 = vunpack.c.l.b16 %v2562
    %v2628 = vunpack.c.l.b16 %v2563
    %v2629 = vpack.c.b16 %v2628, %v2627
    %v2631 = vsel %vm436, %v2629, 0
    %2633 = vmatprep.subr.bf16.mxu0 0
    %2634 = vmatpush1.bf16.msra.mxu0 0
    %2635 = vmatprep.subr.bf16.mxu0 0
    %2636 = vmatpush1.bf16.msra.mxu0 0
    %2637 = vmatprep.subr.bf16.mxu0 0
    %2638 = vmatpush1.bf16.msra.mxu0 0
    %2639 = vmatprep.subr.bf16.mxu0 0
    %2640 = vmatpush1.bf16.msra.mxu0 0
    %2641 = vmatprep.subr.bf16.mxu0 0
    %2642 = vmatpush1.bf16.msra.mxu0 0
    %2643 = vmatprep.subr.bf16.mxu0 0
    %2644 = vmatpush1.bf16.msra.mxu0 0
    %2645 = vmatprep.subr.bf16.mxu0 0
    %2646 = vmatpush1.bf16.msra.mxu0 0
    %2647 = vmatprep.subr.bf16.mxu0 0
    %2648 = vmatpush1.bf16.msra.mxu0 %v2624
    %2649 = vmatprep.subr.bf16.mxu0 0
    %2650 = vmatpush2.bf16.msra.mxu0 0
    %2651 = vmatprep.subr.bf16.mxu0 0
    %2652 = vmatpush2.bf16.msra.mxu0 0
    %2653 = vmatprep.subr.bf16.mxu0 0
    %2654 = vmatpush2.bf16.msra.mxu0 0
    %2655 = vmatprep.subr.bf16.mxu0 0
    %2656 = vmatpush2.bf16.msra.mxu0 0
    %2657 = vmatprep.subr.bf16.mxu0 0
    %2658 = vmatpush2.bf16.msra.mxu0 0
    %2659 = vmatprep.subr.bf16.mxu0 0
    %2660 = vmatpush2.bf16.msra.mxu0 0
    %2661 = vmatprep.subr.bf16.mxu0 0
    %2662 = vmatpush2.bf16.msra.mxu0 0
    %2663 = vmatprep.subr.bf16.mxu0 0
    %2664 = vmatpush2.bf16.msra.mxu0 0
    %2665 = vmatprep.mubr.bf16.mxu0 0
    %2666 = vmatmul.mubr.bf16.gmra.mxu0 %v2631
    %v2667 = vpop.f32.mrf.mxu0
    %v2668 = vadd.f32 0.0, %v2667
    %v2669 = vpop.f32.mrf.mxu0
    %v2670 = vpop.f32.mrf.mxu0
    %v2671 = vadd.f32 0.0, %v2670
    %v2672 = vpop.f32.mrf.mxu0
    %2673 = vdwg.mxu0
    %2674 = vmatprep.subr.bf16.mxu0 %v1450
    %2675 = vmatpush1.bf16.msra.mxu0 %v1449
    %2676 = vmatprep.subr.bf16.mxu0 %v1447
    %2677 = vmatpush1.bf16.msra.mxu0 %v1446
    %2678 = vmatprep.subr.bf16.mxu0 %v1444
    %2679 = vmatpush1.bf16.msra.mxu0 %v1443
    %2680 = vmatprep.subr.bf16.mxu0 %v1441
    %2681 = vmatpush1.bf16.msra.mxu0 %v1440
    %2682 = vmatprep.subr.bf16.mxu0 %v1438
    %2683 = vmatpush1.bf16.msra.mxu0 %v1437
    %2684 = vmatprep.subr.bf16.mxu0 %v1435
    %2685 = vmatpush1.bf16.msra.mxu0 %v1434
    %2686 = vmatprep.subr.bf16.mxu0 %v1432
    %2687 = vmatpush1.bf16.msra.mxu0 %v1431
    %2688 = vmatprep.subr.bf16.mxu0 %v1429
    %2689 = vmatpush1.bf16.msra.mxu0 %v1428
    %2690 = vmatprep.subr.bf16.mxu0 0
    %2691 = vmatpush2.bf16.msra.mxu0 0
    %2692 = vmatprep.subr.bf16.mxu0 0
    %2693 = vmatpush2.bf16.msra.mxu0 0
    %2694 = vmatprep.subr.bf16.mxu0 0
    %2695 = vmatpush2.bf16.msra.mxu0 0
    %2696 = vmatprep.subr.bf16.mxu0 0
    %2697 = vmatpush2.bf16.msra.mxu0 0
    %2698 = vmatprep.subr.bf16.mxu0 0
    %2699 = vmatpush2.bf16.msra.mxu0 0
    %2700 = vmatprep.subr.bf16.mxu0 0
    %2701 = vmatpush2.bf16.msra.mxu0 0
    %2702 = vmatprep.subr.bf16.mxu0 0
    %2703 = vmatpush2.bf16.msra.mxu0 0
    %2704 = vmatprep.subr.bf16.mxu0 0
    %2705 = vmatpush2.bf16.msra.mxu0 0
    %2706 = vmatprep.mubr.bf16.mxu0 0
    %2707 = vmatmul.mubr.bf16.gmra.mxu0 %v2564
    %v2708 = vpop.f32.mrf.mxu0
    %v2709 = vadd.f32 %v1336, %v2708
    %v2710 = vpop.f32.mrf.mxu0
    %v2711 = vadd.f32 %v1340, %v2710
    %v2712 = vpop.f32.mrf.mxu0
    %v2713 = vadd.f32 %v1336, %v2712
    %v2714 = vpop.f32.mrf.mxu0
    %v2715 = vadd.f32 %v1340, %v2714
    %2716 = vdwg.mxu0
    %2717 = vmatprep.subr.bf16.mxu0 0
    %2718 = vmatpush1.bf16.msra.mxu0 %v1451
    %2719 = vmatprep.subr.bf16.mxu0 0
    %2720 = vmatpush1.bf16.msra.mxu0 %v1448
    %2721 = vmatprep.subr.bf16.mxu0 0
    %2722 = vmatpush1.bf16.msra.mxu0 %v1445
    %2723 = vmatprep.subr.bf16.mxu0 0
    %2724 = vmatpush1.bf16.msra.mxu0 %v1442
    %2725 = vmatprep.subr.bf16.mxu0 0
    %2726 = vmatpush1.bf16.msra.mxu0 %v1439
    %2727 = vmatprep.subr.bf16.mxu0 0
    %2728 = vmatpush1.bf16.msra.mxu0 %v1436
    %2729 = vmatprep.subr.bf16.mxu0 0
    %2730 = vmatpush1.bf16.msra.mxu0 %v1433
    %2731 = vmatprep.subr.bf16.mxu0 0
    %2732 = vmatpush1.bf16.msra.mxu0 %v1430
    %2733 = vmatprep.subr.bf16.mxu0 0
    %2734 = vmatpush2.bf16.msra.mxu0 0
    %2735 = vmatprep.subr.bf16.mxu0 0
    %2736 = vmatpush2.bf16.msra.mxu0 0
    %2737 = vmatprep.subr.bf16.mxu0 0
    %2738 = vmatpush2.bf16.msra.mxu0 0
    %2739 = vmatprep.subr.bf16.mxu0 0
    %2740 = vmatpush2.bf16.msra.mxu0 0
    %2741 = vmatprep.subr.bf16.mxu0 0
    %2742 = vmatpush2.bf16.msra.mxu0 0
    %2743 = vmatprep.subr.bf16.mxu0 0
    %2744 = vmatpush2.bf16.msra.mxu0 0
    %2745 = vmatprep.subr.bf16.mxu0 0
    %2746 = vmatpush2.bf16.msra.mxu0 0
    %2747 = vmatprep.subr.bf16.mxu0 0
    %2748 = vmatpush2.bf16.msra.mxu0 0
    %2749 = vmatprep.mubr.bf16.mxu0 0
    %2750 = vmatmul.mubr.bf16.gmra.mxu0 %v2564
    %v2751 = vpop.f32.mrf.mxu0
    %v2752 = vadd.f32 %v1344, %v2751
    %v2753 = vpop.f32.mrf.mxu0
    %v2754 = vpop.f32.mrf.mxu0
    %v2755 = vadd.f32 %v1344, %v2754
    %v2756 = vpop.f32.mrf.mxu0
    %2757 = vdwg.mxu0
    %s2758 = scalar_lea.vmem [#allocation10], 48
    %v2759 = vld [vmem:[%s2758] sm:$0xff]
    %v2760 = vld [vmem:[%s2758 + $0x8] sm:$0xff]
    %v2761 = vpack.c.bf16 %v2671, %v2668
    %2762 = vmatprep.subr.bf16.mxu0 %v2066
    %2763 = vmatpush1.bf16.msra.mxu0 %v2065
    %2764 = vmatprep.subr.bf16.mxu0 %v2063
    %2765 = vmatpush1.bf16.msra.mxu0 %v2062
    %2766 = vmatprep.subr.bf16.mxu0 %v2060
    %2767 = vmatpush1.bf16.msra.mxu0 %v2059
    %2768 = vmatprep.subr.bf16.mxu0 %v2057
    %2769 = vmatpush1.bf16.msra.mxu0 %v2056
    %2770 = vmatprep.subr.bf16.mxu0 %v2054
    %2771 = vmatpush1.bf16.msra.mxu0 %v2053
    %2772 = vmatprep.subr.bf16.mxu0 %v2051
    %2773 = vmatpush1.bf16.msra.mxu0 %v2050
    %2774 = vmatprep.subr.bf16.mxu0 %v2048
    %2775 = vmatpush1.bf16.msra.mxu0 %v2047
    %2776 = vmatprep.subr.bf16.mxu0 %v2045
    %2777 = vmatpush1.bf16.msra.mxu0 %v2044
    %2778 = vmatprep.subr.bf16.mxu0 0
    %2779 = vmatpush2.bf16.msra.mxu0 0
    %2780 = vmatprep.subr.bf16.mxu0 0
    %2781 = vmatpush2.bf16.msra.mxu0 0
    %2782 = vmatprep.subr.bf16.mxu0 0
    %2783 = vmatpush2.bf16.msra.mxu0 0
    %2784 = vmatprep.subr.bf16.mxu0 0
    %2785 = vmatpush2.bf16.msra.mxu0 0
    %2786 = vmatprep.subr.bf16.mxu0 0
    %2787 = vmatpush2.bf16.msra.mxu0 0
    %2788 = vmatprep.subr.bf16.mxu0 0
    %2789 = vmatpush2.bf16.msra.mxu0 0
    %2790 = vmatprep.subr.bf16.mxu0 0
    %2791 = vmatpush2.bf16.msra.mxu0 0
    %2792 = vmatprep.subr.bf16.mxu0 0
    %2793 = vmatpush2.bf16.msra.mxu0 0
    %2794 = vmatprep.mubr.bf16.mxu0 0
    %2795 = vmatmul.mubr.bf16.gmra.mxu0 %v2761
    %v2796 = vpop.f32.mrf.mxu0
    %v2797 = vadd.f32 %v1952, %v2796
    %v2798 = vpop.f32.mrf.mxu0
    %v2799 = vadd.f32 %v1956, %v2798
    %v2800 = vpop.f32.mrf.mxu0
    %v2801 = vadd.f32 %v1952, %v2800
    %v2802 = vpop.f32.mrf.mxu0
    %v2803 = vadd.f32 %v1956, %v2802
    %2804 = vdwg.mxu0
    %2805 = vmatprep.subr.bf16.mxu0 0
    %2806 = vmatpush1.bf16.msra.mxu0 %v2067
    %2807 = vmatprep.subr.bf16.mxu0 0
    %2808 = vmatpush1.bf16.msra.mxu0 %v2064
    %2809 = vmatprep.subr.bf16.mxu0 0
    %2810 = vmatpush1.bf16.msra.mxu0 %v2061
    %2811 = vmatprep.subr.bf16.mxu0 0
    %2812 = vmatpush1.bf16.msra.mxu0 %v2058
    %2813 = vmatprep.subr.bf16.mxu0 0
    %2814 = vmatpush1.bf16.msra.mxu0 %v2055
    %2815 = vmatprep.subr.bf16.mxu0 0
    %2816 = vmatpush1.bf16.msra.mxu0 %v2052
    %2817 = vmatprep.subr.bf16.mxu0 0
    %2818 = vmatpush1.bf16.msra.mxu0 %v2049
    %2819 = vmatprep.subr.bf16.mxu0 0
    %2820 = vmatpush1.bf16.msra.mxu0 %v2046
    %2821 = vmatprep.subr.bf16.mxu0 0
    %2822 = vmatpush2.bf16.msra.mxu0 0
    %2823 = vmatprep.subr.bf16.mxu0 0
    %2824 = vmatpush2.bf16.msra.mxu0 0
    %2825 = vmatprep.subr.bf16.mxu0 0
    %2826 = vmatpush2.bf16.msra.mxu0 0
    %2827 = vmatprep.subr.bf16.mxu0 0
    %2828 = vmatpush2.bf16.msra.mxu0 0
    %2829 = vmatprep.subr.bf16.mxu0 0
    %2830 = vmatpush2.bf16.msra.mxu0 0
    %2831 = vmatprep.subr.bf16.mxu0 0
    %2832 = vmatpush2.bf16.msra.mxu0 0
    %2833 = vmatprep.subr.bf16.mxu0 0
    %2834 = vmatpush2.bf16.msra.mxu0 0
    %2835 = vmatprep.subr.bf16.mxu0 0
    %2836 = vmatpush2.bf16.msra.mxu0 0
    %2837 = vmatprep.mubr.bf16.mxu0 0
    %2838 = vmatmul.mubr.bf16.gmra.mxu0 %v2761
    %v2839 = vpop.f32.mrf.mxu0
    %v2840 = vadd.f32 %v1960, %v2839
    %v2841 = vpop.f32.mrf.mxu0
    %v2842 = vpop.f32.mrf.mxu0
    %v2843 = vadd.f32 %v1960, %v2842
    %v2844 = vpop.f32.mrf.mxu0
    %2845 = vdwg.mxu0
    %v2846 = vadd.f32 %v2709, %v2797
    %v2847 = vadd.f32 %v2713, %v2801
    %v2848 = vxor.u32 %v2846, 2147483648
    %v2849 = vxor.u32 %v2847, 2147483648
    %v2850 = vmul.f32 %v2848, 1.442695
    %v2851 = vpow.pop %v2850
    %v2852 = vmul.f32 %v2849, 1.442695
    %v2853 = vpow.pop %v2852
    %v2854 = vadd.f32 %v2851, 1.0
    %v2855 = vadd.f32 %v2853, 1.0
    %v2856 = vrcp.pop %v2854
    %v2857 = vmul.f32 1.0, %v2856
    %v2858 = vrcp.pop %v2855
    %v2859 = vmul.f32 1.0, %v2858
    %v2860 = vadd.f32 %v2711, %v2799
    %v2861 = vadd.f32 %v2715, %v2803
    %v2862 = vxor.u32 %v2860, 2147483648
    %v2863 = vxor.u32 %v2861, 2147483648
    %v2864 = vmul.f32 %v2862, 1.442695
    %v2865 = vpow.pop %v2864
    %v2866 = vmul.f32 %v2863, 1.442695
    %v2867 = vpow.pop %v2866
    %v2868 = vadd.f32 %v2865, 1.0
    %v2869 = vadd.f32 %v2867, 1.0
    %v2870 = vrcp.pop %v2868
    %v2871 = vmul.f32 1.0, %v2870
    %v2872 = vrcp.pop %v2869
    %v2873 = vmul.f32 1.0, %v2872
    %v2874 = vmul.f32 %v2857, %v2840
    %v2875 = vmul.f32 %v2859, %v2843
    %v2876 = vadd.f32 %v2752, %v2874
    %v2877 = vadd.f32 %v2755, %v2875
    %v2878 = vtanh.pop %v2876
    %v2879 = vtanh.pop %v2877
    %v2880 = vsub.f32 1.0, %v2871
    %v2881 = vsub.f32 1.0, %v2873
    %v2882 = vmul.f32 %v2880, %v2878
    %v2883 = vmul.f32 %v2881, %v2879
    %v2884 = vmul.f32 %v2871, %v2668
    %v2885 = vmul.f32 %v2873, %v2671
    %v2886 = vadd.f32 %v2882, %v2884
    %v2887 = vadd.f32 %v2883, %v2885
    %v2888 = vmul.f32 %v2759, %v2886
    %v2889 = vmul.f32 %v2760, %v2887
    %v2890 = vsub.f32 1.0, %v2759
    %v2891 = vsub.f32 1.0, %v2760
    %v2892 = vmul.f32 %v2890, %v2559
    %v2893 = vmul.f32 %v2891, %v2560
    %v2894 = vadd.f32 %v2888, %v2892
    %v2895 = vadd.f32 %v2889, %v2893
    loop: start=0, step=1, limit=2
    $region114: #{tpu_custom_call.1} parent=1 // loop_pre_header
      _
    $region115: #{tpu_custom_call.1} parent=1 // loop_header
      %s2897 = sphi 0, %s2901
      %p2898 = scmp.ge.s32.totalorder %s2897, 2
      %v2902 = vphi %v2894, %v5834
      %v2903 = vphi %v2895, %v5835
    $region116: #{tpu_custom_call.1} parent=1 // loop_header_branch
      %2900 = sbr.rel (%p2898) target = $region120
    $region117: #{tpu_custom_call.1} parent=1 // loop_body
      %v2904 = vpack.c.bf16 %v2903, %v2902
      %v2905 = vld [vmem:[#allocation11] sm:$0xff]
      %v2906 = vld [vmem:[#allocation11 + $0x8] sm:$0xf]
      %v2907 = vld [vmem:[#allocation11 + $0xc] sm:$0xff]
      %v2908 = vld [vmem:[#allocation11 + $0x14] sm:$0xf]
      %v2909 = vld [vmem:[#allocation11 + $0x18] sm:$0xff]
      %v2910 = vld [vmem:[#allocation11 + $0x20] sm:$0xf]
      %v2911 = vld [vmem:[#allocation11 + $0x24] sm:$0xff]
      %v2912 = vld [vmem:[#allocation11 + $0x2c] sm:$0xf]
      %v2913 = vld [vmem:[#allocation11 + $0x30] sm:$0xff]
      %v2914 = vld [vmem:[#allocation11 + $0x38] sm:$0xf]
      %v2915 = vld [vmem:[#allocation11 + $0x3c] sm:$0xff]
      %v2916 = vld [vmem:[#allocation11 + $0x44] sm:$0xf]
      %v2917 = vld [vmem:[#allocation11 + $0x48] sm:$0xff]
      %v2918 = vld [vmem:[#allocation11 + $0x50] sm:$0xf]
      %v2919 = vld [vmem:[#allocation11 + $0x54] sm:$0xff]
      %v2920 = vld [vmem:[#allocation11 + $0x5c] sm:$0xf]
      %v2921 = vld [vmem:[#allocation11 + $0x60] sm:$0xff]
      %v2922 = vld [vmem:[#allocation11 + $0x68] sm:$0xf]
      %v2923 = vld [vmem:[#allocation11 + $0x6c] sm:$0xff]
      %v2924 = vld [vmem:[#allocation11 + $0x74] sm:$0xf]
      %v2925 = vld [vmem:[#allocation11 + $0x78] sm:$0xff]
      %v2926 = vld [vmem:[#allocation11 + $0x80] sm:$0xf]
      %v2927 = vld [vmem:[#allocation11 + $0x84] sm:$0xff]
      %v2928 = vld [vmem:[#allocation11 + $0x8c] sm:$0xf]
      %v2929 = vld [vmem:[#allocation11 + $0x90] sm:$0xff]
      %v2930 = vld [vmem:[#allocation11 + $0x98] sm:$0xf]
      %v2931 = vld [vmem:[#allocation11 + $0x9c] sm:$0xff]
      %v2932 = vld [vmem:[#allocation11 + $0xa4] sm:$0xf]
      %v2933 = vld [vmem:[#allocation11 + $0xa8] sm:$0xff]
      %v2934 = vld [vmem:[#allocation11 + $0xb0] sm:$0xf]
      %v2935 = vld [vmem:[#allocation11 + $0xb4] sm:$0xff]
      %v2936 = vld [vmem:[#allocation11 + $0xbc] sm:$0xf]
      %v2937 = vld [vmem:[%s6] sm:$0x7]
      %v2939 = vlaneseq
      %v2940 = vshrl.u32 %v2939, 7
      %v2941 = vsub.s32 0, %v2940
      %v2942 = vrot.slane %v2937, %v2941
      %v2943 = vlaneseq
      %v2944 = vshrl.u32 %v2943, 7
      %v2945 = vsub.s32 1, %v2944
      %v2946 = vrot.slane %v2937, %v2945
      %v2947 = vlaneseq
      %v2948 = vshrl.u32 %v2947, 7
      %v2949 = vsub.s32 2, %v2948
      %v2950 = vrot.slane %v2937, %v2949
      %v2986 = vunpack.c.l.b16 %v2905
      %v2987 = vunpack.c.h.b16 %v2905
      %v2988 = vunpack.c.l.b16 %v2906
      %v2989 = vunpack.c.l.b16 %v2907
      %v2990 = vunpack.c.h.b16 %v2907
      %v2991 = vunpack.c.l.b16 %v2908
      %v2992 = vunpack.c.l.b16 %v2909
      %v2993 = vunpack.c.h.b16 %v2909
      %v2994 = vunpack.c.l.b16 %v2910
      %v2995 = vunpack.c.l.b16 %v2911
      %v2996 = vunpack.c.h.b16 %v2911
      %v2997 = vunpack.c.l.b16 %v2912
      %v2998 = vunpack.c.l.b16 %v2913
      %v2999 = vunpack.c.h.b16 %v2913
      %v3000 = vunpack.c.l.b16 %v2914
      %v3001 = vunpack.c.l.b16 %v2915
      %v3002 = vunpack.c.h.b16 %v2915
      %v3003 = vunpack.c.l.b16 %v2916
      %v3004 = vunpack.c.l.b16 %v2917
      %v3005 = vunpack.c.h.b16 %v2917
      %v3006 = vunpack.c.l.b16 %v2918
      %v3007 = vunpack.c.l.b16 %v2919
      %v3008 = vunpack.c.h.b16 %v2919
      %v3009 = vunpack.c.l.b16 %v2920
      %v3010 = vunpack.c.l.b16 %v2921
      %v3011 = vunpack.c.h.b16 %v2921
      %v3012 = vunpack.c.l.b16 %v2922
      %v3013 = vunpack.c.l.b16 %v2923
      %v3014 = vunpack.c.h.b16 %v2923
      %v3015 = vunpack.c.l.b16 %v2924
      %v3016 = vunpack.c.l.b16 %v2925
      %v3017 = vunpack.c.h.b16 %v2925
      %v3018 = vunpack.c.l.b16 %v2926
      %v3019 = vunpack.c.l.b16 %v2927
      %v3020 = vunpack.c.h.b16 %v2927
      %v3021 = vunpack.c.l.b16 %v2928
      %v3022 = vunpack.c.l.b16 %v2929
      %v3023 = vunpack.c.h.b16 %v2929
      %v3024 = vunpack.c.l.b16 %v2930
      %v3025 = vunpack.c.l.b16 %v2931
      %v3026 = vunpack.c.h.b16 %v2931
      %v3027 = vunpack.c.l.b16 %v2932
      %v3028 = vunpack.c.l.b16 %v2933
      %v3029 = vunpack.c.h.b16 %v2933
      %v3030 = vunpack.c.l.b16 %v2934
      %v3031 = vunpack.c.l.b16 %v2935
      %v3032 = vunpack.c.h.b16 %v2935
      %v3033 = vunpack.c.l.b16 %v2936
      %v3034 = vpack.c.b16 %v2989, %v2986
      %v3035 = vpack.c.b16 %v2990, %v2987
      %v3036 = vpack.c.b16 %v2991, %v2988
      %v3037 = vpack.c.b16 %v2995, %v2992
      %v3038 = vpack.c.b16 %v2996, %v2993
      %v3039 = vpack.c.b16 %v2997, %v2994
      %v3040 = vpack.c.b16 %v3001, %v2998
      %v3041 = vpack.c.b16 %v3002, %v2999
      %v3042 = vpack.c.b16 %v3003, %v3000
      %v3043 = vpack.c.b16 %v3007, %v3004
      %v3044 = vpack.c.b16 %v3008, %v3005
      %v3045 = vpack.c.b16 %v3009, %v3006
      %v3046 = vpack.c.b16 %v3013, %v3010
      %v3047 = vpack.c.b16 %v3014, %v3011
      %v3048 = vpack.c.b16 %v3015, %v3012
      %v3049 = vpack.c.b16 %v3019, %v3016
      %v3050 = vpack.c.b16 %v3020, %v3017
      %v3051 = vpack.c.b16 %v3021, %v3018
      %v3052 = vpack.c.b16 %v3025, %v3022
      %v3053 = vpack.c.b16 %v3026, %v3023
      %v3054 = vpack.c.b16 %v3027, %v3024
      %v3055 = vpack.c.b16 %v3031, %v3028
      %v3056 = vpack.c.b16 %v3032, %v3029
      %v3057 = vpack.c.b16 %v3033, %v3030
      %3082 = vmatprep.subr.bf16.mxu0 %v3056
      %3083 = vmatpush1.bf16.msra.mxu0 %v3055
      %3084 = vmatprep.subr.bf16.mxu0 %v3053
      %3085 = vmatpush1.bf16.msra.mxu0 %v3052
      %3086 = vmatprep.subr.bf16.mxu0 %v3050
      %3087 = vmatpush1.bf16.msra.mxu0 %v3049
      %3088 = vmatprep.subr.bf16.mxu0 %v3047
      %3089 = vmatpush1.bf16.msra.mxu0 %v3046
      %3090 = vmatprep.subr.bf16.mxu0 %v3044
      %3091 = vmatpush1.bf16.msra.mxu0 %v3043
      %3092 = vmatprep.subr.bf16.mxu0 %v3041
      %3093 = vmatpush1.bf16.msra.mxu0 %v3040
      %3094 = vmatprep.subr.bf16.mxu0 %v3038
      %3095 = vmatpush1.bf16.msra.mxu0 %v3037
      %3096 = vmatprep.subr.bf16.mxu0 %v3035
      %3097 = vmatpush1.bf16.msra.mxu0 %v3034
      %3098 = vmatprep.subr.bf16.mxu0 0
      %3099 = vmatpush2.bf16.msra.mxu0 0
      %3100 = vmatprep.subr.bf16.mxu0 0
      %3101 = vmatpush2.bf16.msra.mxu0 0
      %3102 = vmatprep.subr.bf16.mxu0 0
      %3103 = vmatpush2.bf16.msra.mxu0 0
      %3104 = vmatprep.subr.bf16.mxu0 0
      %3105 = vmatpush2.bf16.msra.mxu0 0
      %3106 = vmatprep.subr.bf16.mxu0 0
      %3107 = vmatpush2.bf16.msra.mxu0 0
      %3108 = vmatprep.subr.bf16.mxu0 0
      %3109 = vmatpush2.bf16.msra.mxu0 0
      %3110 = vmatprep.subr.bf16.mxu0 0
      %3111 = vmatpush2.bf16.msra.mxu0 0
      %3112 = vmatprep.subr.bf16.mxu0 0
      %3113 = vmatpush2.bf16.msra.mxu0 0
      %3114 = vmatprep.mubr.bf16.mxu0 0
      %3115 = vmatmul.mubr.bf16.gmra.mxu0 %v2904
      %v3116 = vpop.f32.mrf.mxu0
      %v3117 = vadd.f32 %v2942, %v3116
      %v3118 = vpop.f32.mrf.mxu0
      %v3119 = vadd.f32 %v2946, %v3118
      %v3120 = vpop.f32.mrf.mxu0
      %v3121 = vadd.f32 %v2942, %v3120
      %v3122 = vpop.f32.mrf.mxu0
      %v3123 = vadd.f32 %v2946, %v3122
      %3124 = vdwg.mxu0
      %3125 = vmatprep.subr.bf16.mxu0 0
      %3126 = vmatpush1.bf16.msra.mxu0 %v3057
      %3127 = vmatprep.subr.bf16.mxu0 0
      %3128 = vmatpush1.bf16.msra.mxu0 %v3054
      %3129 = vmatprep.subr.bf16.mxu0 0
      %3130 = vmatpush1.bf16.msra.mxu0 %v3051
      %3131 = vmatprep.subr.bf16.mxu0 0
      %3132 = vmatpush1.bf16.msra.mxu0 %v3048
      %3133 = vmatprep.subr.bf16.mxu0 0
      %3134 = vmatpush1.bf16.msra.mxu0 %v3045
      %3135 = vmatprep.subr.bf16.mxu0 0
      %3136 = vmatpush1.bf16.msra.mxu0 %v3042
      %3137 = vmatprep.subr.bf16.mxu0 0
      %3138 = vmatpush1.bf16.msra.mxu0 %v3039
      %3139 = vmatprep.subr.bf16.mxu0 0
      %3140 = vmatpush1.bf16.msra.mxu0 %v3036
      %3141 = vmatprep.subr.bf16.mxu0 0
      %3142 = vmatpush2.bf16.msra.mxu0 0
      %3143 = vmatprep.subr.bf16.mxu0 0
      %3144 = vmatpush2.bf16.msra.mxu0 0
      %3145 = vmatprep.subr.bf16.mxu0 0
      %3146 = vmatpush2.bf16.msra.mxu0 0
      %3147 = vmatprep.subr.bf16.mxu0 0
      %3148 = vmatpush2.bf16.msra.mxu0 0
      %3149 = vmatprep.subr.bf16.mxu0 0
      %3150 = vmatpush2.bf16.msra.mxu0 0
      %3151 = vmatprep.subr.bf16.mxu0 0
      %3152 = vmatpush2.bf16.msra.mxu0 0
      %3153 = vmatprep.subr.bf16.mxu0 0
      %3154 = vmatpush2.bf16.msra.mxu0 0
      %3155 = vmatprep.subr.bf16.mxu0 0
      %3156 = vmatpush2.bf16.msra.mxu0 0
      %3157 = vmatprep.mubr.bf16.mxu0 0
      %3158 = vmatmul.mubr.bf16.gmra.mxu0 %v2904
      %v3159 = vpop.f32.mrf.mxu0
      %v3160 = vadd.f32 %v2950, %v3159
      %v3161 = vpop.f32.mrf.mxu0
      %v3162 = vpop.f32.mrf.mxu0
      %v3163 = vadd.f32 %v2950, %v3162
      %v3164 = vpop.f32.mrf.mxu0
      %3165 = vdwg.mxu0
      %v3166 = vld [vmem:[#allocation8] sm:$0xff]
      %v3167 = vld [vmem:[#allocation8 + $0x8] sm:$0xff]
      %v3168 = vxor.u32 %v3117, 2147483648
      %v3169 = vxor.u32 %v3121, 2147483648
      %v3170 = vmul.f32 %v3168, 1.442695
      %v3171 = vpow.pop %v3170
      %v3172 = vmul.f32 %v3169, 1.442695
      %v3173 = vpow.pop %v3172
      %v3174 = vadd.f32 %v3171, 1.0
      %v3175 = vadd.f32 %v3173, 1.0
      %v3176 = vrcp.pop %v3174
      %v3177 = vmul.f32 1.0, %v3176
      %v3178 = vrcp.pop %v3175
      %v3179 = vmul.f32 1.0, %v3178
      %v3180 = vxor.u32 %v3119, 2147483648
      %v3181 = vxor.u32 %v3123, 2147483648
      %v3182 = vmul.f32 %v3180, 1.442695
      %v3183 = vpow.pop %v3182
      %v3184 = vmul.f32 %v3181, 1.442695
      %v3185 = vpow.pop %v3184
      %v3186 = vadd.f32 %v3183, 1.0
      %v3187 = vadd.f32 %v3185, 1.0
      %v3188 = vrcp.pop %v3186
      %v3189 = vmul.f32 1.0, %v3188
      %v3190 = vrcp.pop %v3187
      %v3191 = vmul.f32 1.0, %v3190
      %v3192 = vld [vmem:[%s8 + $0x2] sm:$0x1]
      %v3194 = vlaneseq
      %v3195 = vshrl.u32 %v3194, 7
      %v3196 = vsub.s32 0, %v3195
      %v3197 = vrot.slane %v3192, %v3196
      %v3199 = vmul.f32 %v3177, %v3197
      %v3200 = vmul.f32 %v3179, %v3197
      %v3201 = vadd.f32 %v3160, %v3199
      %v3202 = vadd.f32 %v3163, %v3200
      %v3203 = vtanh.pop %v3201
      %v3204 = vtanh.pop %v3202
      %v3205 = vsub.f32 1.0, %v3189
      %v3206 = vsub.f32 1.0, %v3191
      %v3207 = vmul.f32 %v3205, %v3203
      %v3208 = vmul.f32 %v3206, %v3204
      %v3209 = vmul.f32 %v3166, %v3207
      %v3210 = vmul.f32 %v3167, %v3208
      %v3211 = vsub.f32 1.0, %v3166
      %v3212 = vsub.f32 1.0, %v3167
      %v3213 = vmul.f32 %v3211, %v2902
      %v3214 = vmul.f32 %v3212, %v2903
      %v3215 = vadd.f32 %v3209, %v3213
      %v3216 = vadd.f32 %v3210, %v3214
      %v3217 = vld [vmem:[%s264] sm:$0xf]
      %v3218 = vld [vmem:[%s264 + $0x4] sm:$0xf]
      %v3219 = vpack.c.bf16 %v3216, %v3215
      %v3220 = vld [vmem:[#allocation17] sm:$0xff]
      %v3221 = vld [vmem:[#allocation17 + $0x8] sm:$0xff]
      %v3222 = vld [vmem:[#allocation17 + $0x10] sm:$0xff]
      %v3223 = vld [vmem:[#allocation17 + $0x18] sm:$0xff]
      %v3224 = vld [vmem:[#allocation17 + $0x20] sm:$0xff]
      %v3225 = vld [vmem:[#allocation17 + $0x28] sm:$0xff]
      %v3226 = vld [vmem:[#allocation17 + $0x30] sm:$0xff]
      %v3227 = vld [vmem:[#allocation17 + $0x38] sm:$0xff]
      %v3228 = vld [vmem:[#allocation17 + $0x40] sm:$0xff]
      %v3229 = vld [vmem:[#allocation17 + $0x48] sm:$0xff]
      %v3230 = vld [vmem:[#allocation17 + $0x50] sm:$0xff]
      %v3231 = vld [vmem:[#allocation17 + $0x58] sm:$0xff]
      %v3232 = vld [vmem:[#allocation17 + $0x60] sm:$0xff]
      %v3233 = vld [vmem:[#allocation17 + $0x68] sm:$0xff]
      %v3234 = vld [vmem:[#allocation17 + $0x70] sm:$0xff]
      %v3235 = vld [vmem:[#allocation17 + $0x78] sm:$0xff]
      %v3252 = vunpack.c.l.b16 %v3220
      %v3253 = vunpack.c.h.b16 %v3220
      %v3254 = vunpack.c.l.b16 %v3221
      %v3255 = vunpack.c.h.b16 %v3221
      %v3256 = vunpack.c.l.b16 %v3222
      %v3257 = vunpack.c.h.b16 %v3222
      %v3258 = vunpack.c.l.b16 %v3223
      %v3259 = vunpack.c.h.b16 %v3223
      %v3260 = vunpack.c.l.b16 %v3224
      %v3261 = vunpack.c.h.b16 %v3224
      %v3262 = vunpack.c.l.b16 %v3225
      %v3263 = vunpack.c.h.b16 %v3225
      %v3264 = vunpack.c.l.b16 %v3226
      %v3265 = vunpack.c.h.b16 %v3226
      %v3266 = vunpack.c.l.b16 %v3227
      %v3267 = vunpack.c.h.b16 %v3227
      %v3268 = vunpack.c.l.b16 %v3228
      %v3269 = vunpack.c.h.b16 %v3228
      %v3270 = vunpack.c.l.b16 %v3229
      %v3271 = vunpack.c.h.b16 %v3229
      %v3272 = vunpack.c.l.b16 %v3230
      %v3273 = vunpack.c.h.b16 %v3230
      %v3274 = vunpack.c.l.b16 %v3231
      %v3275 = vunpack.c.h.b16 %v3231
      %v3276 = vunpack.c.l.b16 %v3232
      %v3277 = vunpack.c.h.b16 %v3232
      %v3278 = vunpack.c.l.b16 %v3233
      %v3279 = vunpack.c.h.b16 %v3233
      %v3280 = vunpack.c.l.b16 %v3234
      %v3281 = vunpack.c.h.b16 %v3234
      %v3282 = vunpack.c.l.b16 %v3235
      %v3283 = vunpack.c.h.b16 %v3235
      %v3284 = vpack.c.b16 %v3254, %v3252
      %v3285 = vpack.c.b16 %v3255, %v3253
      %v3286 = vpack.c.b16 %v3258, %v3256
      %v3287 = vpack.c.b16 %v3259, %v3257
      %v3288 = vpack.c.b16 %v3262, %v3260
      %v3289 = vpack.c.b16 %v3263, %v3261
      %v3290 = vpack.c.b16 %v3266, %v3264
      %v3291 = vpack.c.b16 %v3267, %v3265
      %v3292 = vpack.c.b16 %v3270, %v3268
      %v3293 = vpack.c.b16 %v3271, %v3269
      %v3294 = vpack.c.b16 %v3274, %v3272
      %v3295 = vpack.c.b16 %v3275, %v3273
      %v3296 = vpack.c.b16 %v3278, %v3276
      %v3297 = vpack.c.b16 %v3279, %v3277
      %v3298 = vpack.c.b16 %v3282, %v3280
      %v3299 = vpack.c.b16 %v3283, %v3281
      %3316 = vmatprep.subr.bf16.mxu0 %v3299
      %3317 = vmatpush1.bf16.msra.mxu0 %v3298
      %3318 = vmatprep.subr.bf16.mxu0 %v3297
      %3319 = vmatpush1.bf16.msra.mxu0 %v3296
      %3320 = vmatprep.subr.bf16.mxu0 %v3295
      %3321 = vmatpush1.bf16.msra.mxu0 %v3294
      %3322 = vmatprep.subr.bf16.mxu0 %v3293
      %3323 = vmatpush1.bf16.msra.mxu0 %v3292
      %3324 = vmatprep.subr.bf16.mxu0 %v3291
      %3325 = vmatpush1.bf16.msra.mxu0 %v3290
      %3326 = vmatprep.subr.bf16.mxu0 %v3289
      %3327 = vmatpush1.bf16.msra.mxu0 %v3288
      %3328 = vmatprep.subr.bf16.mxu0 %v3287
      %3329 = vmatpush1.bf16.msra.mxu0 %v3286
      %3330 = vmatprep.subr.bf16.mxu0 %v3285
      %3331 = vmatpush1.bf16.msra.mxu0 %v3284
      %3332 = vmatprep.subr.bf16.mxu0 0
      %3333 = vmatpush2.bf16.msra.mxu0 0
      %3334 = vmatprep.subr.bf16.mxu0 0
      %3335 = vmatpush2.bf16.msra.mxu0 0
      %3336 = vmatprep.subr.bf16.mxu0 0
      %3337 = vmatpush2.bf16.msra.mxu0 0
      %3338 = vmatprep.subr.bf16.mxu0 0
      %3339 = vmatpush2.bf16.msra.mxu0 0
      %3340 = vmatprep.subr.bf16.mxu0 0
      %3341 = vmatpush2.bf16.msra.mxu0 0
      %3342 = vmatprep.subr.bf16.mxu0 0
      %3343 = vmatpush2.bf16.msra.mxu0 0
      %3344 = vmatprep.subr.bf16.mxu0 0
      %3345 = vmatpush2.bf16.msra.mxu0 0
      %3346 = vmatprep.subr.bf16.mxu0 0
      %3347 = vmatpush2.bf16.msra.mxu0 0
      %3348 = vmatprep.mubr.bf16.mxu0 0
      %3349 = vmatmul.mubr.bf16.gmra.mxu0 %v3219
      %v3350 = vpop.f32.mrf.mxu0
      %v3351 = vadd.f32 0.0, %v3350
      %v3352 = vpop.f32.mrf.mxu0
      %v3353 = vadd.f32 0.0, %v3352
      %v3354 = vpop.f32.mrf.mxu0
      %v3355 = vadd.f32 0.0, %v3354
      %v3356 = vpop.f32.mrf.mxu0
      %v3357 = vadd.f32 0.0, %v3356
      %3358 = vdwg.mxu0
      %v3359 = vld [vmem:[%s14] sm:$0x1]
      %v3361 = vlaneseq
      %v3362 = vshrl.u32 %v3361, 7
      %v3363 = vsub.s32 0, %v3362
      %v3364 = vrot.slane %v3359, %v3363
      %v3366 = vadd.f32 %v3351, %v3364
      %v3367 = vadd.f32 %v3355, %v3364
      %v3368 = vxor.u32 %v3366, 2147483648
      %v3369 = vxor.u32 %v3367, 2147483648
      %v3370 = vmul.f32 %v3368, 1.442695
      %v3371 = vpow.pop %v3370
      %v3372 = vmul.f32 %v3369, 1.442695
      %v3373 = vpow.pop %v3372
      %v3374 = vadd.f32 %v3371, 1.0
      %v3375 = vadd.f32 %v3373, 1.0
      %v3376 = vrcp.pop %v3374
      %v3377 = vmul.f32 1.0, %v3376
      %v3378 = vrcp.pop %v3375
      %v3379 = vmul.f32 1.0, %v3378
      %v3380 = vmul.f32 %v3377, %v3353
      %v3381 = vmul.f32 %v3379, %v3357
      %v3382 = vpack.c.bf16 %v3381, %v3380
      %v3385 = vunpack.c.l.b16 %v3217
      %v3386 = vunpack.c.l.b16 %v3218
      %v3387 = vpack.c.b16 %v3386, %v3385
      %v3389 = vsel %vm436, %v3387, 0
      %3391 = vmatprep.subr.bf16.mxu0 0
      %3392 = vmatpush1.bf16.msra.mxu0 0
      %3393 = vmatprep.subr.bf16.mxu0 0
      %3394 = vmatpush1.bf16.msra.mxu0 0
      %3395 = vmatprep.subr.bf16.mxu0 0
      %3396 = vmatpush1.bf16.msra.mxu0 0
      %3397 = vmatprep.subr.bf16.mxu0 0
      %3398 = vmatpush1.bf16.msra.mxu0 0
      %3399 = vmatprep.subr.bf16.mxu0 0
      %3400 = vmatpush1.bf16.msra.mxu0 0
      %3401 = vmatprep.subr.bf16.mxu0 0
      %3402 = vmatpush1.bf16.msra.mxu0 0
      %3403 = vmatprep.subr.bf16.mxu0 0
      %3404 = vmatpush1.bf16.msra.mxu0 0
      %3405 = vmatprep.subr.bf16.mxu0 0
      %3406 = vmatpush1.bf16.msra.mxu0 %v3382
      %3407 = vmatprep.subr.bf16.mxu0 0
      %3408 = vmatpush2.bf16.msra.mxu0 0
      %3409 = vmatprep.subr.bf16.mxu0 0
      %3410 = vmatpush2.bf16.msra.mxu0 0
      %3411 = vmatprep.subr.bf16.mxu0 0
      %3412 = vmatpush2.bf16.msra.mxu0 0
      %3413 = vmatprep.subr.bf16.mxu0 0
      %3414 = vmatpush2.bf16.msra.mxu0 0
      %3415 = vmatprep.subr.bf16.mxu0 0
      %3416 = vmatpush2.bf16.msra.mxu0 0
      %3417 = vmatprep.subr.bf16.mxu0 0
      %3418 = vmatpush2.bf16.msra.mxu0 0
      %3419 = vmatprep.subr.bf16.mxu0 0
      %3420 = vmatpush2.bf16.msra.mxu0 0
      %3421 = vmatprep.subr.bf16.mxu0 0
      %3422 = vmatpush2.bf16.msra.mxu0 0
      %3423 = vmatprep.mubr.bf16.mxu0 0
      %3424 = vmatmul.mubr.bf16.gmra.mxu0 %v3389
      %v3425 = vpop.f32.mrf.mxu0
      %v3426 = vadd.f32 0.0, %v3425
      %v3427 = vpop.f32.mrf.mxu0
      %v3428 = vpop.f32.mrf.mxu0
      %v3429 = vadd.f32 0.0, %v3428
      %v3430 = vpop.f32.mrf.mxu0
      %3431 = vdwg.mxu0
      %v3432 = vld [vmem:[%s481] sm:$0xff]
      %v3433 = vld [vmem:[%s481 + $0x8] sm:$0xff]
      %v3434 = vpack.c.bf16 %v3429, %v3426
      %v3435 = vld [vmem:[#allocation13] sm:$0xff]
      %v3436 = vld [vmem:[#allocation13 + $0x8] sm:$0xf]
      %v3437 = vld [vmem:[#allocation13 + $0xc] sm:$0xff]
      %v3438 = vld [vmem:[#allocation13 + $0x14] sm:$0xf]
      %v3439 = vld [vmem:[#allocation13 + $0x18] sm:$0xff]
      %v3440 = vld [vmem:[#allocation13 + $0x20] sm:$0xf]
      %v3441 = vld [vmem:[#allocation13 + $0x24] sm:$0xff]
      %v3442 = vld [vmem:[#allocation13 + $0x2c] sm:$0xf]
      %v3443 = vld [vmem:[#allocation13 + $0x30] sm:$0xff]
      %v3444 = vld [vmem:[#allocation13 + $0x38] sm:$0xf]
      %v3445 = vld [vmem:[#allocation13 + $0x3c] sm:$0xff]
      %v3446 = vld [vmem:[#allocation13 + $0x44] sm:$0xf]
      %v3447 = vld [vmem:[#allocation13 + $0x48] sm:$0xff]
      %v3448 = vld [vmem:[#allocation13 + $0x50] sm:$0xf]
      %v3449 = vld [vmem:[#allocation13 + $0x54] sm:$0xff]
      %v3450 = vld [vmem:[#allocation13 + $0x5c] sm:$0xf]
      %v3451 = vld [vmem:[#allocation13 + $0x60] sm:$0xff]
      %v3452 = vld [vmem:[#allocation13 + $0x68] sm:$0xf]
      %v3453 = vld [vmem:[#allocation13 + $0x6c] sm:$0xff]
      %v3454 = vld [vmem:[#allocation13 + $0x74] sm:$0xf]
      %v3455 = vld [vmem:[#allocation13 + $0x78] sm:$0xff]
      %v3456 = vld [vmem:[#allocation13 + $0x80] sm:$0xf]
      %v3457 = vld [vmem:[#allocation13 + $0x84] sm:$0xff]
      %v3458 = vld [vmem:[#allocation13 + $0x8c] sm:$0xf]
      %v3459 = vld [vmem:[#allocation13 + $0x90] sm:$0xff]
      %v3460 = vld [vmem:[#allocation13 + $0x98] sm:$0xf]
      %v3461 = vld [vmem:[#allocation13 + $0x9c] sm:$0xff]
      %v3462 = vld [vmem:[#allocation13 + $0xa4] sm:$0xf]
      %v3463 = vld [vmem:[#allocation13 + $0xa8] sm:$0xff]
      %v3464 = vld [vmem:[#allocation13 + $0xb0] sm:$0xf]
      %v3465 = vld [vmem:[#allocation13 + $0xb4] sm:$0xff]
      %v3466 = vld [vmem:[#allocation13 + $0xbc] sm:$0xf]
      %v3467 = vld [vmem:[%s8] sm:$0x7]
      %v3469 = vlaneseq
      %v3470 = vshrl.u32 %v3469, 7
      %v3471 = vsub.s32 0, %v3470
      %v3472 = vrot.slane %v3467, %v3471
      %v3473 = vlaneseq
      %v3474 = vshrl.u32 %v3473, 7
      %v3475 = vsub.s32 1, %v3474
      %v3476 = vrot.slane %v3467, %v3475
      %v3477 = vlaneseq
      %v3478 = vshrl.u32 %v3477, 7
      %v3479 = vsub.s32 2, %v3478
      %v3480 = vrot.slane %v3467, %v3479
      %v3516 = vunpack.c.l.b16 %v3435
      %v3517 = vunpack.c.h.b16 %v3435
      %v3518 = vunpack.c.l.b16 %v3436
      %v3519 = vunpack.c.l.b16 %v3437
      %v3520 = vunpack.c.h.b16 %v3437
      %v3521 = vunpack.c.l.b16 %v3438
      %v3522 = vunpack.c.l.b16 %v3439
      %v3523 = vunpack.c.h.b16 %v3439
      %v3524 = vunpack.c.l.b16 %v3440
      %v3525 = vunpack.c.l.b16 %v3441
      %v3526 = vunpack.c.h.b16 %v3441
      %v3527 = vunpack.c.l.b16 %v3442
      %v3528 = vunpack.c.l.b16 %v3443
      %v3529 = vunpack.c.h.b16 %v3443
      %v3530 = vunpack.c.l.b16 %v3444
      %v3531 = vunpack.c.l.b16 %v3445
      %v3532 = vunpack.c.h.b16 %v3445
      %v3533 = vunpack.c.l.b16 %v3446
      %v3534 = vunpack.c.l.b16 %v3447
      %v3535 = vunpack.c.h.b16 %v3447
      %v3536 = vunpack.c.l.b16 %v3448
      %v3537 = vunpack.c.l.b16 %v3449
      %v3538 = vunpack.c.h.b16 %v3449
      %v3539 = vunpack.c.l.b16 %v3450
      %v3540 = vunpack.c.l.b16 %v3451
      %v3541 = vunpack.c.h.b16 %v3451
      %v3542 = vunpack.c.l.b16 %v3452
      %v3543 = vunpack.c.l.b16 %v3453
      %v3544 = vunpack.c.h.b16 %v3453
      %v3545 = vunpack.c.l.b16 %v3454
      %v3546 = vunpack.c.l.b16 %v3455
      %v3547 = vunpack.c.h.b16 %v3455
      %v3548 = vunpack.c.l.b16 %v3456
      %v3549 = vunpack.c.l.b16 %v3457
      %v3550 = vunpack.c.h.b16 %v3457
      %v3551 = vunpack.c.l.b16 %v3458
      %v3552 = vunpack.c.l.b16 %v3459
      %v3553 = vunpack.c.h.b16 %v3459
      %v3554 = vunpack.c.l.b16 %v3460
      %v3555 = vunpack.c.l.b16 %v3461
      %v3556 = vunpack.c.h.b16 %v3461
      %v3557 = vunpack.c.l.b16 %v3462
      %v3558 = vunpack.c.l.b16 %v3463
      %v3559 = vunpack.c.h.b16 %v3463
      %v3560 = vunpack.c.l.b16 %v3464
      %v3561 = vunpack.c.l.b16 %v3465
      %v3562 = vunpack.c.h.b16 %v3465
      %v3563 = vunpack.c.l.b16 %v3466
      %v3564 = vpack.c.b16 %v3519, %v3516
      %v3565 = vpack.c.b16 %v3520, %v3517
      %v3566 = vpack.c.b16 %v3521, %v3518
      %v3567 = vpack.c.b16 %v3525, %v3522
      %v3568 = vpack.c.b16 %v3526, %v3523
      %v3569 = vpack.c.b16 %v3527, %v3524
      %v3570 = vpack.c.b16 %v3531, %v3528
      %v3571 = vpack.c.b16 %v3532, %v3529
      %v3572 = vpack.c.b16 %v3533, %v3530
      %v3573 = vpack.c.b16 %v3537, %v3534
      %v3574 = vpack.c.b16 %v3538, %v3535
      %v3575 = vpack.c.b16 %v3539, %v3536
      %v3576 = vpack.c.b16 %v3543, %v3540
      %v3577 = vpack.c.b16 %v3544, %v3541
      %v3578 = vpack.c.b16 %v3545, %v3542
      %v3579 = vpack.c.b16 %v3549, %v3546
      %v3580 = vpack.c.b16 %v3550, %v3547
      %v3581 = vpack.c.b16 %v3551, %v3548
      %v3582 = vpack.c.b16 %v3555, %v3552
      %v3583 = vpack.c.b16 %v3556, %v3553
      %v3584 = vpack.c.b16 %v3557, %v3554
      %v3585 = vpack.c.b16 %v3561, %v3558
      %v3586 = vpack.c.b16 %v3562, %v3559
      %v3587 = vpack.c.b16 %v3563, %v3560
      %3612 = vmatprep.subr.bf16.mxu0 %v3586
      %3613 = vmatpush1.bf16.msra.mxu0 %v3585
      %3614 = vmatprep.subr.bf16.mxu0 %v3583
      %3615 = vmatpush1.bf16.msra.mxu0 %v3582
      %3616 = vmatprep.subr.bf16.mxu0 %v3580
      %3617 = vmatpush1.bf16.msra.mxu0 %v3579
      %3618 = vmatprep.subr.bf16.mxu0 %v3577
      %3619 = vmatpush1.bf16.msra.mxu0 %v3576
      %3620 = vmatprep.subr.bf16.mxu0 %v3574
      %3621 = vmatpush1.bf16.msra.mxu0 %v3573
      %3622 = vmatprep.subr.bf16.mxu0 %v3571
      %3623 = vmatpush1.bf16.msra.mxu0 %v3570
      %3624 = vmatprep.subr.bf16.mxu0 %v3568
      %3625 = vmatpush1.bf16.msra.mxu0 %v3567
      %3626 = vmatprep.subr.bf16.mxu0 %v3565
      %3627 = vmatpush1.bf16.msra.mxu0 %v3564
      %3628 = vmatprep.subr.bf16.mxu0 0
      %3629 = vmatpush2.bf16.msra.mxu0 0
      %3630 = vmatprep.subr.bf16.mxu0 0
      %3631 = vmatpush2.bf16.msra.mxu0 0
      %3632 = vmatprep.subr.bf16.mxu0 0
      %3633 = vmatpush2.bf16.msra.mxu0 0
      %3634 = vmatprep.subr.bf16.mxu0 0
      %3635 = vmatpush2.bf16.msra.mxu0 0
      %3636 = vmatprep.subr.bf16.mxu0 0
      %3637 = vmatpush2.bf16.msra.mxu0 0
      %3638 = vmatprep.subr.bf16.mxu0 0
      %3639 = vmatpush2.bf16.msra.mxu0 0
      %3640 = vmatprep.subr.bf16.mxu0 0
      %3641 = vmatpush2.bf16.msra.mxu0 0
      %3642 = vmatprep.subr.bf16.mxu0 0
      %3643 = vmatpush2.bf16.msra.mxu0 0
      %3644 = vmatprep.mubr.bf16.mxu0 0
      %3645 = vmatmul.mubr.bf16.gmra.mxu0 %v3434
      %v3646 = vpop.f32.mrf.mxu0
      %v3647 = vadd.f32 %v3472, %v3646
      %v3648 = vpop.f32.mrf.mxu0
      %v3649 = vadd.f32 %v3476, %v3648
      %v3650 = vpop.f32.mrf.mxu0
      %v3651 = vadd.f32 %v3472, %v3650
      %v3652 = vpop.f32.mrf.mxu0
      %v3653 = vadd.f32 %v3476, %v3652
      %3654 = vdwg.mxu0
      %3655 = vmatprep.subr.bf16.mxu0 0
      %3656 = vmatpush1.bf16.msra.mxu0 %v3587
      %3657 = vmatprep.subr.bf16.mxu0 0
      %3658 = vmatpush1.bf16.msra.mxu0 %v3584
      %3659 = vmatprep.subr.bf16.mxu0 0
      %3660 = vmatpush1.bf16.msra.mxu0 %v3581
      %3661 = vmatprep.subr.bf16.mxu0 0
      %3662 = vmatpush1.bf16.msra.mxu0 %v3578
      %3663 = vmatprep.subr.bf16.mxu0 0
      %3664 = vmatpush1.bf16.msra.mxu0 %v3575
      %3665 = vmatprep.subr.bf16.mxu0 0
      %3666 = vmatpush1.bf16.msra.mxu0 %v3572
      %3667 = vmatprep.subr.bf16.mxu0 0
      %3668 = vmatpush1.bf16.msra.mxu0 %v3569
      %3669 = vmatprep.subr.bf16.mxu0 0
      %3670 = vmatpush1.bf16.msra.mxu0 %v3566
      %3671 = vmatprep.subr.bf16.mxu0 0
      %3672 = vmatpush2.bf16.msra.mxu0 0
      %3673 = vmatprep.subr.bf16.mxu0 0
      %3674 = vmatpush2.bf16.msra.mxu0 0
      %3675 = vmatprep.subr.bf16.mxu0 0
      %3676 = vmatpush2.bf16.msra.mxu0 0
      %3677 = vmatprep.subr.bf16.mxu0 0
      %3678 = vmatpush2.bf16.msra.mxu0 0
      %3679 = vmatprep.subr.bf16.mxu0 0
      %3680 = vmatpush2.bf16.msra.mxu0 0
      %3681 = vmatprep.subr.bf16.mxu0 0
      %3682 = vmatpush2.bf16.msra.mxu0 0
      %3683 = vmatprep.subr.bf16.mxu0 0
      %3684 = vmatpush2.bf16.msra.mxu0 0
      %3685 = vmatprep.subr.bf16.mxu0 0
      %3686 = vmatpush2.bf16.msra.mxu0 0
      %3687 = vmatprep.mubr.bf16.mxu0 0
      %3688 = vmatmul.mubr.bf16.gmra.mxu0 %v3434
      %v3689 = vpop.f32.mrf.mxu0
      %v3690 = vadd.f32 %v3480, %v3689
      %v3691 = vpop.f32.mrf.mxu0
      %v3692 = vpop.f32.mrf.mxu0
      %v3693 = vadd.f32 %v3480, %v3692
      %v3694 = vpop.f32.mrf.mxu0
      %3695 = vdwg.mxu0
      %v3696 = vadd.f32 %v3117, %v3647
      %v3697 = vadd.f32 %v3121, %v3651
      %v3698 = vxor.u32 %v3696, 2147483648
      %v3699 = vxor.u32 %v3697, 2147483648
      %v3700 = vmul.f32 %v3698, 1.442695
      %v3701 = vpow.pop %v3700
      %v3702 = vmul.f32 %v3699, 1.442695
      %v3703 = vpow.pop %v3702
      %v3704 = vadd.f32 %v3701, 1.0
      %v3705 = vadd.f32 %v3703, 1.0
      %v3706 = vrcp.pop %v3704
      %v3707 = vmul.f32 1.0, %v3706
      %v3708 = vrcp.pop %v3705
      %v3709 = vmul.f32 1.0, %v3708
      %v3710 = vadd.f32 %v3119, %v3649
      %v3711 = vadd.f32 %v3123, %v3653
      %v3712 = vxor.u32 %v3710, 2147483648
      %v3713 = vxor.u32 %v3711, 2147483648
      %v3714 = vmul.f32 %v3712, 1.442695
      %v3715 = vpow.pop %v3714
      %v3716 = vmul.f32 %v3713, 1.442695
      %v3717 = vpow.pop %v3716
      %v3718 = vadd.f32 %v3715, 1.0
      %v3719 = vadd.f32 %v3717, 1.0
      %v3720 = vrcp.pop %v3718
      %v3721 = vmul.f32 1.0, %v3720
      %v3722 = vrcp.pop %v3719
      %v3723 = vmul.f32 1.0, %v3722
      %v3724 = vmul.f32 %v3707, %v3690
      %v3725 = vmul.f32 %v3709, %v3693
      %v3726 = vadd.f32 %v3160, %v3724
      %v3727 = vadd.f32 %v3163, %v3725
      %v3728 = vtanh.pop %v3726
      %v3729 = vtanh.pop %v3727
      %v3730 = vsub.f32 1.0, %v3721
      %v3731 = vsub.f32 1.0, %v3723
      %v3732 = vmul.f32 %v3730, %v3728
      %v3733 = vmul.f32 %v3731, %v3729
      %v3734 = vmul.f32 %v3721, %v3426
      %v3735 = vmul.f32 %v3723, %v3429
      %v3736 = vadd.f32 %v3732, %v3734
      %v3737 = vadd.f32 %v3733, %v3735
      %v3738 = vmul.f32 %v3432, %v3736
      %v3739 = vmul.f32 %v3433, %v3737
      %v3740 = vsub.f32 1.0, %v3432
      %v3741 = vsub.f32 1.0, %v3433
      %v3742 = vmul.f32 %v3740, %v3215
      %v3743 = vmul.f32 %v3741, %v3216
      %v3744 = vadd.f32 %v3738, %v3742
      %v3745 = vadd.f32 %v3739, %v3743
      %v3746 = vld [vmem:[%s796] sm:$0xf]
      %v3747 = vld [vmem:[%s796 + $0x4] sm:$0xf]
      %v3748 = vpack.c.bf16 %v3745, %v3744
      %3749 = vmatprep.subr.bf16.mxu0 %v3299
      %3750 = vmatpush1.bf16.msra.mxu0 %v3298
      %3751 = vmatprep.subr.bf16.mxu0 %v3297
      %3752 = vmatpush1.bf16.msra.mxu0 %v3296
      %3753 = vmatprep.subr.bf16.mxu0 %v3295
      %3754 = vmatpush1.bf16.msra.mxu0 %v3294
      %3755 = vmatprep.subr.bf16.mxu0 %v3293
      %3756 = vmatpush1.bf16.msra.mxu0 %v3292
      %3757 = vmatprep.subr.bf16.mxu0 %v3291
      %3758 = vmatpush1.bf16.msra.mxu0 %v3290
      %3759 = vmatprep.subr.bf16.mxu0 %v3289
      %3760 = vmatpush1.bf16.msra.mxu0 %v3288
      %3761 = vmatprep.subr.bf16.mxu0 %v3287
      %3762 = vmatpush1.bf16.msra.mxu0 %v3286
      %3763 = vmatprep.subr.bf16.mxu0 %v3285
      %3764 = vmatpush1.bf16.msra.mxu0 %v3284
      %3765 = vmatprep.subr.bf16.mxu0 0
      %3766 = vmatpush2.bf16.msra.mxu0 0
      %3767 = vmatprep.subr.bf16.mxu0 0
      %3768 = vmatpush2.bf16.msra.mxu0 0
      %3769 = vmatprep.subr.bf16.mxu0 0
      %3770 = vmatpush2.bf16.msra.mxu0 0
      %3771 = vmatprep.subr.bf16.mxu0 0
      %3772 = vmatpush2.bf16.msra.mxu0 0
      %3773 = vmatprep.subr.bf16.mxu0 0
      %3774 = vmatpush2.bf16.msra.mxu0 0
      %3775 = vmatprep.subr.bf16.mxu0 0
      %3776 = vmatpush2.bf16.msra.mxu0 0
      %3777 = vmatprep.subr.bf16.mxu0 0
      %3778 = vmatpush2.bf16.msra.mxu0 0
      %3779 = vmatprep.subr.bf16.mxu0 0
      %3780 = vmatpush2.bf16.msra.mxu0 0
      %3781 = vmatprep.mubr.bf16.mxu0 0
      %3782 = vmatmul.mubr.bf16.gmra.mxu0 %v3748
      %v3783 = vpop.f32.mrf.mxu0
      %v3784 = vadd.f32 0.0, %v3783
      %v3785 = vpop.f32.mrf.mxu0
      %v3786 = vadd.f32 0.0, %v3785
      %v3787 = vpop.f32.mrf.mxu0
      %v3788 = vadd.f32 0.0, %v3787
      %v3789 = vpop.f32.mrf.mxu0
      %v3790 = vadd.f32 0.0, %v3789
      %3791 = vdwg.mxu0
      %v3792 = vadd.f32 %v3784, %v3364
      %v3793 = vadd.f32 %v3788, %v3364
      %v3794 = vxor.u32 %v3792, 2147483648
      %v3795 = vxor.u32 %v3793, 2147483648
      %v3796 = vmul.f32 %v3794, 1.442695
      %v3797 = vpow.pop %v3796
      %v3798 = vmul.f32 %v3795, 1.442695
      %v3799 = vpow.pop %v3798
      %v3800 = vadd.f32 %v3797, 1.0
      %v3801 = vadd.f32 %v3799, 1.0
      %v3802 = vrcp.pop %v3800
      %v3803 = vmul.f32 1.0, %v3802
      %v3804 = vrcp.pop %v3801
      %v3805 = vmul.f32 1.0, %v3804
      %v3806 = vmul.f32 %v3803, %v3786
      %v3807 = vmul.f32 %v3805, %v3790
      %v3808 = vpack.c.bf16 %v3807, %v3806
      %v3811 = vunpack.c.l.b16 %v3746
      %v3812 = vunpack.c.l.b16 %v3747
      %v3813 = vpack.c.b16 %v3812, %v3811
      %v3815 = vsel %vm436, %v3813, 0
      %3817 = vmatprep.subr.bf16.mxu0 0
      %3818 = vmatpush1.bf16.msra.mxu0 0
      %3819 = vmatprep.subr.bf16.mxu0 0
      %3820 = vmatpush1.bf16.msra.mxu0 0
      %3821 = vmatprep.subr.bf16.mxu0 0
      %3822 = vmatpush1.bf16.msra.mxu0 0
      %3823 = vmatprep.subr.bf16.mxu0 0
      %3824 = vmatpush1.bf16.msra.mxu0 0
      %3825 = vmatprep.subr.bf16.mxu0 0
      %3826 = vmatpush1.bf16.msra.mxu0 0
      %3827 = vmatprep.subr.bf16.mxu0 0
      %3828 = vmatpush1.bf16.msra.mxu0 0
      %3829 = vmatprep.subr.bf16.mxu0 0
      %3830 = vmatpush1.bf16.msra.mxu0 0
      %3831 = vmatprep.subr.bf16.mxu0 0
      %3832 = vmatpush1.bf16.msra.mxu0 %v3808
      %3833 = vmatprep.subr.bf16.mxu0 0
      %3834 = vmatpush2.bf16.msra.mxu0 0
      %3835 = vmatprep.subr.bf16.mxu0 0
      %3836 = vmatpush2.bf16.msra.mxu0 0
      %3837 = vmatprep.subr.bf16.mxu0 0
      %3838 = vmatpush2.bf16.msra.mxu0 0
      %3839 = vmatprep.subr.bf16.mxu0 0
      %3840 = vmatpush2.bf16.msra.mxu0 0
      %3841 = vmatprep.subr.bf16.mxu0 0
      %3842 = vmatpush2.bf16.msra.mxu0 0
      %3843 = vmatprep.subr.bf16.mxu0 0
      %3844 = vmatpush2.bf16.msra.mxu0 0
      %3845 = vmatprep.subr.bf16.mxu0 0
      %3846 = vmatpush2.bf16.msra.mxu0 0
      %3847 = vmatprep.subr.bf16.mxu0 0
      %3848 = vmatpush2.bf16.msra.mxu0 0
      %3849 = vmatprep.mubr.bf16.mxu0 0
      %3850 = vmatmul.mubr.bf16.gmra.mxu0 %v3815
      %v3851 = vpop.f32.mrf.mxu0
      %v3852 = vadd.f32 0.0, %v3851
      %v3853 = vpop.f32.mrf.mxu0
      %v3854 = vpop.f32.mrf.mxu0
      %v3855 = vadd.f32 0.0, %v3854
      %v3856 = vpop.f32.mrf.mxu0
      %3857 = vdwg.mxu0
      %v3858 = vld [vmem:[%s909] sm:$0xff]
      %v3859 = vld [vmem:[%s909 + $0x8] sm:$0xff]
      %v3860 = vpack.c.bf16 %v3855, %v3852
      %3861 = vmatprep.subr.bf16.mxu0 %v3586
      %3862 = vmatpush1.bf16.msra.mxu0 %v3585
      %3863 = vmatprep.subr.bf16.mxu0 %v3583
      %3864 = vmatpush1.bf16.msra.mxu0 %v3582
      %3865 = vmatprep.subr.bf16.mxu0 %v3580
      %3866 = vmatpush1.bf16.msra.mxu0 %v3579
      %3867 = vmatprep.subr.bf16.mxu0 %v3577
      %3868 = vmatpush1.bf16.msra.mxu0 %v3576
      %3869 = vmatprep.subr.bf16.mxu0 %v3574
      %3870 = vmatpush1.bf16.msra.mxu0 %v3573
      %3871 = vmatprep.subr.bf16.mxu0 %v3571
      %3872 = vmatpush1.bf16.msra.mxu0 %v3570
      %3873 = vmatprep.subr.bf16.mxu0 %v3568
      %3874 = vmatpush1.bf16.msra.mxu0 %v3567
      %3875 = vmatprep.subr.bf16.mxu0 %v3565
      %3876 = vmatpush1.bf16.msra.mxu0 %v3564
      %3877 = vmatprep.subr.bf16.mxu0 0
      %3878 = vmatpush2.bf16.msra.mxu0 0
      %3879 = vmatprep.subr.bf16.mxu0 0
      %3880 = vmatpush2.bf16.msra.mxu0 0
      %3881 = vmatprep.subr.bf16.mxu0 0
      %3882 = vmatpush2.bf16.msra.mxu0 0
      %3883 = vmatprep.subr.bf16.mxu0 0
      %3884 = vmatpush2.bf16.msra.mxu0 0
      %3885 = vmatprep.subr.bf16.mxu0 0
      %3886 = vmatpush2.bf16.msra.mxu0 0
      %3887 = vmatprep.subr.bf16.mxu0 0
      %3888 = vmatpush2.bf16.msra.mxu0 0
      %3889 = vmatprep.subr.bf16.mxu0 0
      %3890 = vmatpush2.bf16.msra.mxu0 0
      %3891 = vmatprep.subr.bf16.mxu0 0
      %3892 = vmatpush2.bf16.msra.mxu0 0
      %3893 = vmatprep.mubr.bf16.mxu0 0
      %3894 = vmatmul.mubr.bf16.gmra.mxu0 %v3860
      %v3895 = vpop.f32.mrf.mxu0
      %v3896 = vadd.f32 %v3472, %v3895
      %v3897 = vpop.f32.mrf.mxu0
      %v3898 = vadd.f32 %v3476, %v3897
      %v3899 = vpop.f32.mrf.mxu0
      %v3900 = vadd.f32 %v3472, %v3899
      %v3901 = vpop.f32.mrf.mxu0
      %v3902 = vadd.f32 %v3476, %v3901
      %3903 = vdwg.mxu0
      %3904 = vmatprep.subr.bf16.mxu0 0
      %3905 = vmatpush1.bf16.msra.mxu0 %v3587
      %3906 = vmatprep.subr.bf16.mxu0 0
      %3907 = vmatpush1.bf16.msra.mxu0 %v3584
      %3908 = vmatprep.subr.bf16.mxu0 0
      %3909 = vmatpush1.bf16.msra.mxu0 %v3581
      %3910 = vmatprep.subr.bf16.mxu0 0
      %3911 = vmatpush1.bf16.msra.mxu0 %v3578
      %3912 = vmatprep.subr.bf16.mxu0 0
      %3913 = vmatpush1.bf16.msra.mxu0 %v3575
      %3914 = vmatprep.subr.bf16.mxu0 0
      %3915 = vmatpush1.bf16.msra.mxu0 %v3572
      %3916 = vmatprep.subr.bf16.mxu0 0
      %3917 = vmatpush1.bf16.msra.mxu0 %v3569
      %3918 = vmatprep.subr.bf16.mxu0 0
      %3919 = vmatpush1.bf16.msra.mxu0 %v3566
      %3920 = vmatprep.subr.bf16.mxu0 0
      %3921 = vmatpush2.bf16.msra.mxu0 0
      %3922 = vmatprep.subr.bf16.mxu0 0
      %3923 = vmatpush2.bf16.msra.mxu0 0
      %3924 = vmatprep.subr.bf16.mxu0 0
      %3925 = vmatpush2.bf16.msra.mxu0 0
      %3926 = vmatprep.subr.bf16.mxu0 0
      %3927 = vmatpush2.bf16.msra.mxu0 0
      %3928 = vmatprep.subr.bf16.mxu0 0
      %3929 = vmatpush2.bf16.msra.mxu0 0
      %3930 = vmatprep.subr.bf16.mxu0 0
      %3931 = vmatpush2.bf16.msra.mxu0 0
      %3932 = vmatprep.subr.bf16.mxu0 0
      %3933 = vmatpush2.bf16.msra.mxu0 0
      %3934 = vmatprep.subr.bf16.mxu0 0
      %3935 = vmatpush2.bf16.msra.mxu0 0
      %3936 = vmatprep.mubr.bf16.mxu0 0
      %3937 = vmatmul.mubr.bf16.gmra.mxu0 %v3860
      %v3938 = vpop.f32.mrf.mxu0
      %v3939 = vadd.f32 %v3480, %v3938
      %v3940 = vpop.f32.mrf.mxu0
      %v3941 = vpop.f32.mrf.mxu0
      %v3942 = vadd.f32 %v3480, %v3941
      %v3943 = vpop.f32.mrf.mxu0
      %3944 = vdwg.mxu0
      %v3945 = vadd.f32 %v3117, %v3896
      %v3946 = vadd.f32 %v3121, %v3900
      %v3947 = vxor.u32 %v3945, 2147483648
      %v3948 = vxor.u32 %v3946, 2147483648
      %v3949 = vmul.f32 %v3947, 1.442695
      %v3950 = vpow.pop %v3949
      %v3951 = vmul.f32 %v3948, 1.442695
      %v3952 = vpow.pop %v3951
      %v3953 = vadd.f32 %v3950, 1.0
      %v3954 = vadd.f32 %v3952, 1.0
      %v3955 = vrcp.pop %v3953
      %v3956 = vmul.f32 1.0, %v3955
      %v3957 = vrcp.pop %v3954
      %v3958 = vmul.f32 1.0, %v3957
      %v3959 = vadd.f32 %v3119, %v3898
      %v3960 = vadd.f32 %v3123, %v3902
      %v3961 = vxor.u32 %v3959, 2147483648
      %v3962 = vxor.u32 %v3960, 2147483648
      %v3963 = vmul.f32 %v3961, 1.442695
      %v3964 = vpow.pop %v3963
      %v3965 = vmul.f32 %v3962, 1.442695
      %v3966 = vpow.pop %v3965
      %v3967 = vadd.f32 %v3964, 1.0
      %v3968 = vadd.f32 %v3966, 1.0
      %v3969 = vrcp.pop %v3967
      %v3970 = vmul.f32 1.0, %v3969
      %v3971 = vrcp.pop %v3968
      %v3972 = vmul.f32 1.0, %v3971
      %v3973 = vmul.f32 %v3956, %v3939
      %v3974 = vmul.f32 %v3958, %v3942
      %v3975 = vadd.f32 %v3160, %v3973
      %v3976 = vadd.f32 %v3163, %v3974
      %v3977 = vtanh.pop %v3975
      %v3978 = vtanh.pop %v3976
      %v3979 = vsub.f32 1.0, %v3970
      %v3980 = vsub.f32 1.0, %v3972
      %v3981 = vmul.f32 %v3979, %v3977
      %v3982 = vmul.f32 %v3980, %v3978
      %v3983 = vmul.f32 %v3970, %v3852
      %v3984 = vmul.f32 %v3972, %v3855
      %v3985 = vadd.f32 %v3981, %v3983
      %v3986 = vadd.f32 %v3982, %v3984
      %v3987 = vmul.f32 %v3858, %v3985
      %v3988 = vmul.f32 %v3859, %v3986
      %v3989 = vsub.f32 1.0, %v3858
      %v3990 = vsub.f32 1.0, %v3859
      %v3991 = vmul.f32 %v3989, %v3744
      %v3992 = vmul.f32 %v3990, %v3745
      %v3993 = vadd.f32 %v3987, %v3991
      %v3994 = vadd.f32 %v3988, %v3992
      %v3995 = vld [vmem:[%s1047] sm:$0xf]
      %v3996 = vld [vmem:[%s1047 + $0x4] sm:$0xf]
      %v3997 = vpack.c.bf16 %v3994, %v3993
      %3998 = vmatprep.subr.bf16.mxu0 %v3299
      %3999 = vmatpush1.bf16.msra.mxu0 %v3298
      %4000 = vmatprep.subr.bf16.mxu0 %v3297
      %4001 = vmatpush1.bf16.msra.mxu0 %v3296
      %4002 = vmatprep.subr.bf16.mxu0 %v3295
      %4003 = vmatpush1.bf16.msra.mxu0 %v3294
      %4004 = vmatprep.subr.bf16.mxu0 %v3293
      %4005 = vmatpush1.bf16.msra.mxu0 %v3292
      %4006 = vmatprep.subr.bf16.mxu0 %v3291
      %4007 = vmatpush1.bf16.msra.mxu0 %v3290
      %4008 = vmatprep.subr.bf16.mxu0 %v3289
      %4009 = vmatpush1.bf16.msra.mxu0 %v3288
      %4010 = vmatprep.subr.bf16.mxu0 %v3287
      %4011 = vmatpush1.bf16.msra.mxu0 %v3286
      %4012 = vmatprep.subr.bf16.mxu0 %v3285
      %4013 = vmatpush1.bf16.msra.mxu0 %v3284
      %4014 = vmatprep.subr.bf16.mxu0 0
      %4015 = vmatpush2.bf16.msra.mxu0 0
      %4016 = vmatprep.subr.bf16.mxu0 0
      %4017 = vmatpush2.bf16.msra.mxu0 0
      %4018 = vmatprep.subr.bf16.mxu0 0
      %4019 = vmatpush2.bf16.msra.mxu0 0
      %4020 = vmatprep.subr.bf16.mxu0 0
      %4021 = vmatpush2.bf16.msra.mxu0 0
      %4022 = vmatprep.subr.bf16.mxu0 0
      %4023 = vmatpush2.bf16.msra.mxu0 0
      %4024 = vmatprep.subr.bf16.mxu0 0
      %4025 = vmatpush2.bf16.msra.mxu0 0
      %4026 = vmatprep.subr.bf16.mxu0 0
      %4027 = vmatpush2.bf16.msra.mxu0 0
      %4028 = vmatprep.subr.bf16.mxu0 0
      %4029 = vmatpush2.bf16.msra.mxu0 0
      %4030 = vmatprep.mubr.bf16.mxu0 0
      %4031 = vmatmul.mubr.bf16.gmra.mxu0 %v3997
      %v4032 = vpop.f32.mrf.mxu0
      %v4033 = vadd.f32 0.0, %v4032
      %v4034 = vpop.f32.mrf.mxu0
      %v4035 = vadd.f32 0.0, %v4034
      %v4036 = vpop.f32.mrf.mxu0
      %v4037 = vadd.f32 0.0, %v4036
      %v4038 = vpop.f32.mrf.mxu0
      %v4039 = vadd.f32 0.0, %v4038
      %4040 = vdwg.mxu0
      %v4041 = vadd.f32 %v4033, %v3364
      %v4042 = vadd.f32 %v4037, %v3364
      %v4043 = vxor.u32 %v4041, 2147483648
      %v4044 = vxor.u32 %v4042, 2147483648
      %v4045 = vmul.f32 %v4043, 1.442695
      %v4046 = vpow.pop %v4045
      %v4047 = vmul.f32 %v4044, 1.442695
      %v4048 = vpow.pop %v4047
      %v4049 = vadd.f32 %v4046, 1.0
      %v4050 = vadd.f32 %v4048, 1.0
      %v4051 = vrcp.pop %v4049
      %v4052 = vmul.f32 1.0, %v4051
      %v4053 = vrcp.pop %v4050
      %v4054 = vmul.f32 1.0, %v4053
      %v4055 = vmul.f32 %v4052, %v4035
      %v4056 = vmul.f32 %v4054, %v4039
      %v4057 = vpack.c.bf16 %v4056, %v4055
      %v4060 = vunpack.c.l.b16 %v3995
      %v4061 = vunpack.c.l.b16 %v3996
      %v4062 = vpack.c.b16 %v4061, %v4060
      %v4064 = vsel %vm436, %v4062, 0
      %4066 = vmatprep.subr.bf16.mxu0 0
      %4067 = vmatpush1.bf16.msra.mxu0 0
      %4068 = vmatprep.subr.bf16.mxu0 0
      %4069 = vmatpush1.bf16.msra.mxu0 0
      %4070 = vmatprep.subr.bf16.mxu0 0
      %4071 = vmatpush1.bf16.msra.mxu0 0
      %4072 = vmatprep.subr.bf16.mxu0 0
      %4073 = vmatpush1.bf16.msra.mxu0 0
      %4074 = vmatprep.subr.bf16.mxu0 0
      %4075 = vmatpush1.bf16.msra.mxu0 0
      %4076 = vmatprep.subr.bf16.mxu0 0
      %4077 = vmatpush1.bf16.msra.mxu0 0
      %4078 = vmatprep.subr.bf16.mxu0 0
      %4079 = vmatpush1.bf16.msra.mxu0 0
      %4080 = vmatprep.subr.bf16.mxu0 0
      %4081 = vmatpush1.bf16.msra.mxu0 %v4057
      %4082 = vmatprep.subr.bf16.mxu0 0
      %4083 = vmatpush2.bf16.msra.mxu0 0
      %4084 = vmatprep.subr.bf16.mxu0 0
      %4085 = vmatpush2.bf16.msra.mxu0 0
      %4086 = vmatprep.subr.bf16.mxu0 0
      %4087 = vmatpush2.bf16.msra.mxu0 0
      %4088 = vmatprep.subr.bf16.mxu0 0
      %4089 = vmatpush2.bf16.msra.mxu0 0
      %4090 = vmatprep.subr.bf16.mxu0 0
      %4091 = vmatpush2.bf16.msra.mxu0 0
      %4092 = vmatprep.subr.bf16.mxu0 0
      %4093 = vmatpush2.bf16.msra.mxu0 0
      %4094 = vmatprep.subr.bf16.mxu0 0
      %4095 = vmatpush2.bf16.msra.mxu0 0
      %4096 = vmatprep.subr.bf16.mxu0 0
      %4097 = vmatpush2.bf16.msra.mxu0 0
      %4098 = vmatprep.mubr.bf16.mxu0 0
      %4099 = vmatmul.mubr.bf16.gmra.mxu0 %v4064
      %v4100 = vpop.f32.mrf.mxu0
      %v4101 = vadd.f32 0.0, %v4100
      %v4102 = vpop.f32.mrf.mxu0
      %v4103 = vpop.f32.mrf.mxu0
      %v4104 = vadd.f32 0.0, %v4103
      %v4105 = vpop.f32.mrf.mxu0
      %4106 = vdwg.mxu0
      %v4107 = vld [vmem:[%s1160] sm:$0xff]
      %v4108 = vld [vmem:[%s1160 + $0x8] sm:$0xff]
      %v4109 = vpack.c.bf16 %v4104, %v4101
      %4110 = vmatprep.subr.bf16.mxu0 %v3586
      %4111 = vmatpush1.bf16.msra.mxu0 %v3585
      %4112 = vmatprep.subr.bf16.mxu0 %v3583
      %4113 = vmatpush1.bf16.msra.mxu0 %v3582
      %4114 = vmatprep.subr.bf16.mxu0 %v3580
      %4115 = vmatpush1.bf16.msra.mxu0 %v3579
      %4116 = vmatprep.subr.bf16.mxu0 %v3577
      %4117 = vmatpush1.bf16.msra.mxu0 %v3576
      %4118 = vmatprep.subr.bf16.mxu0 %v3574
      %4119 = vmatpush1.bf16.msra.mxu0 %v3573
      %4120 = vmatprep.subr.bf16.mxu0 %v3571
      %4121 = vmatpush1.bf16.msra.mxu0 %v3570
      %4122 = vmatprep.subr.bf16.mxu0 %v3568
      %4123 = vmatpush1.bf16.msra.mxu0 %v3567
      %4124 = vmatprep.subr.bf16.mxu0 %v3565
      %4125 = vmatpush1.bf16.msra.mxu0 %v3564
      %4126 = vmatprep.subr.bf16.mxu0 0
      %4127 = vmatpush2.bf16.msra.mxu0 0
      %4128 = vmatprep.subr.bf16.mxu0 0
      %4129 = vmatpush2.bf16.msra.mxu0 0
      %4130 = vmatprep.subr.bf16.mxu0 0
      %4131 = vmatpush2.bf16.msra.mxu0 0
      %4132 = vmatprep.subr.bf16.mxu0 0
      %4133 = vmatpush2.bf16.msra.mxu0 0
      %4134 = vmatprep.subr.bf16.mxu0 0
      %4135 = vmatpush2.bf16.msra.mxu0 0
      %4136 = vmatprep.subr.bf16.mxu0 0
      %4137 = vmatpush2.bf16.msra.mxu0 0
      %4138 = vmatprep.subr.bf16.mxu0 0
      %4139 = vmatpush2.bf16.msra.mxu0 0
      %4140 = vmatprep.subr.bf16.mxu0 0
      %4141 = vmatpush2.bf16.msra.mxu0 0
      %4142 = vmatprep.mubr.bf16.mxu0 0
      %4143 = vmatmul.mubr.bf16.gmra.mxu0 %v4109
      %v4144 = vpop.f32.mrf.mxu0
      %v4145 = vadd.f32 %v3472, %v4144
      %v4146 = vpop.f32.mrf.mxu0
      %v4147 = vadd.f32 %v3476, %v4146
      %v4148 = vpop.f32.mrf.mxu0
      %v4149 = vadd.f32 %v3472, %v4148
      %v4150 = vpop.f32.mrf.mxu0
      %v4151 = vadd.f32 %v3476, %v4150
      %4152 = vdwg.mxu0
      %4153 = vmatprep.subr.bf16.mxu0 0
      %4154 = vmatpush1.bf16.msra.mxu0 %v3587
      %4155 = vmatprep.subr.bf16.mxu0 0
      %4156 = vmatpush1.bf16.msra.mxu0 %v3584
      %4157 = vmatprep.subr.bf16.mxu0 0
      %4158 = vmatpush1.bf16.msra.mxu0 %v3581
      %4159 = vmatprep.subr.bf16.mxu0 0
      %4160 = vmatpush1.bf16.msra.mxu0 %v3578
      %4161 = vmatprep.subr.bf16.mxu0 0
      %4162 = vmatpush1.bf16.msra.mxu0 %v3575
      %4163 = vmatprep.subr.bf16.mxu0 0
      %4164 = vmatpush1.bf16.msra.mxu0 %v3572
      %4165 = vmatprep.subr.bf16.mxu0 0
      %4166 = vmatpush1.bf16.msra.mxu0 %v3569
      %4167 = vmatprep.subr.bf16.mxu0 0
      %4168 = vmatpush1.bf16.msra.mxu0 %v3566
      %4169 = vmatprep.subr.bf16.mxu0 0
      %4170 = vmatpush2.bf16.msra.mxu0 0
      %4171 = vmatprep.subr.bf16.mxu0 0
      %4172 = vmatpush2.bf16.msra.mxu0 0
      %4173 = vmatprep.subr.bf16.mxu0 0
      %4174 = vmatpush2.bf16.msra.mxu0 0
      %4175 = vmatprep.subr.bf16.mxu0 0
      %4176 = vmatpush2.bf16.msra.mxu0 0
      %4177 = vmatprep.subr.bf16.mxu0 0
      %4178 = vmatpush2.bf16.msra.mxu0 0
      %4179 = vmatprep.subr.bf16.mxu0 0
      %4180 = vmatpush2.bf16.msra.mxu0 0
      %4181 = vmatprep.subr.bf16.mxu0 0
      %4182 = vmatpush2.bf16.msra.mxu0 0
      %4183 = vmatprep.subr.bf16.mxu0 0
      %4184 = vmatpush2.bf16.msra.mxu0 0
      %4185 = vmatprep.mubr.bf16.mxu0 0
      %4186 = vmatmul.mubr.bf16.gmra.mxu0 %v4109
      %v4187 = vpop.f32.mrf.mxu0
      %v4188 = vadd.f32 %v3480, %v4187
      %v4189 = vpop.f32.mrf.mxu0
      %v4190 = vpop.f32.mrf.mxu0
      %v4191 = vadd.f32 %v3480, %v4190
      %v4192 = vpop.f32.mrf.mxu0
      %4193 = vdwg.mxu0
      %v4194 = vadd.f32 %v3117, %v4145
      %v4195 = vadd.f32 %v3121, %v4149
      %v4196 = vxor.u32 %v4194, 2147483648
      %v4197 = vxor.u32 %v4195, 2147483648
      %v4198 = vmul.f32 %v4196, 1.442695
      %v4199 = vpow.pop %v4198
      %v4200 = vmul.f32 %v4197, 1.442695
      %v4201 = vpow.pop %v4200
      %v4202 = vadd.f32 %v4199, 1.0
      %v4203 = vadd.f32 %v4201, 1.0
      %v4204 = vrcp.pop %v4202
      %v4205 = vmul.f32 1.0, %v4204
      %v4206 = vrcp.pop %v4203
      %v4207 = vmul.f32 1.0, %v4206
      %v4208 = vadd.f32 %v3119, %v4147
      %v4209 = vadd.f32 %v3123, %v4151
      %v4210 = vxor.u32 %v4208, 2147483648
      %v4211 = vxor.u32 %v4209, 2147483648
      %v4212 = vmul.f32 %v4210, 1.442695
      %v4213 = vpow.pop %v4212
      %v4214 = vmul.f32 %v4211, 1.442695
      %v4215 = vpow.pop %v4214
      %v4216 = vadd.f32 %v4213, 1.0
      %v4217 = vadd.f32 %v4215, 1.0
      %v4218 = vrcp.pop %v4216
      %v4219 = vmul.f32 1.0, %v4218
      %v4220 = vrcp.pop %v4217
      %v4221 = vmul.f32 1.0, %v4220
      %v4222 = vmul.f32 %v4205, %v4188
      %v4223 = vmul.f32 %v4207, %v4191
      %v4224 = vadd.f32 %v3160, %v4222
      %v4225 = vadd.f32 %v3163, %v4223
      %v4226 = vtanh.pop %v4224
      %v4227 = vtanh.pop %v4225
      %v4228 = vsub.f32 1.0, %v4219
      %v4229 = vsub.f32 1.0, %v4221
      %v4230 = vmul.f32 %v4228, %v4226
      %v4231 = vmul.f32 %v4229, %v4227
      %v4232 = vmul.f32 %v4219, %v4101
      %v4233 = vmul.f32 %v4221, %v4104
      %v4234 = vadd.f32 %v4230, %v4232
      %v4235 = vadd.f32 %v4231, %v4233
      %v4236 = vmul.f32 %v4107, %v4234
      %v4237 = vmul.f32 %v4108, %v4235
      %v4238 = vsub.f32 1.0, %v4107
      %v4239 = vsub.f32 1.0, %v4108
      %v4240 = vmul.f32 %v4238, %v3993
      %v4241 = vmul.f32 %v4239, %v3994
      %v4242 = vadd.f32 %v4236, %v4240
      %v4243 = vadd.f32 %v4237, %v4241
      %v4244 = vpack.c.bf16 %v4243, %v4242
      %v4245 = vld [vmem:[#allocation14] sm:$0xff]
      %v4246 = vld [vmem:[#allocation14 + $0x8] sm:$0xf]
      %v4247 = vld [vmem:[#allocation14 + $0xc] sm:$0xff]
      %v4248 = vld [vmem:[#allocation14 + $0x14] sm:$0xf]
      %v4249 = vld [vmem:[#allocation14 + $0x18] sm:$0xff]
      %v4250 = vld [vmem:[#allocation14 + $0x20] sm:$0xf]
      %v4251 = vld [vmem:[#allocation14 + $0x24] sm:$0xff]
      %v4252 = vld [vmem:[#allocation14 + $0x2c] sm:$0xf]
      %v4253 = vld [vmem:[#allocation14 + $0x30] sm:$0xff]
      %v4254 = vld [vmem:[#allocation14 + $0x38] sm:$0xf]
      %v4255 = vld [vmem:[#allocation14 + $0x3c] sm:$0xff]
      %v4256 = vld [vmem:[#allocation14 + $0x44] sm:$0xf]
      %v4257 = vld [vmem:[#allocation14 + $0x48] sm:$0xff]
      %v4258 = vld [vmem:[#allocation14 + $0x50] sm:$0xf]
      %v4259 = vld [vmem:[#allocation14 + $0x54] sm:$0xff]
      %v4260 = vld [vmem:[#allocation14 + $0x5c] sm:$0xf]
      %v4261 = vld [vmem:[#allocation14 + $0x60] sm:$0xff]
      %v4262 = vld [vmem:[#allocation14 + $0x68] sm:$0xf]
      %v4263 = vld [vmem:[#allocation14 + $0x6c] sm:$0xff]
      %v4264 = vld [vmem:[#allocation14 + $0x74] sm:$0xf]
      %v4265 = vld [vmem:[#allocation14 + $0x78] sm:$0xff]
      %v4266 = vld [vmem:[#allocation14 + $0x80] sm:$0xf]
      %v4267 = vld [vmem:[#allocation14 + $0x84] sm:$0xff]
      %v4268 = vld [vmem:[#allocation14 + $0x8c] sm:$0xf]
      %v4269 = vld [vmem:[#allocation14 + $0x90] sm:$0xff]
      %v4270 = vld [vmem:[#allocation14 + $0x98] sm:$0xf]
      %v4271 = vld [vmem:[#allocation14 + $0x9c] sm:$0xff]
      %v4272 = vld [vmem:[#allocation14 + $0xa4] sm:$0xf]
      %v4273 = vld [vmem:[#allocation14 + $0xa8] sm:$0xff]
      %v4274 = vld [vmem:[#allocation14 + $0xb0] sm:$0xf]
      %v4275 = vld [vmem:[#allocation14 + $0xb4] sm:$0xff]
      %v4276 = vld [vmem:[#allocation14 + $0xbc] sm:$0xf]
      %v4277 = vld [vmem:[%s10] sm:$0x7]
      %v4279 = vlaneseq
      %v4280 = vshrl.u32 %v4279, 7
      %v4281 = vsub.s32 0, %v4280
      %v4282 = vrot.slane %v4277, %v4281
      %v4283 = vlaneseq
      %v4284 = vshrl.u32 %v4283, 7
      %v4285 = vsub.s32 1, %v4284
      %v4286 = vrot.slane %v4277, %v4285
      %v4287 = vlaneseq
      %v4288 = vshrl.u32 %v4287, 7
      %v4289 = vsub.s32 2, %v4288
      %v4290 = vrot.slane %v4277, %v4289
      %v4326 = vunpack.c.l.b16 %v4245
      %v4327 = vunpack.c.h.b16 %v4245
      %v4328 = vunpack.c.l.b16 %v4246
      %v4329 = vunpack.c.l.b16 %v4247
      %v4330 = vunpack.c.h.b16 %v4247
      %v4331 = vunpack.c.l.b16 %v4248
      %v4332 = vunpack.c.l.b16 %v4249
      %v4333 = vunpack.c.h.b16 %v4249
      %v4334 = vunpack.c.l.b16 %v4250
      %v4335 = vunpack.c.l.b16 %v4251
      %v4336 = vunpack.c.h.b16 %v4251
      %v4337 = vunpack.c.l.b16 %v4252
      %v4338 = vunpack.c.l.b16 %v4253
      %v4339 = vunpack.c.h.b16 %v4253
      %v4340 = vunpack.c.l.b16 %v4254
      %v4341 = vunpack.c.l.b16 %v4255
      %v4342 = vunpack.c.h.b16 %v4255
      %v4343 = vunpack.c.l.b16 %v4256
      %v4344 = vunpack.c.l.b16 %v4257
      %v4345 = vunpack.c.h.b16 %v4257
      %v4346 = vunpack.c.l.b16 %v4258
      %v4347 = vunpack.c.l.b16 %v4259
      %v4348 = vunpack.c.h.b16 %v4259
      %v4349 = vunpack.c.l.b16 %v4260
      %v4350 = vunpack.c.l.b16 %v4261
      %v4351 = vunpack.c.h.b16 %v4261
      %v4352 = vunpack.c.l.b16 %v4262
      %v4353 = vunpack.c.l.b16 %v4263
      %v4354 = vunpack.c.h.b16 %v4263
      %v4355 = vunpack.c.l.b16 %v4264
      %v4356 = vunpack.c.l.b16 %v4265
      %v4357 = vunpack.c.h.b16 %v4265
      %v4358 = vunpack.c.l.b16 %v4266
      %v4359 = vunpack.c.l.b16 %v4267
      %v4360 = vunpack.c.h.b16 %v4267
      %v4361 = vunpack.c.l.b16 %v4268
      %v4362 = vunpack.c.l.b16 %v4269
      %v4363 = vunpack.c.h.b16 %v4269
      %v4364 = vunpack.c.l.b16 %v4270
      %v4365 = vunpack.c.l.b16 %v4271
      %v4366 = vunpack.c.h.b16 %v4271
      %v4367 = vunpack.c.l.b16 %v4272
      %v4368 = vunpack.c.l.b16 %v4273
      %v4369 = vunpack.c.h.b16 %v4273
      %v4370 = vunpack.c.l.b16 %v4274
      %v4371 = vunpack.c.l.b16 %v4275
      %v4372 = vunpack.c.h.b16 %v4275
      %v4373 = vunpack.c.l.b16 %v4276
      %v4374 = vpack.c.b16 %v4329, %v4326
      %v4375 = vpack.c.b16 %v4330, %v4327
      %v4376 = vpack.c.b16 %v4331, %v4328
      %v4377 = vpack.c.b16 %v4335, %v4332
      %v4378 = vpack.c.b16 %v4336, %v4333
      %v4379 = vpack.c.b16 %v4337, %v4334
      %v4380 = vpack.c.b16 %v4341, %v4338
      %v4381 = vpack.c.b16 %v4342, %v4339
      %v4382 = vpack.c.b16 %v4343, %v4340
      %v4383 = vpack.c.b16 %v4347, %v4344
      %v4384 = vpack.c.b16 %v4348, %v4345
      %v4385 = vpack.c.b16 %v4349, %v4346
      %v4386 = vpack.c.b16 %v4353, %v4350
      %v4387 = vpack.c.b16 %v4354, %v4351
      %v4388 = vpack.c.b16 %v4355, %v4352
      %v4389 = vpack.c.b16 %v4359, %v4356
      %v4390 = vpack.c.b16 %v4360, %v4357
      %v4391 = vpack.c.b16 %v4361, %v4358
      %v4392 = vpack.c.b16 %v4365, %v4362
      %v4393 = vpack.c.b16 %v4366, %v4363
      %v4394 = vpack.c.b16 %v4367, %v4364
      %v4395 = vpack.c.b16 %v4371, %v4368
      %v4396 = vpack.c.b16 %v4372, %v4369
      %v4397 = vpack.c.b16 %v4373, %v4370
      %4422 = vmatprep.subr.bf16.mxu0 %v4396
      %4423 = vmatpush1.bf16.msra.mxu0 %v4395
      %4424 = vmatprep.subr.bf16.mxu0 %v4393
      %4425 = vmatpush1.bf16.msra.mxu0 %v4392
      %4426 = vmatprep.subr.bf16.mxu0 %v4390
      %4427 = vmatpush1.bf16.msra.mxu0 %v4389
      %4428 = vmatprep.subr.bf16.mxu0 %v4387
      %4429 = vmatpush1.bf16.msra.mxu0 %v4386
      %4430 = vmatprep.subr.bf16.mxu0 %v4384
      %4431 = vmatpush1.bf16.msra.mxu0 %v4383
      %4432 = vmatprep.subr.bf16.mxu0 %v4381
      %4433 = vmatpush1.bf16.msra.mxu0 %v4380
      %4434 = vmatprep.subr.bf16.mxu0 %v4378
      %4435 = vmatpush1.bf16.msra.mxu0 %v4377
      %4436 = vmatprep.subr.bf16.mxu0 %v4375
      %4437 = vmatpush1.bf16.msra.mxu0 %v4374
      %4438 = vmatprep.subr.bf16.mxu0 0
      %4439 = vmatpush2.bf16.msra.mxu0 0
      %4440 = vmatprep.subr.bf16.mxu0 0
      %4441 = vmatpush2.bf16.msra.mxu0 0
      %4442 = vmatprep.subr.bf16.mxu0 0
      %4443 = vmatpush2.bf16.msra.mxu0 0
      %4444 = vmatprep.subr.bf16.mxu0 0
      %4445 = vmatpush2.bf16.msra.mxu0 0
      %4446 = vmatprep.subr.bf16.mxu0 0
      %4447 = vmatpush2.bf16.msra.mxu0 0
      %4448 = vmatprep.subr.bf16.mxu0 0
      %4449 = vmatpush2.bf16.msra.mxu0 0
      %4450 = vmatprep.subr.bf16.mxu0 0
      %4451 = vmatpush2.bf16.msra.mxu0 0
      %4452 = vmatprep.subr.bf16.mxu0 0
      %4453 = vmatpush2.bf16.msra.mxu0 0
      %4454 = vmatprep.mubr.bf16.mxu0 0
      %4455 = vmatmul.mubr.bf16.gmra.mxu0 %v4244
      %v4456 = vpop.f32.mrf.mxu0
      %v4457 = vadd.f32 %v4282, %v4456
      %v4458 = vpop.f32.mrf.mxu0
      %v4459 = vadd.f32 %v4286, %v4458
      %v4460 = vpop.f32.mrf.mxu0
      %v4461 = vadd.f32 %v4282, %v4460
      %v4462 = vpop.f32.mrf.mxu0
      %v4463 = vadd.f32 %v4286, %v4462
      %4464 = vdwg.mxu0
      %4465 = vmatprep.subr.bf16.mxu0 0
      %4466 = vmatpush1.bf16.msra.mxu0 %v4397
      %4467 = vmatprep.subr.bf16.mxu0 0
      %4468 = vmatpush1.bf16.msra.mxu0 %v4394
      %4469 = vmatprep.subr.bf16.mxu0 0
      %4470 = vmatpush1.bf16.msra.mxu0 %v4391
      %4471 = vmatprep.subr.bf16.mxu0 0
      %4472 = vmatpush1.bf16.msra.mxu0 %v4388
      %4473 = vmatprep.subr.bf16.mxu0 0
      %4474 = vmatpush1.bf16.msra.mxu0 %v4385
      %4475 = vmatprep.subr.bf16.mxu0 0
      %4476 = vmatpush1.bf16.msra.mxu0 %v4382
      %4477 = vmatprep.subr.bf16.mxu0 0
      %4478 = vmatpush1.bf16.msra.mxu0 %v4379
      %4479 = vmatprep.subr.bf16.mxu0 0
      %4480 = vmatpush1.bf16.msra.mxu0 %v4376
      %4481 = vmatprep.subr.bf16.mxu0 0
      %4482 = vmatpush2.bf16.msra.mxu0 0
      %4483 = vmatprep.subr.bf16.mxu0 0
      %4484 = vmatpush2.bf16.msra.mxu0 0
      %4485 = vmatprep.subr.bf16.mxu0 0
      %4486 = vmatpush2.bf16.msra.mxu0 0
      %4487 = vmatprep.subr.bf16.mxu0 0
      %4488 = vmatpush2.bf16.msra.mxu0 0
      %4489 = vmatprep.subr.bf16.mxu0 0
      %4490 = vmatpush2.bf16.msra.mxu0 0
      %4491 = vmatprep.subr.bf16.mxu0 0
      %4492 = vmatpush2.bf16.msra.mxu0 0
      %4493 = vmatprep.subr.bf16.mxu0 0
      %4494 = vmatpush2.bf16.msra.mxu0 0
      %4495 = vmatprep.subr.bf16.mxu0 0
      %4496 = vmatpush2.bf16.msra.mxu0 0
      %4497 = vmatprep.mubr.bf16.mxu0 0
      %4498 = vmatmul.mubr.bf16.gmra.mxu0 %v4244
      %v4499 = vpop.f32.mrf.mxu0
      %v4500 = vadd.f32 %v4290, %v4499
      %v4501 = vpop.f32.mrf.mxu0
      %v4502 = vpop.f32.mrf.mxu0
      %v4503 = vadd.f32 %v4290, %v4502
      %v4504 = vpop.f32.mrf.mxu0
      %4505 = vdwg.mxu0
      %v4506 = vld [vmem:[#allocation10] sm:$0xff]
      %v4507 = vld [vmem:[#allocation10 + $0x8] sm:$0xff]
      %v4508 = vxor.u32 %v4457, 2147483648
      %v4509 = vxor.u32 %v4461, 2147483648
      %v4510 = vmul.f32 %v4508, 1.442695
      %v4511 = vpow.pop %v4510
      %v4512 = vmul.f32 %v4509, 1.442695
      %v4513 = vpow.pop %v4512
      %v4514 = vadd.f32 %v4511, 1.0
      %v4515 = vadd.f32 %v4513, 1.0
      %v4516 = vrcp.pop %v4514
      %v4517 = vmul.f32 1.0, %v4516
      %v4518 = vrcp.pop %v4515
      %v4519 = vmul.f32 1.0, %v4518
      %v4520 = vxor.u32 %v4459, 2147483648
      %v4521 = vxor.u32 %v4463, 2147483648
      %v4522 = vmul.f32 %v4520, 1.442695
      %v4523 = vpow.pop %v4522
      %v4524 = vmul.f32 %v4521, 1.442695
      %v4525 = vpow.pop %v4524
      %v4526 = vadd.f32 %v4523, 1.0
      %v4527 = vadd.f32 %v4525, 1.0
      %v4528 = vrcp.pop %v4526
      %v4529 = vmul.f32 1.0, %v4528
      %v4530 = vrcp.pop %v4527
      %v4531 = vmul.f32 1.0, %v4530
      %v4532 = vld [vmem:[%s12 + $0x2] sm:$0x1]
      %v4534 = vlaneseq
      %v4535 = vshrl.u32 %v4534, 7
      %v4536 = vsub.s32 0, %v4535
      %v4537 = vrot.slane %v4532, %v4536
      %v4539 = vmul.f32 %v4517, %v4537
      %v4540 = vmul.f32 %v4519, %v4537
      %v4541 = vadd.f32 %v4500, %v4539
      %v4542 = vadd.f32 %v4503, %v4540
      %v4543 = vtanh.pop %v4541
      %v4544 = vtanh.pop %v4542
      %v4545 = vsub.f32 1.0, %v4529
      %v4546 = vsub.f32 1.0, %v4531
      %v4547 = vmul.f32 %v4545, %v4543
      %v4548 = vmul.f32 %v4546, %v4544
      %v4549 = vmul.f32 %v4506, %v4547
      %v4550 = vmul.f32 %v4507, %v4548
      %v4551 = vsub.f32 1.0, %v4506
      %v4552 = vsub.f32 1.0, %v4507
      %v4553 = vmul.f32 %v4551, %v4242
      %v4554 = vmul.f32 %v4552, %v4243
      %v4555 = vadd.f32 %v4549, %v4553
      %v4556 = vadd.f32 %v4550, %v4554
      %v4557 = vld [vmem:[%s1611] sm:$0xf]
      %v4558 = vld [vmem:[%s1611 + $0x4] sm:$0xf]
      %v4559 = vpack.c.bf16 %v4556, %v4555
      %v4560 = vld [vmem:[#allocation19] sm:$0xff]
      %v4561 = vld [vmem:[#allocation19 + $0x8] sm:$0xff]
      %v4562 = vld [vmem:[#allocation19 + $0x10] sm:$0xff]
      %v4563 = vld [vmem:[#allocation19 + $0x18] sm:$0xff]
      %v4564 = vld [vmem:[#allocation19 + $0x20] sm:$0xff]
      %v4565 = vld [vmem:[#allocation19 + $0x28] sm:$0xff]
      %v4566 = vld [vmem:[#allocation19 + $0x30] sm:$0xff]
      %v4567 = vld [vmem:[#allocation19 + $0x38] sm:$0xff]
      %v4568 = vld [vmem:[#allocation19 + $0x40] sm:$0xff]
      %v4569 = vld [vmem:[#allocation19 + $0x48] sm:$0xff]
      %v4570 = vld [vmem:[#allocation19 + $0x50] sm:$0xff]
      %v4571 = vld [vmem:[#allocation19 + $0x58] sm:$0xff]
      %v4572 = vld [vmem:[#allocation19 + $0x60] sm:$0xff]
      %v4573 = vld [vmem:[#allocation19 + $0x68] sm:$0xff]
      %v4574 = vld [vmem:[#allocation19 + $0x70] sm:$0xff]
      %v4575 = vld [vmem:[#allocation19 + $0x78] sm:$0xff]
      %v4592 = vunpack.c.l.b16 %v4560
      %v4593 = vunpack.c.h.b16 %v4560
      %v4594 = vunpack.c.l.b16 %v4561
      %v4595 = vunpack.c.h.b16 %v4561
      %v4596 = vunpack.c.l.b16 %v4562
      %v4597 = vunpack.c.h.b16 %v4562
      %v4598 = vunpack.c.l.b16 %v4563
      %v4599 = vunpack.c.h.b16 %v4563
      %v4600 = vunpack.c.l.b16 %v4564
      %v4601 = vunpack.c.h.b16 %v4564
      %v4602 = vunpack.c.l.b16 %v4565
      %v4603 = vunpack.c.h.b16 %v4565
      %v4604 = vunpack.c.l.b16 %v4566
      %v4605 = vunpack.c.h.b16 %v4566
      %v4606 = vunpack.c.l.b16 %v4567
      %v4607 = vunpack.c.h.b16 %v4567
      %v4608 = vunpack.c.l.b16 %v4568
      %v4609 = vunpack.c.h.b16 %v4568
      %v4610 = vunpack.c.l.b16 %v4569
      %v4611 = vunpack.c.h.b16 %v4569
      %v4612 = vunpack.c.l.b16 %v4570
      %v4613 = vunpack.c.h.b16 %v4570
      %v4614 = vunpack.c.l.b16 %v4571
      %v4615 = vunpack.c.h.b16 %v4571
      %v4616 = vunpack.c.l.b16 %v4572
      %v4617 = vunpack.c.h.b16 %v4572
      %v4618 = vunpack.c.l.b16 %v4573
      %v4619 = vunpack.c.h.b16 %v4573
      %v4620 = vunpack.c.l.b16 %v4574
      %v4621 = vunpack.c.h.b16 %v4574
      %v4622 = vunpack.c.l.b16 %v4575
      %v4623 = vunpack.c.h.b16 %v4575
      %v4624 = vpack.c.b16 %v4594, %v4592
      %v4625 = vpack.c.b16 %v4595, %v4593
      %v4626 = vpack.c.b16 %v4598, %v4596
      %v4627 = vpack.c.b16 %v4599, %v4597
      %v4628 = vpack.c.b16 %v4602, %v4600
      %v4629 = vpack.c.b16 %v4603, %v4601
      %v4630 = vpack.c.b16 %v4606, %v4604
      %v4631 = vpack.c.b16 %v4607, %v4605
      %v4632 = vpack.c.b16 %v4610, %v4608
      %v4633 = vpack.c.b16 %v4611, %v4609
      %v4634 = vpack.c.b16 %v4614, %v4612
      %v4635 = vpack.c.b16 %v4615, %v4613
      %v4636 = vpack.c.b16 %v4618, %v4616
      %v4637 = vpack.c.b16 %v4619, %v4617
      %v4638 = vpack.c.b16 %v4622, %v4620
      %v4639 = vpack.c.b16 %v4623, %v4621
      %4656 = vmatprep.subr.bf16.mxu0 %v4639
      %4657 = vmatpush1.bf16.msra.mxu0 %v4638
      %4658 = vmatprep.subr.bf16.mxu0 %v4637
      %4659 = vmatpush1.bf16.msra.mxu0 %v4636
      %4660 = vmatprep.subr.bf16.mxu0 %v4635
      %4661 = vmatpush1.bf16.msra.mxu0 %v4634
      %4662 = vmatprep.subr.bf16.mxu0 %v4633
      %4663 = vmatpush1.bf16.msra.mxu0 %v4632
      %4664 = vmatprep.subr.bf16.mxu0 %v4631
      %4665 = vmatpush1.bf16.msra.mxu0 %v4630
      %4666 = vmatprep.subr.bf16.mxu0 %v4629
      %4667 = vmatpush1.bf16.msra.mxu0 %v4628
      %4668 = vmatprep.subr.bf16.mxu0 %v4627
      %4669 = vmatpush1.bf16.msra.mxu0 %v4626
      %4670 = vmatprep.subr.bf16.mxu0 %v4625
      %4671 = vmatpush1.bf16.msra.mxu0 %v4624
      %4672 = vmatprep.subr.bf16.mxu0 0
      %4673 = vmatpush2.bf16.msra.mxu0 0
      %4674 = vmatprep.subr.bf16.mxu0 0
      %4675 = vmatpush2.bf16.msra.mxu0 0
      %4676 = vmatprep.subr.bf16.mxu0 0
      %4677 = vmatpush2.bf16.msra.mxu0 0
      %4678 = vmatprep.subr.bf16.mxu0 0
      %4679 = vmatpush2.bf16.msra.mxu0 0
      %4680 = vmatprep.subr.bf16.mxu0 0
      %4681 = vmatpush2.bf16.msra.mxu0 0
      %4682 = vmatprep.subr.bf16.mxu0 0
      %4683 = vmatpush2.bf16.msra.mxu0 0
      %4684 = vmatprep.subr.bf16.mxu0 0
      %4685 = vmatpush2.bf16.msra.mxu0 0
      %4686 = vmatprep.subr.bf16.mxu0 0
      %4687 = vmatpush2.bf16.msra.mxu0 0
      %4688 = vmatprep.mubr.bf16.mxu0 0
      %4689 = vmatmul.mubr.bf16.gmra.mxu0 %v4559
      %v4690 = vpop.f32.mrf.mxu0
      %v4691 = vadd.f32 0.0, %v4690
      %v4692 = vpop.f32.mrf.mxu0
      %v4693 = vadd.f32 0.0, %v4692
      %v4694 = vpop.f32.mrf.mxu0
      %v4695 = vadd.f32 0.0, %v4694
      %v4696 = vpop.f32.mrf.mxu0
      %v4697 = vadd.f32 0.0, %v4696
      %4698 = vdwg.mxu0
      %v4699 = vld [vmem:[%s16] sm:$0x1]
      %v4701 = vlaneseq
      %v4702 = vshrl.u32 %v4701, 7
      %v4703 = vsub.s32 0, %v4702
      %v4704 = vrot.slane %v4699, %v4703
      %v4706 = vadd.f32 %v4691, %v4704
      %v4707 = vadd.f32 %v4695, %v4704
      %v4708 = vxor.u32 %v4706, 2147483648
      %v4709 = vxor.u32 %v4707, 2147483648
      %v4710 = vmul.f32 %v4708, 1.442695
      %v4711 = vpow.pop %v4710
      %v4712 = vmul.f32 %v4709, 1.442695
      %v4713 = vpow.pop %v4712
      %v4714 = vadd.f32 %v4711, 1.0
      %v4715 = vadd.f32 %v4713, 1.0
      %v4716 = vrcp.pop %v4714
      %v4717 = vmul.f32 1.0, %v4716
      %v4718 = vrcp.pop %v4715
      %v4719 = vmul.f32 1.0, %v4718
      %v4720 = vmul.f32 %v4717, %v4693
      %v4721 = vmul.f32 %v4719, %v4697
      %v4722 = vpack.c.bf16 %v4721, %v4720
      %v4725 = vunpack.c.l.b16 %v4557
      %v4726 = vunpack.c.l.b16 %v4558
      %v4727 = vpack.c.b16 %v4726, %v4725
      %v4729 = vsel %vm436, %v4727, 0
      %4731 = vmatprep.subr.bf16.mxu0 0
      %4732 = vmatpush1.bf16.msra.mxu0 0
      %4733 = vmatprep.subr.bf16.mxu0 0
      %4734 = vmatpush1.bf16.msra.mxu0 0
      %4735 = vmatprep.subr.bf16.mxu0 0
      %4736 = vmatpush1.bf16.msra.mxu0 0
      %4737 = vmatprep.subr.bf16.mxu0 0
      %4738 = vmatpush1.bf16.msra.mxu0 0
      %4739 = vmatprep.subr.bf16.mxu0 0
      %4740 = vmatpush1.bf16.msra.mxu0 0
      %4741 = vmatprep.subr.bf16.mxu0 0
      %4742 = vmatpush1.bf16.msra.mxu0 0
      %4743 = vmatprep.subr.bf16.mxu0 0
      %4744 = vmatpush1.bf16.msra.mxu0 0
      %4745 = vmatprep.subr.bf16.mxu0 0
      %4746 = vmatpush1.bf16.msra.mxu0 %v4722
      %4747 = vmatprep.subr.bf16.mxu0 0
      %4748 = vmatpush2.bf16.msra.mxu0 0
      %4749 = vmatprep.subr.bf16.mxu0 0
      %4750 = vmatpush2.bf16.msra.mxu0 0
      %4751 = vmatprep.subr.bf16.mxu0 0
      %4752 = vmatpush2.bf16.msra.mxu0 0
      %4753 = vmatprep.subr.bf16.mxu0 0
      %4754 = vmatpush2.bf16.msra.mxu0 0
      %4755 = vmatprep.subr.bf16.mxu0 0
      %4756 = vmatpush2.bf16.msra.mxu0 0
      %4757 = vmatprep.subr.bf16.mxu0 0
      %4758 = vmatpush2.bf16.msra.mxu0 0
      %4759 = vmatprep.subr.bf16.mxu0 0
      %4760 = vmatpush2.bf16.msra.mxu0 0
      %4761 = vmatprep.subr.bf16.mxu0 0
      %4762 = vmatpush2.bf16.msra.mxu0 0
      %4763 = vmatprep.mubr.bf16.mxu0 0
      %4764 = vmatmul.mubr.bf16.gmra.mxu0 %v4729
      %v4765 = vpop.f32.mrf.mxu0
      %v4766 = vadd.f32 0.0, %v4765
      %v4767 = vpop.f32.mrf.mxu0
      %v4768 = vpop.f32.mrf.mxu0
      %v4769 = vadd.f32 0.0, %v4768
      %v4770 = vpop.f32.mrf.mxu0
      %4771 = vdwg.mxu0
      %4772 = vmatprep.subr.bf16.mxu0 %v4396
      %4773 = vmatpush1.bf16.msra.mxu0 %v4395
      %4774 = vmatprep.subr.bf16.mxu0 %v4393
      %4775 = vmatpush1.bf16.msra.mxu0 %v4392
      %4776 = vmatprep.subr.bf16.mxu0 %v4390
      %4777 = vmatpush1.bf16.msra.mxu0 %v4389
      %4778 = vmatprep.subr.bf16.mxu0 %v4387
      %4779 = vmatpush1.bf16.msra.mxu0 %v4386
      %4780 = vmatprep.subr.bf16.mxu0 %v4384
      %4781 = vmatpush1.bf16.msra.mxu0 %v4383
      %4782 = vmatprep.subr.bf16.mxu0 %v4381
      %4783 = vmatpush1.bf16.msra.mxu0 %v4380
      %4784 = vmatprep.subr.bf16.mxu0 %v4378
      %4785 = vmatpush1.bf16.msra.mxu0 %v4377
      %4786 = vmatprep.subr.bf16.mxu0 %v4375
      %4787 = vmatpush1.bf16.msra.mxu0 %v4374
      %4788 = vmatprep.subr.bf16.mxu0 0
      %4789 = vmatpush2.bf16.msra.mxu0 0
      %4790 = vmatprep.subr.bf16.mxu0 0
      %4791 = vmatpush2.bf16.msra.mxu0 0
      %4792 = vmatprep.subr.bf16.mxu0 0
      %4793 = vmatpush2.bf16.msra.mxu0 0
      %4794 = vmatprep.subr.bf16.mxu0 0
      %4795 = vmatpush2.bf16.msra.mxu0 0
      %4796 = vmatprep.subr.bf16.mxu0 0
      %4797 = vmatpush2.bf16.msra.mxu0 0
      %4798 = vmatprep.subr.bf16.mxu0 0
      %4799 = vmatpush2.bf16.msra.mxu0 0
      %4800 = vmatprep.subr.bf16.mxu0 0
      %4801 = vmatpush2.bf16.msra.mxu0 0
      %4802 = vmatprep.subr.bf16.mxu0 0
      %4803 = vmatpush2.bf16.msra.mxu0 0
      %4804 = vmatprep.mubr.bf16.mxu0 0
      %4805 = vmatmul.mubr.bf16.gmra.mxu0 %v4559
      %v4806 = vpop.f32.mrf.mxu0
      %v4807 = vadd.f32 %v4282, %v4806
      %v4808 = vpop.f32.mrf.mxu0
      %v4809 = vadd.f32 %v4286, %v4808
      %v4810 = vpop.f32.mrf.mxu0
      %v4811 = vadd.f32 %v4282, %v4810
      %v4812 = vpop.f32.mrf.mxu0
      %v4813 = vadd.f32 %v4286, %v4812
      %4814 = vdwg.mxu0
      %4815 = vmatprep.subr.bf16.mxu0 0
      %4816 = vmatpush1.bf16.msra.mxu0 %v4397
      %4817 = vmatprep.subr.bf16.mxu0 0
      %4818 = vmatpush1.bf16.msra.mxu0 %v4394
      %4819 = vmatprep.subr.bf16.mxu0 0
      %4820 = vmatpush1.bf16.msra.mxu0 %v4391
      %4821 = vmatprep.subr.bf16.mxu0 0
      %4822 = vmatpush1.bf16.msra.mxu0 %v4388
      %4823 = vmatprep.subr.bf16.mxu0 0
      %4824 = vmatpush1.bf16.msra.mxu0 %v4385
      %4825 = vmatprep.subr.bf16.mxu0 0
      %4826 = vmatpush1.bf16.msra.mxu0 %v4382
      %4827 = vmatprep.subr.bf16.mxu0 0
      %4828 = vmatpush1.bf16.msra.mxu0 %v4379
      %4829 = vmatprep.subr.bf16.mxu0 0
      %4830 = vmatpush1.bf16.msra.mxu0 %v4376
      %4831 = vmatprep.subr.bf16.mxu0 0
      %4832 = vmatpush2.bf16.msra.mxu0 0
      %4833 = vmatprep.subr.bf16.mxu0 0
      %4834 = vmatpush2.bf16.msra.mxu0 0
      %4835 = vmatprep.subr.bf16.mxu0 0
      %4836 = vmatpush2.bf16.msra.mxu0 0
      %4837 = vmatprep.subr.bf16.mxu0 0
      %4838 = vmatpush2.bf16.msra.mxu0 0
      %4839 = vmatprep.subr.bf16.mxu0 0
      %4840 = vmatpush2.bf16.msra.mxu0 0
      %4841 = vmatprep.subr.bf16.mxu0 0
      %4842 = vmatpush2.bf16.msra.mxu0 0
      %4843 = vmatprep.subr.bf16.mxu0 0
      %4844 = vmatpush2.bf16.msra.mxu0 0
      %4845 = vmatprep.subr.bf16.mxu0 0
      %4846 = vmatpush2.bf16.msra.mxu0 0
      %4847 = vmatprep.mubr.bf16.mxu0 0
      %4848 = vmatmul.mubr.bf16.gmra.mxu0 %v4559
      %v4849 = vpop.f32.mrf.mxu0
      %v4850 = vadd.f32 %v4290, %v4849
      %v4851 = vpop.f32.mrf.mxu0
      %v4852 = vpop.f32.mrf.mxu0
      %v4853 = vadd.f32 %v4290, %v4852
      %v4854 = vpop.f32.mrf.mxu0
      %4855 = vdwg.mxu0
      %v4856 = vld [vmem:[%s1911] sm:$0xff]
      %v4857 = vld [vmem:[%s1911 + $0x8] sm:$0xff]
      %v4858 = vpack.c.bf16 %v4769, %v4766
      %v4859 = vld [vmem:[#allocation16] sm:$0xff]
      %v4860 = vld [vmem:[#allocation16 + $0x8] sm:$0xf]
      %v4861 = vld [vmem:[#allocation16 + $0xc] sm:$0xff]
      %v4862 = vld [vmem:[#allocation16 + $0x14] sm:$0xf]
      %v4863 = vld [vmem:[#allocation16 + $0x18] sm:$0xff]
      %v4864 = vld [vmem:[#allocation16 + $0x20] sm:$0xf]
      %v4865 = vld [vmem:[#allocation16 + $0x24] sm:$0xff]
      %v4866 = vld [vmem:[#allocation16 + $0x2c] sm:$0xf]
      %v4867 = vld [vmem:[#allocation16 + $0x30] sm:$0xff]
      %v4868 = vld [vmem:[#allocation16 + $0x38] sm:$0xf]
      %v4869 = vld [vmem:[#allocation16 + $0x3c] sm:$0xff]
      %v4870 = vld [vmem:[#allocation16 + $0x44] sm:$0xf]
      %v4871 = vld [vmem:[#allocation16 + $0x48] sm:$0xff]
      %v4872 = vld [vmem:[#allocation16 + $0x50] sm:$0xf]
      %v4873 = vld [vmem:[#allocation16 + $0x54] sm:$0xff]
      %v4874 = vld [vmem:[#allocation16 + $0x5c] sm:$0xf]
      %v4875 = vld [vmem:[#allocation16 + $0x60] sm:$0xff]
      %v4876 = vld [vmem:[#allocation16 + $0x68] sm:$0xf]
      %v4877 = vld [vmem:[#allocation16 + $0x6c] sm:$0xff]
      %v4878 = vld [vmem:[#allocation16 + $0x74] sm:$0xf]
      %v4879 = vld [vmem:[#allocation16 + $0x78] sm:$0xff]
      %v4880 = vld [vmem:[#allocation16 + $0x80] sm:$0xf]
      %v4881 = vld [vmem:[#allocation16 + $0x84] sm:$0xff]
      %v4882 = vld [vmem:[#allocation16 + $0x8c] sm:$0xf]
      %v4883 = vld [vmem:[#allocation16 + $0x90] sm:$0xff]
      %v4884 = vld [vmem:[#allocation16 + $0x98] sm:$0xf]
      %v4885 = vld [vmem:[#allocation16 + $0x9c] sm:$0xff]
      %v4886 = vld [vmem:[#allocation16 + $0xa4] sm:$0xf]
      %v4887 = vld [vmem:[#allocation16 + $0xa8] sm:$0xff]
      %v4888 = vld [vmem:[#allocation16 + $0xb0] sm:$0xf]
      %v4889 = vld [vmem:[#allocation16 + $0xb4] sm:$0xff]
      %v4890 = vld [vmem:[#allocation16 + $0xbc] sm:$0xf]
      %v4891 = vld [vmem:[%s12] sm:$0x7]
      %v4893 = vlaneseq
      %v4894 = vshrl.u32 %v4893, 7
      %v4895 = vsub.s32 0, %v4894
      %v4896 = vrot.slane %v4891, %v4895
      %v4897 = vlaneseq
      %v4898 = vshrl.u32 %v4897, 7
      %v4899 = vsub.s32 1, %v4898
      %v4900 = vrot.slane %v4891, %v4899
      %v4901 = vlaneseq
      %v4902 = vshrl.u32 %v4901, 7
      %v4903 = vsub.s32 2, %v4902
      %v4904 = vrot.slane %v4891, %v4903
      %v4940 = vunpack.c.l.b16 %v4859
      %v4941 = vunpack.c.h.b16 %v4859
      %v4942 = vunpack.c.l.b16 %v4860
      %v4943 = vunpack.c.l.b16 %v4861
      %v4944 = vunpack.c.h.b16 %v4861
      %v4945 = vunpack.c.l.b16 %v4862
      %v4946 = vunpack.c.l.b16 %v4863
      %v4947 = vunpack.c.h.b16 %v4863
      %v4948 = vunpack.c.l.b16 %v4864
      %v4949 = vunpack.c.l.b16 %v4865
      %v4950 = vunpack.c.h.b16 %v4865
      %v4951 = vunpack.c.l.b16 %v4866
      %v4952 = vunpack.c.l.b16 %v4867
      %v4953 = vunpack.c.h.b16 %v4867
      %v4954 = vunpack.c.l.b16 %v4868
      %v4955 = vunpack.c.l.b16 %v4869
      %v4956 = vunpack.c.h.b16 %v4869
      %v4957 = vunpack.c.l.b16 %v4870
      %v4958 = vunpack.c.l.b16 %v4871
      %v4959 = vunpack.c.h.b16 %v4871
      %v4960 = vunpack.c.l.b16 %v4872
      %v4961 = vunpack.c.l.b16 %v4873
      %v4962 = vunpack.c.h.b16 %v4873
      %v4963 = vunpack.c.l.b16 %v4874
      %v4964 = vunpack.c.l.b16 %v4875
      %v4965 = vunpack.c.h.b16 %v4875
      %v4966 = vunpack.c.l.b16 %v4876
      %v4967 = vunpack.c.l.b16 %v4877
      %v4968 = vunpack.c.h.b16 %v4877
      %v4969 = vunpack.c.l.b16 %v4878
      %v4970 = vunpack.c.l.b16 %v4879
      %v4971 = vunpack.c.h.b16 %v4879
      %v4972 = vunpack.c.l.b16 %v4880
      %v4973 = vunpack.c.l.b16 %v4881
      %v4974 = vunpack.c.h.b16 %v4881
      %v4975 = vunpack.c.l.b16 %v4882
      %v4976 = vunpack.c.l.b16 %v4883
      %v4977 = vunpack.c.h.b16 %v4883
      %v4978 = vunpack.c.l.b16 %v4884
      %v4979 = vunpack.c.l.b16 %v4885
      %v4980 = vunpack.c.h.b16 %v4885
      %v4981 = vunpack.c.l.b16 %v4886
      %v4982 = vunpack.c.l.b16 %v4887
      %v4983 = vunpack.c.h.b16 %v4887
      %v4984 = vunpack.c.l.b16 %v4888
      %v4985 = vunpack.c.l.b16 %v4889
      %v4986 = vunpack.c.h.b16 %v4889
      %v4987 = vunpack.c.l.b16 %v4890
      %v4988 = vpack.c.b16 %v4943, %v4940
      %v4989 = vpack.c.b16 %v4944, %v4941
      %v4990 = vpack.c.b16 %v4945, %v4942
      %v4991 = vpack.c.b16 %v4949, %v4946
      %v4992 = vpack.c.b16 %v4950, %v4947
      %v4993 = vpack.c.b16 %v4951, %v4948
      %v4994 = vpack.c.b16 %v4955, %v4952
      %v4995 = vpack.c.b16 %v4956, %v4953
      %v4996 = vpack.c.b16 %v4957, %v4954
      %v4997 = vpack.c.b16 %v4961, %v4958
      %v4998 = vpack.c.b16 %v4962, %v4959
      %v4999 = vpack.c.b16 %v4963, %v4960
      %v5000 = vpack.c.b16 %v4967, %v4964
      %v5001 = vpack.c.b16 %v4968, %v4965
      %v5002 = vpack.c.b16 %v4969, %v4966
      %v5003 = vpack.c.b16 %v4973, %v4970
      %v5004 = vpack.c.b16 %v4974, %v4971
      %v5005 = vpack.c.b16 %v4975, %v4972
      %v5006 = vpack.c.b16 %v4979, %v4976
      %v5007 = vpack.c.b16 %v4980, %v4977
      %v5008 = vpack.c.b16 %v4981, %v4978
      %v5009 = vpack.c.b16 %v4985, %v4982
      %v5010 = vpack.c.b16 %v4986, %v4983
      %v5011 = vpack.c.b16 %v4987, %v4984
      %5036 = vmatprep.subr.bf16.mxu0 %v5010
      %5037 = vmatpush1.bf16.msra.mxu0 %v5009
      %5038 = vmatprep.subr.bf16.mxu0 %v5007
      %5039 = vmatpush1.bf16.msra.mxu0 %v5006
      %5040 = vmatprep.subr.bf16.mxu0 %v5004
      %5041 = vmatpush1.bf16.msra.mxu0 %v5003
      %5042 = vmatprep.subr.bf16.mxu0 %v5001
      %5043 = vmatpush1.bf16.msra.mxu0 %v5000
      %5044 = vmatprep.subr.bf16.mxu0 %v4998
      %5045 = vmatpush1.bf16.msra.mxu0 %v4997
      %5046 = vmatprep.subr.bf16.mxu0 %v4995
      %5047 = vmatpush1.bf16.msra.mxu0 %v4994
      %5048 = vmatprep.subr.bf16.mxu0 %v4992
      %5049 = vmatpush1.bf16.msra.mxu0 %v4991
      %5050 = vmatprep.subr.bf16.mxu0 %v4989
      %5051 = vmatpush1.bf16.msra.mxu0 %v4988
      %5052 = vmatprep.subr.bf16.mxu0 0
      %5053 = vmatpush2.bf16.msra.mxu0 0
      %5054 = vmatprep.subr.bf16.mxu0 0
      %5055 = vmatpush2.bf16.msra.mxu0 0
      %5056 = vmatprep.subr.bf16.mxu0 0
      %5057 = vmatpush2.bf16.msra.mxu0 0
      %5058 = vmatprep.subr.bf16.mxu0 0
      %5059 = vmatpush2.bf16.msra.mxu0 0
      %5060 = vmatprep.subr.bf16.mxu0 0
      %5061 = vmatpush2.bf16.msra.mxu0 0
      %5062 = vmatprep.subr.bf16.mxu0 0
      %5063 = vmatpush2.bf16.msra.mxu0 0
      %5064 = vmatprep.subr.bf16.mxu0 0
      %5065 = vmatpush2.bf16.msra.mxu0 0
      %5066 = vmatprep.subr.bf16.mxu0 0
      %5067 = vmatpush2.bf16.msra.mxu0 0
      %5068 = vmatprep.mubr.bf16.mxu0 0
      %5069 = vmatmul.mubr.bf16.gmra.mxu0 %v4858
      %v5070 = vpop.f32.mrf.mxu0
      %v5071 = vadd.f32 %v4896, %v5070
      %v5072 = vpop.f32.mrf.mxu0
      %v5073 = vadd.f32 %v4900, %v5072
      %v5074 = vpop.f32.mrf.mxu0
      %v5075 = vadd.f32 %v4896, %v5074
      %v5076 = vpop.f32.mrf.mxu0
      %v5077 = vadd.f32 %v4900, %v5076
      %5078 = vdwg.mxu0
      %5079 = vmatprep.subr.bf16.mxu0 0
      %5080 = vmatpush1.bf16.msra.mxu0 %v5011
      %5081 = vmatprep.subr.bf16.mxu0 0
      %5082 = vmatpush1.bf16.msra.mxu0 %v5008
      %5083 = vmatprep.subr.bf16.mxu0 0
      %5084 = vmatpush1.bf16.msra.mxu0 %v5005
      %5085 = vmatprep.subr.bf16.mxu0 0
      %5086 = vmatpush1.bf16.msra.mxu0 %v5002
      %5087 = vmatprep.subr.bf16.mxu0 0
      %5088 = vmatpush1.bf16.msra.mxu0 %v4999
      %5089 = vmatprep.subr.bf16.mxu0 0
      %5090 = vmatpush1.bf16.msra.mxu0 %v4996
      %5091 = vmatprep.subr.bf16.mxu0 0
      %5092 = vmatpush1.bf16.msra.mxu0 %v4993
      %5093 = vmatprep.subr.bf16.mxu0 0
      %5094 = vmatpush1.bf16.msra.mxu0 %v4990
      %5095 = vmatprep.subr.bf16.mxu0 0
      %5096 = vmatpush2.bf16.msra.mxu0 0
      %5097 = vmatprep.subr.bf16.mxu0 0
      %5098 = vmatpush2.bf16.msra.mxu0 0
      %5099 = vmatprep.subr.bf16.mxu0 0
      %5100 = vmatpush2.bf16.msra.mxu0 0
      %5101 = vmatprep.subr.bf16.mxu0 0
      %5102 = vmatpush2.bf16.msra.mxu0 0
      %5103 = vmatprep.subr.bf16.mxu0 0
      %5104 = vmatpush2.bf16.msra.mxu0 0
      %5105 = vmatprep.subr.bf16.mxu0 0
      %5106 = vmatpush2.bf16.msra.mxu0 0
      %5107 = vmatprep.subr.bf16.mxu0 0
      %5108 = vmatpush2.bf16.msra.mxu0 0
      %5109 = vmatprep.subr.bf16.mxu0 0
      %5110 = vmatpush2.bf16.msra.mxu0 0
      %5111 = vmatprep.mubr.bf16.mxu0 0
      %5112 = vmatmul.mubr.bf16.gmra.mxu0 %v4858
      %v5113 = vpop.f32.mrf.mxu0
      %v5114 = vadd.f32 %v4904, %v5113
      %v5115 = vpop.f32.mrf.mxu0
      %v5116 = vpop.f32.mrf.mxu0
      %v5117 = vadd.f32 %v4904, %v5116
      %v5118 = vpop.f32.mrf.mxu0
      %5119 = vdwg.mxu0
      %v5120 = vadd.f32 %v4807, %v5071
      %v5121 = vadd.f32 %v4811, %v5075
      %v5122 = vxor.u32 %v5120, 2147483648
      %v5123 = vxor.u32 %v5121, 2147483648
      %v5124 = vmul.f32 %v5122, 1.442695
      %v5125 = vpow.pop %v5124
      %v5126 = vmul.f32 %v5123, 1.442695
      %v5127 = vpow.pop %v5126
      %v5128 = vadd.f32 %v5125, 1.0
      %v5129 = vadd.f32 %v5127, 1.0
      %v5130 = vrcp.pop %v5128
      %v5131 = vmul.f32 1.0, %v5130
      %v5132 = vrcp.pop %v5129
      %v5133 = vmul.f32 1.0, %v5132
      %v5134 = vadd.f32 %v4809, %v5073
      %v5135 = vadd.f32 %v4813, %v5077
      %v5136 = vxor.u32 %v5134, 2147483648
      %v5137 = vxor.u32 %v5135, 2147483648
      %v5138 = vmul.f32 %v5136, 1.442695
      %v5139 = vpow.pop %v5138
      %v5140 = vmul.f32 %v5137, 1.442695
      %v5141 = vpow.pop %v5140
      %v5142 = vadd.f32 %v5139, 1.0
      %v5143 = vadd.f32 %v5141, 1.0
      %v5144 = vrcp.pop %v5142
      %v5145 = vmul.f32 1.0, %v5144
      %v5146 = vrcp.pop %v5143
      %v5147 = vmul.f32 1.0, %v5146
      %v5148 = vmul.f32 %v5131, %v5114
      %v5149 = vmul.f32 %v5133, %v5117
      %v5150 = vadd.f32 %v4850, %v5148
      %v5151 = vadd.f32 %v4853, %v5149
      %v5152 = vtanh.pop %v5150
      %v5153 = vtanh.pop %v5151
      %v5154 = vsub.f32 1.0, %v5145
      %v5155 = vsub.f32 1.0, %v5147
      %v5156 = vmul.f32 %v5154, %v5152
      %v5157 = vmul.f32 %v5155, %v5153
      %v5158 = vmul.f32 %v5145, %v4766
      %v5159 = vmul.f32 %v5147, %v4769
      %v5160 = vadd.f32 %v5156, %v5158
      %v5161 = vadd.f32 %v5157, %v5159
      %v5162 = vmul.f32 %v4856, %v5160
      %v5163 = vmul.f32 %v4857, %v5161
      %v5164 = vsub.f32 1.0, %v4856
      %v5165 = vsub.f32 1.0, %v4857
      %v5166 = vmul.f32 %v5164, %v4555
      %v5167 = vmul.f32 %v5165, %v4556
      %v5168 = vadd.f32 %v5162, %v5166
      %v5169 = vadd.f32 %v5163, %v5167
      %v5170 = vld [vmem:[%s2226] sm:$0xf]
      %v5171 = vld [vmem:[%s2226 + $0x4] sm:$0xf]
      %v5172 = vpack.c.bf16 %v5169, %v5168
      %5173 = vmatprep.subr.bf16.mxu0 %v4639
      %5174 = vmatpush1.bf16.msra.mxu0 %v4638
      %5175 = vmatprep.subr.bf16.mxu0 %v4637
      %5176 = vmatpush1.bf16.msra.mxu0 %v4636
      %5177 = vmatprep.subr.bf16.mxu0 %v4635
      %5178 = vmatpush1.bf16.msra.mxu0 %v4634
      %5179 = vmatprep.subr.bf16.mxu0 %v4633
      %5180 = vmatpush1.bf16.msra.mxu0 %v4632
      %5181 = vmatprep.subr.bf16.mxu0 %v4631
      %5182 = vmatpush1.bf16.msra.mxu0 %v4630
      %5183 = vmatprep.subr.bf16.mxu0 %v4629
      %5184 = vmatpush1.bf16.msra.mxu0 %v4628
      %5185 = vmatprep.subr.bf16.mxu0 %v4627
      %5186 = vmatpush1.bf16.msra.mxu0 %v4626
      %5187 = vmatprep.subr.bf16.mxu0 %v4625
      %5188 = vmatpush1.bf16.msra.mxu0 %v4624
      %5189 = vmatprep.subr.bf16.mxu0 0
      %5190 = vmatpush2.bf16.msra.mxu0 0
      %5191 = vmatprep.subr.bf16.mxu0 0
      %5192 = vmatpush2.bf16.msra.mxu0 0
      %5193 = vmatprep.subr.bf16.mxu0 0
      %5194 = vmatpush2.bf16.msra.mxu0 0
      %5195 = vmatprep.subr.bf16.mxu0 0
      %5196 = vmatpush2.bf16.msra.mxu0 0
      %5197 = vmatprep.subr.bf16.mxu0 0
      %5198 = vmatpush2.bf16.msra.mxu0 0
      %5199 = vmatprep.subr.bf16.mxu0 0
      %5200 = vmatpush2.bf16.msra.mxu0 0
      %5201 = vmatprep.subr.bf16.mxu0 0
      %5202 = vmatpush2.bf16.msra.mxu0 0
      %5203 = vmatprep.subr.bf16.mxu0 0
      %5204 = vmatpush2.bf16.msra.mxu0 0
      %5205 = vmatprep.mubr.bf16.mxu0 0
      %5206 = vmatmul.mubr.bf16.gmra.mxu0 %v5172
      %v5207 = vpop.f32.mrf.mxu0
      %v5208 = vadd.f32 0.0, %v5207
      %v5209 = vpop.f32.mrf.mxu0
      %v5210 = vadd.f32 0.0, %v5209
      %v5211 = vpop.f32.mrf.mxu0
      %v5212 = vadd.f32 0.0, %v5211
      %v5213 = vpop.f32.mrf.mxu0
      %v5214 = vadd.f32 0.0, %v5213
      %5215 = vdwg.mxu0
      %v5216 = vadd.f32 %v5208, %v4704
      %v5217 = vadd.f32 %v5212, %v4704
      %v5218 = vxor.u32 %v5216, 2147483648
      %v5219 = vxor.u32 %v5217, 2147483648
      %v5220 = vmul.f32 %v5218, 1.442695
      %v5221 = vpow.pop %v5220
      %v5222 = vmul.f32 %v5219, 1.442695
      %v5223 = vpow.pop %v5222
      %v5224 = vadd.f32 %v5221, 1.0
      %v5225 = vadd.f32 %v5223, 1.0
      %v5226 = vrcp.pop %v5224
      %v5227 = vmul.f32 1.0, %v5226
      %v5228 = vrcp.pop %v5225
      %v5229 = vmul.f32 1.0, %v5228
      %v5230 = vmul.f32 %v5227, %v5210
      %v5231 = vmul.f32 %v5229, %v5214
      %v5232 = vpack.c.bf16 %v5231, %v5230
      %v5235 = vunpack.c.l.b16 %v5170
      %v5236 = vunpack.c.l.b16 %v5171
      %v5237 = vpack.c.b16 %v5236, %v5235
      %v5239 = vsel %vm436, %v5237, 0
      %5241 = vmatprep.subr.bf16.mxu0 0
      %5242 = vmatpush1.bf16.msra.mxu0 0
      %5243 = vmatprep.subr.bf16.mxu0 0
      %5244 = vmatpush1.bf16.msra.mxu0 0
      %5245 = vmatprep.subr.bf16.mxu0 0
      %5246 = vmatpush1.bf16.msra.mxu0 0
      %5247 = vmatprep.subr.bf16.mxu0 0
      %5248 = vmatpush1.bf16.msra.mxu0 0
      %5249 = vmatprep.subr.bf16.mxu0 0
      %5250 = vmatpush1.bf16.msra.mxu0 0
      %5251 = vmatprep.subr.bf16.mxu0 0
      %5252 = vmatpush1.bf16.msra.mxu0 0
      %5253 = vmatprep.subr.bf16.mxu0 0
      %5254 = vmatpush1.bf16.msra.mxu0 0
      %5255 = vmatprep.subr.bf16.mxu0 0
      %5256 = vmatpush1.bf16.msra.mxu0 %v5232
      %5257 = vmatprep.subr.bf16.mxu0 0
      %5258 = vmatpush2.bf16.msra.mxu0 0
      %5259 = vmatprep.subr.bf16.mxu0 0
      %5260 = vmatpush2.bf16.msra.mxu0 0
      %5261 = vmatprep.subr.bf16.mxu0 0
      %5262 = vmatpush2.bf16.msra.mxu0 0
      %5263 = vmatprep.subr.bf16.mxu0 0
      %5264 = vmatpush2.bf16.msra.mxu0 0
      %5265 = vmatprep.subr.bf16.mxu0 0
      %5266 = vmatpush2.bf16.msra.mxu0 0
      %5267 = vmatprep.subr.bf16.mxu0 0
      %5268 = vmatpush2.bf16.msra.mxu0 0
      %5269 = vmatprep.subr.bf16.mxu0 0
      %5270 = vmatpush2.bf16.msra.mxu0 0
      %5271 = vmatprep.subr.bf16.mxu0 0
      %5272 = vmatpush2.bf16.msra.mxu0 0
      %5273 = vmatprep.mubr.bf16.mxu0 0
      %5274 = vmatmul.mubr.bf16.gmra.mxu0 %v5239
      %v5275 = vpop.f32.mrf.mxu0
      %v5276 = vadd.f32 0.0, %v5275
      %v5277 = vpop.f32.mrf.mxu0
      %v5278 = vpop.f32.mrf.mxu0
      %v5279 = vadd.f32 0.0, %v5278
      %v5280 = vpop.f32.mrf.mxu0
      %5281 = vdwg.mxu0
      %5282 = vmatprep.subr.bf16.mxu0 %v4396
      %5283 = vmatpush1.bf16.msra.mxu0 %v4395
      %5284 = vmatprep.subr.bf16.mxu0 %v4393
      %5285 = vmatpush1.bf16.msra.mxu0 %v4392
      %5286 = vmatprep.subr.bf16.mxu0 %v4390
      %5287 = vmatpush1.bf16.msra.mxu0 %v4389
      %5288 = vmatprep.subr.bf16.mxu0 %v4387
      %5289 = vmatpush1.bf16.msra.mxu0 %v4386
      %5290 = vmatprep.subr.bf16.mxu0 %v4384
      %5291 = vmatpush1.bf16.msra.mxu0 %v4383
      %5292 = vmatprep.subr.bf16.mxu0 %v4381
      %5293 = vmatpush1.bf16.msra.mxu0 %v4380
      %5294 = vmatprep.subr.bf16.mxu0 %v4378
      %5295 = vmatpush1.bf16.msra.mxu0 %v4377
      %5296 = vmatprep.subr.bf16.mxu0 %v4375
      %5297 = vmatpush1.bf16.msra.mxu0 %v4374
      %5298 = vmatprep.subr.bf16.mxu0 0
      %5299 = vmatpush2.bf16.msra.mxu0 0
      %5300 = vmatprep.subr.bf16.mxu0 0
      %5301 = vmatpush2.bf16.msra.mxu0 0
      %5302 = vmatprep.subr.bf16.mxu0 0
      %5303 = vmatpush2.bf16.msra.mxu0 0
      %5304 = vmatprep.subr.bf16.mxu0 0
      %5305 = vmatpush2.bf16.msra.mxu0 0
      %5306 = vmatprep.subr.bf16.mxu0 0
      %5307 = vmatpush2.bf16.msra.mxu0 0
      %5308 = vmatprep.subr.bf16.mxu0 0
      %5309 = vmatpush2.bf16.msra.mxu0 0
      %5310 = vmatprep.subr.bf16.mxu0 0
      %5311 = vmatpush2.bf16.msra.mxu0 0
      %5312 = vmatprep.subr.bf16.mxu0 0
      %5313 = vmatpush2.bf16.msra.mxu0 0
      %5314 = vmatprep.mubr.bf16.mxu0 0
      %5315 = vmatmul.mubr.bf16.gmra.mxu0 %v5172
      %v5316 = vpop.f32.mrf.mxu0
      %v5317 = vadd.f32 %v4282, %v5316
      %v5318 = vpop.f32.mrf.mxu0
      %v5319 = vadd.f32 %v4286, %v5318
      %v5320 = vpop.f32.mrf.mxu0
      %v5321 = vadd.f32 %v4282, %v5320
      %v5322 = vpop.f32.mrf.mxu0
      %v5323 = vadd.f32 %v4286, %v5322
      %5324 = vdwg.mxu0
      %5325 = vmatprep.subr.bf16.mxu0 0
      %5326 = vmatpush1.bf16.msra.mxu0 %v4397
      %5327 = vmatprep.subr.bf16.mxu0 0
      %5328 = vmatpush1.bf16.msra.mxu0 %v4394
      %5329 = vmatprep.subr.bf16.mxu0 0
      %5330 = vmatpush1.bf16.msra.mxu0 %v4391
      %5331 = vmatprep.subr.bf16.mxu0 0
      %5332 = vmatpush1.bf16.msra.mxu0 %v4388
      %5333 = vmatprep.subr.bf16.mxu0 0
      %5334 = vmatpush1.bf16.msra.mxu0 %v4385
      %5335 = vmatprep.subr.bf16.mxu0 0
      %5336 = vmatpush1.bf16.msra.mxu0 %v4382
      %5337 = vmatprep.subr.bf16.mxu0 0
      %5338 = vmatpush1.bf16.msra.mxu0 %v4379
      %5339 = vmatprep.subr.bf16.mxu0 0
      %5340 = vmatpush1.bf16.msra.mxu0 %v4376
      %5341 = vmatprep.subr.bf16.mxu0 0
      %5342 = vmatpush2.bf16.msra.mxu0 0
      %5343 = vmatprep.subr.bf16.mxu0 0
      %5344 = vmatpush2.bf16.msra.mxu0 0
      %5345 = vmatprep.subr.bf16.mxu0 0
      %5346 = vmatpush2.bf16.msra.mxu0 0
      %5347 = vmatprep.subr.bf16.mxu0 0
      %5348 = vmatpush2.bf16.msra.mxu0 0
      %5349 = vmatprep.subr.bf16.mxu0 0
      %5350 = vmatpush2.bf16.msra.mxu0 0
      %5351 = vmatprep.subr.bf16.mxu0 0
      %5352 = vmatpush2.bf16.msra.mxu0 0
      %5353 = vmatprep.subr.bf16.mxu0 0
      %5354 = vmatpush2.bf16.msra.mxu0 0
      %5355 = vmatprep.subr.bf16.mxu0 0
      %5356 = vmatpush2.bf16.msra.mxu0 0
      %5357 = vmatprep.mubr.bf16.mxu0 0
      %5358 = vmatmul.mubr.bf16.gmra.mxu0 %v5172
      %v5359 = vpop.f32.mrf.mxu0
      %v5360 = vadd.f32 %v4290, %v5359
      %v5361 = vpop.f32.mrf.mxu0
      %v5362 = vpop.f32.mrf.mxu0
      %v5363 = vadd.f32 %v4290, %v5362
      %v5364 = vpop.f32.mrf.mxu0
      %5365 = vdwg.mxu0
      %v5366 = vld [vmem:[%s2423] sm:$0xff]
      %v5367 = vld [vmem:[%s2423 + $0x8] sm:$0xff]
      %v5368 = vpack.c.bf16 %v5279, %v5276
      %5369 = vmatprep.subr.bf16.mxu0 %v5010
      %5370 = vmatpush1.bf16.msra.mxu0 %v5009
      %5371 = vmatprep.subr.bf16.mxu0 %v5007
      %5372 = vmatpush1.bf16.msra.mxu0 %v5006
      %5373 = vmatprep.subr.bf16.mxu0 %v5004
      %5374 = vmatpush1.bf16.msra.mxu0 %v5003
      %5375 = vmatprep.subr.bf16.mxu0 %v5001
      %5376 = vmatpush1.bf16.msra.mxu0 %v5000
      %5377 = vmatprep.subr.bf16.mxu0 %v4998
      %5378 = vmatpush1.bf16.msra.mxu0 %v4997
      %5379 = vmatprep.subr.bf16.mxu0 %v4995
      %5380 = vmatpush1.bf16.msra.mxu0 %v4994
      %5381 = vmatprep.subr.bf16.mxu0 %v4992
      %5382 = vmatpush1.bf16.msra.mxu0 %v4991
      %5383 = vmatprep.subr.bf16.mxu0 %v4989
      %5384 = vmatpush1.bf16.msra.mxu0 %v4988
      %5385 = vmatprep.subr.bf16.mxu0 0
      %5386 = vmatpush2.bf16.msra.mxu0 0
      %5387 = vmatprep.subr.bf16.mxu0 0
      %5388 = vmatpush2.bf16.msra.mxu0 0
      %5389 = vmatprep.subr.bf16.mxu0 0
      %5390 = vmatpush2.bf16.msra.mxu0 0
      %5391 = vmatprep.subr.bf16.mxu0 0
      %5392 = vmatpush2.bf16.msra.mxu0 0
      %5393 = vmatprep.subr.bf16.mxu0 0
      %5394 = vmatpush2.bf16.msra.mxu0 0
      %5395 = vmatprep.subr.bf16.mxu0 0
      %5396 = vmatpush2.bf16.msra.mxu0 0
      %5397 = vmatprep.subr.bf16.mxu0 0
      %5398 = vmatpush2.bf16.msra.mxu0 0
      %5399 = vmatprep.subr.bf16.mxu0 0
      %5400 = vmatpush2.bf16.msra.mxu0 0
      %5401 = vmatprep.mubr.bf16.mxu0 0
      %5402 = vmatmul.mubr.bf16.gmra.mxu0 %v5368
      %v5403 = vpop.f32.mrf.mxu0
      %v5404 = vadd.f32 %v4896, %v5403
      %v5405 = vpop.f32.mrf.mxu0
      %v5406 = vadd.f32 %v4900, %v5405
      %v5407 = vpop.f32.mrf.mxu0
      %v5408 = vadd.f32 %v4896, %v5407
      %v5409 = vpop.f32.mrf.mxu0
      %v5410 = vadd.f32 %v4900, %v5409
      %5411 = vdwg.mxu0
      %5412 = vmatprep.subr.bf16.mxu0 0
      %5413 = vmatpush1.bf16.msra.mxu0 %v5011
      %5414 = vmatprep.subr.bf16.mxu0 0
      %5415 = vmatpush1.bf16.msra.mxu0 %v5008
      %5416 = vmatprep.subr.bf16.mxu0 0
      %5417 = vmatpush1.bf16.msra.mxu0 %v5005
      %5418 = vmatprep.subr.bf16.mxu0 0
      %5419 = vmatpush1.bf16.msra.mxu0 %v5002
      %5420 = vmatprep.subr.bf16.mxu0 0
      %5421 = vmatpush1.bf16.msra.mxu0 %v4999
      %5422 = vmatprep.subr.bf16.mxu0 0
      %5423 = vmatpush1.bf16.msra.mxu0 %v4996
      %5424 = vmatprep.subr.bf16.mxu0 0
      %5425 = vmatpush1.bf16.msra.mxu0 %v4993
      %5426 = vmatprep.subr.bf16.mxu0 0
      %5427 = vmatpush1.bf16.msra.mxu0 %v4990
      %5428 = vmatprep.subr.bf16.mxu0 0
      %5429 = vmatpush2.bf16.msra.mxu0 0
      %5430 = vmatprep.subr.bf16.mxu0 0
      %5431 = vmatpush2.bf16.msra.mxu0 0
      %5432 = vmatprep.subr.bf16.mxu0 0
      %5433 = vmatpush2.bf16.msra.mxu0 0
      %5434 = vmatprep.subr.bf16.mxu0 0
      %5435 = vmatpush2.bf16.msra.mxu0 0
      %5436 = vmatprep.subr.bf16.mxu0 0
      %5437 = vmatpush2.bf16.msra.mxu0 0
      %5438 = vmatprep.subr.bf16.mxu0 0
      %5439 = vmatpush2.bf16.msra.mxu0 0
      %5440 = vmatprep.subr.bf16.mxu0 0
      %5441 = vmatpush2.bf16.msra.mxu0 0
      %5442 = vmatprep.subr.bf16.mxu0 0
      %5443 = vmatpush2.bf16.msra.mxu0 0
      %5444 = vmatprep.mubr.bf16.mxu0 0
      %5445 = vmatmul.mubr.bf16.gmra.mxu0 %v5368
      %v5446 = vpop.f32.mrf.mxu0
      %v5447 = vadd.f32 %v4904, %v5446
      %v5448 = vpop.f32.mrf.mxu0
      %v5449 = vpop.f32.mrf.mxu0
      %v5450 = vadd.f32 %v4904, %v5449
      %v5451 = vpop.f32.mrf.mxu0
      %5452 = vdwg.mxu0
      %v5453 = vadd.f32 %v5317, %v5404
      %v5454 = vadd.f32 %v5321, %v5408
      %v5455 = vxor.u32 %v5453, 2147483648
      %v5456 = vxor.u32 %v5454, 2147483648
      %v5457 = vmul.f32 %v5455, 1.442695
      %v5458 = vpow.pop %v5457
      %v5459 = vmul.f32 %v5456, 1.442695
      %v5460 = vpow.pop %v5459
      %v5461 = vadd.f32 %v5458, 1.0
      %v5462 = vadd.f32 %v5460, 1.0
      %v5463 = vrcp.pop %v5461
      %v5464 = vmul.f32 1.0, %v5463
      %v5465 = vrcp.pop %v5462
      %v5466 = vmul.f32 1.0, %v5465
      %v5467 = vadd.f32 %v5319, %v5406
      %v5468 = vadd.f32 %v5323, %v5410
      %v5469 = vxor.u32 %v5467, 2147483648
      %v5470 = vxor.u32 %v5468, 2147483648
      %v5471 = vmul.f32 %v5469, 1.442695
      %v5472 = vpow.pop %v5471
      %v5473 = vmul.f32 %v5470, 1.442695
      %v5474 = vpow.pop %v5473
      %v5475 = vadd.f32 %v5472, 1.0
      %v5476 = vadd.f32 %v5474, 1.0
      %v5477 = vrcp.pop %v5475
      %v5478 = vmul.f32 1.0, %v5477
      %v5479 = vrcp.pop %v5476
      %v5480 = vmul.f32 1.0, %v5479
      %v5481 = vmul.f32 %v5464, %v5447
      %v5482 = vmul.f32 %v5466, %v5450
      %v5483 = vadd.f32 %v5360, %v5481
      %v5484 = vadd.f32 %v5363, %v5482
      %v5485 = vtanh.pop %v5483
      %v5486 = vtanh.pop %v5484
      %v5487 = vsub.f32 1.0, %v5478
      %v5488 = vsub.f32 1.0, %v5480
      %v5489 = vmul.f32 %v5487, %v5485
      %v5490 = vmul.f32 %v5488, %v5486
      %v5491 = vmul.f32 %v5478, %v5276
      %v5492 = vmul.f32 %v5480, %v5279
      %v5493 = vadd.f32 %v5489, %v5491
      %v5494 = vadd.f32 %v5490, %v5492
      %v5495 = vmul.f32 %v5366, %v5493
      %v5496 = vmul.f32 %v5367, %v5494
      %v5497 = vsub.f32 1.0, %v5366
      %v5498 = vsub.f32 1.0, %v5367
      %v5499 = vmul.f32 %v5497, %v5168
      %v5500 = vmul.f32 %v5498, %v5169
      %v5501 = vadd.f32 %v5495, %v5499
      %v5502 = vadd.f32 %v5496, %v5500
      %v5503 = vld [vmem:[%s2561] sm:$0xf]
      %v5504 = vld [vmem:[%s2561 + $0x4] sm:$0xf]
      %v5505 = vpack.c.bf16 %v5502, %v5501
      %5506 = vmatprep.subr.bf16.mxu0 %v4639
      %5507 = vmatpush1.bf16.msra.mxu0 %v4638
      %5508 = vmatprep.subr.bf16.mxu0 %v4637
      %5509 = vmatpush1.bf16.msra.mxu0 %v4636
      %5510 = vmatprep.subr.bf16.mxu0 %v4635
      %5511 = vmatpush1.bf16.msra.mxu0 %v4634
      %5512 = vmatprep.subr.bf16.mxu0 %v4633
      %5513 = vmatpush1.bf16.msra.mxu0 %v4632
      %5514 = vmatprep.subr.bf16.mxu0 %v4631
      %5515 = vmatpush1.bf16.msra.mxu0 %v4630
      %5516 = vmatprep.subr.bf16.mxu0 %v4629
      %5517 = vmatpush1.bf16.msra.mxu0 %v4628
      %5518 = vmatprep.subr.bf16.mxu0 %v4627
      %5519 = vmatpush1.bf16.msra.mxu0 %v4626
      %5520 = vmatprep.subr.bf16.mxu0 %v4625
      %5521 = vmatpush1.bf16.msra.mxu0 %v4624
      %5522 = vmatprep.subr.bf16.mxu0 0
      %5523 = vmatpush2.bf16.msra.mxu0 0
      %5524 = vmatprep.subr.bf16.mxu0 0
      %5525 = vmatpush2.bf16.msra.mxu0 0
      %5526 = vmatprep.subr.bf16.mxu0 0
      %5527 = vmatpush2.bf16.msra.mxu0 0
      %5528 = vmatprep.subr.bf16.mxu0 0
      %5529 = vmatpush2.bf16.msra.mxu0 0
      %5530 = vmatprep.subr.bf16.mxu0 0
      %5531 = vmatpush2.bf16.msra.mxu0 0
      %5532 = vmatprep.subr.bf16.mxu0 0
      %5533 = vmatpush2.bf16.msra.mxu0 0
      %5534 = vmatprep.subr.bf16.mxu0 0
      %5535 = vmatpush2.bf16.msra.mxu0 0
      %5536 = vmatprep.subr.bf16.mxu0 0
      %5537 = vmatpush2.bf16.msra.mxu0 0
      %5538 = vmatprep.mubr.bf16.mxu0 0
      %5539 = vmatmul.mubr.bf16.gmra.mxu0 %v5505
      %v5540 = vpop.f32.mrf.mxu0
      %v5541 = vadd.f32 0.0, %v5540
      %v5542 = vpop.f32.mrf.mxu0
      %v5543 = vadd.f32 0.0, %v5542
      %v5544 = vpop.f32.mrf.mxu0
      %v5545 = vadd.f32 0.0, %v5544
      %v5546 = vpop.f32.mrf.mxu0
      %v5547 = vadd.f32 0.0, %v5546
      %5548 = vdwg.mxu0
      %v5549 = vadd.f32 %v5541, %v4704
      %v5550 = vadd.f32 %v5545, %v4704
      %v5551 = vxor.u32 %v5549, 2147483648
      %v5552 = vxor.u32 %v5550, 2147483648
      %v5553 = vmul.f32 %v5551, 1.442695
      %v5554 = vpow.pop %v5553
      %v5555 = vmul.f32 %v5552, 1.442695
      %v5556 = vpow.pop %v5555
      %v5557 = vadd.f32 %v5554, 1.0
      %v5558 = vadd.f32 %v5556, 1.0
      %v5559 = vrcp.pop %v5557
      %v5560 = vmul.f32 1.0, %v5559
      %v5561 = vrcp.pop %v5558
      %v5562 = vmul.f32 1.0, %v5561
      %v5563 = vmul.f32 %v5560, %v5543
      %v5564 = vmul.f32 %v5562, %v5547
      %v5565 = vpack.c.bf16 %v5564, %v5563
      %v5568 = vunpack.c.l.b16 %v5503
      %v5569 = vunpack.c.l.b16 %v5504
      %v5570 = vpack.c.b16 %v5569, %v5568
      %v5572 = vsel %vm436, %v5570, 0
      %5574 = vmatprep.subr.bf16.mxu0 0
      %5575 = vmatpush1.bf16.msra.mxu0 0
      %5576 = vmatprep.subr.bf16.mxu0 0
      %5577 = vmatpush1.bf16.msra.mxu0 0
      %5578 = vmatprep.subr.bf16.mxu0 0
      %5579 = vmatpush1.bf16.msra.mxu0 0
      %5580 = vmatprep.subr.bf16.mxu0 0
      %5581 = vmatpush1.bf16.msra.mxu0 0
      %5582 = vmatprep.subr.bf16.mxu0 0
      %5583 = vmatpush1.bf16.msra.mxu0 0
      %5584 = vmatprep.subr.bf16.mxu0 0
      %5585 = vmatpush1.bf16.msra.mxu0 0
      %5586 = vmatprep.subr.bf16.mxu0 0
      %5587 = vmatpush1.bf16.msra.mxu0 0
      %5588 = vmatprep.subr.bf16.mxu0 0
      %5589 = vmatpush1.bf16.msra.mxu0 %v5565
      %5590 = vmatprep.subr.bf16.mxu0 0
      %5591 = vmatpush2.bf16.msra.mxu0 0
      %5592 = vmatprep.subr.bf16.mxu0 0
      %5593 = vmatpush2.bf16.msra.mxu0 0
      %5594 = vmatprep.subr.bf16.mxu0 0
      %5595 = vmatpush2.bf16.msra.mxu0 0
      %5596 = vmatprep.subr.bf16.mxu0 0
      %5597 = vmatpush2.bf16.msra.mxu0 0
      %5598 = vmatprep.subr.bf16.mxu0 0
      %5599 = vmatpush2.bf16.msra.mxu0 0
      %5600 = vmatprep.subr.bf16.mxu0 0
      %5601 = vmatpush2.bf16.msra.mxu0 0
      %5602 = vmatprep.subr.bf16.mxu0 0
      %5603 = vmatpush2.bf16.msra.mxu0 0
      %5604 = vmatprep.subr.bf16.mxu0 0
      %5605 = vmatpush2.bf16.msra.mxu0 0
      %5606 = vmatprep.mubr.bf16.mxu0 0
      %5607 = vmatmul.mubr.bf16.gmra.mxu0 %v5572
      %v5608 = vpop.f32.mrf.mxu0
      %v5609 = vadd.f32 0.0, %v5608
      %v5610 = vpop.f32.mrf.mxu0
      %v5611 = vpop.f32.mrf.mxu0
      %v5612 = vadd.f32 0.0, %v5611
      %v5613 = vpop.f32.mrf.mxu0
      %5614 = vdwg.mxu0
      %5615 = vmatprep.subr.bf16.mxu0 %v4396
      %5616 = vmatpush1.bf16.msra.mxu0 %v4395
      %5617 = vmatprep.subr.bf16.mxu0 %v4393
      %5618 = vmatpush1.bf16.msra.mxu0 %v4392
      %5619 = vmatprep.subr.bf16.mxu0 %v4390
      %5620 = vmatpush1.bf16.msra.mxu0 %v4389
      %5621 = vmatprep.subr.bf16.mxu0 %v4387
      %5622 = vmatpush1.bf16.msra.mxu0 %v4386
      %5623 = vmatprep.subr.bf16.mxu0 %v4384
      %5624 = vmatpush1.bf16.msra.mxu0 %v4383
      %5625 = vmatprep.subr.bf16.mxu0 %v4381
      %5626 = vmatpush1.bf16.msra.mxu0 %v4380
      %5627 = vmatprep.subr.bf16.mxu0 %v4378
      %5628 = vmatpush1.bf16.msra.mxu0 %v4377
      %5629 = vmatprep.subr.bf16.mxu0 %v4375
      %5630 = vmatpush1.bf16.msra.mxu0 %v4374
      %5631 = vmatprep.subr.bf16.mxu0 0
      %5632 = vmatpush2.bf16.msra.mxu0 0
      %5633 = vmatprep.subr.bf16.mxu0 0
      %5634 = vmatpush2.bf16.msra.mxu0 0
      %5635 = vmatprep.subr.bf16.mxu0 0
      %5636 = vmatpush2.bf16.msra.mxu0 0
      %5637 = vmatprep.subr.bf16.mxu0 0
      %5638 = vmatpush2.bf16.msra.mxu0 0
      %5639 = vmatprep.subr.bf16.mxu0 0
      %5640 = vmatpush2.bf16.msra.mxu0 0
      %5641 = vmatprep.subr.bf16.mxu0 0
      %5642 = vmatpush2.bf16.msra.mxu0 0
      %5643 = vmatprep.subr.bf16.mxu0 0
      %5644 = vmatpush2.bf16.msra.mxu0 0
      %5645 = vmatprep.subr.bf16.mxu0 0
      %5646 = vmatpush2.bf16.msra.mxu0 0
      %5647 = vmatprep.mubr.bf16.mxu0 0
      %5648 = vmatmul.mubr.bf16.gmra.mxu0 %v5505
      %v5649 = vpop.f32.mrf.mxu0
      %v5650 = vadd.f32 %v4282, %v5649
      %v5651 = vpop.f32.mrf.mxu0
      %v5652 = vadd.f32 %v4286, %v5651
      %v5653 = vpop.f32.mrf.mxu0
      %v5654 = vadd.f32 %v4282, %v5653
      %v5655 = vpop.f32.mrf.mxu0
      %v5656 = vadd.f32 %v4286, %v5655
      %5657 = vdwg.mxu0
      %5658 = vmatprep.subr.bf16.mxu0 0
      %5659 = vmatpush1.bf16.msra.mxu0 %v4397
      %5660 = vmatprep.subr.bf16.mxu0 0
      %5661 = vmatpush1.bf16.msra.mxu0 %v4394
      %5662 = vmatprep.subr.bf16.mxu0 0
      %5663 = vmatpush1.bf16.msra.mxu0 %v4391
      %5664 = vmatprep.subr.bf16.mxu0 0
      %5665 = vmatpush1.bf16.msra.mxu0 %v4388
      %5666 = vmatprep.subr.bf16.mxu0 0
      %5667 = vmatpush1.bf16.msra.mxu0 %v4385
      %5668 = vmatprep.subr.bf16.mxu0 0
      %5669 = vmatpush1.bf16.msra.mxu0 %v4382
      %5670 = vmatprep.subr.bf16.mxu0 0
      %5671 = vmatpush1.bf16.msra.mxu0 %v4379
      %5672 = vmatprep.subr.bf16.mxu0 0
      %5673 = vmatpush1.bf16.msra.mxu0 %v4376
      %5674 = vmatprep.subr.bf16.mxu0 0
      %5675 = vmatpush2.bf16.msra.mxu0 0
      %5676 = vmatprep.subr.bf16.mxu0 0
      %5677 = vmatpush2.bf16.msra.mxu0 0
      %5678 = vmatprep.subr.bf16.mxu0 0
      %5679 = vmatpush2.bf16.msra.mxu0 0
      %5680 = vmatprep.subr.bf16.mxu0 0
      %5681 = vmatpush2.bf16.msra.mxu0 0
      %5682 = vmatprep.subr.bf16.mxu0 0
      %5683 = vmatpush2.bf16.msra.mxu0 0
      %5684 = vmatprep.subr.bf16.mxu0 0
      %5685 = vmatpush2.bf16.msra.mxu0 0
      %5686 = vmatprep.subr.bf16.mxu0 0
      %5687 = vmatpush2.bf16.msra.mxu0 0
      %5688 = vmatprep.subr.bf16.mxu0 0
      %5689 = vmatpush2.bf16.msra.mxu0 0
      %5690 = vmatprep.mubr.bf16.mxu0 0
      %5691 = vmatmul.mubr.bf16.gmra.mxu0 %v5505
      %v5692 = vpop.f32.mrf.mxu0
      %v5693 = vadd.f32 %v4290, %v5692
      %v5694 = vpop.f32.mrf.mxu0
      %v5695 = vpop.f32.mrf.mxu0
      %v5696 = vadd.f32 %v4290, %v5695
      %v5697 = vpop.f32.mrf.mxu0
      %5698 = vdwg.mxu0
      %v5699 = vld [vmem:[%s2758] sm:$0xff]
      %v5700 = vld [vmem:[%s2758 + $0x8] sm:$0xff]
      %v5701 = vpack.c.bf16 %v5612, %v5609
      %5702 = vmatprep.subr.bf16.mxu0 %v5010
      %5703 = vmatpush1.bf16.msra.mxu0 %v5009
      %5704 = vmatprep.subr.bf16.mxu0 %v5007
      %5705 = vmatpush1.bf16.msra.mxu0 %v5006
      %5706 = vmatprep.subr.bf16.mxu0 %v5004
      %5707 = vmatpush1.bf16.msra.mxu0 %v5003
      %5708 = vmatprep.subr.bf16.mxu0 %v5001
      %5709 = vmatpush1.bf16.msra.mxu0 %v5000
      %5710 = vmatprep.subr.bf16.mxu0 %v4998
      %5711 = vmatpush1.bf16.msra.mxu0 %v4997
      %5712 = vmatprep.subr.bf16.mxu0 %v4995
      %5713 = vmatpush1.bf16.msra.mxu0 %v4994
      %5714 = vmatprep.subr.bf16.mxu0 %v4992
      %5715 = vmatpush1.bf16.msra.mxu0 %v4991
      %5716 = vmatprep.subr.bf16.mxu0 %v4989
      %5717 = vmatpush1.bf16.msra.mxu0 %v4988
      %5718 = vmatprep.subr.bf16.mxu0 0
      %5719 = vmatpush2.bf16.msra.mxu0 0
      %5720 = vmatprep.subr.bf16.mxu0 0
      %5721 = vmatpush2.bf16.msra.mxu0 0
      %5722 = vmatprep.subr.bf16.mxu0 0
      %5723 = vmatpush2.bf16.msra.mxu0 0
      %5724 = vmatprep.subr.bf16.mxu0 0
      %5725 = vmatpush2.bf16.msra.mxu0 0
      %5726 = vmatprep.subr.bf16.mxu0 0
      %5727 = vmatpush2.bf16.msra.mxu0 0
      %5728 = vmatprep.subr.bf16.mxu0 0
      %5729 = vmatpush2.bf16.msra.mxu0 0
      %5730 = vmatprep.subr.bf16.mxu0 0
      %5731 = vmatpush2.bf16.msra.mxu0 0
      %5732 = vmatprep.subr.bf16.mxu0 0
      %5733 = vmatpush2.bf16.msra.mxu0 0
      %5734 = vmatprep.mubr.bf16.mxu0 0
      %5735 = vmatmul.mubr.bf16.gmra.mxu0 %v5701
      %v5736 = vpop.f32.mrf.mxu0
      %v5737 = vadd.f32 %v4896, %v5736
      %v5738 = vpop.f32.mrf.mxu0
      %v5739 = vadd.f32 %v4900, %v5738
      %v5740 = vpop.f32.mrf.mxu0
      %v5741 = vadd.f32 %v4896, %v5740
      %v5742 = vpop.f32.mrf.mxu0
      %v5743 = vadd.f32 %v4900, %v5742
      %5744 = vdwg.mxu0
      %5745 = vmatprep.subr.bf16.mxu0 0
      %5746 = vmatpush1.bf16.msra.mxu0 %v5011
      %5747 = vmatprep.subr.bf16.mxu0 0
      %5748 = vmatpush1.bf16.msra.mxu0 %v5008
      %5749 = vmatprep.subr.bf16.mxu0 0
      %5750 = vmatpush1.bf16.msra.mxu0 %v5005
      %5751 = vmatprep.subr.bf16.mxu0 0
      %5752 = vmatpush1.bf16.msra.mxu0 %v5002
      %5753 = vmatprep.subr.bf16.mxu0 0
      %5754 = vmatpush1.bf16.msra.mxu0 %v4999
      %5755 = vmatprep.subr.bf16.mxu0 0
      %5756 = vmatpush1.bf16.msra.mxu0 %v4996
      %5757 = vmatprep.subr.bf16.mxu0 0
      %5758 = vmatpush1.bf16.msra.mxu0 %v4993
      %5759 = vmatprep.subr.bf16.mxu0 0
      %5760 = vmatpush1.bf16.msra.mxu0 %v4990
      %5761 = vmatprep.subr.bf16.mxu0 0
      %5762 = vmatpush2.bf16.msra.mxu0 0
      %5763 = vmatprep.subr.bf16.mxu0 0
      %5764 = vmatpush2.bf16.msra.mxu0 0
      %5765 = vmatprep.subr.bf16.mxu0 0
      %5766 = vmatpush2.bf16.msra.mxu0 0
      %5767 = vmatprep.subr.bf16.mxu0 0
      %5768 = vmatpush2.bf16.msra.mxu0 0
      %5769 = vmatprep.subr.bf16.mxu0 0
      %5770 = vmatpush2.bf16.msra.mxu0 0
      %5771 = vmatprep.subr.bf16.mxu0 0
      %5772 = vmatpush2.bf16.msra.mxu0 0
      %5773 = vmatprep.subr.bf16.mxu0 0
      %5774 = vmatpush2.bf16.msra.mxu0 0
      %5775 = vmatprep.subr.bf16.mxu0 0
      %5776 = vmatpush2.bf16.msra.mxu0 0
      %5777 = vmatprep.mubr.bf16.mxu0 0
      %5778 = vmatmul.mubr.bf16.gmra.mxu0 %v5701
      %v5779 = vpop.f32.mrf.mxu0
      %v5780 = vadd.f32 %v4904, %v5779
      %v5781 = vpop.f32.mrf.mxu0
      %v5782 = vpop.f32.mrf.mxu0
      %v5783 = vadd.f32 %v4904, %v5782
      %v5784 = vpop.f32.mrf.mxu0
      %5785 = vdwg.mxu0
      %v5786 = vadd.f32 %v5650, %v5737
      %v5787 = vadd.f32 %v5654, %v5741
      %v5788 = vxor.u32 %v5786, 2147483648
      %v5789 = vxor.u32 %v5787, 2147483648
      %v5790 = vmul.f32 %v5788, 1.442695
      %v5791 = vpow.pop %v5790
      %v5792 = vmul.f32 %v5789, 1.442695
      %v5793 = vpow.pop %v5792
      %v5794 = vadd.f32 %v5791, 1.0
      %v5795 = vadd.f32 %v5793, 1.0
      %v5796 = vrcp.pop %v5794
      %v5797 = vmul.f32 1.0, %v5796
      %v5798 = vrcp.pop %v5795
      %v5799 = vmul.f32 1.0, %v5798
      %v5800 = vadd.f32 %v5652, %v5739
      %v5801 = vadd.f32 %v5656, %v5743
      %v5802 = vxor.u32 %v5800, 2147483648
      %v5803 = vxor.u32 %v5801, 2147483648
      %v5804 = vmul.f32 %v5802, 1.442695
      %v5805 = vpow.pop %v5804
      %v5806 = vmul.f32 %v5803, 1.442695
      %v5807 = vpow.pop %v5806
      %v5808 = vadd.f32 %v5805, 1.0
      %v5809 = vadd.f32 %v5807, 1.0
      %v5810 = vrcp.pop %v5808
      %v5811 = vmul.f32 1.0, %v5810
      %v5812 = vrcp.pop %v5809
      %v5813 = vmul.f32 1.0, %v5812
      %v5814 = vmul.f32 %v5797, %v5780
      %v5815 = vmul.f32 %v5799, %v5783
      %v5816 = vadd.f32 %v5693, %v5814
      %v5817 = vadd.f32 %v5696, %v5815
      %v5818 = vtanh.pop %v5816
      %v5819 = vtanh.pop %v5817
      %v5820 = vsub.f32 1.0, %v5811
      %v5821 = vsub.f32 1.0, %v5813
      %v5822 = vmul.f32 %v5820, %v5818
      %v5823 = vmul.f32 %v5821, %v5819
      %v5824 = vmul.f32 %v5811, %v5609
      %v5825 = vmul.f32 %v5813, %v5612
      %v5826 = vadd.f32 %v5822, %v5824
      %v5827 = vadd.f32 %v5823, %v5825
      %v5828 = vmul.f32 %v5699, %v5826
      %v5829 = vmul.f32 %v5700, %v5827
      %v5830 = vsub.f32 1.0, %v5699
      %v5831 = vsub.f32 1.0, %v5700
      %v5832 = vmul.f32 %v5830, %v5501
      %v5833 = vmul.f32 %v5831, %v5502
      %v5834 = vadd.f32 %v5828, %v5832
      %v5835 = vadd.f32 %v5829, %v5833
    $region118: #{tpu_custom_call.1} parent=1 // loop_footer
      %s2901 = sadd.s32 1, %s2897
    $region119: #{tpu_custom_call.1} parent=1 // loop_footer_branch
      %2896 = sbr.rel target = $region115
    $region120: #{tpu_custom_call.1} parent=1 // loop_exit
      _
    %5836 = vst [vmem:[#allocation20] sm:$0xff] %v2902
    %5837 = vst [vmem:[#allocation20 + $0x8] sm:$0xff] %v2903
    // Predicated region
    $region121: #{tpu_custom_call.1} parent=1 // pred_check
      _
    $region122: #{tpu_custom_call.1} parent=1 // pred_check_branch
      %5839 = sbr.rel (0) target = $region124
    $region123: #{tpu_custom_call.1} parent=1 // pred_region
      %s5841 = ssub.s32 256, 256
      %5842 = vsyncadd [#allocation4], %s5841
      %s5843 = sshll.u32 [#allocation20], 4
      %s5844 = int_to_ptr.vmem [resolvable:$true] %s5843
      %5849 = dma.vmem_to_hbm [thread:$0]  %s5844, 256, %s17, [#allocation4], 128, 128, 8
    $region124: #{tpu_custom_call.1} parent=1 // pred_fallthru
      _
    // Predicated region
    $region125: #{tpu_custom_call.1} parent=1 // pred_check
      _
    $region126: #{tpu_custom_call.1} parent=1 // pred_check_branch
      %5851 = sbr.rel (0) target = $region128
    $region127: #{tpu_custom_call.1} parent=1 // pred_region
      %5852 = dma.done [#allocation4], 256
    $region128: #{tpu_custom_call.1} parent=1 // pred_fallthru
      _
    %5853 = vsyncpa [#allocation3], 1
    %5854 = vsyncpa [#allocation6], 1
    %5855 = vsyncpa [#allocation9], 1
    %5856 = vsyncpa [#allocation12], 1
    %5857 = vsyncpa [#allocation15], 1
    %5858 = vsyncpa [#allocation18], 1
    %5859 = vsyncpa [#allocation4], 1

</llo_original>
